<compile_context>
chip_gen: v7x
topology: tpu7x:2x2x1
jax: 0.10.0
libtpu: 0.0.40
codegen_flags: <defaults>
</compile_context>

<pallas_src>
import functools
import math

import jax
import jax.numpy as jnp
from jax import lax
from jax.experimental import pallas as pl
from jax.experimental.pallas import tpu as pltpu


def _core_attention_kernel(q_ref, k_ref, v_ref, mask_ref, o_ref,
                           m_sc, l_sc, acc_sc, *, softmax_scale):
    ki = pl.program_id(2)

    @pl.when(ki == 0)
    def _init():
        m_sc[...] = jnp.full_like(m_sc, -jnp.inf)
        l_sc[...] = jnp.zeros_like(l_sc)
        acc_sc[...] = jnp.zeros_like(acc_sc)

    q = q_ref[0]            # (np, tq, hn)  compute dtype (bf16) -> native MXU path
    k = k_ref[0]            # (np, tk, hn)
    v = v_ref[0]            # (np, tk, hn)

    # scores = (Q @ K^T) * (1/sqrt(hn)), batched over heads, f32 accumulation.
    s = jnp.einsum("gqd,gkd->gqk", q, k,
                   preferred_element_type=jnp.float32)            # (np, tq, tk)
    s = s * jnp.float32(softmax_scale)

    # Megatron attention_mask_func: masked positions filled with -10000.0.
    # int8 mask tile is shared across all heads of this batch element.
    masked = (mask_ref[0] != 0)[None, :, :]                       # (1, tq, tk)
    s = jnp.where(masked, jnp.float32(-10000.0), s)

    # Online softmax update (fp32 state).
    m_prev = m_sc[...]                                            # (np, tq, 1)
    m_new = jnp.maximum(m_prev, jnp.max(s, axis=-1, keepdims=True))
    alpha = jnp.exp(m_prev - m_new)
    p = jnp.exp(s - m_new)                                        # (np, tq, tk)
    l_sc[...] = alpha * l_sc[...] + jnp.sum(p, axis=-1, keepdims=True)
    acc_sc[...] = alpha * acc_sc[...] + jnp.einsum(
        "gqk,gkd->gqd", p.astype(v.dtype), v,
        preferred_element_type=jnp.float32)                       # (np, tq, hn)
    m_sc[...] = m_new

    @pl.when(ki == pl.num_programs(2) - 1)
    def _finalize():
        num_heads = acc_sc.shape[0]
        inv_l = pl.reciprocal(l_sc[...], approx=True)             # (np, tq, 1)
        ctx = acc_sc[...] * inv_l                                 # (np, tq, hn) f32
        # Build a lane-dense (tq, np*hn) tile: one unmasked store.
        ctx = jnp.concatenate([ctx[g] for g in range(num_heads)], axis=-1)
        o_ref[0] = ctx.astype(o_ref.dtype)


def gpt_moe_core_attention(query_layer, key_layer, value_layer, attention_mask,
                           *, layer_number=1, apply_query_key_layer_scaling=True,
                           tq=256, tk=512, compute_dtype=None):
    """Pallas forward of GPTMoECoreAttention.

    query_layer:  [sq, b, np, hn]
    key_layer:    [sk, b, np, hn]
    value_layer:  [sk, b, np, hn]
    attention_mask: [b, 1, sq, sk] bool/int, True (nonzero) = masked out.
    Returns context_layer: [sq, b, np*hn] in the query dtype.
    """
    sq, b, np_, hn = query_layer.shape
    sk = key_layer.shape[0]
    assert key_layer.shape == (sk, b, np_, hn)
    assert value_layer.shape == (sk, b, np_, hn)
    assert attention_mask.shape == (b, 1, sq, sk)

    # The QK layer-scaling coeff (= layer_number) cancels between the baddbmm
    # alpha and the FusedScaleMaskSoftmax scale -> net scale is 1/sqrt(hn).
    del layer_number, apply_query_key_layer_scaling
    softmax_scale = 1.0 / math.sqrt(hn)

    out_dtype = query_layer.dtype
    if compute_dtype is None:
        # f32 inputs would not use the native bf16 MXU path; cast (per review).
        compute_dtype = (jnp.bfloat16 if query_layer.dtype == jnp.float32
                         else query_layer.dtype)

    tq = min(tq, sq)
    tk = min(tk, sk)
    assert sq % tq == 0 and sk % tk == 0, "sq/sk must be divisible by tq/tk"

    # [s, b, np, hn] -> [b, np, s, hn]; transpose fused with the dtype cast.
    qb = jnp.transpose(query_layer, (1, 2, 0, 3)).astype(compute_dtype)
    kb = jnp.transpose(key_layer, (1, 2, 0, 3)).astype(compute_dtype)
    vb = jnp.transpose(value_layer, (1, 2, 0, 3)).astype(compute_dtype)
    # Mask streamed as int8 (shared across heads).
    mask3 = (attention_mask.reshape(b, sq, sk) != 0).astype(jnp.int8)

    grid = (b, sq // tq, sk // tk)

    # Explicit VMEM budget (double-buffered blocks + f32 scratch + s/p temps).
    c_item = jnp.dtype(compute_dtype).itemsize
    o_item = jnp.dtype(out_dtype).itemsize
    vmem_est = (2 * (np_ * tq * hn * c_item            # Q
                     + 2 * np_ * tk * hn * c_item      # K + V
                     + tq * tk                         # int8 mask
                     + tq * np_ * hn * o_item)         # output
                + np_ * tq * (hn + 2) * 4              # m/l/acc scratch
                + 2 * np_ * tq * tk * 4)               # s / p f32 intermediates
    vmem_limit = int(min(max(2 * vmem_est, 32 * 1024 * 1024), 64 * 1024 * 1024))

    o = pl.pallas_call(
        functools.partial(_core_attention_kernel, softmax_scale=softmax_scale),
        out_shape=jax.ShapeDtypeStruct((b, sq, np_ * hn), out_dtype),
        grid=grid,
        in_specs=[
            # Q block resident across the key (reduction) axis; all heads folded in.
            pl.BlockSpec((1, np_, tq, hn), lambda bi, qi, ki: (bi, 0, qi, 0)),
            # K / V blocks streamed along the reduction axis.
            pl.BlockSpec((1, np_, tk, hn), lambda bi, qi, ki: (bi, 0, ki, 0)),
            pl.BlockSpec((1, np_, tk, hn), lambda bi, qi, ki: (bi, 0, ki, 0)),
            # int8 mask tile, loaded once per (b, qi, ki) and shared across heads.
            pl.BlockSpec((1, tq, tk), lambda bi, qi, ki: (bi, qi, ki)),
        ],
        out_specs=pl.BlockSpec((1, tq, np_ * hn), lambda bi, qi, ki: (bi, qi, 0)),
        scratch_shapes=[
            pltpu.VMEM((np_, tq, 1), jnp.float32),    # running max m
            pltpu.VMEM((np_, tq, 1), jnp.float32),    # running sum l
            pltpu.VMEM((np_, tq, hn), jnp.float32),   # output accumulator
        ],
        compiler_params=pltpu.CompilerParams(
            dimension_semantics=("parallel", "parallel", "arbitrary"),
            vmem_limit_bytes=vmem_limit),
    )(qb, kb, vb, mask3)

    # [b, sq, np*hn] -> [sq, b, np*hn]
    return jnp.transpose(o, (1, 0, 2))


def _reference(query_layer, key_layer, value_layer, attention_mask):
    sq, b, np_, hn = query_layer.shape
    scale = 1.0 / math.sqrt(hn)
    qf = query_layer.astype(jnp.float32)
    kf = key_layer.astype(jnp.float32)
    vf = value_layer.astype(jnp.float32)
    scores = jnp.einsum("sbnh,tbnh->bnst", qf, kf,
                        precision=lax.Precision.HIGHEST) * scale
    scores = jnp.where(attention_mask != 0, jnp.float32(-10000.0), scores)
    probs = jax.nn.softmax(scores, axis=-1)
    ctx = jnp.einsum("bnst,tbnh->sbnh", probs, vf,
                     precision=lax.Precision.HIGHEST)
    return ctx.reshape(sq, b, np_ * hn).astype(query_layer.dtype)


if __name__ == "__main__":
    # Small config that still exercises the tiled reduction:
    # seq_q = seq_k = 256, batch = 2, heads = 4, head_dim = 32 (hidden = 128).
    sq = sk = 256
    b, heads, hn = 2, 4, 32

    key = jax.random.PRNGKey(0)
    kq, kk, kv = jax.random.split(key, 3)
    # bf16 inputs (the typical GPT-MoE fp16/bf16 config) -> native MXU path.
    query_layer = jax.random.normal(kq, (sq, b, heads, hn),
                                    dtype=jnp.float32).astype(jnp.bfloat16)
    key_layer = jax.random.normal(kk, (sk, b, heads, hn),
                                  dtype=jnp.float32).astype(jnp.bfloat16)
    value_layer = jax.random.normal(kv, (sk, b, heads, hn),
                                    dtype=jnp.float32).astype(jnp.bfloat16)

    # Padding-style attention mask: True = masked.  Batch 0 keeps all keys,
    # batch 1 masks out the last 64 key positions.
    valid_len = jnp.array([sk, sk - 64], dtype=jnp.int32)
    key_pos = jnp.arange(sk, dtype=jnp.int32)
    attention_mask = (key_pos[None, :] >= valid_len[:, None])           # [b, sk]
    attention_mask = jnp.broadcast_to(attention_mask[:, None, None, :],
                                      (b, 1, sq, sk))                   # [b,1,sq,sk]

    # Use small tiles here so the online-softmax reduction runs over multiple
    # key tiles (grid = (2, 2, 2)); production defaults are tq=256, tk=512.
    out = gpt_moe_core_attention(query_layer, key_layer, value_layer,
                                 attention_mask, layer_number=3,
                                 tq=128, tk=128)
    out = jax.block_until_ready(out)

    ref = _reference(query_layer, key_layer, value_layer, attention_mask)
    assert out.shape == (sq, b, heads * hn)
    err = float(jnp.max(jnp.abs(out.astype(jnp.float32) - ref.astype(jnp.float32))))
    assert err < 2e-2, err

    print("KERNEL_OK")
</pallas_src>

<mosaic_0001>
module attributes {stable_mosaic.version = 11 : i64} {
  func.func @_core_attention_kernel(%arg0: i32, %arg1: i32, %arg2: i32, %arg3: memref<1x4x128x32xbf16, #tpu.memory_space<vmem>>, %arg4: memref<1x4x128x32xbf16, #tpu.memory_space<vmem>>, %arg5: memref<1x4x128x32xbf16, #tpu.memory_space<vmem>>, %arg6: memref<1x128x128xi8, #tpu.memory_space<vmem>>, %arg7: memref<1x128x128xbf16, #tpu.memory_space<vmem>>, %arg8: memref<4x128x1xf32, #tpu.memory_space<vmem>>, %arg9: memref<4x128x1xf32, #tpu.memory_space<vmem>>, %arg10: memref<4x128x32xf32, #tpu.memory_space<vmem>>) attributes {dimension_semantics = [#tpu.dimension_semantics<parallel>, #tpu.dimension_semantics<parallel>, #tpu.dimension_semantics<arbitrary>], iteration_bounds = array<i64: 2, 2, 2>, scalar_prefetch = 0 : i64, scratch_operands = 3 : i64, tpu.core_type = #tpu.core_type<tc>, window_params = [{transform_indices = @transform_0, window_bounds = array<i64: 1, 4, 128, 32>}, {transform_indices = @transform_1, window_bounds = array<i64: 1, 4, 128, 32>}, {transform_indices = @transform_2, window_bounds = array<i64: 1, 4, 128, 32>}, {transform_indices = @transform_3, window_bounds = array<i64: 1, 128, 128>}, {transform_indices = @transform_4, window_bounds = array<i64: 1, 128, 128>}]} {
    %c0_i32 = arith.constant 0 : i32
    %0 = arith.cmpi eq, %arg2, %c0_i32 : i32
    %1 = arith.extui %0 : i1 to i32
    %c0_i32_0 = arith.constant 0 : i32
    %2 = arith.cmpi ne, %1, %c0_i32_0 : i32
    scf.if %2 {
      %cst_39 = arith.constant 0xFF800000 : f32
      %47 = vector.broadcast %cst_39 : f32 to vector<4x128x1xf32>
      %c0_40 = arith.constant 0 : index
      %c0_41 = arith.constant 0 : index
      %c0_42 = arith.constant 0 : index
      %48 = vector.load %arg8[%c0_40, %c0_41, %c0_42] : memref<4x128x1xf32, #tpu.memory_space<vmem>>, vector<4x128x1xf32>
      tpu.vector_store %arg8[%c0_40, %c0_41, %c0_42], %47 {strides = array<i32>} : memref<4x128x1xf32, #tpu.memory_space<vmem>>, vector<4x128x1xf32>,
      %cst_43 = arith.constant 0.000000e+00 : f32
      %49 = vector.broadcast %cst_43 : f32 to vector<4x128x1xf32>
      %c0_44 = arith.constant 0 : index
      %c0_45 = arith.constant 0 : index
      %c0_46 = arith.constant 0 : index
      %50 = vector.load %arg9[%c0_44, %c0_45, %c0_46] : memref<4x128x1xf32, #tpu.memory_space<vmem>>, vector<4x128x1xf32>
      tpu.vector_store %arg9[%c0_44, %c0_45, %c0_46], %49 {strides = array<i32>} : memref<4x128x1xf32, #tpu.memory_space<vmem>>, vector<4x128x1xf32>,
      %cst_47 = arith.constant 0.000000e+00 : f32
      %51 = vector.broadcast %cst_47 : f32 to vector<4x128x32xf32>
      %c0_48 = arith.constant 0 : index
      %c0_49 = arith.constant 0 : index
      %c0_50 = arith.constant 0 : index
      %52 = vector.load %arg10[%c0_48, %c0_49, %c0_50] : memref<4x128x32xf32, #tpu.memory_space<vmem>>, vector<4x128x32xf32>
      tpu.vector_store %arg10[%c0_48, %c0_49, %c0_50], %51 {strides = array<i32>} : memref<4x128x32xf32, #tpu.memory_space<vmem>>, vector<4x128x32xf32>,
    } else {
    }
    %c0 = arith.constant 0 : index
    %c0_1 = arith.constant 0 : index
    %c0_2 = arith.constant 0 : index
    %c0_3 = arith.constant 0 : index
    %3 = vector.load %arg3[%c0, %c0_1, %c0_2, %c0_3] : memref<1x4x128x32xbf16, #tpu.memory_space<vmem>>, vector<1x4x128x32xbf16>
    %4 = vector.shape_cast %3 : vector<1x4x128x32xbf16> to vector<4x128x32xbf16>
    %c0_4 = arith.constant 0 : index
    %c0_5 = arith.constant 0 : index
    %c0_6 = arith.constant 0 : index
    %c0_7 = arith.constant 0 : index
    %5 = vector.load %arg4[%c0_4, %c0_5, %c0_6, %c0_7] : memref<1x4x128x32xbf16, #tpu.memory_space<vmem>>, vector<1x4x128x32xbf16>
    %6 = vector.shape_cast %5 : vector<1x4x128x32xbf16> to vector<4x128x32xbf16>
    %c0_8 = arith.constant 0 : index
    %c0_9 = arith.constant 0 : index
    %c0_10 = arith.constant 0 : index
    %c0_11 = arith.constant 0 : index
    %7 = vector.load %arg5[%c0_8, %c0_9, %c0_10, %c0_11] : memref<1x4x128x32xbf16, #tpu.memory_space<vmem>>, vector<1x4x128x32xbf16>
    %8 = vector.shape_cast %7 : vector<1x4x128x32xbf16> to vector<4x128x32xbf16>
    "tpu.trace_start"() <{level = 10 : i32, message = "gqd,gkd->gqk"}> : () -> ()
    %cst = arith.constant dense<0.000000e+00> : vector<4x128x128xf32>
    %9 = tpu.matmul %4, %6, %cst {dimension_numbers = #tpu.dot_dimension_numbers<[2], [2], [1], [1], [0, 0, 0, 1, 1, 1], [0], [0]>} : vector<4x128x32xbf16>, vector<4x128x32xbf16>, vector<4x128x128xf32> -> vector<4x128x128xf32>
    "tpu.trace_stop"() : () -> ()
    %cst_12 = arith.constant 0.176776692 : f32
    %10 = vector.broadcast %cst_12 : f32 to vector<4x128x128xf32>
    %11 = arith.mulf %9, %10 : vector<4x128x128xf32>
    %c0_13 = arith.constant 0 : index
    %c0_14 = arith.constant 0 : index
    %c0_15 = arith.constant 0 : index
    %12 = vector.load %arg6[%c0_13, %c0_14, %c0_15] : memref<1x128x128xi8, #tpu.memory_space<vmem>>, vector<1x128x128xi8>
    %13 = vector.shape_cast %12 : vector<1x128x128xi8> to vector<128x128xi8>
    %c0_i8 = arith.constant 0 : i8
    %14 = vector.broadcast %c0_i8 : i8 to vector<128x128xi8>
    %15 = arith.cmpi ne, %13, %14 : vector<128x128xi8>
    %16 = vector.shape_cast %15 : vector<128x128xi1> to vector<1x128x128xi1>
    %cst_16 = arith.constant -1.000000e+04 : f32
    %17 = vector.shape_cast %16 : vector<1x128x128xi1> to vector<1x128x128xi1>
    %18 = vector.broadcast %17 : vector<1x128x128xi1> to vector<4x128x128xi1>
    %19 = vector.broadcast %cst_16 : f32 to vector<4x128x128xf32>
    %20 = arith.select %18, %19, %11 : vector<4x128x128xi1>, vector<4x128x128xf32>
    %c0_17 = arith.constant 0 : index
    %c0_18 = arith.constant 0 : index
    %c0_19 = arith.constant 0 : index
    %21 = vector.load %arg8[%c0_17, %c0_18, %c0_19] : memref<4x128x1xf32, #tpu.memory_space<vmem>>, vector<4x128x1xf32>
    %cst_20 = arith.constant dense<0xFF800000> : vector<4x128xf32>
    %22 = vector.multi_reduction <maximumf>, %20, %cst_20 [2] : vector<4x128x128xf32> to vector<4x128xf32>
    %23 = vector.shape_cast %22 : vector<4x128xf32> to vector<4x128x1xf32>
    %24 = arith.maximumf %21, %23 : vector<4x128x1xf32>
    %25 = arith.subf %21, %24 : vector<4x128x1xf32>
    %26 = math.exp %25 : vector<4x128x1xf32>
    %27 = vector.broadcast %24 : vector<4x128x1xf32> to vector<4x128x128xf32>
    %28 = arith.subf %20, %27 : vector<4x128x128xf32>
    %29 = math.exp %28 : vector<4x128x128xf32>
    %c0_21 = arith.constant 0 : index
    %c0_22 = arith.constant 0 : index
    %c0_23 = arith.constant 0 : index
    %30 = vector.load %arg9[%c0_21, %c0_22, %c0_23] : memref<4x128x1xf32, #tpu.memory_space<vmem>>, vector<4x128x1xf32>
    %31 = arith.mulf %26, %30 : vector<4x128x1xf32>
    %cst_24 = arith.constant dense<0.000000e+00> : vector<4x128xf32>
    %32 = vector.multi_reduction <add>, %29, %cst_24 [2] : vector<4x128x128xf32> to vector<4x128xf32>
    %33 = vector.shape_cast %32 : vector<4x128xf32> to vector<4x128x1xf32>
    %34 = arith.addf %31, %33 : vector<4x128x1xf32>
    %c0_25 = arith.constant 0 : index
    %c0_26 = arith.constant 0 : index
    %c0_27 = arith.constant 0 : index
    %35 = vector.load %arg9[%c0_25, %c0_26, %c0_27] : memref<4x128x1xf32, #tpu.memory_space<vmem>>, vector<4x128x1xf32>
    tpu.vector_store %arg9[%c0_25, %c0_26, %c0_27], %34 {strides = array<i32>} : memref<4x128x1xf32, #tpu.memory_space<vmem>>, vector<4x128x1xf32>,
    %c0_28 = arith.constant 0 : index
    %c0_29 = arith.constant 0 : index
    %c0_30 = arith.constant 0 : index
    %36 = vector.load %arg10[%c0_28, %c0_29, %c0_30] : memref<4x128x32xf32, #tpu.memory_space<vmem>>, vector<4x128x32xf32>
    %37 = vector.broadcast %26 : vector<4x128x1xf32> to vector<4x128x32xf32>
    %38 = arith.mulf %37, %36 : vector<4x128x32xf32>
    %39 = arith.truncf %29 : vector<4x128x128xf32> to vector<4x128x128xbf16>
    "tpu.trace_start"() <{level = 10 : i32, message = "gqk,gkd->gqd"}> : () -> ()
    %cst_31 = arith.constant dense<0.000000e+00> : vector<4x128x32xf32>
    %40 = tpu.matmul %39, %8, %cst_31 {dimension_numbers = #tpu.dot_dimension_numbers<[2], [1], [1], [2], [0, 0, 0, 1, 1, 2], [0], [0]>} : vector<4x128x128xbf16>, vector<4x128x32xbf16>, vector<4x128x32xf32> -> vector<4x128x32xf32>
    "tpu.trace_stop"() : () -> ()
    %41 = arith.addf %38, %40 : vector<4x128x32xf32>
    %c0_32 = arith.constant 0 : index
    %c0_33 = arith.constant 0 : index
    %c0_34 = arith.constant 0 : index
    %42 = vector.load %arg10[%c0_32, %c0_33, %c0_34] : memref<4x128x32xf32, #tpu.memory_space<vmem>>, vector<4x128x32xf32>
    tpu.vector_store %arg10[%c0_32, %c0_33, %c0_34], %41 {strides = array<i32>} : memref<4x128x32xf32, #tpu.memory_space<vmem>>, vector<4x128x32xf32>,
    %c0_35 = arith.constant 0 : index
    %c0_36 = arith.constant 0 : index
    %c0_37 = arith.constant 0 : index
    %43 = vector.load %arg8[%c0_35, %c0_36, %c0_37] : memref<4x128x1xf32, #tpu.memory_space<vmem>>, vector<4x128x1xf32>
    tpu.vector_store %arg8[%c0_35, %c0_36, %c0_37], %24 {strides = array<i32>} : memref<4x128x1xf32, #tpu.memory_space<vmem>>, vector<4x128x1xf32>,
    %c1_i32 = arith.constant 1 : i32
    %44 = arith.cmpi eq, %arg2, %c1_i32 : i32
    %45 = arith.extui %44 : i1 to i32
    %c0_i32_38 = arith.constant 0 : i32
    %46 = arith.cmpi ne, %45, %c0_i32_38 : i32
    scf.if %46 {
      %c0_39 = arith.constant 0 : index
      %c0_40 = arith.constant 0 : index
      %c0_41 = arith.constant 0 : index
      %47 = vector.load %arg9[%c0_39, %c0_40, %c0_41] : memref<4x128x1xf32, #tpu.memory_space<vmem>>, vector<4x128x1xf32>
      %48 = tpu.reciprocal %47 {approx = true} : vector<4x128x1xf32> -> vector<4x128x1xf32>
      %c0_42 = arith.constant 0 : index
      %c0_43 = arith.constant 0 : index
      %c0_44 = arith.constant 0 : index
      %49 = vector.load %arg10[%c0_42, %c0_43, %c0_44] : memref<4x128x32xf32, #tpu.memory_space<vmem>>, vector<4x128x32xf32>
      %50 = vector.broadcast %48 : vector<4x128x1xf32> to vector<4x128x32xf32>
      %51 = arith.mulf %49, %50 : vector<4x128x32xf32>
      %52 = vector.extract_strided_slice %51 {offsets = [0, 0, 0], sizes = [1, 128, 32], strides = [1, 1, 1]} : vector<4x128x32xf32> to vector<1x128x32xf32>
      %53 = vector.shape_cast %52 : vector<1x128x32xf32> to vector<128x32xf32>
      %54 = vector.extract_strided_slice %51 {offsets = [1, 0, 0], sizes = [1, 128, 32], strides = [1, 1, 1]} : vector<4x128x32xf32> to vector<1x128x32xf32>
      %55 = vector.shape_cast %54 : vector<1x128x32xf32> to vector<128x32xf32>
      %56 = vector.extract_strided_slice %51 {offsets = [2, 0, 0], sizes = [1, 128, 32], strides = [1, 1, 1]} : vector<4x128x32xf32> to vector<1x128x32xf32>
      %57 = vector.shape_cast %56 : vector<1x128x32xf32> to vector<128x32xf32>
      %58 = vector.extract_strided_slice %51 {offsets = [3, 0, 0], sizes = [1, 128, 32], strides = [1, 1, 1]} : vector<4x128x32xf32> to vector<1x128x32xf32>
      %59 = vector.shape_cast %58 : vector<1x128x32xf32> to vector<128x32xf32>
      %60 = tpu.concatenate %53, %55, %57, %59 in 1 : vector<128x32xf32>, vector<128x32xf32>, vector<128x32xf32>, vector<128x32xf32> -> vector<128x128xf32>
      %61 = arith.truncf %60 : vector<128x128xf32> to vector<128x128xbf16>
      %c0_45 = arith.constant 0 : index
      %c0_46 = arith.constant 0 : index
      %c0_47 = arith.constant 0 : index
      %62 = vector.load %arg7[%c0_45, %c0_46, %c0_47] : memref<1x128x128xbf16, #tpu.memory_space<vmem>>, vector<1x128x128xbf16>
      %63 = vector.shape_cast %62 : vector<1x128x128xbf16> to vector<128x128xbf16>
      %64 = vector.shape_cast %61 : vector<128x128xbf16> to vector<1x128x128xbf16>
      tpu.vector_store %arg7[%c0_45, %c0_46, %c0_47], %64 {strides = array<i32>} : memref<1x128x128xbf16, #tpu.memory_space<vmem>>, vector<1x128x128xbf16>,
    } else {
    }
    return
  }
  func.func @transform_0(%arg0: i32, %arg1: i32, %arg2: i32) -> (i32, i32, i32, i32) {
    %c0_i32 = arith.constant 0 : i32
    %c0_i32_0 = arith.constant 0 : i32
    %c0_i32_1 = arith.constant 0 : i32
    return %arg0, %c0_i32, %arg1, %c0_i32_0 : i32, i32, i32, i32
  }
  func.func @transform_1(%arg0: i32, %arg1: i32, %arg2: i32) -> (i32, i32, i32, i32) {
    %c0_i32 = arith.constant 0 : i32
    %c0_i32_0 = arith.constant 0 : i32
    %c0_i32_1 = arith.constant 0 : i32
    return %arg0, %c0_i32, %arg2, %c0_i32_0 : i32, i32, i32, i32
  }
  func.func @transform_2(%arg0: i32, %arg1: i32, %arg2: i32) -> (i32, i32, i32, i32) {
    %c0_i32 = arith.constant 0 : i32
    %c0_i32_0 = arith.constant 0 : i32
    %c0_i32_1 = arith.constant 0 : i32
    return %arg0, %c0_i32, %arg2, %c0_i32_0 : i32, i32, i32, i32
  }
  func.func @transform_3(%arg0: i32, %arg1: i32, %arg2: i32) -> (i32, i32, i32) {
    %c0_i32 = arith.constant 0 : i32
    return %arg0, %arg1, %arg2 : i32, i32, i32
  }
  func.func @transform_4(%arg0: i32, %arg1: i32, %arg2: i32) -> (i32, i32, i32) {
    %c0_i32 = arith.constant 0 : i32
    %c0_i32_0 = arith.constant 0 : i32
    return %arg0, %arg1, %c0_i32 : i32, i32, i32
  }
}

</mosaic_0001>

<llo_original>
// kernel: tpu_custom_call.1
$region0: #{tpu_custom_call.1}
  #allocation0 [shape = 'u32[]', space=smem, size = 0x4, offset = 0x4, fixed_abs, tag = 'smem constant byte address 0x4 - core index']
  #allocation1 [shape = 'u32[144,128]{1,0:T(1,128)}', space=vmem, size = 0x12000, scoped, tag = 'internal scratch']
  #allocation2 [shape = 'f32[4,128,1]{2,1,0:T(8,128)}', space=vmem, size = 0x40000, scoped, tag = 'scratch operand']
  #allocation3 [shape = 'f32[4,128,1]{2,1,0:T(8,128)}', space=vmem, size = 0x40000, scoped, tag = 'scratch operand']
  #allocation4 [shape = 'f32[4,128,32]{2,1,0:T(8,128)}', space=vmem, size = 0x40000, scoped, tag = 'scratch operand']
  %s0 = inlined_call_operand.vmem [shape: bf16[2,4,256,32], index: 0, kind: input, shape index: {}]
  %s1 = inlined_call_operand.vmem [shape: bf16[2,4,256,32], index: 1, kind: input, shape index: {}]
  %s2 = inlined_call_operand.vmem [shape: bf16[2,4,256,32], index: 2, kind: input, shape index: {}]
  %s3 = inlined_call_operand.vmem [shape: s8[2,256,256], index: 3, kind: input, shape index: {}]
  %s4 = inlined_call_operand.hbm [shape: bf16[2,256,128], index: 4, kind: output, shape index: {}]
  %s5 = sld [smem:[#allocation0]]
  $region218: #{tpu_custom_call.1} parent=0
    _
  %s7 = ssub.s32 1, %s5
  %s8 = scalar_select 0, %s7, %s5
  $region1: #{tpu_custom_call.1} parent=0
    #allocation5 [shape = 'u8[262144]{0}', space=vmem, size = 0x40000, scoped, tag = 'input window, operand 0']
    #allocation6 [shape = 'u8[262144]{0}', space=vmem, size = 0x40000, scoped, tag = 'input window, operand 1']
    #allocation7 [shape = 'u8[262144]{0}', space=vmem, size = 0x40000, scoped, tag = 'input window, operand 2']
    #allocation8 [shape = 'u8[32768]{0}', space=vmem, size = 0x8000, scoped, tag = 'input window, operand 3']
    #allocation9 [shape = 'u8[65536]{0}', space=vmem, size = 0x10000, scoped, tag = 'output window, operand 0']
    #allocation10 [shape = 's32[2]{0}', space=sflag, size = 0x8, scoped, tag = 'scoped memory for tpu_custom_call.1']
    %9 = vsyncpa [#allocation10], 0
    %s10 = scalar_lea.sflag [#allocation10], 1
    %11 = vsyncpa %s10, 0
    loop: start=0, step=1, limit=10
    $region2: #{tpu_custom_call.1} parent=1 // loop_pre_header
      _
    $region3: #{tpu_custom_call.1} parent=1 // loop_header
      %s13 = sphi 0, %s17
      %p14 = scmp.ge.s32.totalorder %s13, 10
      %s20 = sphi 0, %s39
      %s21 = sphi 0, %s35
      %s22 = sphi 0, %s31
      %s23 = sphi 0, %s20
      %s24 = sphi 0, %s21
      %s25 = sphi 0, %s22
      %s26 = sphi 0, %s23
      %s27 = sphi 0, %s24
      %s28 = sphi 0, %s25
      %s44 = sphi 0, %s46
      %s47 = sphi 0, %s44
      %s48 = sphi 0, %s47
      %s64 = sphi 0, %s48
      %s72 = sphi 0, %s74
      %s75 = sphi 0, %s72
      %s76 = sphi 0, %s75
      %s92 = sphi 0, %s76
      %s100 = sphi 0, %s102
      %s103 = sphi 0, %s100
      %s104 = sphi 0, %s103
      %s120 = sphi 0, %s104
      %s130 = sphi 0, %s132
      %s133 = sphi 0, %s130
      %s134 = sphi 0, %s133
      %s150 = sphi 0, %s134
      %s158 = sphi 0, %s160
      %s161 = sphi 0, %s158
      %s162 = sphi 0, %s161
      %s178 = sphi 0, %s162
    $region4: #{tpu_custom_call.1} parent=1 // loop_header_branch
      %16 = sbr.rel (%p14) target = $region8
    $region5: #{tpu_custom_call.1} parent=1 // loop_body
      %s18 = ssub.s32 %s13, 1
      %s19 = ssub.s32 %s13, 2
      %s29 = sadd.s32 1, %s22
      %p30 = scmp.ge.s32.totalorder %s29, 2
      %s31 = scalar_select %p30, 0, %s29
      %s32 = sadd.s32 1, %s21
      %s33 = scalar_select %p30, %s32, %s21
      %p34 = scmp.ge.s32.totalorder %s33, 2
      %s35 = scalar_select %p34, 0, %s33
      %s36 = sadd.s32 1, %s20
      %s37 = scalar_select %p34, %s36, %s20
      %p38 = scmp.ge.s32.totalorder %s37, 2
      %s39 = scalar_select %p38, 0, %s37
      %s40 = ssub.s32 %s20, %s39
      %s41 = ssub.s32 %s21, %s35
      %s42 = sor.u32 %s40, %s41
      %p43 = scmp.eq.s32.totalorder %s42, 0
      %s45 = sadd.s32 %s44, 1
      %s46 = scalar_select %p43, %s44, %s45
      %p49 = pneg %p43
      %p50 = scmp.eq.s32.totalorder %s13, 7
      %p51 = por %p49, %p50
      %p52 = scmp.ne.s32.totalorder %s44, %s47
      %p53 = scmp.eq.s32.totalorder %s13, 0
      %p54 = por %p52, %p53
      %p55 = scmp.ne.s32.totalorder %s44, %s47
      %p56 = scmp.eq.s32.totalorder %s18, 7
      %p57 = por %p55, %p56
      %p58 = scmp.ne.s32.totalorder %s47, %s48
      %p59 = scmp.eq.s32.totalorder %s18, 0
      %p60 = por %p58, %p59
      %p61 = scmp.ne.s32.totalorder %s47, %s48
      %p62 = scmp.eq.s32.totalorder %s19, 7
      %p63 = por %p61, %p62
      %p65 = scmp.ne.s32.totalorder %s48, %s64
      %p66 = scmp.eq.s32.totalorder %s19, 0
      %p67 = por %p65, %p66
      %s68 = ssub.s32 %s20, %s39
      %s69 = ssub.s32 %s22, %s31
      %s70 = sor.u32 %s68, %s69
      %p71 = scmp.eq.s32.totalorder %s70, 0
      %s73 = sadd.s32 %s72, 1
      %s74 = scalar_select %p71, %s72, %s73
      %p77 = pneg %p71
      %p78 = scmp.eq.s32.totalorder %s13, 7
      %p79 = por %p77, %p78
      %p80 = scmp.ne.s32.totalorder %s72, %s75
      %p81 = scmp.eq.s32.totalorder %s13, 0
      %p82 = por %p80, %p81
      %p83 = scmp.ne.s32.totalorder %s72, %s75
      %p84 = scmp.eq.s32.totalorder %s18, 7
      %p85 = por %p83, %p84
      %p86 = scmp.ne.s32.totalorder %s75, %s76
      %p87 = scmp.eq.s32.totalorder %s18, 0
      %p88 = por %p86, %p87
      %p89 = scmp.ne.s32.totalorder %s75, %s76
      %p90 = scmp.eq.s32.totalorder %s19, 7
      %p91 = por %p89, %p90
      %p93 = scmp.ne.s32.totalorder %s76, %s92
      %p94 = scmp.eq.s32.totalorder %s19, 0
      %p95 = por %p93, %p94
      %s96 = ssub.s32 %s20, %s39
      %s97 = ssub.s32 %s22, %s31
      %s98 = sor.u32 %s96, %s97
      %p99 = scmp.eq.s32.totalorder %s98, 0
      %s101 = sadd.s32 %s100, 1
      %s102 = scalar_select %p99, %s100, %s101
      %p105 = pneg %p99
      %p106 = scmp.eq.s32.totalorder %s13, 7
      %p107 = por %p105, %p106
      %p108 = scmp.ne.s32.totalorder %s100, %s103
      %p109 = scmp.eq.s32.totalorder %s13, 0
      %p110 = por %p108, %p109
      %p111 = scmp.ne.s32.totalorder %s100, %s103
      %p112 = scmp.eq.s32.totalorder %s18, 7
      %p113 = por %p111, %p112
      %p114 = scmp.ne.s32.totalorder %s103, %s104
      %p115 = scmp.eq.s32.totalorder %s18, 0
      %p116 = por %p114, %p115
      %p117 = scmp.ne.s32.totalorder %s103, %s104
      %p118 = scmp.eq.s32.totalorder %s19, 7
      %p119 = por %p117, %p118
      %p121 = scmp.ne.s32.totalorder %s104, %s120
      %p122 = scmp.eq.s32.totalorder %s19, 0
      %p123 = por %p121, %p122
      %s124 = ssub.s32 %s20, %s39
      %s125 = ssub.s32 %s21, %s35
      %s126 = sor.u32 %s124, %s125
      %s127 = ssub.s32 %s22, %s31
      %s128 = sor.u32 %s126, %s127
      %p129 = scmp.eq.s32.totalorder %s128, 0
      %s131 = sadd.s32 %s130, 1
      %s132 = scalar_select %p129, %s130, %s131
      %p135 = pneg %p129
      %p136 = scmp.eq.s32.totalorder %s13, 7
      %p137 = por %p135, %p136
      %p138 = scmp.ne.s32.totalorder %s130, %s133
      %p139 = scmp.eq.s32.totalorder %s13, 0
      %p140 = por %p138, %p139
      %p141 = scmp.ne.s32.totalorder %s130, %s133
      %p142 = scmp.eq.s32.totalorder %s18, 7
      %p143 = por %p141, %p142
      %p144 = scmp.ne.s32.totalorder %s133, %s134
      %p145 = scmp.eq.s32.totalorder %s18, 0
      %p146 = por %p144, %p145
      %p147 = scmp.ne.s32.totalorder %s133, %s134
      %p148 = scmp.eq.s32.totalorder %s19, 7
      %p149 = por %p147, %p148
      %p151 = scmp.ne.s32.totalorder %s134, %s150
      %p152 = scmp.eq.s32.totalorder %s19, 0
      %p153 = por %p151, %p152
      %s154 = ssub.s32 %s20, %s39
      %s155 = ssub.s32 %s21, %s35
      %s156 = sor.u32 %s154, %s155
      %p157 = scmp.eq.s32.totalorder %s156, 0
      %s159 = sadd.s32 %s158, 1
      %s160 = scalar_select %p157, %s158, %s159
      %p163 = pneg %p157
      %p164 = scmp.eq.s32.totalorder %s13, 7
      %p165 = por %p163, %p164
      %p166 = scmp.ne.s32.totalorder %s158, %s161
      %p167 = scmp.eq.s32.totalorder %s13, 0
      %p168 = por %p166, %p167
      %p169 = scmp.ne.s32.totalorder %s158, %s161
      %p170 = scmp.eq.s32.totalorder %s18, 7
      %p171 = por %p169, %p170
      %p172 = scmp.ne.s32.totalorder %s161, %s162
      %p173 = scmp.eq.s32.totalorder %s18, 0
      %p174 = por %p172, %p173
      %p175 = scmp.ne.s32.totalorder %s161, %s162
      %p176 = scmp.eq.s32.totalorder %s19, 7
      %p177 = por %p175, %p176
      %p179 = scmp.ne.s32.totalorder %s162, %s178
      %p180 = scmp.eq.s32.totalorder %s19, 0
      %p181 = por %p179, %p180
      %p182 = scmp.le.s32.totalorder 1, %s13
      %p183 = scmp.lt.s32.totalorder %s13, 9
      %p184 = pnand %p182, %p183
      %p185 = pneg %p184
      // Predicated region
      $region9: #{tpu_custom_call.1} parent=5 // pred_check
        _
      $region10: #{tpu_custom_call.1} parent=5 // pred_check_branch
        %187 = sbr.rel (%p184) target = $region12
      $region11: #{tpu_custom_call.1} parent=5 // pred_region
        %s188 = ssub.s32 %s13, 1
      $region12: #{tpu_custom_call.1} parent=5 // pred_fallthru
        _
      %p189 = scmp.lt.s32.totalorder %s13, 8
      // Predicated region
      $region13: #{tpu_custom_call.1} parent=5 // pred_check
        %p190 = pneg %p189
      $region14: #{tpu_custom_call.1} parent=5 // pred_check_branch
        %192 = sbr.rel (%p190) target = $region16
      $region15: #{tpu_custom_call.1} parent=5 // pred_region
        // Predicated region
        $region17: #{tpu_custom_call.1} parent=15 // pred_check
          %p193 = pneg %p54
        $region18: #{tpu_custom_call.1} parent=15 // pred_check_branch
          %195 = sbr.rel (%p193) target = $region20
        $region19: #{tpu_custom_call.1} parent=15 // pred_region
          %s196 = sand.u32 %s44, 1
          %s197 = sand.u32 %s44, 1
          %s198 = smul.addr %s197, 256
          %s199 = scalar_lea.vmem [#allocation5], %s198
          %s200 = smul.u32 16, %s21
          %s201 = smul.addr %s20, 128
          %s202 = sadd.s32 %s200, %s201
          %s203 = smul.addr %s202, 4
          %s204 = scalar_lea.vmem %s0, %s203
          // Predicated region
          $region21: #{tpu_custom_call.1} parent=19 // pred_check
            _
          $region22: #{tpu_custom_call.1} parent=19 // pred_check_branch
            %206 = sbr.rel (0) target = $region24
          $region23: #{tpu_custom_call.1} parent=19 // pred_region
            // Predicated region
            $region25: #{tpu_custom_call.1} parent=23 // pred_check
              _
            $region26: #{tpu_custom_call.1} parent=23 // pred_check_branch
              %208 = sbr.rel target = $region28
            $region27: #{tpu_custom_call.1} parent=23 // pred_region
              // Predicated region
              $region40: #{tpu_custom_call.1} parent=27 // pred_check
                _
              $region41: #{tpu_custom_call.1} parent=27 // pred_check_branch
                %349 = sbr.rel (0) target = $region43
              $region42: #{tpu_custom_call.1} parent=27 // pred_region
                loop: start=0, step=1, limit=1
                $region44: #{tpu_custom_call.1} parent=42 // loop_pre_header
                  _
                $region45: #{tpu_custom_call.1} parent=42 // loop_header
                  %s351 = sphi 0, %s355
                  %p352 = scmp.ge.s32.totalorder %s351, 1
                  %s356 = sphi %s204, %s204
                  %s357 = sphi %s199, %s199
                $region46: #{tpu_custom_call.1} parent=42 // loop_header_branch
                  %354 = sbr.rel (%p352) target = $region50
                $region47: #{tpu_custom_call.1} parent=42 // loop_body
                  _
                $region48: #{tpu_custom_call.1} parent=42 // loop_footer
                  %s355 = sadd.s32 1, %s351
                $region49: #{tpu_custom_call.1} parent=42 // loop_footer_branch
                  %350 = sbr.rel target = $region45
                $region50: #{tpu_custom_call.1} parent=42 // loop_exit
                  _
                loop: start=0, step=1, limit=1
                $region51: #{tpu_custom_call.1} parent=42 // loop_pre_header
                  _
                $region52: #{tpu_custom_call.1} parent=42 // loop_header
                  %s360 = sphi 0, %s364
                  %p361 = scmp.ge.s32.totalorder %s360, 1
                  %s365 = sphi %s204, %s204
                  %s366 = sphi %s199, %s199
                $region53: #{tpu_custom_call.1} parent=42 // loop_header_branch
                  %363 = sbr.rel (%p361) target = $region57
                $region54: #{tpu_custom_call.1} parent=42 // loop_body
                  %v367 = vld [vmem:[%s365] sm:$0xf]
                  %368 = vst [vmem:[%s366] sm:$0xf] %v367
                  %v369 = vld [vmem:[%s365 + $0x4] sm:$0xf]
                  %370 = vst [vmem:[%s366 + $0x4] sm:$0xf] %v369
                  %v371 = vld [vmem:[%s365 + $0x8] sm:$0xf]
                  %372 = vst [vmem:[%s366 + $0x8] sm:$0xf] %v371
                  %v373 = vld [vmem:[%s365 + $0xc] sm:$0xf]
                  %374 = vst [vmem:[%s366 + $0xc] sm:$0xf] %v373
                  %v375 = vld [vmem:[%s365 + $0x10] sm:$0xf]
                  %376 = vst [vmem:[%s366 + $0x10] sm:$0xf] %v375
                  %v377 = vld [vmem:[%s365 + $0x14] sm:$0xf]
                  %378 = vst [vmem:[%s366 + $0x14] sm:$0xf] %v377
                  %v379 = vld [vmem:[%s365 + $0x18] sm:$0xf]
                  %380 = vst [vmem:[%s366 + $0x18] sm:$0xf] %v379
                  %v381 = vld [vmem:[%s365 + $0x1c] sm:$0xf]
                  %382 = vst [vmem:[%s366 + $0x1c] sm:$0xf] %v381
                  %v383 = vld [vmem:[%s365 + $0x20] sm:$0xf]
                  %384 = vst [vmem:[%s366 + $0x20] sm:$0xf] %v383
                  %v385 = vld [vmem:[%s365 + $0x24] sm:$0xf]
                  %386 = vst [vmem:[%s366 + $0x24] sm:$0xf] %v385
                  %v387 = vld [vmem:[%s365 + $0x28] sm:$0xf]
                  %388 = vst [vmem:[%s366 + $0x28] sm:$0xf] %v387
                  %v389 = vld [vmem:[%s365 + $0x2c] sm:$0xf]
                  %390 = vst [vmem:[%s366 + $0x2c] sm:$0xf] %v389
                  %v391 = vld [vmem:[%s365 + $0x30] sm:$0xf]
                  %392 = vst [vmem:[%s366 + $0x30] sm:$0xf] %v391
                  %v393 = vld [vmem:[%s365 + $0x34] sm:$0xf]
                  %394 = vst [vmem:[%s366 + $0x34] sm:$0xf] %v393
                  %v395 = vld [vmem:[%s365 + $0x38] sm:$0xf]
                  %396 = vst [vmem:[%s366 + $0x38] sm:$0xf] %v395
                  %v397 = vld [vmem:[%s365 + $0x3c] sm:$0xf]
                  %398 = vst [vmem:[%s366 + $0x3c] sm:$0xf] %v397
                  %v399 = vld [vmem:[%s365 + $0x80] sm:$0xf]
                  %400 = vst [vmem:[%s366 + $0x40] sm:$0xf] %v399
                  %v401 = vld [vmem:[%s365 + $0x84] sm:$0xf]
                  %402 = vst [vmem:[%s366 + $0x44] sm:$0xf] %v401
                  %v403 = vld [vmem:[%s365 + $0x88] sm:$0xf]
                  %404 = vst [vmem:[%s366 + $0x48] sm:$0xf] %v403
                  %v405 = vld [vmem:[%s365 + $0x8c] sm:$0xf]
                  %406 = vst [vmem:[%s366 + $0x4c] sm:$0xf] %v405
                  %v407 = vld [vmem:[%s365 + $0x90] sm:$0xf]
                  %408 = vst [vmem:[%s366 + $0x50] sm:$0xf] %v407
                  %v409 = vld [vmem:[%s365 + $0x94] sm:$0xf]
                  %410 = vst [vmem:[%s366 + $0x54] sm:$0xf] %v409
                  %v411 = vld [vmem:[%s365 + $0x98] sm:$0xf]
                  %412 = vst [vmem:[%s366 + $0x58] sm:$0xf] %v411
                  %v413 = vld [vmem:[%s365 + $0x9c] sm:$0xf]
                  %414 = vst [vmem:[%s366 + $0x5c] sm:$0xf] %v413
                  %v415 = vld [vmem:[%s365 + $0xa0] sm:$0xf]
                  %416 = vst [vmem:[%s366 + $0x60] sm:$0xf] %v415
                  %v417 = vld [vmem:[%s365 + $0xa4] sm:$0xf]
                  %418 = vst [vmem:[%s366 + $0x64] sm:$0xf] %v417
                  %v419 = vld [vmem:[%s365 + $0xa8] sm:$0xf]
                  %420 = vst [vmem:[%s366 + $0x68] sm:$0xf] %v419
                  %v421 = vld [vmem:[%s365 + $0xac] sm:$0xf]
                  %422 = vst [vmem:[%s366 + $0x6c] sm:$0xf] %v421
                  %v423 = vld [vmem:[%s365 + $0xb0] sm:$0xf]
                  %424 = vst [vmem:[%s366 + $0x70] sm:$0xf] %v423
                  %v425 = vld [vmem:[%s365 + $0xb4] sm:$0xf]
                  %426 = vst [vmem:[%s366 + $0x74] sm:$0xf] %v425
                  %v427 = vld [vmem:[%s365 + $0xb8] sm:$0xf]
                  %428 = vst [vmem:[%s366 + $0x78] sm:$0xf] %v427
                  %v429 = vld [vmem:[%s365 + $0xbc] sm:$0xf]
                  %430 = vst [vmem:[%s366 + $0x7c] sm:$0xf] %v429
                  %v431 = vld [vmem:[%s365 + $0x100] sm:$0xf]
                  %432 = vst [vmem:[%s366 + $0x80] sm:$0xf] %v431
                  %v433 = vld [vmem:[%s365 + $0x104] sm:$0xf]
                  %434 = vst [vmem:[%s366 + $0x84] sm:$0xf] %v433
                  %v435 = vld [vmem:[%s365 + $0x108] sm:$0xf]
                  %436 = vst [vmem:[%s366 + $0x88] sm:$0xf] %v435
                  %v437 = vld [vmem:[%s365 + $0x10c] sm:$0xf]
                  %438 = vst [vmem:[%s366 + $0x8c] sm:$0xf] %v437
                  %v439 = vld [vmem:[%s365 + $0x110] sm:$0xf]
                  %440 = vst [vmem:[%s366 + $0x90] sm:$0xf] %v439
                  %v441 = vld [vmem:[%s365 + $0x114] sm:$0xf]
                  %442 = vst [vmem:[%s366 + $0x94] sm:$0xf] %v441
                  %v443 = vld [vmem:[%s365 + $0x118] sm:$0xf]
                  %444 = vst [vmem:[%s366 + $0x98] sm:$0xf] %v443
                  %v445 = vld [vmem:[%s365 + $0x11c] sm:$0xf]
                  %446 = vst [vmem:[%s366 + $0x9c] sm:$0xf] %v445
                  %v447 = vld [vmem:[%s365 + $0x120] sm:$0xf]
                  %448 = vst [vmem:[%s366 + $0xa0] sm:$0xf] %v447
                  %v449 = vld [vmem:[%s365 + $0x124] sm:$0xf]
                  %450 = vst [vmem:[%s366 + $0xa4] sm:$0xf] %v449
                  %v451 = vld [vmem:[%s365 + $0x128] sm:$0xf]
                  %452 = vst [vmem:[%s366 + $0xa8] sm:$0xf] %v451
                  %v453 = vld [vmem:[%s365 + $0x12c] sm:$0xf]
                  %454 = vst [vmem:[%s366 + $0xac] sm:$0xf] %v453
                  %v455 = vld [vmem:[%s365 + $0x130] sm:$0xf]
                  %456 = vst [vmem:[%s366 + $0xb0] sm:$0xf] %v455
                  %v457 = vld [vmem:[%s365 + $0x134] sm:$0xf]
                  %458 = vst [vmem:[%s366 + $0xb4] sm:$0xf] %v457
                  %v459 = vld [vmem:[%s365 + $0x138] sm:$0xf]
                  %460 = vst [vmem:[%s366 + $0xb8] sm:$0xf] %v459
                  %v461 = vld [vmem:[%s365 + $0x13c] sm:$0xf]
                  %462 = vst [vmem:[%s366 + $0xbc] sm:$0xf] %v461
                  %v463 = vld [vmem:[%s365 + $0x180] sm:$0xf]
                  %464 = vst [vmem:[%s366 + $0xc0] sm:$0xf] %v463
                  %v465 = vld [vmem:[%s365 + $0x184] sm:$0xf]
                  %466 = vst [vmem:[%s366 + $0xc4] sm:$0xf] %v465
                  %v467 = vld [vmem:[%s365 + $0x188] sm:$0xf]
                  %468 = vst [vmem:[%s366 + $0xc8] sm:$0xf] %v467
                  %v469 = vld [vmem:[%s365 + $0x18c] sm:$0xf]
                  %470 = vst [vmem:[%s366 + $0xcc] sm:$0xf] %v469
                  %v471 = vld [vmem:[%s365 + $0x190] sm:$0xf]
                  %472 = vst [vmem:[%s366 + $0xd0] sm:$0xf] %v471
                  %v473 = vld [vmem:[%s365 + $0x194] sm:$0xf]
                  %474 = vst [vmem:[%s366 + $0xd4] sm:$0xf] %v473
                  %v475 = vld [vmem:[%s365 + $0x198] sm:$0xf]
                  %476 = vst [vmem:[%s366 + $0xd8] sm:$0xf] %v475
                  %v477 = vld [vmem:[%s365 + $0x19c] sm:$0xf]
                  %478 = vst [vmem:[%s366 + $0xdc] sm:$0xf] %v477
                  %v479 = vld [vmem:[%s365 + $0x1a0] sm:$0xf]
                  %480 = vst [vmem:[%s366 + $0xe0] sm:$0xf] %v479
                  %v481 = vld [vmem:[%s365 + $0x1a4] sm:$0xf]
                  %482 = vst [vmem:[%s366 + $0xe4] sm:$0xf] %v481
                  %v483 = vld [vmem:[%s365 + $0x1a8] sm:$0xf]
                  %484 = vst [vmem:[%s366 + $0xe8] sm:$0xf] %v483
                  %v485 = vld [vmem:[%s365 + $0x1ac] sm:$0xf]
                  %486 = vst [vmem:[%s366 + $0xec] sm:$0xf] %v485
                  %v487 = vld [vmem:[%s365 + $0x1b0] sm:$0xf]
                  %488 = vst [vmem:[%s366 + $0xf0] sm:$0xf] %v487
                  %v489 = vld [vmem:[%s365 + $0x1b4] sm:$0xf]
                  %490 = vst [vmem:[%s366 + $0xf4] sm:$0xf] %v489
                  %v491 = vld [vmem:[%s365 + $0x1b8] sm:$0xf]
                  %492 = vst [vmem:[%s366 + $0xf8] sm:$0xf] %v491
                  %v493 = vld [vmem:[%s365 + $0x1bc] sm:$0xf]
                  %494 = vst [vmem:[%s366 + $0xfc] sm:$0xf] %v493
                $region55: #{tpu_custom_call.1} parent=42 // loop_footer
                  %s364 = sadd.s32 1, %s360
                $region56: #{tpu_custom_call.1} parent=42 // loop_footer_branch
                  %359 = sbr.rel target = $region52
                $region57: #{tpu_custom_call.1} parent=42 // loop_exit
                  _
              $region43: #{tpu_custom_call.1} parent=27 // pred_fallthru
                _
            $region28: #{tpu_custom_call.1} parent=23 // pred_fallthru
              _
            // Predicated region
            $region29: #{tpu_custom_call.1} parent=23 // pred_check
              _
            $region30: #{tpu_custom_call.1} parent=23 // pred_check_branch
              %210 = sbr.rel (0) target = $region32
            $region31: #{tpu_custom_call.1} parent=23 // pred_region
              loop: start=0, step=1, limit=1
              $region33: #{tpu_custom_call.1} parent=31 // loop_pre_header
                _
              $region34: #{tpu_custom_call.1} parent=31 // loop_header
                %s213 = sphi 0, %s217
                %p214 = scmp.ge.s32.totalorder %s213, 1
                %s218 = sphi %s204, %s204
                %s219 = sphi %s199, %s199
              $region35: #{tpu_custom_call.1} parent=31 // loop_header_branch
                %216 = sbr.rel (%p214) target = $region39
              $region36: #{tpu_custom_call.1} parent=31 // loop_body
                %v220 = vld [vmem:[%s218] sm:$0xf]
                %221 = vst [vmem:[%s219] sm:$0xf] %v220
                %v222 = vld [vmem:[%s218 + $0x4] sm:$0xf]
                %223 = vst [vmem:[%s219 + $0x4] sm:$0xf] %v222
                %v224 = vld [vmem:[%s218 + $0x8] sm:$0xf]
                %225 = vst [vmem:[%s219 + $0x8] sm:$0xf] %v224
                %v226 = vld [vmem:[%s218 + $0xc] sm:$0xf]
                %227 = vst [vmem:[%s219 + $0xc] sm:$0xf] %v226
                %v228 = vld [vmem:[%s218 + $0x10] sm:$0xf]
                %229 = vst [vmem:[%s219 + $0x10] sm:$0xf] %v228
                %v230 = vld [vmem:[%s218 + $0x14] sm:$0xf]
                %231 = vst [vmem:[%s219 + $0x14] sm:$0xf] %v230
                %v232 = vld [vmem:[%s218 + $0x18] sm:$0xf]
                %233 = vst [vmem:[%s219 + $0x18] sm:$0xf] %v232
                %v234 = vld [vmem:[%s218 + $0x1c] sm:$0xf]
                %235 = vst [vmem:[%s219 + $0x1c] sm:$0xf] %v234
                %v236 = vld [vmem:[%s218 + $0x20] sm:$0xf]
                %237 = vst [vmem:[%s219 + $0x20] sm:$0xf] %v236
                %v238 = vld [vmem:[%s218 + $0x24] sm:$0xf]
                %239 = vst [vmem:[%s219 + $0x24] sm:$0xf] %v238
                %v240 = vld [vmem:[%s218 + $0x28] sm:$0xf]
                %241 = vst [vmem:[%s219 + $0x28] sm:$0xf] %v240
                %v242 = vld [vmem:[%s218 + $0x2c] sm:$0xf]
                %243 = vst [vmem:[%s219 + $0x2c] sm:$0xf] %v242
                %v244 = vld [vmem:[%s218 + $0x30] sm:$0xf]
                %245 = vst [vmem:[%s219 + $0x30] sm:$0xf] %v244
                %v246 = vld [vmem:[%s218 + $0x34] sm:$0xf]
                %247 = vst [vmem:[%s219 + $0x34] sm:$0xf] %v246
                %v248 = vld [vmem:[%s218 + $0x38] sm:$0xf]
                %249 = vst [vmem:[%s219 + $0x38] sm:$0xf] %v248
                %v250 = vld [vmem:[%s218 + $0x3c] sm:$0xf]
                %251 = vst [vmem:[%s219 + $0x3c] sm:$0xf] %v250
                %v252 = vld [vmem:[%s218 + $0x80] sm:$0xf]
                %253 = vst [vmem:[%s219 + $0x40] sm:$0xf] %v252
                %v254 = vld [vmem:[%s218 + $0x84] sm:$0xf]
                %255 = vst [vmem:[%s219 + $0x44] sm:$0xf] %v254
                %v256 = vld [vmem:[%s218 + $0x88] sm:$0xf]
                %257 = vst [vmem:[%s219 + $0x48] sm:$0xf] %v256
                %v258 = vld [vmem:[%s218 + $0x8c] sm:$0xf]
                %259 = vst [vmem:[%s219 + $0x4c] sm:$0xf] %v258
                %v260 = vld [vmem:[%s218 + $0x90] sm:$0xf]
                %261 = vst [vmem:[%s219 + $0x50] sm:$0xf] %v260
                %v262 = vld [vmem:[%s218 + $0x94] sm:$0xf]
                %263 = vst [vmem:[%s219 + $0x54] sm:$0xf] %v262
                %v264 = vld [vmem:[%s218 + $0x98] sm:$0xf]
                %265 = vst [vmem:[%s219 + $0x58] sm:$0xf] %v264
                %v266 = vld [vmem:[%s218 + $0x9c] sm:$0xf]
                %267 = vst [vmem:[%s219 + $0x5c] sm:$0xf] %v266
                %v268 = vld [vmem:[%s218 + $0xa0] sm:$0xf]
                %269 = vst [vmem:[%s219 + $0x60] sm:$0xf] %v268
                %v270 = vld [vmem:[%s218 + $0xa4] sm:$0xf]
                %271 = vst [vmem:[%s219 + $0x64] sm:$0xf] %v270
                %v272 = vld [vmem:[%s218 + $0xa8] sm:$0xf]
                %273 = vst [vmem:[%s219 + $0x68] sm:$0xf] %v272
                %v274 = vld [vmem:[%s218 + $0xac] sm:$0xf]
                %275 = vst [vmem:[%s219 + $0x6c] sm:$0xf] %v274
                %v276 = vld [vmem:[%s218 + $0xb0] sm:$0xf]
                %277 = vst [vmem:[%s219 + $0x70] sm:$0xf] %v276
                %v278 = vld [vmem:[%s218 + $0xb4] sm:$0xf]
                %279 = vst [vmem:[%s219 + $0x74] sm:$0xf] %v278
                %v280 = vld [vmem:[%s218 + $0xb8] sm:$0xf]
                %281 = vst [vmem:[%s219 + $0x78] sm:$0xf] %v280
                %v282 = vld [vmem:[%s218 + $0xbc] sm:$0xf]
                %283 = vst [vmem:[%s219 + $0x7c] sm:$0xf] %v282
                %v284 = vld [vmem:[%s218 + $0x100] sm:$0xf]
                %285 = vst [vmem:[%s219 + $0x80] sm:$0xf] %v284
                %v286 = vld [vmem:[%s218 + $0x104] sm:$0xf]
                %287 = vst [vmem:[%s219 + $0x84] sm:$0xf] %v286
                %v288 = vld [vmem:[%s218 + $0x108] sm:$0xf]
                %289 = vst [vmem:[%s219 + $0x88] sm:$0xf] %v288
                %v290 = vld [vmem:[%s218 + $0x10c] sm:$0xf]
                %291 = vst [vmem:[%s219 + $0x8c] sm:$0xf] %v290
                %v292 = vld [vmem:[%s218 + $0x110] sm:$0xf]
                %293 = vst [vmem:[%s219 + $0x90] sm:$0xf] %v292
                %v294 = vld [vmem:[%s218 + $0x114] sm:$0xf]
                %295 = vst [vmem:[%s219 + $0x94] sm:$0xf] %v294
                %v296 = vld [vmem:[%s218 + $0x118] sm:$0xf]
                %297 = vst [vmem:[%s219 + $0x98] sm:$0xf] %v296
                %v298 = vld [vmem:[%s218 + $0x11c] sm:$0xf]
                %299 = vst [vmem:[%s219 + $0x9c] sm:$0xf] %v298
                %v300 = vld [vmem:[%s218 + $0x120] sm:$0xf]
                %301 = vst [vmem:[%s219 + $0xa0] sm:$0xf] %v300
                %v302 = vld [vmem:[%s218 + $0x124] sm:$0xf]
                %303 = vst [vmem:[%s219 + $0xa4] sm:$0xf] %v302
                %v304 = vld [vmem:[%s218 + $0x128] sm:$0xf]
                %305 = vst [vmem:[%s219 + $0xa8] sm:$0xf] %v304
                %v306 = vld [vmem:[%s218 + $0x12c] sm:$0xf]
                %307 = vst [vmem:[%s219 + $0xac] sm:$0xf] %v306
                %v308 = vld [vmem:[%s218 + $0x130] sm:$0xf]
                %309 = vst [vmem:[%s219 + $0xb0] sm:$0xf] %v308
                %v310 = vld [vmem:[%s218 + $0x134] sm:$0xf]
                %311 = vst [vmem:[%s219 + $0xb4] sm:$0xf] %v310
                %v312 = vld [vmem:[%s218 + $0x138] sm:$0xf]
                %313 = vst [vmem:[%s219 + $0xb8] sm:$0xf] %v312
                %v314 = vld [vmem:[%s218 + $0x13c] sm:$0xf]
                %315 = vst [vmem:[%s219 + $0xbc] sm:$0xf] %v314
                %v316 = vld [vmem:[%s218 + $0x180] sm:$0xf]
                %317 = vst [vmem:[%s219 + $0xc0] sm:$0xf] %v316
                %v318 = vld [vmem:[%s218 + $0x184] sm:$0xf]
                %319 = vst [vmem:[%s219 + $0xc4] sm:$0xf] %v318
                %v320 = vld [vmem:[%s218 + $0x188] sm:$0xf]
                %321 = vst [vmem:[%s219 + $0xc8] sm:$0xf] %v320
                %v322 = vld [vmem:[%s218 + $0x18c] sm:$0xf]
                %323 = vst [vmem:[%s219 + $0xcc] sm:$0xf] %v322
                %v324 = vld [vmem:[%s218 + $0x190] sm:$0xf]
                %325 = vst [vmem:[%s219 + $0xd0] sm:$0xf] %v324
                %v326 = vld [vmem:[%s218 + $0x194] sm:$0xf]
                %327 = vst [vmem:[%s219 + $0xd4] sm:$0xf] %v326
                %v328 = vld [vmem:[%s218 + $0x198] sm:$0xf]
                %329 = vst [vmem:[%s219 + $0xd8] sm:$0xf] %v328
                %v330 = vld [vmem:[%s218 + $0x19c] sm:$0xf]
                %331 = vst [vmem:[%s219 + $0xdc] sm:$0xf] %v330
                %v332 = vld [vmem:[%s218 + $0x1a0] sm:$0xf]
                %333 = vst [vmem:[%s219 + $0xe0] sm:$0xf] %v332
                %v334 = vld [vmem:[%s218 + $0x1a4] sm:$0xf]
                %335 = vst [vmem:[%s219 + $0xe4] sm:$0xf] %v334
                %v336 = vld [vmem:[%s218 + $0x1a8] sm:$0xf]
                %337 = vst [vmem:[%s219 + $0xe8] sm:$0xf] %v336
                %v338 = vld [vmem:[%s218 + $0x1ac] sm:$0xf]
                %339 = vst [vmem:[%s219 + $0xec] sm:$0xf] %v338
                %v340 = vld [vmem:[%s218 + $0x1b0] sm:$0xf]
                %341 = vst [vmem:[%s219 + $0xf0] sm:$0xf] %v340
                %v342 = vld [vmem:[%s218 + $0x1b4] sm:$0xf]
                %343 = vst [vmem:[%s219 + $0xf4] sm:$0xf] %v342
                %v344 = vld [vmem:[%s218 + $0x1b8] sm:$0xf]
                %345 = vst [vmem:[%s219 + $0xf8] sm:$0xf] %v344
                %v346 = vld [vmem:[%s218 + $0x1bc] sm:$0xf]
                %347 = vst [vmem:[%s219 + $0xfc] sm:$0xf] %v346
              $region37: #{tpu_custom_call.1} parent=31 // loop_footer
                %s217 = sadd.s32 1, %s213
              $region38: #{tpu_custom_call.1} parent=31 // loop_footer_branch
                %212 = sbr.rel target = $region34
              $region39: #{tpu_custom_call.1} parent=31 // loop_exit
                _
            $region32: #{tpu_custom_call.1} parent=23 // pred_fallthru
              _
          $region24: #{tpu_custom_call.1} parent=19 // pred_fallthru
            _
          %495 = vnop
        $region20: #{tpu_custom_call.1} parent=15 // pred_fallthru
          _
        // Predicated region
        $region58: #{tpu_custom_call.1} parent=15 // pred_check
          %p496 = pneg %p82
        $region59: #{tpu_custom_call.1} parent=15 // pred_check_branch
          %498 = sbr.rel (%p496) target = $region61
        $region60: #{tpu_custom_call.1} parent=15 // pred_region
          %s499 = sand.u32 %s72, 1
          %s500 = sand.u32 %s72, 1
          %s501 = smul.addr %s500, 256
          %s502 = scalar_lea.vmem [#allocation6], %s501
          %s503 = smul.u32 16, %s22
          %s504 = smul.addr %s20, 128
          %s505 = sadd.s32 %s503, %s504
          %s506 = smul.addr %s505, 4
          %s507 = scalar_lea.vmem %s1, %s506
          // Predicated region
          $region62: #{tpu_custom_call.1} parent=60 // pred_check
            _
          $region63: #{tpu_custom_call.1} parent=60 // pred_check_branch
            %509 = sbr.rel (0) target = $region65
          $region64: #{tpu_custom_call.1} parent=60 // pred_region
            // Predicated region
            $region66: #{tpu_custom_call.1} parent=64 // pred_check
              _
            $region67: #{tpu_custom_call.1} parent=64 // pred_check_branch
              %511 = sbr.rel target = $region69
            $region68: #{tpu_custom_call.1} parent=64 // pred_region
              // Predicated region
              $region81: #{tpu_custom_call.1} parent=68 // pred_check
                _
              $region82: #{tpu_custom_call.1} parent=68 // pred_check_branch
                %652 = sbr.rel (0) target = $region84
              $region83: #{tpu_custom_call.1} parent=68 // pred_region
                loop: start=0, step=1, limit=1
                $region85: #{tpu_custom_call.1} parent=83 // loop_pre_header
                  _
                $region86: #{tpu_custom_call.1} parent=83 // loop_header
                  %s654 = sphi 0, %s658
                  %p655 = scmp.ge.s32.totalorder %s654, 1
                  %s659 = sphi %s507, %s507
                  %s660 = sphi %s502, %s502
                $region87: #{tpu_custom_call.1} parent=83 // loop_header_branch
                  %657 = sbr.rel (%p655) target = $region91
                $region88: #{tpu_custom_call.1} parent=83 // loop_body
                  _
                $region89: #{tpu_custom_call.1} parent=83 // loop_footer
                  %s658 = sadd.s32 1, %s654
                $region90: #{tpu_custom_call.1} parent=83 // loop_footer_branch
                  %653 = sbr.rel target = $region86
                $region91: #{tpu_custom_call.1} parent=83 // loop_exit
                  _
                loop: start=0, step=1, limit=1
                $region92: #{tpu_custom_call.1} parent=83 // loop_pre_header
                  _
                $region93: #{tpu_custom_call.1} parent=83 // loop_header
                  %s663 = sphi 0, %s667
                  %p664 = scmp.ge.s32.totalorder %s663, 1
                  %s668 = sphi %s507, %s507
                  %s669 = sphi %s502, %s502
                $region94: #{tpu_custom_call.1} parent=83 // loop_header_branch
                  %666 = sbr.rel (%p664) target = $region98
                $region95: #{tpu_custom_call.1} parent=83 // loop_body
                  %v670 = vld [vmem:[%s668] sm:$0xf]
                  %671 = vst [vmem:[%s669] sm:$0xf] %v670
                  %v672 = vld [vmem:[%s668 + $0x4] sm:$0xf]
                  %673 = vst [vmem:[%s669 + $0x4] sm:$0xf] %v672
                  %v674 = vld [vmem:[%s668 + $0x8] sm:$0xf]
                  %675 = vst [vmem:[%s669 + $0x8] sm:$0xf] %v674
                  %v676 = vld [vmem:[%s668 + $0xc] sm:$0xf]
                  %677 = vst [vmem:[%s669 + $0xc] sm:$0xf] %v676
                  %v678 = vld [vmem:[%s668 + $0x10] sm:$0xf]
                  %679 = vst [vmem:[%s669 + $0x10] sm:$0xf] %v678
                  %v680 = vld [vmem:[%s668 + $0x14] sm:$0xf]
                  %681 = vst [vmem:[%s669 + $0x14] sm:$0xf] %v680
                  %v682 = vld [vmem:[%s668 + $0x18] sm:$0xf]
                  %683 = vst [vmem:[%s669 + $0x18] sm:$0xf] %v682
                  %v684 = vld [vmem:[%s668 + $0x1c] sm:$0xf]
                  %685 = vst [vmem:[%s669 + $0x1c] sm:$0xf] %v684
                  %v686 = vld [vmem:[%s668 + $0x20] sm:$0xf]
                  %687 = vst [vmem:[%s669 + $0x20] sm:$0xf] %v686
                  %v688 = vld [vmem:[%s668 + $0x24] sm:$0xf]
                  %689 = vst [vmem:[%s669 + $0x24] sm:$0xf] %v688
                  %v690 = vld [vmem:[%s668 + $0x28] sm:$0xf]
                  %691 = vst [vmem:[%s669 + $0x28] sm:$0xf] %v690
                  %v692 = vld [vmem:[%s668 + $0x2c] sm:$0xf]
                  %693 = vst [vmem:[%s669 + $0x2c] sm:$0xf] %v692
                  %v694 = vld [vmem:[%s668 + $0x30] sm:$0xf]
                  %695 = vst [vmem:[%s669 + $0x30] sm:$0xf] %v694
                  %v696 = vld [vmem:[%s668 + $0x34] sm:$0xf]
                  %697 = vst [vmem:[%s669 + $0x34] sm:$0xf] %v696
                  %v698 = vld [vmem:[%s668 + $0x38] sm:$0xf]
                  %699 = vst [vmem:[%s669 + $0x38] sm:$0xf] %v698
                  %v700 = vld [vmem:[%s668 + $0x3c] sm:$0xf]
                  %701 = vst [vmem:[%s669 + $0x3c] sm:$0xf] %v700
                  %v702 = vld [vmem:[%s668 + $0x80] sm:$0xf]
                  %703 = vst [vmem:[%s669 + $0x40] sm:$0xf] %v702
                  %v704 = vld [vmem:[%s668 + $0x84] sm:$0xf]
                  %705 = vst [vmem:[%s669 + $0x44] sm:$0xf] %v704
                  %v706 = vld [vmem:[%s668 + $0x88] sm:$0xf]
                  %707 = vst [vmem:[%s669 + $0x48] sm:$0xf] %v706
                  %v708 = vld [vmem:[%s668 + $0x8c] sm:$0xf]
                  %709 = vst [vmem:[%s669 + $0x4c] sm:$0xf] %v708
                  %v710 = vld [vmem:[%s668 + $0x90] sm:$0xf]
                  %711 = vst [vmem:[%s669 + $0x50] sm:$0xf] %v710
                  %v712 = vld [vmem:[%s668 + $0x94] sm:$0xf]
                  %713 = vst [vmem:[%s669 + $0x54] sm:$0xf] %v712
                  %v714 = vld [vmem:[%s668 + $0x98] sm:$0xf]
                  %715 = vst [vmem:[%s669 + $0x58] sm:$0xf] %v714
                  %v716 = vld [vmem:[%s668 + $0x9c] sm:$0xf]
                  %717 = vst [vmem:[%s669 + $0x5c] sm:$0xf] %v716
                  %v718 = vld [vmem:[%s668 + $0xa0] sm:$0xf]
                  %719 = vst [vmem:[%s669 + $0x60] sm:$0xf] %v718
                  %v720 = vld [vmem:[%s668 + $0xa4] sm:$0xf]
                  %721 = vst [vmem:[%s669 + $0x64] sm:$0xf] %v720
                  %v722 = vld [vmem:[%s668 + $0xa8] sm:$0xf]
                  %723 = vst [vmem:[%s669 + $0x68] sm:$0xf] %v722
                  %v724 = vld [vmem:[%s668 + $0xac] sm:$0xf]
                  %725 = vst [vmem:[%s669 + $0x6c] sm:$0xf] %v724
                  %v726 = vld [vmem:[%s668 + $0xb0] sm:$0xf]
                  %727 = vst [vmem:[%s669 + $0x70] sm:$0xf] %v726
                  %v728 = vld [vmem:[%s668 + $0xb4] sm:$0xf]
                  %729 = vst [vmem:[%s669 + $0x74] sm:$0xf] %v728
                  %v730 = vld [vmem:[%s668 + $0xb8] sm:$0xf]
                  %731 = vst [vmem:[%s669 + $0x78] sm:$0xf] %v730
                  %v732 = vld [vmem:[%s668 + $0xbc] sm:$0xf]
                  %733 = vst [vmem:[%s669 + $0x7c] sm:$0xf] %v732
                  %v734 = vld [vmem:[%s668 + $0x100] sm:$0xf]
                  %735 = vst [vmem:[%s669 + $0x80] sm:$0xf] %v734
                  %v736 = vld [vmem:[%s668 + $0x104] sm:$0xf]
                  %737 = vst [vmem:[%s669 + $0x84] sm:$0xf] %v736
                  %v738 = vld [vmem:[%s668 + $0x108] sm:$0xf]
                  %739 = vst [vmem:[%s669 + $0x88] sm:$0xf] %v738
                  %v740 = vld [vmem:[%s668 + $0x10c] sm:$0xf]
                  %741 = vst [vmem:[%s669 + $0x8c] sm:$0xf] %v740
                  %v742 = vld [vmem:[%s668 + $0x110] sm:$0xf]
                  %743 = vst [vmem:[%s669 + $0x90] sm:$0xf] %v742
                  %v744 = vld [vmem:[%s668 + $0x114] sm:$0xf]
                  %745 = vst [vmem:[%s669 + $0x94] sm:$0xf] %v744
                  %v746 = vld [vmem:[%s668 + $0x118] sm:$0xf]
                  %747 = vst [vmem:[%s669 + $0x98] sm:$0xf] %v746
                  %v748 = vld [vmem:[%s668 + $0x11c] sm:$0xf]
                  %749 = vst [vmem:[%s669 + $0x9c] sm:$0xf] %v748
                  %v750 = vld [vmem:[%s668 + $0x120] sm:$0xf]
                  %751 = vst [vmem:[%s669 + $0xa0] sm:$0xf] %v750
                  %v752 = vld [vmem:[%s668 + $0x124] sm:$0xf]
                  %753 = vst [vmem:[%s669 + $0xa4] sm:$0xf] %v752
                  %v754 = vld [vmem:[%s668 + $0x128] sm:$0xf]
                  %755 = vst [vmem:[%s669 + $0xa8] sm:$0xf] %v754
                  %v756 = vld [vmem:[%s668 + $0x12c] sm:$0xf]
                  %757 = vst [vmem:[%s669 + $0xac] sm:$0xf] %v756
                  %v758 = vld [vmem:[%s668 + $0x130] sm:$0xf]
                  %759 = vst [vmem:[%s669 + $0xb0] sm:$0xf] %v758
                  %v760 = vld [vmem:[%s668 + $0x134] sm:$0xf]
                  %761 = vst [vmem:[%s669 + $0xb4] sm:$0xf] %v760
                  %v762 = vld [vmem:[%s668 + $0x138] sm:$0xf]
                  %763 = vst [vmem:[%s669 + $0xb8] sm:$0xf] %v762
                  %v764 = vld [vmem:[%s668 + $0x13c] sm:$0xf]
                  %765 = vst [vmem:[%s669 + $0xbc] sm:$0xf] %v764
                  %v766 = vld [vmem:[%s668 + $0x180] sm:$0xf]
                  %767 = vst [vmem:[%s669 + $0xc0] sm:$0xf] %v766
                  %v768 = vld [vmem:[%s668 + $0x184] sm:$0xf]
                  %769 = vst [vmem:[%s669 + $0xc4] sm:$0xf] %v768
                  %v770 = vld [vmem:[%s668 + $0x188] sm:$0xf]
                  %771 = vst [vmem:[%s669 + $0xc8] sm:$0xf] %v770
                  %v772 = vld [vmem:[%s668 + $0x18c] sm:$0xf]
                  %773 = vst [vmem:[%s669 + $0xcc] sm:$0xf] %v772
                  %v774 = vld [vmem:[%s668 + $0x190] sm:$0xf]
                  %775 = vst [vmem:[%s669 + $0xd0] sm:$0xf] %v774
                  %v776 = vld [vmem:[%s668 + $0x194] sm:$0xf]
                  %777 = vst [vmem:[%s669 + $0xd4] sm:$0xf] %v776
                  %v778 = vld [vmem:[%s668 + $0x198] sm:$0xf]
                  %779 = vst [vmem:[%s669 + $0xd8] sm:$0xf] %v778
                  %v780 = vld [vmem:[%s668 + $0x19c] sm:$0xf]
                  %781 = vst [vmem:[%s669 + $0xdc] sm:$0xf] %v780
                  %v782 = vld [vmem:[%s668 + $0x1a0] sm:$0xf]
                  %783 = vst [vmem:[%s669 + $0xe0] sm:$0xf] %v782
                  %v784 = vld [vmem:[%s668 + $0x1a4] sm:$0xf]
                  %785 = vst [vmem:[%s669 + $0xe4] sm:$0xf] %v784
                  %v786 = vld [vmem:[%s668 + $0x1a8] sm:$0xf]
                  %787 = vst [vmem:[%s669 + $0xe8] sm:$0xf] %v786
                  %v788 = vld [vmem:[%s668 + $0x1ac] sm:$0xf]
                  %789 = vst [vmem:[%s669 + $0xec] sm:$0xf] %v788
                  %v790 = vld [vmem:[%s668 + $0x1b0] sm:$0xf]
                  %791 = vst [vmem:[%s669 + $0xf0] sm:$0xf] %v790
                  %v792 = vld [vmem:[%s668 + $0x1b4] sm:$0xf]
                  %793 = vst [vmem:[%s669 + $0xf4] sm:$0xf] %v792
                  %v794 = vld [vmem:[%s668 + $0x1b8] sm:$0xf]
                  %795 = vst [vmem:[%s669 + $0xf8] sm:$0xf] %v794
                  %v796 = vld [vmem:[%s668 + $0x1bc] sm:$0xf]
                  %797 = vst [vmem:[%s669 + $0xfc] sm:$0xf] %v796
                $region96: #{tpu_custom_call.1} parent=83 // loop_footer
                  %s667 = sadd.s32 1, %s663
                $region97: #{tpu_custom_call.1} parent=83 // loop_footer_branch
                  %662 = sbr.rel target = $region93
                $region98: #{tpu_custom_call.1} parent=83 // loop_exit
                  _
              $region84: #{tpu_custom_call.1} parent=68 // pred_fallthru
                _
            $region69: #{tpu_custom_call.1} parent=64 // pred_fallthru
              _
            // Predicated region
            $region70: #{tpu_custom_call.1} parent=64 // pred_check
              _
            $region71: #{tpu_custom_call.1} parent=64 // pred_check_branch
              %513 = sbr.rel (0) target = $region73
            $region72: #{tpu_custom_call.1} parent=64 // pred_region
              loop: start=0, step=1, limit=1
              $region74: #{tpu_custom_call.1} parent=72 // loop_pre_header
                _
              $region75: #{tpu_custom_call.1} parent=72 // loop_header
                %s516 = sphi 0, %s520
                %p517 = scmp.ge.s32.totalorder %s516, 1
                %s521 = sphi %s507, %s507
                %s522 = sphi %s502, %s502
              $region76: #{tpu_custom_call.1} parent=72 // loop_header_branch
                %519 = sbr.rel (%p517) target = $region80
              $region77: #{tpu_custom_call.1} parent=72 // loop_body
                %v523 = vld [vmem:[%s521] sm:$0xf]
                %524 = vst [vmem:[%s522] sm:$0xf] %v523
                %v525 = vld [vmem:[%s521 + $0x4] sm:$0xf]
                %526 = vst [vmem:[%s522 + $0x4] sm:$0xf] %v525
                %v527 = vld [vmem:[%s521 + $0x8] sm:$0xf]
                %528 = vst [vmem:[%s522 + $0x8] sm:$0xf] %v527
                %v529 = vld [vmem:[%s521 + $0xc] sm:$0xf]
                %530 = vst [vmem:[%s522 + $0xc] sm:$0xf] %v529
                %v531 = vld [vmem:[%s521 + $0x10] sm:$0xf]
                %532 = vst [vmem:[%s522 + $0x10] sm:$0xf] %v531
                %v533 = vld [vmem:[%s521 + $0x14] sm:$0xf]
                %534 = vst [vmem:[%s522 + $0x14] sm:$0xf] %v533
                %v535 = vld [vmem:[%s521 + $0x18] sm:$0xf]
                %536 = vst [vmem:[%s522 + $0x18] sm:$0xf] %v535
                %v537 = vld [vmem:[%s521 + $0x1c] sm:$0xf]
                %538 = vst [vmem:[%s522 + $0x1c] sm:$0xf] %v537
                %v539 = vld [vmem:[%s521 + $0x20] sm:$0xf]
                %540 = vst [vmem:[%s522 + $0x20] sm:$0xf] %v539
                %v541 = vld [vmem:[%s521 + $0x24] sm:$0xf]
                %542 = vst [vmem:[%s522 + $0x24] sm:$0xf] %v541
                %v543 = vld [vmem:[%s521 + $0x28] sm:$0xf]
                %544 = vst [vmem:[%s522 + $0x28] sm:$0xf] %v543
                %v545 = vld [vmem:[%s521 + $0x2c] sm:$0xf]
                %546 = vst [vmem:[%s522 + $0x2c] sm:$0xf] %v545
                %v547 = vld [vmem:[%s521 + $0x30] sm:$0xf]
                %548 = vst [vmem:[%s522 + $0x30] sm:$0xf] %v547
                %v549 = vld [vmem:[%s521 + $0x34] sm:$0xf]
                %550 = vst [vmem:[%s522 + $0x34] sm:$0xf] %v549
                %v551 = vld [vmem:[%s521 + $0x38] sm:$0xf]
                %552 = vst [vmem:[%s522 + $0x38] sm:$0xf] %v551
                %v553 = vld [vmem:[%s521 + $0x3c] sm:$0xf]
                %554 = vst [vmem:[%s522 + $0x3c] sm:$0xf] %v553
                %v555 = vld [vmem:[%s521 + $0x80] sm:$0xf]
                %556 = vst [vmem:[%s522 + $0x40] sm:$0xf] %v555
                %v557 = vld [vmem:[%s521 + $0x84] sm:$0xf]
                %558 = vst [vmem:[%s522 + $0x44] sm:$0xf] %v557
                %v559 = vld [vmem:[%s521 + $0x88] sm:$0xf]
                %560 = vst [vmem:[%s522 + $0x48] sm:$0xf] %v559
                %v561 = vld [vmem:[%s521 + $0x8c] sm:$0xf]
                %562 = vst [vmem:[%s522 + $0x4c] sm:$0xf] %v561
                %v563 = vld [vmem:[%s521 + $0x90] sm:$0xf]
                %564 = vst [vmem:[%s522 + $0x50] sm:$0xf] %v563
                %v565 = vld [vmem:[%s521 + $0x94] sm:$0xf]
                %566 = vst [vmem:[%s522 + $0x54] sm:$0xf] %v565
                %v567 = vld [vmem:[%s521 + $0x98] sm:$0xf]
                %568 = vst [vmem:[%s522 + $0x58] sm:$0xf] %v567
                %v569 = vld [vmem:[%s521 + $0x9c] sm:$0xf]
                %570 = vst [vmem:[%s522 + $0x5c] sm:$0xf] %v569
                %v571 = vld [vmem:[%s521 + $0xa0] sm:$0xf]
                %572 = vst [vmem:[%s522 + $0x60] sm:$0xf] %v571
                %v573 = vld [vmem:[%s521 + $0xa4] sm:$0xf]
                %574 = vst [vmem:[%s522 + $0x64] sm:$0xf] %v573
                %v575 = vld [vmem:[%s521 + $0xa8] sm:$0xf]
                %576 = vst [vmem:[%s522 + $0x68] sm:$0xf] %v575
                %v577 = vld [vmem:[%s521 + $0xac] sm:$0xf]
                %578 = vst [vmem:[%s522 + $0x6c] sm:$0xf] %v577
                %v579 = vld [vmem:[%s521 + $0xb0] sm:$0xf]
                %580 = vst [vmem:[%s522 + $0x70] sm:$0xf] %v579
                %v581 = vld [vmem:[%s521 + $0xb4] sm:$0xf]
                %582 = vst [vmem:[%s522 + $0x74] sm:$0xf] %v581
                %v583 = vld [vmem:[%s521 + $0xb8] sm:$0xf]
                %584 = vst [vmem:[%s522 + $0x78] sm:$0xf] %v583
                %v585 = vld [vmem:[%s521 + $0xbc] sm:$0xf]
                %586 = vst [vmem:[%s522 + $0x7c] sm:$0xf] %v585
                %v587 = vld [vmem:[%s521 + $0x100] sm:$0xf]
                %588 = vst [vmem:[%s522 + $0x80] sm:$0xf] %v587
                %v589 = vld [vmem:[%s521 + $0x104] sm:$0xf]
                %590 = vst [vmem:[%s522 + $0x84] sm:$0xf] %v589
                %v591 = vld [vmem:[%s521 + $0x108] sm:$0xf]
                %592 = vst [vmem:[%s522 + $0x88] sm:$0xf] %v591
                %v593 = vld [vmem:[%s521 + $0x10c] sm:$0xf]
                %594 = vst [vmem:[%s522 + $0x8c] sm:$0xf] %v593
                %v595 = vld [vmem:[%s521 + $0x110] sm:$0xf]
                %596 = vst [vmem:[%s522 + $0x90] sm:$0xf] %v595
                %v597 = vld [vmem:[%s521 + $0x114] sm:$0xf]
                %598 = vst [vmem:[%s522 + $0x94] sm:$0xf] %v597
                %v599 = vld [vmem:[%s521 + $0x118] sm:$0xf]
                %600 = vst [vmem:[%s522 + $0x98] sm:$0xf] %v599
                %v601 = vld [vmem:[%s521 + $0x11c] sm:$0xf]
                %602 = vst [vmem:[%s522 + $0x9c] sm:$0xf] %v601
                %v603 = vld [vmem:[%s521 + $0x120] sm:$0xf]
                %604 = vst [vmem:[%s522 + $0xa0] sm:$0xf] %v603
                %v605 = vld [vmem:[%s521 + $0x124] sm:$0xf]
                %606 = vst [vmem:[%s522 + $0xa4] sm:$0xf] %v605
                %v607 = vld [vmem:[%s521 + $0x128] sm:$0xf]
                %608 = vst [vmem:[%s522 + $0xa8] sm:$0xf] %v607
                %v609 = vld [vmem:[%s521 + $0x12c] sm:$0xf]
                %610 = vst [vmem:[%s522 + $0xac] sm:$0xf] %v609
                %v611 = vld [vmem:[%s521 + $0x130] sm:$0xf]
                %612 = vst [vmem:[%s522 + $0xb0] sm:$0xf] %v611
                %v613 = vld [vmem:[%s521 + $0x134] sm:$0xf]
                %614 = vst [vmem:[%s522 + $0xb4] sm:$0xf] %v613
                %v615 = vld [vmem:[%s521 + $0x138] sm:$0xf]
                %616 = vst [vmem:[%s522 + $0xb8] sm:$0xf] %v615
                %v617 = vld [vmem:[%s521 + $0x13c] sm:$0xf]
                %618 = vst [vmem:[%s522 + $0xbc] sm:$0xf] %v617
                %v619 = vld [vmem:[%s521 + $0x180] sm:$0xf]
                %620 = vst [vmem:[%s522 + $0xc0] sm:$0xf] %v619
                %v621 = vld [vmem:[%s521 + $0x184] sm:$0xf]
                %622 = vst [vmem:[%s522 + $0xc4] sm:$0xf] %v621
                %v623 = vld [vmem:[%s521 + $0x188] sm:$0xf]
                %624 = vst [vmem:[%s522 + $0xc8] sm:$0xf] %v623
                %v625 = vld [vmem:[%s521 + $0x18c] sm:$0xf]
                %626 = vst [vmem:[%s522 + $0xcc] sm:$0xf] %v625
                %v627 = vld [vmem:[%s521 + $0x190] sm:$0xf]
                %628 = vst [vmem:[%s522 + $0xd0] sm:$0xf] %v627
                %v629 = vld [vmem:[%s521 + $0x194] sm:$0xf]
                %630 = vst [vmem:[%s522 + $0xd4] sm:$0xf] %v629
                %v631 = vld [vmem:[%s521 + $0x198] sm:$0xf]
                %632 = vst [vmem:[%s522 + $0xd8] sm:$0xf] %v631
                %v633 = vld [vmem:[%s521 + $0x19c] sm:$0xf]
                %634 = vst [vmem:[%s522 + $0xdc] sm:$0xf] %v633
                %v635 = vld [vmem:[%s521 + $0x1a0] sm:$0xf]
                %636 = vst [vmem:[%s522 + $0xe0] sm:$0xf] %v635
                %v637 = vld [vmem:[%s521 + $0x1a4] sm:$0xf]
                %638 = vst [vmem:[%s522 + $0xe4] sm:$0xf] %v637
                %v639 = vld [vmem:[%s521 + $0x1a8] sm:$0xf]
                %640 = vst [vmem:[%s522 + $0xe8] sm:$0xf] %v639
                %v641 = vld [vmem:[%s521 + $0x1ac] sm:$0xf]
                %642 = vst [vmem:[%s522 + $0xec] sm:$0xf] %v641
                %v643 = vld [vmem:[%s521 + $0x1b0] sm:$0xf]
                %644 = vst [vmem:[%s522 + $0xf0] sm:$0xf] %v643
                %v645 = vld [vmem:[%s521 + $0x1b4] sm:$0xf]
                %646 = vst [vmem:[%s522 + $0xf4] sm:$0xf] %v645
                %v647 = vld [vmem:[%s521 + $0x1b8] sm:$0xf]
                %648 = vst [vmem:[%s522 + $0xf8] sm:$0xf] %v647
                %v649 = vld [vmem:[%s521 + $0x1bc] sm:$0xf]
                %650 = vst [vmem:[%s522 + $0xfc] sm:$0xf] %v649
              $region78: #{tpu_custom_call.1} parent=72 // loop_footer
                %s520 = sadd.s32 1, %s516
              $region79: #{tpu_custom_call.1} parent=72 // loop_footer_branch
                %515 = sbr.rel target = $region75
              $region80: #{tpu_custom_call.1} parent=72 // loop_exit
                _
            $region73: #{tpu_custom_call.1} parent=64 // pred_fallthru
              _
          $region65: #{tpu_custom_call.1} parent=60 // pred_fallthru
            _
          %798 = vnop
        $region61: #{tpu_custom_call.1} parent=15 // pred_fallthru
          _
        // Predicated region
        $region99: #{tpu_custom_call.1} parent=15 // pred_check
          %p799 = pneg %p110
        $region100: #{tpu_custom_call.1} parent=15 // pred_check_branch
          %801 = sbr.rel (%p799) target = $region102
        $region101: #{tpu_custom_call.1} parent=15 // pred_region
          %s802 = sand.u32 %s100, 1
          %s803 = sand.u32 %s100, 1
          %s804 = smul.addr %s803, 256
          %s805 = scalar_lea.vmem [#allocation7], %s804
          %s806 = smul.u32 16, %s22
          %s807 = smul.addr %s20, 128
          %s808 = sadd.s32 %s806, %s807
          %s809 = smul.addr %s808, 4
          %s810 = scalar_lea.vmem %s2, %s809
          // Predicated region
          $region103: #{tpu_custom_call.1} parent=101 // pred_check
            _
          $region104: #{tpu_custom_call.1} parent=101 // pred_check_branch
            %812 = sbr.rel (0) target = $region106
          $region105: #{tpu_custom_call.1} parent=101 // pred_region
            // Predicated region
            $region107: #{tpu_custom_call.1} parent=105 // pred_check
              _
            $region108: #{tpu_custom_call.1} parent=105 // pred_check_branch
              %814 = sbr.rel target = $region110
            $region109: #{tpu_custom_call.1} parent=105 // pred_region
              // Predicated region
              $region122: #{tpu_custom_call.1} parent=109 // pred_check
                _
              $region123: #{tpu_custom_call.1} parent=109 // pred_check_branch
                %955 = sbr.rel (0) target = $region125
              $region124: #{tpu_custom_call.1} parent=109 // pred_region
                loop: start=0, step=1, limit=1
                $region126: #{tpu_custom_call.1} parent=124 // loop_pre_header
                  _
                $region127: #{tpu_custom_call.1} parent=124 // loop_header
                  %s957 = sphi 0, %s961
                  %p958 = scmp.ge.s32.totalorder %s957, 1
                  %s962 = sphi %s810, %s810
                  %s963 = sphi %s805, %s805
                $region128: #{tpu_custom_call.1} parent=124 // loop_header_branch
                  %960 = sbr.rel (%p958) target = $region132
                $region129: #{tpu_custom_call.1} parent=124 // loop_body
                  _
                $region130: #{tpu_custom_call.1} parent=124 // loop_footer
                  %s961 = sadd.s32 1, %s957
                $region131: #{tpu_custom_call.1} parent=124 // loop_footer_branch
                  %956 = sbr.rel target = $region127
                $region132: #{tpu_custom_call.1} parent=124 // loop_exit
                  _
                loop: start=0, step=1, limit=1
                $region133: #{tpu_custom_call.1} parent=124 // loop_pre_header
                  _
                $region134: #{tpu_custom_call.1} parent=124 // loop_header
                  %s966 = sphi 0, %s970
                  %p967 = scmp.ge.s32.totalorder %s966, 1
                  %s971 = sphi %s810, %s810
                  %s972 = sphi %s805, %s805
                $region135: #{tpu_custom_call.1} parent=124 // loop_header_branch
                  %969 = sbr.rel (%p967) target = $region139
                $region136: #{tpu_custom_call.1} parent=124 // loop_body
                  %v973 = vld [vmem:[%s971] sm:$0xf]
                  %974 = vst [vmem:[%s972] sm:$0xf] %v973
                  %v975 = vld [vmem:[%s971 + $0x4] sm:$0xf]
                  %976 = vst [vmem:[%s972 + $0x4] sm:$0xf] %v975
                  %v977 = vld [vmem:[%s971 + $0x8] sm:$0xf]
                  %978 = vst [vmem:[%s972 + $0x8] sm:$0xf] %v977
                  %v979 = vld [vmem:[%s971 + $0xc] sm:$0xf]
                  %980 = vst [vmem:[%s972 + $0xc] sm:$0xf] %v979
                  %v981 = vld [vmem:[%s971 + $0x10] sm:$0xf]
                  %982 = vst [vmem:[%s972 + $0x10] sm:$0xf] %v981
                  %v983 = vld [vmem:[%s971 + $0x14] sm:$0xf]
                  %984 = vst [vmem:[%s972 + $0x14] sm:$0xf] %v983
                  %v985 = vld [vmem:[%s971 + $0x18] sm:$0xf]
                  %986 = vst [vmem:[%s972 + $0x18] sm:$0xf] %v985
                  %v987 = vld [vmem:[%s971 + $0x1c] sm:$0xf]
                  %988 = vst [vmem:[%s972 + $0x1c] sm:$0xf] %v987
                  %v989 = vld [vmem:[%s971 + $0x20] sm:$0xf]
                  %990 = vst [vmem:[%s972 + $0x20] sm:$0xf] %v989
                  %v991 = vld [vmem:[%s971 + $0x24] sm:$0xf]
                  %992 = vst [vmem:[%s972 + $0x24] sm:$0xf] %v991
                  %v993 = vld [vmem:[%s971 + $0x28] sm:$0xf]
                  %994 = vst [vmem:[%s972 + $0x28] sm:$0xf] %v993
                  %v995 = vld [vmem:[%s971 + $0x2c] sm:$0xf]
                  %996 = vst [vmem:[%s972 + $0x2c] sm:$0xf] %v995
                  %v997 = vld [vmem:[%s971 + $0x30] sm:$0xf]
                  %998 = vst [vmem:[%s972 + $0x30] sm:$0xf] %v997
                  %v999 = vld [vmem:[%s971 + $0x34] sm:$0xf]
                  %1000 = vst [vmem:[%s972 + $0x34] sm:$0xf] %v999
                  %v1001 = vld [vmem:[%s971 + $0x38] sm:$0xf]
                  %1002 = vst [vmem:[%s972 + $0x38] sm:$0xf] %v1001
                  %v1003 = vld [vmem:[%s971 + $0x3c] sm:$0xf]
                  %1004 = vst [vmem:[%s972 + $0x3c] sm:$0xf] %v1003
                  %v1005 = vld [vmem:[%s971 + $0x80] sm:$0xf]
                  %1006 = vst [vmem:[%s972 + $0x40] sm:$0xf] %v1005
                  %v1007 = vld [vmem:[%s971 + $0x84] sm:$0xf]
                  %1008 = vst [vmem:[%s972 + $0x44] sm:$0xf] %v1007
                  %v1009 = vld [vmem:[%s971 + $0x88] sm:$0xf]
                  %1010 = vst [vmem:[%s972 + $0x48] sm:$0xf] %v1009
                  %v1011 = vld [vmem:[%s971 + $0x8c] sm:$0xf]
                  %1012 = vst [vmem:[%s972 + $0x4c] sm:$0xf] %v1011
                  %v1013 = vld [vmem:[%s971 + $0x90] sm:$0xf]
                  %1014 = vst [vmem:[%s972 + $0x50] sm:$0xf] %v1013
                  %v1015 = vld [vmem:[%s971 + $0x94] sm:$0xf]
                  %1016 = vst [vmem:[%s972 + $0x54] sm:$0xf] %v1015
                  %v1017 = vld [vmem:[%s971 + $0x98] sm:$0xf]
                  %1018 = vst [vmem:[%s972 + $0x58] sm:$0xf] %v1017
                  %v1019 = vld [vmem:[%s971 + $0x9c] sm:$0xf]
                  %1020 = vst [vmem:[%s972 + $0x5c] sm:$0xf] %v1019
                  %v1021 = vld [vmem:[%s971 + $0xa0] sm:$0xf]
                  %1022 = vst [vmem:[%s972 + $0x60] sm:$0xf] %v1021
                  %v1023 = vld [vmem:[%s971 + $0xa4] sm:$0xf]
                  %1024 = vst [vmem:[%s972 + $0x64] sm:$0xf] %v1023
                  %v1025 = vld [vmem:[%s971 + $0xa8] sm:$0xf]
                  %1026 = vst [vmem:[%s972 + $0x68] sm:$0xf] %v1025
                  %v1027 = vld [vmem:[%s971 + $0xac] sm:$0xf]
                  %1028 = vst [vmem:[%s972 + $0x6c] sm:$0xf] %v1027
                  %v1029 = vld [vmem:[%s971 + $0xb0] sm:$0xf]
                  %1030 = vst [vmem:[%s972 + $0x70] sm:$0xf] %v1029
                  %v1031 = vld [vmem:[%s971 + $0xb4] sm:$0xf]
                  %1032 = vst [vmem:[%s972 + $0x74] sm:$0xf] %v1031
                  %v1033 = vld [vmem:[%s971 + $0xb8] sm:$0xf]
                  %1034 = vst [vmem:[%s972 + $0x78] sm:$0xf] %v1033
                  %v1035 = vld [vmem:[%s971 + $0xbc] sm:$0xf]
                  %1036 = vst [vmem:[%s972 + $0x7c] sm:$0xf] %v1035
                  %v1037 = vld [vmem:[%s971 + $0x100] sm:$0xf]
                  %1038 = vst [vmem:[%s972 + $0x80] sm:$0xf] %v1037
                  %v1039 = vld [vmem:[%s971 + $0x104] sm:$0xf]
                  %1040 = vst [vmem:[%s972 + $0x84] sm:$0xf] %v1039
                  %v1041 = vld [vmem:[%s971 + $0x108] sm:$0xf]
                  %1042 = vst [vmem:[%s972 + $0x88] sm:$0xf] %v1041
                  %v1043 = vld [vmem:[%s971 + $0x10c] sm:$0xf]
                  %1044 = vst [vmem:[%s972 + $0x8c] sm:$0xf] %v1043
                  %v1045 = vld [vmem:[%s971 + $0x110] sm:$0xf]
                  %1046 = vst [vmem:[%s972 + $0x90] sm:$0xf] %v1045
                  %v1047 = vld [vmem:[%s971 + $0x114] sm:$0xf]
                  %1048 = vst [vmem:[%s972 + $0x94] sm:$0xf] %v1047
                  %v1049 = vld [vmem:[%s971 + $0x118] sm:$0xf]
                  %1050 = vst [vmem:[%s972 + $0x98] sm:$0xf] %v1049
                  %v1051 = vld [vmem:[%s971 + $0x11c] sm:$0xf]
                  %1052 = vst [vmem:[%s972 + $0x9c] sm:$0xf] %v1051
                  %v1053 = vld [vmem:[%s971 + $0x120] sm:$0xf]
                  %1054 = vst [vmem:[%s972 + $0xa0] sm:$0xf] %v1053
                  %v1055 = vld [vmem:[%s971 + $0x124] sm:$0xf]
                  %1056 = vst [vmem:[%s972 + $0xa4] sm:$0xf] %v1055
                  %v1057 = vld [vmem:[%s971 + $0x128] sm:$0xf]
                  %1058 = vst [vmem:[%s972 + $0xa8] sm:$0xf] %v1057
                  %v1059 = vld [vmem:[%s971 + $0x12c] sm:$0xf]
                  %1060 = vst [vmem:[%s972 + $0xac] sm:$0xf] %v1059
                  %v1061 = vld [vmem:[%s971 + $0x130] sm:$0xf]
                  %1062 = vst [vmem:[%s972 + $0xb0] sm:$0xf] %v1061
                  %v1063 = vld [vmem:[%s971 + $0x134] sm:$0xf]
                  %1064 = vst [vmem:[%s972 + $0xb4] sm:$0xf] %v1063
                  %v1065 = vld [vmem:[%s971 + $0x138] sm:$0xf]
                  %1066 = vst [vmem:[%s972 + $0xb8] sm:$0xf] %v1065
                  %v1067 = vld [vmem:[%s971 + $0x13c] sm:$0xf]
                  %1068 = vst [vmem:[%s972 + $0xbc] sm:$0xf] %v1067
                  %v1069 = vld [vmem:[%s971 + $0x180] sm:$0xf]
                  %1070 = vst [vmem:[%s972 + $0xc0] sm:$0xf] %v1069
                  %v1071 = vld [vmem:[%s971 + $0x184] sm:$0xf]
                  %1072 = vst [vmem:[%s972 + $0xc4] sm:$0xf] %v1071
                  %v1073 = vld [vmem:[%s971 + $0x188] sm:$0xf]
                  %1074 = vst [vmem:[%s972 + $0xc8] sm:$0xf] %v1073
                  %v1075 = vld [vmem:[%s971 + $0x18c] sm:$0xf]
                  %1076 = vst [vmem:[%s972 + $0xcc] sm:$0xf] %v1075
                  %v1077 = vld [vmem:[%s971 + $0x190] sm:$0xf]
                  %1078 = vst [vmem:[%s972 + $0xd0] sm:$0xf] %v1077
                  %v1079 = vld [vmem:[%s971 + $0x194] sm:$0xf]
                  %1080 = vst [vmem:[%s972 + $0xd4] sm:$0xf] %v1079
                  %v1081 = vld [vmem:[%s971 + $0x198] sm:$0xf]
                  %1082 = vst [vmem:[%s972 + $0xd8] sm:$0xf] %v1081
                  %v1083 = vld [vmem:[%s971 + $0x19c] sm:$0xf]
                  %1084 = vst [vmem:[%s972 + $0xdc] sm:$0xf] %v1083
                  %v1085 = vld [vmem:[%s971 + $0x1a0] sm:$0xf]
                  %1086 = vst [vmem:[%s972 + $0xe0] sm:$0xf] %v1085
                  %v1087 = vld [vmem:[%s971 + $0x1a4] sm:$0xf]
                  %1088 = vst [vmem:[%s972 + $0xe4] sm:$0xf] %v1087
                  %v1089 = vld [vmem:[%s971 + $0x1a8] sm:$0xf]
                  %1090 = vst [vmem:[%s972 + $0xe8] sm:$0xf] %v1089
                  %v1091 = vld [vmem:[%s971 + $0x1ac] sm:$0xf]
                  %1092 = vst [vmem:[%s972 + $0xec] sm:$0xf] %v1091
                  %v1093 = vld [vmem:[%s971 + $0x1b0] sm:$0xf]
                  %1094 = vst [vmem:[%s972 + $0xf0] sm:$0xf] %v1093
                  %v1095 = vld [vmem:[%s971 + $0x1b4] sm:$0xf]
                  %1096 = vst [vmem:[%s972 + $0xf4] sm:$0xf] %v1095
                  %v1097 = vld [vmem:[%s971 + $0x1b8] sm:$0xf]
                  %1098 = vst [vmem:[%s972 + $0xf8] sm:$0xf] %v1097
                  %v1099 = vld [vmem:[%s971 + $0x1bc] sm:$0xf]
                  %1100 = vst [vmem:[%s972 + $0xfc] sm:$0xf] %v1099
                $region137: #{tpu_custom_call.1} parent=124 // loop_footer
                  %s970 = sadd.s32 1, %s966
                $region138: #{tpu_custom_call.1} parent=124 // loop_footer_branch
                  %965 = sbr.rel target = $region134
                $region139: #{tpu_custom_call.1} parent=124 // loop_exit
                  _
              $region125: #{tpu_custom_call.1} parent=109 // pred_fallthru
                _
            $region110: #{tpu_custom_call.1} parent=105 // pred_fallthru
              _
            // Predicated region
            $region111: #{tpu_custom_call.1} parent=105 // pred_check
              _
            $region112: #{tpu_custom_call.1} parent=105 // pred_check_branch
              %816 = sbr.rel (0) target = $region114
            $region113: #{tpu_custom_call.1} parent=105 // pred_region
              loop: start=0, step=1, limit=1
              $region115: #{tpu_custom_call.1} parent=113 // loop_pre_header
                _
              $region116: #{tpu_custom_call.1} parent=113 // loop_header
                %s819 = sphi 0, %s823
                %p820 = scmp.ge.s32.totalorder %s819, 1
                %s824 = sphi %s810, %s810
                %s825 = sphi %s805, %s805
              $region117: #{tpu_custom_call.1} parent=113 // loop_header_branch
                %822 = sbr.rel (%p820) target = $region121
              $region118: #{tpu_custom_call.1} parent=113 // loop_body
                %v826 = vld [vmem:[%s824] sm:$0xf]
                %827 = vst [vmem:[%s825] sm:$0xf] %v826
                %v828 = vld [vmem:[%s824 + $0x4] sm:$0xf]
                %829 = vst [vmem:[%s825 + $0x4] sm:$0xf] %v828
                %v830 = vld [vmem:[%s824 + $0x8] sm:$0xf]
                %831 = vst [vmem:[%s825 + $0x8] sm:$0xf] %v830
                %v832 = vld [vmem:[%s824 + $0xc] sm:$0xf]
                %833 = vst [vmem:[%s825 + $0xc] sm:$0xf] %v832
                %v834 = vld [vmem:[%s824 + $0x10] sm:$0xf]
                %835 = vst [vmem:[%s825 + $0x10] sm:$0xf] %v834
                %v836 = vld [vmem:[%s824 + $0x14] sm:$0xf]
                %837 = vst [vmem:[%s825 + $0x14] sm:$0xf] %v836
                %v838 = vld [vmem:[%s824 + $0x18] sm:$0xf]
                %839 = vst [vmem:[%s825 + $0x18] sm:$0xf] %v838
                %v840 = vld [vmem:[%s824 + $0x1c] sm:$0xf]
                %841 = vst [vmem:[%s825 + $0x1c] sm:$0xf] %v840
                %v842 = vld [vmem:[%s824 + $0x20] sm:$0xf]
                %843 = vst [vmem:[%s825 + $0x20] sm:$0xf] %v842
                %v844 = vld [vmem:[%s824 + $0x24] sm:$0xf]
                %845 = vst [vmem:[%s825 + $0x24] sm:$0xf] %v844
                %v846 = vld [vmem:[%s824 + $0x28] sm:$0xf]
                %847 = vst [vmem:[%s825 + $0x28] sm:$0xf] %v846
                %v848 = vld [vmem:[%s824 + $0x2c] sm:$0xf]
                %849 = vst [vmem:[%s825 + $0x2c] sm:$0xf] %v848
                %v850 = vld [vmem:[%s824 + $0x30] sm:$0xf]
                %851 = vst [vmem:[%s825 + $0x30] sm:$0xf] %v850
                %v852 = vld [vmem:[%s824 + $0x34] sm:$0xf]
                %853 = vst [vmem:[%s825 + $0x34] sm:$0xf] %v852
                %v854 = vld [vmem:[%s824 + $0x38] sm:$0xf]
                %855 = vst [vmem:[%s825 + $0x38] sm:$0xf] %v854
                %v856 = vld [vmem:[%s824 + $0x3c] sm:$0xf]
                %857 = vst [vmem:[%s825 + $0x3c] sm:$0xf] %v856
                %v858 = vld [vmem:[%s824 + $0x80] sm:$0xf]
                %859 = vst [vmem:[%s825 + $0x40] sm:$0xf] %v858
                %v860 = vld [vmem:[%s824 + $0x84] sm:$0xf]
                %861 = vst [vmem:[%s825 + $0x44] sm:$0xf] %v860
                %v862 = vld [vmem:[%s824 + $0x88] sm:$0xf]
                %863 = vst [vmem:[%s825 + $0x48] sm:$0xf] %v862
                %v864 = vld [vmem:[%s824 + $0x8c] sm:$0xf]
                %865 = vst [vmem:[%s825 + $0x4c] sm:$0xf] %v864
                %v866 = vld [vmem:[%s824 + $0x90] sm:$0xf]
                %867 = vst [vmem:[%s825 + $0x50] sm:$0xf] %v866
                %v868 = vld [vmem:[%s824 + $0x94] sm:$0xf]
                %869 = vst [vmem:[%s825 + $0x54] sm:$0xf] %v868
                %v870 = vld [vmem:[%s824 + $0x98] sm:$0xf]
                %871 = vst [vmem:[%s825 + $0x58] sm:$0xf] %v870
                %v872 = vld [vmem:[%s824 + $0x9c] sm:$0xf]
                %873 = vst [vmem:[%s825 + $0x5c] sm:$0xf] %v872
                %v874 = vld [vmem:[%s824 + $0xa0] sm:$0xf]
                %875 = vst [vmem:[%s825 + $0x60] sm:$0xf] %v874
                %v876 = vld [vmem:[%s824 + $0xa4] sm:$0xf]
                %877 = vst [vmem:[%s825 + $0x64] sm:$0xf] %v876
                %v878 = vld [vmem:[%s824 + $0xa8] sm:$0xf]
                %879 = vst [vmem:[%s825 + $0x68] sm:$0xf] %v878
                %v880 = vld [vmem:[%s824 + $0xac] sm:$0xf]
                %881 = vst [vmem:[%s825 + $0x6c] sm:$0xf] %v880
                %v882 = vld [vmem:[%s824 + $0xb0] sm:$0xf]
                %883 = vst [vmem:[%s825 + $0x70] sm:$0xf] %v882
                %v884 = vld [vmem:[%s824 + $0xb4] sm:$0xf]
                %885 = vst [vmem:[%s825 + $0x74] sm:$0xf] %v884
                %v886 = vld [vmem:[%s824 + $0xb8] sm:$0xf]
                %887 = vst [vmem:[%s825 + $0x78] sm:$0xf] %v886
                %v888 = vld [vmem:[%s824 + $0xbc] sm:$0xf]
                %889 = vst [vmem:[%s825 + $0x7c] sm:$0xf] %v888
                %v890 = vld [vmem:[%s824 + $0x100] sm:$0xf]
                %891 = vst [vmem:[%s825 + $0x80] sm:$0xf] %v890
                %v892 = vld [vmem:[%s824 + $0x104] sm:$0xf]
                %893 = vst [vmem:[%s825 + $0x84] sm:$0xf] %v892
                %v894 = vld [vmem:[%s824 + $0x108] sm:$0xf]
                %895 = vst [vmem:[%s825 + $0x88] sm:$0xf] %v894
                %v896 = vld [vmem:[%s824 + $0x10c] sm:$0xf]
                %897 = vst [vmem:[%s825 + $0x8c] sm:$0xf] %v896
                %v898 = vld [vmem:[%s824 + $0x110] sm:$0xf]
                %899 = vst [vmem:[%s825 + $0x90] sm:$0xf] %v898
                %v900 = vld [vmem:[%s824 + $0x114] sm:$0xf]
                %901 = vst [vmem:[%s825 + $0x94] sm:$0xf] %v900
                %v902 = vld [vmem:[%s824 + $0x118] sm:$0xf]
                %903 = vst [vmem:[%s825 + $0x98] sm:$0xf] %v902
                %v904 = vld [vmem:[%s824 + $0x11c] sm:$0xf]
                %905 = vst [vmem:[%s825 + $0x9c] sm:$0xf] %v904
                %v906 = vld [vmem:[%s824 + $0x120] sm:$0xf]
                %907 = vst [vmem:[%s825 + $0xa0] sm:$0xf] %v906
                %v908 = vld [vmem:[%s824 + $0x124] sm:$0xf]
                %909 = vst [vmem:[%s825 + $0xa4] sm:$0xf] %v908
                %v910 = vld [vmem:[%s824 + $0x128] sm:$0xf]
                %911 = vst [vmem:[%s825 + $0xa8] sm:$0xf] %v910
                %v912 = vld [vmem:[%s824 + $0x12c] sm:$0xf]
                %913 = vst [vmem:[%s825 + $0xac] sm:$0xf] %v912
                %v914 = vld [vmem:[%s824 + $0x130] sm:$0xf]
                %915 = vst [vmem:[%s825 + $0xb0] sm:$0xf] %v914
                %v916 = vld [vmem:[%s824 + $0x134] sm:$0xf]
                %917 = vst [vmem:[%s825 + $0xb4] sm:$0xf] %v916
                %v918 = vld [vmem:[%s824 + $0x138] sm:$0xf]
                %919 = vst [vmem:[%s825 + $0xb8] sm:$0xf] %v918
                %v920 = vld [vmem:[%s824 + $0x13c] sm:$0xf]
                %921 = vst [vmem:[%s825 + $0xbc] sm:$0xf] %v920
                %v922 = vld [vmem:[%s824 + $0x180] sm:$0xf]
                %923 = vst [vmem:[%s825 + $0xc0] sm:$0xf] %v922
                %v924 = vld [vmem:[%s824 + $0x184] sm:$0xf]
                %925 = vst [vmem:[%s825 + $0xc4] sm:$0xf] %v924
                %v926 = vld [vmem:[%s824 + $0x188] sm:$0xf]
                %927 = vst [vmem:[%s825 + $0xc8] sm:$0xf] %v926
                %v928 = vld [vmem:[%s824 + $0x18c] sm:$0xf]
                %929 = vst [vmem:[%s825 + $0xcc] sm:$0xf] %v928
                %v930 = vld [vmem:[%s824 + $0x190] sm:$0xf]
                %931 = vst [vmem:[%s825 + $0xd0] sm:$0xf] %v930
                %v932 = vld [vmem:[%s824 + $0x194] sm:$0xf]
                %933 = vst [vmem:[%s825 + $0xd4] sm:$0xf] %v932
                %v934 = vld [vmem:[%s824 + $0x198] sm:$0xf]
                %935 = vst [vmem:[%s825 + $0xd8] sm:$0xf] %v934
                %v936 = vld [vmem:[%s824 + $0x19c] sm:$0xf]
                %937 = vst [vmem:[%s825 + $0xdc] sm:$0xf] %v936
                %v938 = vld [vmem:[%s824 + $0x1a0] sm:$0xf]
                %939 = vst [vmem:[%s825 + $0xe0] sm:$0xf] %v938
                %v940 = vld [vmem:[%s824 + $0x1a4] sm:$0xf]
                %941 = vst [vmem:[%s825 + $0xe4] sm:$0xf] %v940
                %v942 = vld [vmem:[%s824 + $0x1a8] sm:$0xf]
                %943 = vst [vmem:[%s825 + $0xe8] sm:$0xf] %v942
                %v944 = vld [vmem:[%s824 + $0x1ac] sm:$0xf]
                %945 = vst [vmem:[%s825 + $0xec] sm:$0xf] %v944
                %v946 = vld [vmem:[%s824 + $0x1b0] sm:$0xf]
                %947 = vst [vmem:[%s825 + $0xf0] sm:$0xf] %v946
                %v948 = vld [vmem:[%s824 + $0x1b4] sm:$0xf]
                %949 = vst [vmem:[%s825 + $0xf4] sm:$0xf] %v948
                %v950 = vld [vmem:[%s824 + $0x1b8] sm:$0xf]
                %951 = vst [vmem:[%s825 + $0xf8] sm:$0xf] %v950
                %v952 = vld [vmem:[%s824 + $0x1bc] sm:$0xf]
                %953 = vst [vmem:[%s825 + $0xfc] sm:$0xf] %v952
              $region119: #{tpu_custom_call.1} parent=113 // loop_footer
                %s823 = sadd.s32 1, %s819
              $region120: #{tpu_custom_call.1} parent=113 // loop_footer_branch
                %818 = sbr.rel target = $region116
              $region121: #{tpu_custom_call.1} parent=113 // loop_exit
                _
            $region114: #{tpu_custom_call.1} parent=105 // pred_fallthru
              _
          $region106: #{tpu_custom_call.1} parent=101 // pred_fallthru
            _
          %1101 = vnop
        $region102: #{tpu_custom_call.1} parent=15 // pred_fallthru
          _
        // Predicated region
        $region140: #{tpu_custom_call.1} parent=15 // pred_check
          %p1102 = pneg %p140
        $region141: #{tpu_custom_call.1} parent=15 // pred_check_branch
          %1104 = sbr.rel (%p1102) target = $region143
        $region142: #{tpu_custom_call.1} parent=15 // pred_region
          %s1105 = sand.u32 %s130, 1
          %s1106 = sand.u32 %s130, 1
          %s1107 = smul.addr %s1106, 32
          %s1108 = scalar_lea.vmem [#allocation8], %s1107
          %s1109 = smul.u32 4, %s21
          %s1110 = smul.addr %s1109, 2
          %s1111 = sadd.s32 %s22, %s1110
          %s1112 = smul.addr %s20, 16
          %s1113 = sadd.s32 %s1111, %s1112
          %s1114 = smul.addr %s1113, 8
          %s1115 = scalar_lea.vmem %s3, %s1114
          // Predicated region
          $region144: #{tpu_custom_call.1} parent=142 // pred_check
            _
          $region145: #{tpu_custom_call.1} parent=142 // pred_check_branch
            %1117 = sbr.rel (0) target = $region147
          $region146: #{tpu_custom_call.1} parent=142 // pred_region
            // Predicated region
            $region148: #{tpu_custom_call.1} parent=146 // pred_check
              _
            $region149: #{tpu_custom_call.1} parent=146 // pred_check_branch
              %1119 = sbr.rel (0) target = $region151
            $region150: #{tpu_custom_call.1} parent=146 // pred_region
              // Predicated region
              $region163: #{tpu_custom_call.1} parent=150 // pred_check
                _
              $region164: #{tpu_custom_call.1} parent=150 // pred_check_branch
                %1140 = sbr.rel (0) target = $region166
              $region165: #{tpu_custom_call.1} parent=150 // pred_region
                loop: start=0, step=1, limit=1
                $region167: #{tpu_custom_call.1} parent=165 // loop_pre_header
                  _
                $region168: #{tpu_custom_call.1} parent=165 // loop_header
                  %s1142 = sphi 0, %s1146
                  %p1143 = scmp.ge.s32.totalorder %s1142, 1
                  %s1147 = sphi %s1115, %s1115
                  %s1148 = sphi %s1108, %s1108
                $region169: #{tpu_custom_call.1} parent=165 // loop_header_branch
                  %1145 = sbr.rel (%p1143) target = $region173
                $region170: #{tpu_custom_call.1} parent=165 // loop_body
                  %v1149 = vld [vmem:[%s1147] sm:$0xff]
                  %1150 = vst [vmem:[%s1148] sm:$0xff] %v1149
                  %v1151 = vld [vmem:[%s1147 + $0x10] sm:$0xff]
                  %1152 = vst [vmem:[%s1148 + $0x8] sm:$0xff] %v1151
                  %v1153 = vld [vmem:[%s1147 + $0x20] sm:$0xff]
                  %1154 = vst [vmem:[%s1148 + $0x10] sm:$0xff] %v1153
                  %v1155 = vld [vmem:[%s1147 + $0x30] sm:$0xff]
                  %1156 = vst [vmem:[%s1148 + $0x18] sm:$0xff] %v1155
                $region171: #{tpu_custom_call.1} parent=165 // loop_footer
                  %s1146 = sadd.s32 1, %s1142
                $region172: #{tpu_custom_call.1} parent=165 // loop_footer_branch
                  %1141 = sbr.rel target = $region168
                $region173: #{tpu_custom_call.1} parent=165 // loop_exit
                  _
              $region166: #{tpu_custom_call.1} parent=150 // pred_fallthru
                _
              // Predicated region
              $region174: #{tpu_custom_call.1} parent=150 // pred_check
                _
              $region175: #{tpu_custom_call.1} parent=150 // pred_check_branch
                %1158 = sbr.rel target = $region177
              $region176: #{tpu_custom_call.1} parent=150 // pred_region
                _
              $region177: #{tpu_custom_call.1} parent=150 // pred_fallthru
                _
            $region151: #{tpu_custom_call.1} parent=146 // pred_fallthru
              _
            // Predicated region
            $region152: #{tpu_custom_call.1} parent=146 // pred_check
              _
            $region153: #{tpu_custom_call.1} parent=146 // pred_check_branch
              %1121 = sbr.rel target = $region155
            $region154: #{tpu_custom_call.1} parent=146 // pred_region
              loop: start=0, step=1, limit=1
              $region156: #{tpu_custom_call.1} parent=154 // loop_pre_header
                _
              $region157: #{tpu_custom_call.1} parent=154 // loop_header
                %s1124 = sphi 0, %s1128
                %p1125 = scmp.ge.s32.totalorder %s1124, 1
                %s1129 = sphi %s1115, %s1115
                %s1130 = sphi %s1108, %s1108
              $region158: #{tpu_custom_call.1} parent=154 // loop_header_branch
                %1127 = sbr.rel (%p1125) target = $region162
              $region159: #{tpu_custom_call.1} parent=154 // loop_body
                %v1131 = vld [vmem:[%s1129] sm:$0xff]
                %1132 = vst [vmem:[%s1130] sm:$0xff] %v1131
                %v1133 = vld [vmem:[%s1129 + $0x10] sm:$0xff]
                %1134 = vst [vmem:[%s1130 + $0x8] sm:$0xff] %v1133
                %v1135 = vld [vmem:[%s1129 + $0x20] sm:$0xff]
                %1136 = vst [vmem:[%s1130 + $0x10] sm:$0xff] %v1135
                %v1137 = vld [vmem:[%s1129 + $0x30] sm:$0xff]
                %1138 = vst [vmem:[%s1130 + $0x18] sm:$0xff] %v1137
              $region160: #{tpu_custom_call.1} parent=154 // loop_footer
                %s1128 = sadd.s32 1, %s1124
              $region161: #{tpu_custom_call.1} parent=154 // loop_footer_branch
                %1123 = sbr.rel target = $region157
              $region162: #{tpu_custom_call.1} parent=154 // loop_exit
                _
            $region155: #{tpu_custom_call.1} parent=146 // pred_fallthru
              _
          $region147: #{tpu_custom_call.1} parent=142 // pred_fallthru
            _
          %1159 = vnop
        $region143: #{tpu_custom_call.1} parent=15 // pred_fallthru
          _
      $region16: #{tpu_custom_call.1} parent=5 // pred_fallthru
        _
      %p1160 = scmp.le.s32.totalorder 1, %s13
      %p1161 = scmp.lt.s32.totalorder %s13, 9
      %p1162 = pnand %p1160, %p1161
      %p1163 = pneg %p1162
      // Predicated region
      $region178: #{tpu_custom_call.1} parent=5 // pred_check
        _
      $region179: #{tpu_custom_call.1} parent=5 // pred_check_branch
        %1165 = sbr.rel (%p1162) target = $region181
      $region180: #{tpu_custom_call.1} parent=5 // pred_region
        %s1166 = ssub.s32 %s13, 1
        %s1167 = sand.u32 %s47, 1
        %s1168 = sand.u32 %s47, 1
        %s1169 = smul.addr %s1168, 256
        %s1170 = scalar_lea.vmem [#allocation5], %s1169
        // Predicated region
        $region182: #{tpu_custom_call.1} parent=180 // pred_check
          %p1171 = pneg %p60
        $region183: #{tpu_custom_call.1} parent=180 // pred_check_branch
          %1173 = sbr.rel (%p1171) target = $region185
        $region184: #{tpu_custom_call.1} parent=180 // pred_region
          _
        $region185: #{tpu_custom_call.1} parent=180 // pred_fallthru
          _
        %s1174 = sand.u32 %s75, 1
        %s1175 = sand.u32 %s75, 1
        %s1176 = smul.addr %s1175, 256
        %s1177 = scalar_lea.vmem [#allocation6], %s1176
        // Predicated region
        $region186: #{tpu_custom_call.1} parent=180 // pred_check
          %p1178 = pneg %p88
        $region187: #{tpu_custom_call.1} parent=180 // pred_check_branch
          %1180 = sbr.rel (%p1178) target = $region189
        $region188: #{tpu_custom_call.1} parent=180 // pred_region
          _
        $region189: #{tpu_custom_call.1} parent=180 // pred_fallthru
          _
        %s1181 = sand.u32 %s103, 1
        %s1182 = sand.u32 %s103, 1
        %s1183 = smul.addr %s1182, 256
        %s1184 = scalar_lea.vmem [#allocation7], %s1183
        // Predicated region
        $region190: #{tpu_custom_call.1} parent=180 // pred_check
          %p1185 = pneg %p116
        $region191: #{tpu_custom_call.1} parent=180 // pred_check_branch
          %1187 = sbr.rel (%p1185) target = $region193
        $region192: #{tpu_custom_call.1} parent=180 // pred_region
          _
        $region193: #{tpu_custom_call.1} parent=180 // pred_fallthru
          _
        %s1188 = sand.u32 %s133, 1
        %s1189 = sand.u32 %s133, 1
        %s1190 = smul.addr %s1189, 32
        %s1191 = scalar_lea.vmem [#allocation8], %s1190
        // Predicated region
        $region194: #{tpu_custom_call.1} parent=180 // pred_check
          %p1192 = pneg %p146
        $region195: #{tpu_custom_call.1} parent=180 // pred_check_branch
          %1194 = sbr.rel (%p1192) target = $region197
        $region196: #{tpu_custom_call.1} parent=180 // pred_region
          _
        $region197: #{tpu_custom_call.1} parent=180 // pred_fallthru
          _
        %s1195 = sand.u32 %s47, 1
        %s1196 = sand.u32 %s47, 1
        %s1197 = smul.addr %s1196, 256
        %s1198 = scalar_lea.vmem [#allocation5], %s1197
        %p1199 = pneg %p60
        %p1200 = pneg %p57
        %s1201 = sand.u32 %s75, 1
        %s1202 = sand.u32 %s75, 1
        %s1203 = smul.addr %s1202, 256
        %s1204 = scalar_lea.vmem [#allocation6], %s1203
        %p1205 = pneg %p88
        %p1206 = pneg %p85
        %s1207 = sand.u32 %s103, 1
        %s1208 = sand.u32 %s103, 1
        %s1209 = smul.addr %s1208, 256
        %s1210 = scalar_lea.vmem [#allocation7], %s1209
        %p1211 = pneg %p116
        %p1212 = pneg %p113
        %s1213 = sand.u32 %s133, 1
        %s1214 = sand.u32 %s133, 1
        %s1215 = smul.addr %s1214, 32
        %s1216 = scalar_lea.vmem [#allocation8], %s1215
        %p1217 = pneg %p146
        %p1218 = pneg %p143
        %p1219 = pneg %p174
        %p1220 = pneg %p171
        %s1221 = sand.u32 %s161, 1
        %s1222 = scalar_lea.sflag [#allocation10], %s1221
        %s1223 = sand.u32 %s161, 1
        %s1224 = smul.addr %s1223, 64
        %s1225 = scalar_lea.vmem [#allocation9], %s1224
        %s1226 = smul.u32 16, %s24
        %s1227 = smul.u32 16, %s25
        %s1228 = smul.u32 16, %s25
        %s1229 = smul.u32 4, %s24
        %s1230 = smul.u32 16, %s24
        %p1234 = scmp.eq.s32.totalorder %s25, 0
        // Predicated region
        $region198: #{tpu_custom_call.1} parent=180 // pred_check
          %p1235 = pneg %p1234
        $region199: #{tpu_custom_call.1} parent=180 // pred_check_branch
          %1237 = sbr.rel (%p1235) target = $region201
        $region200: #{tpu_custom_call.1} parent=180 // pred_region
          %vm1238 = vcmask 7168
          %1239 = vst.msk [vmem:[#allocation2] sm:$0xff] %vm1238, -inf
          %1240 = vst.msk [vmem:[#allocation2 + $0x8] sm:$0xff] %vm1238, -inf
          %1241 = vst.msk [vmem:[#allocation2 + $0x10] sm:$0xff] %vm1238, -inf
          %1242 = vst.msk [vmem:[#allocation2 + $0x18] sm:$0xff] %vm1238, -inf
          %1243 = vst.msk [vmem:[#allocation2 + $0x20] sm:$0xff] %vm1238, -inf
          %1244 = vst.msk [vmem:[#allocation2 + $0x28] sm:$0xff] %vm1238, -inf
          %1245 = vst.msk [vmem:[#allocation2 + $0x30] sm:$0xff] %vm1238, -inf
          %1246 = vst.msk [vmem:[#allocation2 + $0x38] sm:$0xff] %vm1238, -inf
          %1247 = vst.msk [vmem:[#allocation2 + $0x40] sm:$0xff] %vm1238, -inf
          %1248 = vst.msk [vmem:[#allocation2 + $0x48] sm:$0xff] %vm1238, -inf
          %1249 = vst.msk [vmem:[#allocation2 + $0x50] sm:$0xff] %vm1238, -inf
          %1250 = vst.msk [vmem:[#allocation2 + $0x58] sm:$0xff] %vm1238, -inf
          %1251 = vst.msk [vmem:[#allocation2 + $0x60] sm:$0xff] %vm1238, -inf
          %1252 = vst.msk [vmem:[#allocation2 + $0x68] sm:$0xff] %vm1238, -inf
          %1253 = vst.msk [vmem:[#allocation2 + $0x70] sm:$0xff] %vm1238, -inf
          %1254 = vst.msk [vmem:[#allocation2 + $0x78] sm:$0xff] %vm1238, -inf
          %1255 = vst.msk [vmem:[#allocation2 + $0x80] sm:$0xff] %vm1238, -inf
          %1256 = vst.msk [vmem:[#allocation2 + $0x88] sm:$0xff] %vm1238, -inf
          %1257 = vst.msk [vmem:[#allocation2 + $0x90] sm:$0xff] %vm1238, -inf
          %1258 = vst.msk [vmem:[#allocation2 + $0x98] sm:$0xff] %vm1238, -inf
          %1259 = vst.msk [vmem:[#allocation2 + $0xa0] sm:$0xff] %vm1238, -inf
          %1260 = vst.msk [vmem:[#allocation2 + $0xa8] sm:$0xff] %vm1238, -inf
          %1261 = vst.msk [vmem:[#allocation2 + $0xb0] sm:$0xff] %vm1238, -inf
          %1262 = vst.msk [vmem:[#allocation2 + $0xb8] sm:$0xff] %vm1238, -inf
          %1263 = vst.msk [vmem:[#allocation2 + $0xc0] sm:$0xff] %vm1238, -inf
          %1264 = vst.msk [vmem:[#allocation2 + $0xc8] sm:$0xff] %vm1238, -inf
          %1265 = vst.msk [vmem:[#allocation2 + $0xd0] sm:$0xff] %vm1238, -inf
          %1266 = vst.msk [vmem:[#allocation2 + $0xd8] sm:$0xff] %vm1238, -inf
          %1267 = vst.msk [vmem:[#allocation2 + $0xe0] sm:$0xff] %vm1238, -inf
          %1268 = vst.msk [vmem:[#allocation2 + $0xe8] sm:$0xff] %vm1238, -inf
          %1269 = vst.msk [vmem:[#allocation2 + $0xf0] sm:$0xff] %vm1238, -inf
          %1270 = vst.msk [vmem:[#allocation2 + $0xf8] sm:$0xff] %vm1238, -inf
          %1271 = vst.msk [vmem:[#allocation2 + $0x100] sm:$0xff] %vm1238, -inf
          %1272 = vst.msk [vmem:[#allocation2 + $0x108] sm:$0xff] %vm1238, -inf
          %1273 = vst.msk [vmem:[#allocation2 + $0x110] sm:$0xff] %vm1238, -inf
          %1274 = vst.msk [vmem:[#allocation2 + $0x118] sm:$0xff] %vm1238, -inf
          %1275 = vst.msk [vmem:[#allocation2 + $0x120] sm:$0xff] %vm1238, -inf
          %1276 = vst.msk [vmem:[#allocation2 + $0x128] sm:$0xff] %vm1238, -inf
          %1277 = vst.msk [vmem:[#allocation2 + $0x130] sm:$0xff] %vm1238, -inf
          %1278 = vst.msk [vmem:[#allocation2 + $0x138] sm:$0xff] %vm1238, -inf
          %1279 = vst.msk [vmem:[#allocation2 + $0x140] sm:$0xff] %vm1238, -inf
          %1280 = vst.msk [vmem:[#allocation2 + $0x148] sm:$0xff] %vm1238, -inf
          %1281 = vst.msk [vmem:[#allocation2 + $0x150] sm:$0xff] %vm1238, -inf
          %1282 = vst.msk [vmem:[#allocation2 + $0x158] sm:$0xff] %vm1238, -inf
          %1283 = vst.msk [vmem:[#allocation2 + $0x160] sm:$0xff] %vm1238, -inf
          %1284 = vst.msk [vmem:[#allocation2 + $0x168] sm:$0xff] %vm1238, -inf
          %1285 = vst.msk [vmem:[#allocation2 + $0x170] sm:$0xff] %vm1238, -inf
          %1286 = vst.msk [vmem:[#allocation2 + $0x178] sm:$0xff] %vm1238, -inf
          %1287 = vst.msk [vmem:[#allocation2 + $0x180] sm:$0xff] %vm1238, -inf
          %1288 = vst.msk [vmem:[#allocation2 + $0x188] sm:$0xff] %vm1238, -inf
          %1289 = vst.msk [vmem:[#allocation2 + $0x190] sm:$0xff] %vm1238, -inf
          %1290 = vst.msk [vmem:[#allocation2 + $0x198] sm:$0xff] %vm1238, -inf
          %1291 = vst.msk [vmem:[#allocation2 + $0x1a0] sm:$0xff] %vm1238, -inf
          %1292 = vst.msk [vmem:[#allocation2 + $0x1a8] sm:$0xff] %vm1238, -inf
          %1293 = vst.msk [vmem:[#allocation2 + $0x1b0] sm:$0xff] %vm1238, -inf
          %1294 = vst.msk [vmem:[#allocation2 + $0x1b8] sm:$0xff] %vm1238, -inf
          %1295 = vst.msk [vmem:[#allocation2 + $0x1c0] sm:$0xff] %vm1238, -inf
          %1296 = vst.msk [vmem:[#allocation2 + $0x1c8] sm:$0xff] %vm1238, -inf
          %1297 = vst.msk [vmem:[#allocation2 + $0x1d0] sm:$0xff] %vm1238, -inf
          %1298 = vst.msk [vmem:[#allocation2 + $0x1d8] sm:$0xff] %vm1238, -inf
          %1299 = vst.msk [vmem:[#allocation2 + $0x1e0] sm:$0xff] %vm1238, -inf
          %1300 = vst.msk [vmem:[#allocation2 + $0x1e8] sm:$0xff] %vm1238, -inf
          %1301 = vst.msk [vmem:[#allocation2 + $0x1f0] sm:$0xff] %vm1238, -inf
          %1302 = vst.msk [vmem:[#allocation2 + $0x1f8] sm:$0xff] %vm1238, -inf
          %1303 = vst.msk [vmem:[#allocation3] sm:$0xff] %vm1238, 0.0
          %1304 = vst.msk [vmem:[#allocation3 + $0x8] sm:$0xff] %vm1238, 0.0
          %1305 = vst.msk [vmem:[#allocation3 + $0x10] sm:$0xff] %vm1238, 0.0
          %1306 = vst.msk [vmem:[#allocation3 + $0x18] sm:$0xff] %vm1238, 0.0
          %1307 = vst.msk [vmem:[#allocation3 + $0x20] sm:$0xff] %vm1238, 0.0
          %1308 = vst.msk [vmem:[#allocation3 + $0x28] sm:$0xff] %vm1238, 0.0
          %1309 = vst.msk [vmem:[#allocation3 + $0x30] sm:$0xff] %vm1238, 0.0
          %1310 = vst.msk [vmem:[#allocation3 + $0x38] sm:$0xff] %vm1238, 0.0
          %1311 = vst.msk [vmem:[#allocation3 + $0x40] sm:$0xff] %vm1238, 0.0
          %1312 = vst.msk [vmem:[#allocation3 + $0x48] sm:$0xff] %vm1238, 0.0
          %1313 = vst.msk [vmem:[#allocation3 + $0x50] sm:$0xff] %vm1238, 0.0
          %1314 = vst.msk [vmem:[#allocation3 + $0x58] sm:$0xff] %vm1238, 0.0
          %1315 = vst.msk [vmem:[#allocation3 + $0x60] sm:$0xff] %vm1238, 0.0
          %1316 = vst.msk [vmem:[#allocation3 + $0x68] sm:$0xff] %vm1238, 0.0
          %1317 = vst.msk [vmem:[#allocation3 + $0x70] sm:$0xff] %vm1238, 0.0
          %1318 = vst.msk [vmem:[#allocation3 + $0x78] sm:$0xff] %vm1238, 0.0
          %1319 = vst.msk [vmem:[#allocation3 + $0x80] sm:$0xff] %vm1238, 0.0
          %1320 = vst.msk [vmem:[#allocation3 + $0x88] sm:$0xff] %vm1238, 0.0
          %1321 = vst.msk [vmem:[#allocation3 + $0x90] sm:$0xff] %vm1238, 0.0
          %1322 = vst.msk [vmem:[#allocation3 + $0x98] sm:$0xff] %vm1238, 0.0
          %1323 = vst.msk [vmem:[#allocation3 + $0xa0] sm:$0xff] %vm1238, 0.0
          %1324 = vst.msk [vmem:[#allocation3 + $0xa8] sm:$0xff] %vm1238, 0.0
          %1325 = vst.msk [vmem:[#allocation3 + $0xb0] sm:$0xff] %vm1238, 0.0
          %1326 = vst.msk [vmem:[#allocation3 + $0xb8] sm:$0xff] %vm1238, 0.0
          %1327 = vst.msk [vmem:[#allocation3 + $0xc0] sm:$0xff] %vm1238, 0.0
          %1328 = vst.msk [vmem:[#allocation3 + $0xc8] sm:$0xff] %vm1238, 0.0
          %1329 = vst.msk [vmem:[#allocation3 + $0xd0] sm:$0xff] %vm1238, 0.0
          %1330 = vst.msk [vmem:[#allocation3 + $0xd8] sm:$0xff] %vm1238, 0.0
          %1331 = vst.msk [vmem:[#allocation3 + $0xe0] sm:$0xff] %vm1238, 0.0
          %1332 = vst.msk [vmem:[#allocation3 + $0xe8] sm:$0xff] %vm1238, 0.0
          %1333 = vst.msk [vmem:[#allocation3 + $0xf0] sm:$0xff] %vm1238, 0.0
          %1334 = vst.msk [vmem:[#allocation3 + $0xf8] sm:$0xff] %vm1238, 0.0
          %1335 = vst.msk [vmem:[#allocation3 + $0x100] sm:$0xff] %vm1238, 0.0
          %1336 = vst.msk [vmem:[#allocation3 + $0x108] sm:$0xff] %vm1238, 0.0
          %1337 = vst.msk [vmem:[#allocation3 + $0x110] sm:$0xff] %vm1238, 0.0
          %1338 = vst.msk [vmem:[#allocation3 + $0x118] sm:$0xff] %vm1238, 0.0
          %1339 = vst.msk [vmem:[#allocation3 + $0x120] sm:$0xff] %vm1238, 0.0
          %1340 = vst.msk [vmem:[#allocation3 + $0x128] sm:$0xff] %vm1238, 0.0
          %1341 = vst.msk [vmem:[#allocation3 + $0x130] sm:$0xff] %vm1238, 0.0
          %1342 = vst.msk [vmem:[#allocation3 + $0x138] sm:$0xff] %vm1238, 0.0
          %1343 = vst.msk [vmem:[#allocation3 + $0x140] sm:$0xff] %vm1238, 0.0
          %1344 = vst.msk [vmem:[#allocation3 + $0x148] sm:$0xff] %vm1238, 0.0
          %1345 = vst.msk [vmem:[#allocation3 + $0x150] sm:$0xff] %vm1238, 0.0
          %1346 = vst.msk [vmem:[#allocation3 + $0x158] sm:$0xff] %vm1238, 0.0
          %1347 = vst.msk [vmem:[#allocation3 + $0x160] sm:$0xff] %vm1238, 0.0
          %1348 = vst.msk [vmem:[#allocation3 + $0x168] sm:$0xff] %vm1238, 0.0
          %1349 = vst.msk [vmem:[#allocation3 + $0x170] sm:$0xff] %vm1238, 0.0
          %1350 = vst.msk [vmem:[#allocation3 + $0x178] sm:$0xff] %vm1238, 0.0
          %1351 = vst.msk [vmem:[#allocation3 + $0x180] sm:$0xff] %vm1238, 0.0
          %1352 = vst.msk [vmem:[#allocation3 + $0x188] sm:$0xff] %vm1238, 0.0
          %1353 = vst.msk [vmem:[#allocation3 + $0x190] sm:$0xff] %vm1238, 0.0
          %1354 = vst.msk [vmem:[#allocation3 + $0x198] sm:$0xff] %vm1238, 0.0
          %1355 = vst.msk [vmem:[#allocation3 + $0x1a0] sm:$0xff] %vm1238, 0.0
          %1356 = vst.msk [vmem:[#allocation3 + $0x1a8] sm:$0xff] %vm1238, 0.0
          %1357 = vst.msk [vmem:[#allocation3 + $0x1b0] sm:$0xff] %vm1238, 0.0
          %1358 = vst.msk [vmem:[#allocation3 + $0x1b8] sm:$0xff] %vm1238, 0.0
          %1359 = vst.msk [vmem:[#allocation3 + $0x1c0] sm:$0xff] %vm1238, 0.0
          %1360 = vst.msk [vmem:[#allocation3 + $0x1c8] sm:$0xff] %vm1238, 0.0
          %1361 = vst.msk [vmem:[#allocation3 + $0x1d0] sm:$0xff] %vm1238, 0.0
          %1362 = vst.msk [vmem:[#allocation3 + $0x1d8] sm:$0xff] %vm1238, 0.0
          %1363 = vst.msk [vmem:[#allocation3 + $0x1e0] sm:$0xff] %vm1238, 0.0
          %1364 = vst.msk [vmem:[#allocation3 + $0x1e8] sm:$0xff] %vm1238, 0.0
          %1365 = vst.msk [vmem:[#allocation3 + $0x1f0] sm:$0xff] %vm1238, 0.0
          %1366 = vst.msk [vmem:[#allocation3 + $0x1f8] sm:$0xff] %vm1238, 0.0
          %vm1367 = vcmask 261120
          %1368 = vst.msk [vmem:[#allocation4] sm:$0xff] %vm1367, 0.0
          %1369 = vst.msk [vmem:[#allocation4 + $0x8] sm:$0xff] %vm1367, 0.0
          %1370 = vst.msk [vmem:[#allocation4 + $0x10] sm:$0xff] %vm1367, 0.0
          %1371 = vst.msk [vmem:[#allocation4 + $0x18] sm:$0xff] %vm1367, 0.0
          %1372 = vst.msk [vmem:[#allocation4 + $0x20] sm:$0xff] %vm1367, 0.0
          %1373 = vst.msk [vmem:[#allocation4 + $0x28] sm:$0xff] %vm1367, 0.0
          %1374 = vst.msk [vmem:[#allocation4 + $0x30] sm:$0xff] %vm1367, 0.0
          %1375 = vst.msk [vmem:[#allocation4 + $0x38] sm:$0xff] %vm1367, 0.0
          %1376 = vst.msk [vmem:[#allocation4 + $0x40] sm:$0xff] %vm1367, 0.0
          %1377 = vst.msk [vmem:[#allocation4 + $0x48] sm:$0xff] %vm1367, 0.0
          %1378 = vst.msk [vmem:[#allocation4 + $0x50] sm:$0xff] %vm1367, 0.0
          %1379 = vst.msk [vmem:[#allocation4 + $0x58] sm:$0xff] %vm1367, 0.0
          %1380 = vst.msk [vmem:[#allocation4 + $0x60] sm:$0xff] %vm1367, 0.0
          %1381 = vst.msk [vmem:[#allocation4 + $0x68] sm:$0xff] %vm1367, 0.0
          %1382 = vst.msk [vmem:[#allocation4 + $0x70] sm:$0xff] %vm1367, 0.0
          %1383 = vst.msk [vmem:[#allocation4 + $0x78] sm:$0xff] %vm1367, 0.0
          %1384 = vst.msk [vmem:[#allocation4 + $0x80] sm:$0xff] %vm1367, 0.0
          %1385 = vst.msk [vmem:[#allocation4 + $0x88] sm:$0xff] %vm1367, 0.0
          %1386 = vst.msk [vmem:[#allocation4 + $0x90] sm:$0xff] %vm1367, 0.0
          %1387 = vst.msk [vmem:[#allocation4 + $0x98] sm:$0xff] %vm1367, 0.0
          %1388 = vst.msk [vmem:[#allocation4 + $0xa0] sm:$0xff] %vm1367, 0.0
          %1389 = vst.msk [vmem:[#allocation4 + $0xa8] sm:$0xff] %vm1367, 0.0
          %1390 = vst.msk [vmem:[#allocation4 + $0xb0] sm:$0xff] %vm1367, 0.0
          %1391 = vst.msk [vmem:[#allocation4 + $0xb8] sm:$0xff] %vm1367, 0.0
          %1392 = vst.msk [vmem:[#allocation4 + $0xc0] sm:$0xff] %vm1367, 0.0
          %1393 = vst.msk [vmem:[#allocation4 + $0xc8] sm:$0xff] %vm1367, 0.0
          %1394 = vst.msk [vmem:[#allocation4 + $0xd0] sm:$0xff] %vm1367, 0.0
          %1395 = vst.msk [vmem:[#allocation4 + $0xd8] sm:$0xff] %vm1367, 0.0
          %1396 = vst.msk [vmem:[#allocation4 + $0xe0] sm:$0xff] %vm1367, 0.0
          %1397 = vst.msk [vmem:[#allocation4 + $0xe8] sm:$0xff] %vm1367, 0.0
          %1398 = vst.msk [vmem:[#allocation4 + $0xf0] sm:$0xff] %vm1367, 0.0
          %1399 = vst.msk [vmem:[#allocation4 + $0xf8] sm:$0xff] %vm1367, 0.0
          %1400 = vst.msk [vmem:[#allocation4 + $0x100] sm:$0xff] %vm1367, 0.0
          %1401 = vst.msk [vmem:[#allocation4 + $0x108] sm:$0xff] %vm1367, 0.0
          %1402 = vst.msk [vmem:[#allocation4 + $0x110] sm:$0xff] %vm1367, 0.0
          %1403 = vst.msk [vmem:[#allocation4 + $0x118] sm:$0xff] %vm1367, 0.0
          %1404 = vst.msk [vmem:[#allocation4 + $0x120] sm:$0xff] %vm1367, 0.0
          %1405 = vst.msk [vmem:[#allocation4 + $0x128] sm:$0xff] %vm1367, 0.0
          %1406 = vst.msk [vmem:[#allocation4 + $0x130] sm:$0xff] %vm1367, 0.0
          %1407 = vst.msk [vmem:[#allocation4 + $0x138] sm:$0xff] %vm1367, 0.0
          %1408 = vst.msk [vmem:[#allocation4 + $0x140] sm:$0xff] %vm1367, 0.0
          %1409 = vst.msk [vmem:[#allocation4 + $0x148] sm:$0xff] %vm1367, 0.0
          %1410 = vst.msk [vmem:[#allocation4 + $0x150] sm:$0xff] %vm1367, 0.0
          %1411 = vst.msk [vmem:[#allocation4 + $0x158] sm:$0xff] %vm1367, 0.0
          %1412 = vst.msk [vmem:[#allocation4 + $0x160] sm:$0xff] %vm1367, 0.0
          %1413 = vst.msk [vmem:[#allocation4 + $0x168] sm:$0xff] %vm1367, 0.0
          %1414 = vst.msk [vmem:[#allocation4 + $0x170] sm:$0xff] %vm1367, 0.0
          %1415 = vst.msk [vmem:[#allocation4 + $0x178] sm:$0xff] %vm1367, 0.0
          %1416 = vst.msk [vmem:[#allocation4 + $0x180] sm:$0xff] %vm1367, 0.0
          %1417 = vst.msk [vmem:[#allocation4 + $0x188] sm:$0xff] %vm1367, 0.0
          %1418 = vst.msk [vmem:[#allocation4 + $0x190] sm:$0xff] %vm1367, 0.0
          %1419 = vst.msk [vmem:[#allocation4 + $0x198] sm:$0xff] %vm1367, 0.0
          %1420 = vst.msk [vmem:[#allocation4 + $0x1a0] sm:$0xff] %vm1367, 0.0
          %1421 = vst.msk [vmem:[#allocation4 + $0x1a8] sm:$0xff] %vm1367, 0.0
          %1422 = vst.msk [vmem:[#allocation4 + $0x1b0] sm:$0xff] %vm1367, 0.0
          %1423 = vst.msk [vmem:[#allocation4 + $0x1b8] sm:$0xff] %vm1367, 0.0
          %1424 = vst.msk [vmem:[#allocation4 + $0x1c0] sm:$0xff] %vm1367, 0.0
          %1425 = vst.msk [vmem:[#allocation4 + $0x1c8] sm:$0xff] %vm1367, 0.0
          %1426 = vst.msk [vmem:[#allocation4 + $0x1d0] sm:$0xff] %vm1367, 0.0
          %1427 = vst.msk [vmem:[#allocation4 + $0x1d8] sm:$0xff] %vm1367, 0.0
          %1428 = vst.msk [vmem:[#allocation4 + $0x1e0] sm:$0xff] %vm1367, 0.0
          %1429 = vst.msk [vmem:[#allocation4 + $0x1e8] sm:$0xff] %vm1367, 0.0
          %1430 = vst.msk [vmem:[#allocation4 + $0x1f0] sm:$0xff] %vm1367, 0.0
          %1431 = vst.msk [vmem:[#allocation4 + $0x1f8] sm:$0xff] %vm1367, 0.0
        $region201: #{tpu_custom_call.1} parent=180 // pred_fallthru
          _
        %v1432 = vld [vmem:[%s1170] sm:$0xf]
        %v1433 = vld [vmem:[%s1170 + $0x4] sm:$0xf]
        %v1434 = vld [vmem:[%s1170 + $0x8] sm:$0xf]
        %v1435 = vld [vmem:[%s1170 + $0xc] sm:$0xf]
        %v1436 = vld [vmem:[%s1170 + $0x10] sm:$0xf]
        %v1437 = vld [vmem:[%s1170 + $0x14] sm:$0xf]
        %v1438 = vld [vmem:[%s1170 + $0x18] sm:$0xf]
        %v1439 = vld [vmem:[%s1170 + $0x1c] sm:$0xf]
        %v1440 = vld [vmem:[%s1170 + $0x20] sm:$0xf]
        %v1441 = vld [vmem:[%s1170 + $0x24] sm:$0xf]
        %v1442 = vld [vmem:[%s1170 + $0x28] sm:$0xf]
        %v1443 = vld [vmem:[%s1170 + $0x2c] sm:$0xf]
        %v1444 = vld [vmem:[%s1170 + $0x30] sm:$0xf]
        %v1445 = vld [vmem:[%s1170 + $0x34] sm:$0xf]
        %v1446 = vld [vmem:[%s1170 + $0x38] sm:$0xf]
        %v1447 = vld [vmem:[%s1170 + $0x3c] sm:$0xf]
        %v1448 = vld [vmem:[%s1170 + $0x40] sm:$0xf]
        %v1449 = vld [vmem:[%s1170 + $0x44] sm:$0xf]
        %v1450 = vld [vmem:[%s1170 + $0x48] sm:$0xf]
        %v1451 = vld [vmem:[%s1170 + $0x4c] sm:$0xf]
        %v1452 = vld [vmem:[%s1170 + $0x50] sm:$0xf]
        %v1453 = vld [vmem:[%s1170 + $0x54] sm:$0xf]
        %v1454 = vld [vmem:[%s1170 + $0x58] sm:$0xf]
        %v1455 = vld [vmem:[%s1170 + $0x5c] sm:$0xf]
        %v1456 = vld [vmem:[%s1170 + $0x60] sm:$0xf]
        %v1457 = vld [vmem:[%s1170 + $0x64] sm:$0xf]
        %v1458 = vld [vmem:[%s1170 + $0x68] sm:$0xf]
        %v1459 = vld [vmem:[%s1170 + $0x6c] sm:$0xf]
        %v1460 = vld [vmem:[%s1170 + $0x70] sm:$0xf]
        %v1461 = vld [vmem:[%s1170 + $0x74] sm:$0xf]
        %v1462 = vld [vmem:[%s1170 + $0x78] sm:$0xf]
        %v1463 = vld [vmem:[%s1170 + $0x7c] sm:$0xf]
        %v1464 = vld [vmem:[%s1170 + $0x80] sm:$0xf]
        %v1465 = vld [vmem:[%s1170 + $0x84] sm:$0xf]
        %v1466 = vld [vmem:[%s1170 + $0x88] sm:$0xf]
        %v1467 = vld [vmem:[%s1170 + $0x8c] sm:$0xf]
        %v1468 = vld [vmem:[%s1170 + $0x90] sm:$0xf]
        %v1469 = vld [vmem:[%s1170 + $0x94] sm:$0xf]
        %v1470 = vld [vmem:[%s1170 + $0x98] sm:$0xf]
        %v1471 = vld [vmem:[%s1170 + $0x9c] sm:$0xf]
        %v1472 = vld [vmem:[%s1170 + $0xa0] sm:$0xf]
        %v1473 = vld [vmem:[%s1170 + $0xa4] sm:$0xf]
        %v1474 = vld [vmem:[%s1170 + $0xa8] sm:$0xf]
        %v1475 = vld [vmem:[%s1170 + $0xac] sm:$0xf]
        %v1476 = vld [vmem:[%s1170 + $0xb0] sm:$0xf]
        %v1477 = vld [vmem:[%s1170 + $0xb4] sm:$0xf]
        %v1478 = vld [vmem:[%s1170 + $0xb8] sm:$0xf]
        %v1479 = vld [vmem:[%s1170 + $0xbc] sm:$0xf]
        %v1480 = vld [vmem:[%s1170 + $0xc0] sm:$0xf]
        %v1481 = vld [vmem:[%s1170 + $0xc4] sm:$0xf]
        %v1482 = vld [vmem:[%s1170 + $0xc8] sm:$0xf]
        %v1483 = vld [vmem:[%s1170 + $0xcc] sm:$0xf]
        %v1484 = vld [vmem:[%s1170 + $0xd0] sm:$0xf]
        %v1485 = vld [vmem:[%s1170 + $0xd4] sm:$0xf]
        %v1486 = vld [vmem:[%s1170 + $0xd8] sm:$0xf]
        %v1487 = vld [vmem:[%s1170 + $0xdc] sm:$0xf]
        %v1488 = vld [vmem:[%s1170 + $0xe0] sm:$0xf]
        %v1489 = vld [vmem:[%s1170 + $0xe4] sm:$0xf]
        %v1490 = vld [vmem:[%s1170 + $0xe8] sm:$0xf]
        %v1491 = vld [vmem:[%s1170 + $0xec] sm:$0xf]
        %v1492 = vld [vmem:[%s1170 + $0xf0] sm:$0xf]
        %v1493 = vld [vmem:[%s1170 + $0xf4] sm:$0xf]
        %v1494 = vld [vmem:[%s1170 + $0xf8] sm:$0xf]
        %v1495 = vld [vmem:[%s1170 + $0xfc] sm:$0xf]
        %v1496 = vld [vmem:[%s1177] sm:$0xf]
        %v1497 = vld [vmem:[%s1177 + $0x4] sm:$0xf]
        %v1498 = vld [vmem:[%s1177 + $0x8] sm:$0xf]
        %v1499 = vld [vmem:[%s1177 + $0xc] sm:$0xf]
        %v1500 = vld [vmem:[%s1177 + $0x10] sm:$0xf]
        %v1501 = vld [vmem:[%s1177 + $0x14] sm:$0xf]
        %v1502 = vld [vmem:[%s1177 + $0x18] sm:$0xf]
        %v1503 = vld [vmem:[%s1177 + $0x1c] sm:$0xf]
        %v1504 = vld [vmem:[%s1177 + $0x20] sm:$0xf]
        %v1505 = vld [vmem:[%s1177 + $0x24] sm:$0xf]
        %v1506 = vld [vmem:[%s1177 + $0x28] sm:$0xf]
        %v1507 = vld [vmem:[%s1177 + $0x2c] sm:$0xf]
        %v1508 = vld [vmem:[%s1177 + $0x30] sm:$0xf]
        %v1509 = vld [vmem:[%s1177 + $0x34] sm:$0xf]
        %v1510 = vld [vmem:[%s1177 + $0x38] sm:$0xf]
        %v1511 = vld [vmem:[%s1177 + $0x3c] sm:$0xf]
        %v1512 = vld [vmem:[%s1177 + $0x40] sm:$0xf]
        %v1513 = vld [vmem:[%s1177 + $0x44] sm:$0xf]
        %v1514 = vld [vmem:[%s1177 + $0x48] sm:$0xf]
        %v1515 = vld [vmem:[%s1177 + $0x4c] sm:$0xf]
        %v1516 = vld [vmem:[%s1177 + $0x50] sm:$0xf]
        %v1517 = vld [vmem:[%s1177 + $0x54] sm:$0xf]
        %v1518 = vld [vmem:[%s1177 + $0x58] sm:$0xf]
        %v1519 = vld [vmem:[%s1177 + $0x5c] sm:$0xf]
        %v1520 = vld [vmem:[%s1177 + $0x60] sm:$0xf]
        %v1521 = vld [vmem:[%s1177 + $0x64] sm:$0xf]
        %v1522 = vld [vmem:[%s1177 + $0x68] sm:$0xf]
        %v1523 = vld [vmem:[%s1177 + $0x6c] sm:$0xf]
        %v1524 = vld [vmem:[%s1177 + $0x70] sm:$0xf]
        %v1525 = vld [vmem:[%s1177 + $0x74] sm:$0xf]
        %v1526 = vld [vmem:[%s1177 + $0x78] sm:$0xf]
        %v1527 = vld [vmem:[%s1177 + $0x7c] sm:$0xf]
        %v1528 = vld [vmem:[%s1177 + $0x80] sm:$0xf]
        %v1529 = vld [vmem:[%s1177 + $0x84] sm:$0xf]
        %v1530 = vld [vmem:[%s1177 + $0x88] sm:$0xf]
        %v1531 = vld [vmem:[%s1177 + $0x8c] sm:$0xf]
        %v1532 = vld [vmem:[%s1177 + $0x90] sm:$0xf]
        %v1533 = vld [vmem:[%s1177 + $0x94] sm:$0xf]
        %v1534 = vld [vmem:[%s1177 + $0x98] sm:$0xf]
        %v1535 = vld [vmem:[%s1177 + $0x9c] sm:$0xf]
        %v1536 = vld [vmem:[%s1177 + $0xa0] sm:$0xf]
        %v1537 = vld [vmem:[%s1177 + $0xa4] sm:$0xf]
        %v1538 = vld [vmem:[%s1177 + $0xa8] sm:$0xf]
        %v1539 = vld [vmem:[%s1177 + $0xac] sm:$0xf]
        %v1540 = vld [vmem:[%s1177 + $0xb0] sm:$0xf]
        %v1541 = vld [vmem:[%s1177 + $0xb4] sm:$0xf]
        %v1542 = vld [vmem:[%s1177 + $0xb8] sm:$0xf]
        %v1543 = vld [vmem:[%s1177 + $0xbc] sm:$0xf]
        %v1544 = vld [vmem:[%s1177 + $0xc0] sm:$0xf]
        %v1545 = vld [vmem:[%s1177 + $0xc4] sm:$0xf]
        %v1546 = vld [vmem:[%s1177 + $0xc8] sm:$0xf]
        %v1547 = vld [vmem:[%s1177 + $0xcc] sm:$0xf]
        %v1548 = vld [vmem:[%s1177 + $0xd0] sm:$0xf]
        %v1549 = vld [vmem:[%s1177 + $0xd4] sm:$0xf]
        %v1550 = vld [vmem:[%s1177 + $0xd8] sm:$0xf]
        %v1551 = vld [vmem:[%s1177 + $0xdc] sm:$0xf]
        %v1552 = vld [vmem:[%s1177 + $0xe0] sm:$0xf]
        %v1553 = vld [vmem:[%s1177 + $0xe4] sm:$0xf]
        %v1554 = vld [vmem:[%s1177 + $0xe8] sm:$0xf]
        %v1555 = vld [vmem:[%s1177 + $0xec] sm:$0xf]
        %v1556 = vld [vmem:[%s1177 + $0xf0] sm:$0xf]
        %v1557 = vld [vmem:[%s1177 + $0xf4] sm:$0xf]
        %v1558 = vld [vmem:[%s1177 + $0xf8] sm:$0xf]
        %v1559 = vld [vmem:[%s1177 + $0xfc] sm:$0xf]
        %v1560 = vld [vmem:[%s1184] sm:$0xf]
        %v1561 = vld [vmem:[%s1184 + $0x4] sm:$0xf]
        %v1562 = vld [vmem:[%s1184 + $0x8] sm:$0xf]
        %v1563 = vld [vmem:[%s1184 + $0xc] sm:$0xf]
        %v1564 = vld [vmem:[%s1184 + $0x10] sm:$0xf]
        %v1565 = vld [vmem:[%s1184 + $0x14] sm:$0xf]
        %v1566 = vld [vmem:[%s1184 + $0x18] sm:$0xf]
        %v1567 = vld [vmem:[%s1184 + $0x1c] sm:$0xf]
        %v1568 = vld [vmem:[%s1184 + $0x20] sm:$0xf]
        %v1569 = vld [vmem:[%s1184 + $0x24] sm:$0xf]
        %v1570 = vld [vmem:[%s1184 + $0x28] sm:$0xf]
        %v1571 = vld [vmem:[%s1184 + $0x2c] sm:$0xf]
        %v1572 = vld [vmem:[%s1184 + $0x30] sm:$0xf]
        %v1573 = vld [vmem:[%s1184 + $0x34] sm:$0xf]
        %v1574 = vld [vmem:[%s1184 + $0x38] sm:$0xf]
        %v1575 = vld [vmem:[%s1184 + $0x3c] sm:$0xf]
        %v1576 = vld [vmem:[%s1184 + $0x40] sm:$0xf]
        %v1577 = vld [vmem:[%s1184 + $0x44] sm:$0xf]
        %v1578 = vld [vmem:[%s1184 + $0x48] sm:$0xf]
        %v1579 = vld [vmem:[%s1184 + $0x4c] sm:$0xf]
        %v1580 = vld [vmem:[%s1184 + $0x50] sm:$0xf]
        %v1581 = vld [vmem:[%s1184 + $0x54] sm:$0xf]
        %v1582 = vld [vmem:[%s1184 + $0x58] sm:$0xf]
        %v1583 = vld [vmem:[%s1184 + $0x5c] sm:$0xf]
        %v1584 = vld [vmem:[%s1184 + $0x60] sm:$0xf]
        %v1585 = vld [vmem:[%s1184 + $0x64] sm:$0xf]
        %v1586 = vld [vmem:[%s1184 + $0x68] sm:$0xf]
        %v1587 = vld [vmem:[%s1184 + $0x6c] sm:$0xf]
        %v1588 = vld [vmem:[%s1184 + $0x70] sm:$0xf]
        %v1589 = vld [vmem:[%s1184 + $0x74] sm:$0xf]
        %v1590 = vld [vmem:[%s1184 + $0x78] sm:$0xf]
        %v1591 = vld [vmem:[%s1184 + $0x7c] sm:$0xf]
        %v1592 = vld [vmem:[%s1184 + $0x80] sm:$0xf]
        %v1593 = vld [vmem:[%s1184 + $0x84] sm:$0xf]
        %v1594 = vld [vmem:[%s1184 + $0x88] sm:$0xf]
        %v1595 = vld [vmem:[%s1184 + $0x8c] sm:$0xf]
        %v1596 = vld [vmem:[%s1184 + $0x90] sm:$0xf]
        %v1597 = vld [vmem:[%s1184 + $0x94] sm:$0xf]
        %v1598 = vld [vmem:[%s1184 + $0x98] sm:$0xf]
        %v1599 = vld [vmem:[%s1184 + $0x9c] sm:$0xf]
        %v1600 = vld [vmem:[%s1184 + $0xa0] sm:$0xf]
        %v1601 = vld [vmem:[%s1184 + $0xa4] sm:$0xf]
        %v1602 = vld [vmem:[%s1184 + $0xa8] sm:$0xf]
        %v1603 = vld [vmem:[%s1184 + $0xac] sm:$0xf]
        %v1604 = vld [vmem:[%s1184 + $0xb0] sm:$0xf]
        %v1605 = vld [vmem:[%s1184 + $0xb4] sm:$0xf]
        %v1606 = vld [vmem:[%s1184 + $0xb8] sm:$0xf]
        %v1607 = vld [vmem:[%s1184 + $0xbc] sm:$0xf]
        %v1608 = vld [vmem:[%s1184 + $0xc0] sm:$0xf]
        %v1609 = vld [vmem:[%s1184 + $0xc4] sm:$0xf]
        %v1610 = vld [vmem:[%s1184 + $0xc8] sm:$0xf]
        %v1611 = vld [vmem:[%s1184 + $0xcc] sm:$0xf]
        %v1612 = vld [vmem:[%s1184 + $0xd0] sm:$0xf]
        %v1613 = vld [vmem:[%s1184 + $0xd4] sm:$0xf]
        %v1614 = vld [vmem:[%s1184 + $0xd8] sm:$0xf]
        %v1615 = vld [vmem:[%s1184 + $0xdc] sm:$0xf]
        %v1616 = vld [vmem:[%s1184 + $0xe0] sm:$0xf]
        %v1617 = vld [vmem:[%s1184 + $0xe4] sm:$0xf]
        %v1618 = vld [vmem:[%s1184 + $0xe8] sm:$0xf]
        %v1619 = vld [vmem:[%s1184 + $0xec] sm:$0xf]
        %v1620 = vld [vmem:[%s1184 + $0xf0] sm:$0xf]
        %v1621 = vld [vmem:[%s1184 + $0xf4] sm:$0xf]
        %v1622 = vld [vmem:[%s1184 + $0xf8] sm:$0xf]
        %v1623 = vld [vmem:[%s1184 + $0xfc] sm:$0xf]
        %v1640 = vunpack.c.l.b16 %v1432
        %v1641 = vunpack.c.l.b16 %v1433
        %v1642 = vunpack.c.l.b16 %v1434
        %v1643 = vunpack.c.l.b16 %v1435
        %v1644 = vunpack.c.l.b16 %v1436
        %v1645 = vunpack.c.l.b16 %v1437
        %v1646 = vunpack.c.l.b16 %v1438
        %v1647 = vunpack.c.l.b16 %v1439
        %v1648 = vunpack.c.l.b16 %v1440
        %v1649 = vunpack.c.l.b16 %v1441
        %v1650 = vunpack.c.l.b16 %v1442
        %v1651 = vunpack.c.l.b16 %v1443
        %v1652 = vunpack.c.l.b16 %v1444
        %v1653 = vunpack.c.l.b16 %v1445
        %v1654 = vunpack.c.l.b16 %v1446
        %v1655 = vunpack.c.l.b16 %v1447
        %v1656 = vpack.c.b16 %v1641, %v1640
        %v1657 = vpack.c.b16 %v1643, %v1642
        %v1658 = vpack.c.b16 %v1645, %v1644
        %v1659 = vpack.c.b16 %v1647, %v1646
        %v1660 = vpack.c.b16 %v1649, %v1648
        %v1661 = vpack.c.b16 %v1651, %v1650
        %v1662 = vpack.c.b16 %v1653, %v1652
        %v1663 = vpack.c.b16 %v1655, %v1654
        %v1680 = vunpack.c.l.b16 %v1496
        %v1681 = vunpack.c.l.b16 %v1497
        %v1682 = vunpack.c.l.b16 %v1498
        %v1683 = vunpack.c.l.b16 %v1499
        %v1684 = vunpack.c.l.b16 %v1500
        %v1685 = vunpack.c.l.b16 %v1501
        %v1686 = vunpack.c.l.b16 %v1502
        %v1687 = vunpack.c.l.b16 %v1503
        %v1688 = vunpack.c.l.b16 %v1504
        %v1689 = vunpack.c.l.b16 %v1505
        %v1690 = vunpack.c.l.b16 %v1506
        %v1691 = vunpack.c.l.b16 %v1507
        %v1692 = vunpack.c.l.b16 %v1508
        %v1693 = vunpack.c.l.b16 %v1509
        %v1694 = vunpack.c.l.b16 %v1510
        %v1695 = vunpack.c.l.b16 %v1511
        %v1696 = vpack.c.b16 %v1681, %v1680
        %v1697 = vpack.c.b16 %v1683, %v1682
        %v1698 = vpack.c.b16 %v1685, %v1684
        %v1699 = vpack.c.b16 %v1687, %v1686
        %v1700 = vpack.c.b16 %v1689, %v1688
        %v1701 = vpack.c.b16 %v1691, %v1690
        %v1702 = vpack.c.b16 %v1693, %v1692
        %v1703 = vpack.c.b16 %v1695, %v1694
        %vm1704 = vcmask 261120
        %v1706 = vsel %vm1704, %v1656, 0
        %v1709 = vsel %vm1704, %v1657, 0
        %v1712 = vsel %vm1704, %v1658, 0
        %v1715 = vsel %vm1704, %v1659, 0
        %v1718 = vsel %vm1704, %v1660, 0
        %v1721 = vsel %vm1704, %v1661, 0
        %v1724 = vsel %vm1704, %v1662, 0
        %v1727 = vsel %vm1704, %v1663, 0
        %v1730 = vsel %vm1704, %v1696, 0
        %v1733 = vsel %vm1704, %v1697, 0
        %v1736 = vsel %vm1704, %v1698, 0
        %v1739 = vsel %vm1704, %v1699, 0
        %v1742 = vsel %vm1704, %v1700, 0
        %v1745 = vsel %vm1704, %v1701, 0
        %v1748 = vsel %vm1704, %v1702, 0
        %v1751 = vsel %vm1704, %v1703, 0
        %1753 = vmatprep.subr.bf16.mxu0 0
        %1754 = vmatpush1.bf16.xpose.msra.mxu0 %v1730
        %1755 = vmatprep.subr.bf16.mxu0 0
        %1756 = vmatpush1.bf16.xpose.msra.mxu0 %v1733
        %1757 = vmatprep.subr.bf16.mxu0 0
        %1758 = vmatpush1.bf16.xpose.msra.mxu0 %v1736
        %1759 = vmatprep.subr.bf16.mxu0 0
        %1760 = vmatpush1.bf16.xpose.msra.mxu0 %v1739
        %1761 = vmatprep.subr.bf16.mxu0 0
        %1762 = vmatpush1.bf16.xpose.msra.mxu0 %v1742
        %1763 = vmatprep.subr.bf16.mxu0 0
        %1764 = vmatpush1.bf16.xpose.msra.mxu0 %v1745
        %1765 = vmatprep.subr.bf16.mxu0 0
        %1766 = vmatpush1.bf16.xpose.msra.mxu0 %v1748
        %1767 = vmatprep.subr.bf16.mxu0 0
        %1768 = vmatpush1.bf16.xpose.msra.mxu0 %v1751
        %1769 = vmatprep.subr.bf16.mxu0 0
        %1770 = vmatpush1.bf16.xpose.msra.mxu0 0
        %1771 = vmatprep.subr.bf16.mxu0 0
        %1772 = vmatpush1.bf16.xpose.msra.mxu0 0
        %1773 = vmatprep.subr.bf16.mxu0 0
        %1774 = vmatpush1.bf16.xpose.msra.mxu0 0
        %1775 = vmatprep.subr.bf16.mxu0 0
        %1776 = vmatpush1.bf16.xpose.msra.mxu0 0
        %1777 = vmatprep.subr.bf16.mxu0 0
        %1778 = vmatpush1.bf16.xpose.msra.mxu0 0
        %1779 = vmatprep.subr.bf16.mxu0 0
        %1780 = vmatpush1.bf16.xpose.msra.mxu0 0
        %1781 = vmatprep.subr.bf16.mxu0 0
        %1782 = vmatpush1.bf16.xpose.msra.mxu0 0
        %1783 = vmatprep.subr.bf16.mxu0 0
        %1784 = vmatpush1.bf16.xpose.msra.mxu0 0
        %1785 = vmatprep.mubr.bf16.mxu0 0
        %1786 = vmatmul.mubr.bf16.gmra.mrb[0].mxu0 %v1706
        %v1787 = vpop.f32.mrb[0].mxu0
        %v1788 = vadd.f32 0.0, %v1787
        %v1789 = vpop.f32.mrb[0].mxu0
        %v1790 = vpop.f32.mrb[0].mxu0
        %v1791 = vadd.f32 0.0, %v1790
        %v1792 = vpop.f32.mrb[0].mxu0
        %1793 = vmatprep.mubr.bf16.mxu0 0
        %1794 = vmatmul.mubr.bf16.gmra.mrb[0].mxu0 %v1709
        %v1795 = vpop.f32.mrb[0].mxu0
        %v1796 = vadd.f32 0.0, %v1795
        %v1797 = vpop.f32.mrb[0].mxu0
        %v1798 = vpop.f32.mrb[0].mxu0
        %v1799 = vadd.f32 0.0, %v1798
        %v1800 = vpop.f32.mrb[0].mxu0
        %1801 = vmatprep.mubr.bf16.mxu0 0
        %1802 = vmatmul.mubr.bf16.gmra.mrb[0].mxu0 %v1712
        %v1803 = vpop.f32.mrb[0].mxu0
        %v1804 = vadd.f32 0.0, %v1803
        %v1805 = vpop.f32.mrb[0].mxu0
        %v1806 = vpop.f32.mrb[0].mxu0
        %v1807 = vadd.f32 0.0, %v1806
        %v1808 = vpop.f32.mrb[0].mxu0
        %1809 = vmatprep.mubr.bf16.mxu0 0
        %1810 = vmatmul.mubr.bf16.gmra.mrb[0].mxu0 %v1715
        %v1811 = vpop.f32.mrb[0].mxu0
        %v1812 = vadd.f32 0.0, %v1811
        %v1813 = vpop.f32.mrb[0].mxu0
        %v1814 = vpop.f32.mrb[0].mxu0
        %v1815 = vadd.f32 0.0, %v1814
        %v1816 = vpop.f32.mrb[0].mxu0
        %1817 = vmatprep.mubr.bf16.mxu0 0
        %1818 = vmatmul.mubr.bf16.gmra.mrb[0].mxu0 %v1718
        %v1819 = vpop.f32.mrb[0].mxu0
        %v1820 = vadd.f32 0.0, %v1819
        %v1821 = vpop.f32.mrb[0].mxu0
        %v1822 = vpop.f32.mrb[0].mxu0
        %v1823 = vadd.f32 0.0, %v1822
        %v1824 = vpop.f32.mrb[0].mxu0
        %1825 = vmatprep.mubr.bf16.mxu0 0
        %1826 = vmatmul.mubr.bf16.gmra.mrb[0].mxu0 %v1721
        %v1827 = vpop.f32.mrb[0].mxu0
        %v1828 = vadd.f32 0.0, %v1827
        %v1829 = vpop.f32.mrb[0].mxu0
        %v1830 = vpop.f32.mrb[0].mxu0
        %v1831 = vadd.f32 0.0, %v1830
        %v1832 = vpop.f32.mrb[0].mxu0
        %1833 = vmatprep.mubr.bf16.mxu0 0
        %1834 = vmatmul.mubr.bf16.gmra.mrb[0].mxu0 %v1724
        %v1835 = vpop.f32.mrb[0].mxu0
        %v1836 = vadd.f32 0.0, %v1835
        %v1837 = vpop.f32.mrb[0].mxu0
        %v1838 = vpop.f32.mrb[0].mxu0
        %v1839 = vadd.f32 0.0, %v1838
        %v1840 = vpop.f32.mrb[0].mxu0
        %1841 = vmatprep.mubr.bf16.mxu0 0
        %1842 = vmatmul.mubr.bf16.gmra.mrb[0].mxu0 %v1727
        %v1843 = vpop.f32.mrb[0].mxu0
        %v1844 = vadd.f32 0.0, %v1843
        %v1845 = vpop.f32.mrb[0].mxu0
        %v1846 = vpop.f32.mrb[0].mxu0
        %v1847 = vadd.f32 0.0, %v1846
        %v1848 = vpop.f32.mrb[0].mxu0
        %1849 = vdwg.mxu0
        %v1866 = vunpack.c.l.b16 %v1448
        %v1867 = vunpack.c.l.b16 %v1449
        %v1868 = vunpack.c.l.b16 %v1450
        %v1869 = vunpack.c.l.b16 %v1451
        %v1870 = vunpack.c.l.b16 %v1452
        %v1871 = vunpack.c.l.b16 %v1453
        %v1872 = vunpack.c.l.b16 %v1454
        %v1873 = vunpack.c.l.b16 %v1455
        %v1874 = vunpack.c.l.b16 %v1456
        %v1875 = vunpack.c.l.b16 %v1457
        %v1876 = vunpack.c.l.b16 %v1458
        %v1877 = vunpack.c.l.b16 %v1459
        %v1878 = vunpack.c.l.b16 %v1460
        %v1879 = vunpack.c.l.b16 %v1461
        %v1880 = vunpack.c.l.b16 %v1462
        %v1881 = vunpack.c.l.b16 %v1463
        %v1882 = vpack.c.b16 %v1867, %v1866
        %v1883 = vpack.c.b16 %v1869, %v1868
        %v1884 = vpack.c.b16 %v1871, %v1870
        %v1885 = vpack.c.b16 %v1873, %v1872
        %v1886 = vpack.c.b16 %v1875, %v1874
        %v1887 = vpack.c.b16 %v1877, %v1876
        %v1888 = vpack.c.b16 %v1879, %v1878
        %v1889 = vpack.c.b16 %v1881, %v1880
        %v1906 = vunpack.c.l.b16 %v1512
        %v1907 = vunpack.c.l.b16 %v1513
        %v1908 = vunpack.c.l.b16 %v1514
        %v1909 = vunpack.c.l.b16 %v1515
        %v1910 = vunpack.c.l.b16 %v1516
        %v1911 = vunpack.c.l.b16 %v1517
        %v1912 = vunpack.c.l.b16 %v1518
        %v1913 = vunpack.c.l.b16 %v1519
        %v1914 = vunpack.c.l.b16 %v1520
        %v1915 = vunpack.c.l.b16 %v1521
        %v1916 = vunpack.c.l.b16 %v1522
        %v1917 = vunpack.c.l.b16 %v1523
        %v1918 = vunpack.c.l.b16 %v1524
        %v1919 = vunpack.c.l.b16 %v1525
        %v1920 = vunpack.c.l.b16 %v1526
        %v1921 = vunpack.c.l.b16 %v1527
        %v1922 = vpack.c.b16 %v1907, %v1906
        %v1923 = vpack.c.b16 %v1909, %v1908
        %v1924 = vpack.c.b16 %v1911, %v1910
        %v1925 = vpack.c.b16 %v1913, %v1912
        %v1926 = vpack.c.b16 %v1915, %v1914
        %v1927 = vpack.c.b16 %v1917, %v1916
        %v1928 = vpack.c.b16 %v1919, %v1918
        %v1929 = vpack.c.b16 %v1921, %v1920
        %v1931 = vsel %vm1704, %v1882, 0
        %v1934 = vsel %vm1704, %v1883, 0
        %v1937 = vsel %vm1704, %v1884, 0
        %v1940 = vsel %vm1704, %v1885, 0
        %v1943 = vsel %vm1704, %v1886, 0
        %v1946 = vsel %vm1704, %v1887, 0
        %v1949 = vsel %vm1704, %v1888, 0
        %v1952 = vsel %vm1704, %v1889, 0
        %v1955 = vsel %vm1704, %v1922, 0
        %v1958 = vsel %vm1704, %v1923, 0
        %v1961 = vsel %vm1704, %v1924, 0
        %v1964 = vsel %vm1704, %v1925, 0
        %v1967 = vsel %vm1704, %v1926, 0
        %v1970 = vsel %vm1704, %v1927, 0
        %v1973 = vsel %vm1704, %v1928, 0
        %v1976 = vsel %vm1704, %v1929, 0
        %1978 = vmatprep.subr.bf16.mxu0 0
        %1979 = vmatpush1.bf16.xpose.msra.mxu0 %v1955
        %1980 = vmatprep.subr.bf16.mxu0 0
        %1981 = vmatpush1.bf16.xpose.msra.mxu0 %v1958
        %1982 = vmatprep.subr.bf16.mxu0 0
        %1983 = vmatpush1.bf16.xpose.msra.mxu0 %v1961
        %1984 = vmatprep.subr.bf16.mxu0 0
        %1985 = vmatpush1.bf16.xpose.msra.mxu0 %v1964
        %1986 = vmatprep.subr.bf16.mxu0 0
        %1987 = vmatpush1.bf16.xpose.msra.mxu0 %v1967
        %1988 = vmatprep.subr.bf16.mxu0 0
        %1989 = vmatpush1.bf16.xpose.msra.mxu0 %v1970
        %1990 = vmatprep.subr.bf16.mxu0 0
        %1991 = vmatpush1.bf16.xpose.msra.mxu0 %v1973
        %1992 = vmatprep.subr.bf16.mxu0 0
        %1993 = vmatpush1.bf16.xpose.msra.mxu0 %v1976
        %1994 = vmatprep.subr.bf16.mxu0 0
        %1995 = vmatpush1.bf16.xpose.msra.mxu0 0
        %1996 = vmatprep.subr.bf16.mxu0 0
        %1997 = vmatpush1.bf16.xpose.msra.mxu0 0
        %1998 = vmatprep.subr.bf16.mxu0 0
        %1999 = vmatpush1.bf16.xpose.msra.mxu0 0
        %2000 = vmatprep.subr.bf16.mxu0 0
        %2001 = vmatpush1.bf16.xpose.msra.mxu0 0
        %2002 = vmatprep.subr.bf16.mxu0 0
        %2003 = vmatpush1.bf16.xpose.msra.mxu0 0
        %2004 = vmatprep.subr.bf16.mxu0 0
        %2005 = vmatpush1.bf16.xpose.msra.mxu0 0
        %2006 = vmatprep.subr.bf16.mxu0 0
        %2007 = vmatpush1.bf16.xpose.msra.mxu0 0
        %2008 = vmatprep.subr.bf16.mxu0 0
        %2009 = vmatpush1.bf16.xpose.msra.mxu0 0
        %2010 = vmatprep.mubr.bf16.mxu0 0
        %2011 = vmatmul.mubr.bf16.gmra.mrb[0].mxu0 %v1931
        %v2012 = vpop.f32.mrb[0].mxu0
        %v2013 = vadd.f32 0.0, %v2012
        %v2014 = vpop.f32.mrb[0].mxu0
        %v2015 = vpop.f32.mrb[0].mxu0
        %v2016 = vadd.f32 0.0, %v2015
        %v2017 = vpop.f32.mrb[0].mxu0
        %2018 = vmatprep.mubr.bf16.mxu0 0
        %2019 = vmatmul.mubr.bf16.gmra.mrb[0].mxu0 %v1934
        %v2020 = vpop.f32.mrb[0].mxu0
        %v2021 = vadd.f32 0.0, %v2020
        %v2022 = vpop.f32.mrb[0].mxu0
        %v2023 = vpop.f32.mrb[0].mxu0
        %v2024 = vadd.f32 0.0, %v2023
        %v2025 = vpop.f32.mrb[0].mxu0
        %2026 = vmatprep.mubr.bf16.mxu0 0
        %2027 = vmatmul.mubr.bf16.gmra.mrb[0].mxu0 %v1937
        %v2028 = vpop.f32.mrb[0].mxu0
        %v2029 = vadd.f32 0.0, %v2028
        %v2030 = vpop.f32.mrb[0].mxu0
        %v2031 = vpop.f32.mrb[0].mxu0
        %v2032 = vadd.f32 0.0, %v2031
        %v2033 = vpop.f32.mrb[0].mxu0
        %2034 = vmatprep.mubr.bf16.mxu0 0
        %2035 = vmatmul.mubr.bf16.gmra.mrb[0].mxu0 %v1940
        %v2036 = vpop.f32.mrb[0].mxu0
        %v2037 = vadd.f32 0.0, %v2036
        %v2038 = vpop.f32.mrb[0].mxu0
        %v2039 = vpop.f32.mrb[0].mxu0
        %v2040 = vadd.f32 0.0, %v2039
        %v2041 = vpop.f32.mrb[0].mxu0
        %2042 = vmatprep.mubr.bf16.mxu0 0
        %2043 = vmatmul.mubr.bf16.gmra.mrb[0].mxu0 %v1943
        %v2044 = vpop.f32.mrb[0].mxu0
        %v2045 = vadd.f32 0.0, %v2044
        %v2046 = vpop.f32.mrb[0].mxu0
        %v2047 = vpop.f32.mrb[0].mxu0
        %v2048 = vadd.f32 0.0, %v2047
        %v2049 = vpop.f32.mrb[0].mxu0
        %2050 = vmatprep.mubr.bf16.mxu0 0
        %2051 = vmatmul.mubr.bf16.gmra.mrb[0].mxu0 %v1946
        %v2052 = vpop.f32.mrb[0].mxu0
        %v2053 = vadd.f32 0.0, %v2052
        %v2054 = vpop.f32.mrb[0].mxu0
        %v2055 = vpop.f32.mrb[0].mxu0
        %v2056 = vadd.f32 0.0, %v2055
        %v2057 = vpop.f32.mrb[0].mxu0
        %2058 = vmatprep.mubr.bf16.mxu0 0
        %2059 = vmatmul.mubr.bf16.gmra.mrb[0].mxu0 %v1949
        %v2060 = vpop.f32.mrb[0].mxu0
        %v2061 = vadd.f32 0.0, %v2060
        %v2062 = vpop.f32.mrb[0].mxu0
        %v2063 = vpop.f32.mrb[0].mxu0
        %v2064 = vadd.f32 0.0, %v2063
        %v2065 = vpop.f32.mrb[0].mxu0
        %2066 = vmatprep.mubr.bf16.mxu0 0
        %2067 = vmatmul.mubr.bf16.gmra.mrb[0].mxu0 %v1952
        %v2068 = vpop.f32.mrb[0].mxu0
        %v2069 = vadd.f32 0.0, %v2068
        %v2070 = vpop.f32.mrb[0].mxu0
        %v2071 = vpop.f32.mrb[0].mxu0
        %v2072 = vadd.f32 0.0, %v2071
        %v2073 = vpop.f32.mrb[0].mxu0
        %2074 = vdwg.mxu0
        %v2091 = vunpack.c.l.b16 %v1464
        %v2092 = vunpack.c.l.b16 %v1465
        %v2093 = vunpack.c.l.b16 %v1466
        %v2094 = vunpack.c.l.b16 %v1467
        %v2095 = vunpack.c.l.b16 %v1468
        %v2096 = vunpack.c.l.b16 %v1469
        %v2097 = vunpack.c.l.b16 %v1470
        %v2098 = vunpack.c.l.b16 %v1471
        %v2099 = vunpack.c.l.b16 %v1472
        %v2100 = vunpack.c.l.b16 %v1473
        %v2101 = vunpack.c.l.b16 %v1474
        %v2102 = vunpack.c.l.b16 %v1475
        %v2103 = vunpack.c.l.b16 %v1476
        %v2104 = vunpack.c.l.b16 %v1477
        %v2105 = vunpack.c.l.b16 %v1478
        %v2106 = vunpack.c.l.b16 %v1479
        %v2107 = vpack.c.b16 %v2092, %v2091
        %v2108 = vpack.c.b16 %v2094, %v2093
        %v2109 = vpack.c.b16 %v2096, %v2095
        %v2110 = vpack.c.b16 %v2098, %v2097
        %v2111 = vpack.c.b16 %v2100, %v2099
        %v2112 = vpack.c.b16 %v2102, %v2101
        %v2113 = vpack.c.b16 %v2104, %v2103
        %v2114 = vpack.c.b16 %v2106, %v2105
        %v2131 = vunpack.c.l.b16 %v1528
        %v2132 = vunpack.c.l.b16 %v1529
        %v2133 = vunpack.c.l.b16 %v1530
        %v2134 = vunpack.c.l.b16 %v1531
        %v2135 = vunpack.c.l.b16 %v1532
        %v2136 = vunpack.c.l.b16 %v1533
        %v2137 = vunpack.c.l.b16 %v1534
        %v2138 = vunpack.c.l.b16 %v1535
        %v2139 = vunpack.c.l.b16 %v1536
        %v2140 = vunpack.c.l.b16 %v1537
        %v2141 = vunpack.c.l.b16 %v1538
        %v2142 = vunpack.c.l.b16 %v1539
        %v2143 = vunpack.c.l.b16 %v1540
        %v2144 = vunpack.c.l.b16 %v1541
        %v2145 = vunpack.c.l.b16 %v1542
        %v2146 = vunpack.c.l.b16 %v1543
        %v2147 = vpack.c.b16 %v2132, %v2131
        %v2148 = vpack.c.b16 %v2134, %v2133
        %v2149 = vpack.c.b16 %v2136, %v2135
        %v2150 = vpack.c.b16 %v2138, %v2137
        %v2151 = vpack.c.b16 %v2140, %v2139
        %v2152 = vpack.c.b16 %v2142, %v2141
        %v2153 = vpack.c.b16 %v2144, %v2143
        %v2154 = vpack.c.b16 %v2146, %v2145
        %v2156 = vsel %vm1704, %v2107, 0
        %v2159 = vsel %vm1704, %v2108, 0
        %v2162 = vsel %vm1704, %v2109, 0
        %v2165 = vsel %vm1704, %v2110, 0
        %v2168 = vsel %vm1704, %v2111, 0
        %v2171 = vsel %vm1704, %v2112, 0
        %v2174 = vsel %vm1704, %v2113, 0
        %v2177 = vsel %vm1704, %v2114, 0
        %v2180 = vsel %vm1704, %v2147, 0
        %v2183 = vsel %vm1704, %v2148, 0
        %v2186 = vsel %vm1704, %v2149, 0
        %v2189 = vsel %vm1704, %v2150, 0
        %v2192 = vsel %vm1704, %v2151, 0
        %v2195 = vsel %vm1704, %v2152, 0
        %v2198 = vsel %vm1704, %v2153, 0
        %v2201 = vsel %vm1704, %v2154, 0
        %2203 = vmatprep.subr.bf16.mxu0 0
        %2204 = vmatpush1.bf16.xpose.msra.mxu0 %v2180
        %2205 = vmatprep.subr.bf16.mxu0 0
        %2206 = vmatpush1.bf16.xpose.msra.mxu0 %v2183
        %2207 = vmatprep.subr.bf16.mxu0 0
        %2208 = vmatpush1.bf16.xpose.msra.mxu0 %v2186
        %2209 = vmatprep.subr.bf16.mxu0 0
        %2210 = vmatpush1.bf16.xpose.msra.mxu0 %v2189
        %2211 = vmatprep.subr.bf16.mxu0 0
        %2212 = vmatpush1.bf16.xpose.msra.mxu0 %v2192
        %2213 = vmatprep.subr.bf16.mxu0 0
        %2214 = vmatpush1.bf16.xpose.msra.mxu0 %v2195
        %2215 = vmatprep.subr.bf16.mxu0 0
        %2216 = vmatpush1.bf16.xpose.msra.mxu0 %v2198
        %2217 = vmatprep.subr.bf16.mxu0 0
        %2218 = vmatpush1.bf16.xpose.msra.mxu0 %v2201
        %2219 = vmatprep.subr.bf16.mxu0 0
        %2220 = vmatpush1.bf16.xpose.msra.mxu0 0
        %2221 = vmatprep.subr.bf16.mxu0 0
        %2222 = vmatpush1.bf16.xpose.msra.mxu0 0
        %2223 = vmatprep.subr.bf16.mxu0 0
        %2224 = vmatpush1.bf16.xpose.msra.mxu0 0
        %2225 = vmatprep.subr.bf16.mxu0 0
        %2226 = vmatpush1.bf16.xpose.msra.mxu0 0
        %2227 = vmatprep.subr.bf16.mxu0 0
        %2228 = vmatpush1.bf16.xpose.msra.mxu0 0
        %2229 = vmatprep.subr.bf16.mxu0 0
        %2230 = vmatpush1.bf16.xpose.msra.mxu0 0
        %2231 = vmatprep.subr.bf16.mxu0 0
        %2232 = vmatpush1.bf16.xpose.msra.mxu0 0
        %2233 = vmatprep.subr.bf16.mxu0 0
        %2234 = vmatpush1.bf16.xpose.msra.mxu0 0
        %2235 = vmatprep.mubr.bf16.mxu0 0
        %2236 = vmatmul.mubr.bf16.gmra.mrb[0].mxu0 %v2156
        %v2237 = vpop.f32.mrb[0].mxu0
        %v2238 = vadd.f32 0.0, %v2237
        %v2239 = vpop.f32.mrb[0].mxu0
        %v2240 = vpop.f32.mrb[0].mxu0
        %v2241 = vadd.f32 0.0, %v2240
        %v2242 = vpop.f32.mrb[0].mxu0
        %2243 = vmatprep.mubr.bf16.mxu0 0
        %2244 = vmatmul.mubr.bf16.gmra.mrb[0].mxu0 %v2159
        %v2245 = vpop.f32.mrb[0].mxu0
        %v2246 = vadd.f32 0.0, %v2245
        %v2247 = vpop.f32.mrb[0].mxu0
        %v2248 = vpop.f32.mrb[0].mxu0
        %v2249 = vadd.f32 0.0, %v2248
        %v2250 = vpop.f32.mrb[0].mxu0
        %2251 = vmatprep.mubr.bf16.mxu0 0
        %2252 = vmatmul.mubr.bf16.gmra.mrb[0].mxu0 %v2162
        %v2253 = vpop.f32.mrb[0].mxu0
        %v2254 = vadd.f32 0.0, %v2253
        %v2255 = vpop.f32.mrb[0].mxu0
        %v2256 = vpop.f32.mrb[0].mxu0
        %v2257 = vadd.f32 0.0, %v2256
        %v2258 = vpop.f32.mrb[0].mxu0
        %2259 = vmatprep.mubr.bf16.mxu0 0
        %2260 = vmatmul.mubr.bf16.gmra.mrb[0].mxu0 %v2165
        %v2261 = vpop.f32.mrb[0].mxu0
        %v2262 = vadd.f32 0.0, %v2261
        %v2263 = vpop.f32.mrb[0].mxu0
        %v2264 = vpop.f32.mrb[0].mxu0
        %v2265 = vadd.f32 0.0, %v2264
        %v2266 = vpop.f32.mrb[0].mxu0
        %2267 = vmatprep.mubr.bf16.mxu0 0
        %2268 = vmatmul.mubr.bf16.gmra.mrb[0].mxu0 %v2168
        %v2269 = vpop.f32.mrb[0].mxu0
        %v2270 = vadd.f32 0.0, %v2269
        %v2271 = vpop.f32.mrb[0].mxu0
        %v2272 = vpop.f32.mrb[0].mxu0
        %v2273 = vadd.f32 0.0, %v2272
        %v2274 = vpop.f32.mrb[0].mxu0
        %2275 = vmatprep.mubr.bf16.mxu0 0
        %2276 = vmatmul.mubr.bf16.gmra.mrb[0].mxu0 %v2171
        %v2277 = vpop.f32.mrb[0].mxu0
        %v2278 = vadd.f32 0.0, %v2277
        %v2279 = vpop.f32.mrb[0].mxu0
        %v2280 = vpop.f32.mrb[0].mxu0
        %v2281 = vadd.f32 0.0, %v2280
        %v2282 = vpop.f32.mrb[0].mxu0
        %2283 = vmatprep.mubr.bf16.mxu0 0
        %2284 = vmatmul.mubr.bf16.gmra.mrb[0].mxu0 %v2174
        %v2285 = vpop.f32.mrb[0].mxu0
        %v2286 = vadd.f32 0.0, %v2285
        %v2287 = vpop.f32.mrb[0].mxu0
        %v2288 = vpop.f32.mrb[0].mxu0
        %v2289 = vadd.f32 0.0, %v2288
        %v2290 = vpop.f32.mrb[0].mxu0
        %2291 = vmatprep.mubr.bf16.mxu0 0
        %2292 = vmatmul.mubr.bf16.gmra.mrb[0].mxu0 %v2177
        %v2293 = vpop.f32.mrb[0].mxu0
        %v2294 = vadd.f32 0.0, %v2293
        %v2295 = vpop.f32.mrb[0].mxu0
        %v2296 = vpop.f32.mrb[0].mxu0
        %v2297 = vadd.f32 0.0, %v2296
        %v2298 = vpop.f32.mrb[0].mxu0
        %2299 = vdwg.mxu0
        %v2316 = vunpack.c.l.b16 %v1480
        %v2317 = vunpack.c.l.b16 %v1481
        %v2318 = vunpack.c.l.b16 %v1482
        %v2319 = vunpack.c.l.b16 %v1483
        %v2320 = vunpack.c.l.b16 %v1484
        %v2321 = vunpack.c.l.b16 %v1485
        %v2322 = vunpack.c.l.b16 %v1486
        %v2323 = vunpack.c.l.b16 %v1487
        %v2324 = vunpack.c.l.b16 %v1488
        %v2325 = vunpack.c.l.b16 %v1489
        %v2326 = vunpack.c.l.b16 %v1490
        %v2327 = vunpack.c.l.b16 %v1491
        %v2328 = vunpack.c.l.b16 %v1492
        %v2329 = vunpack.c.l.b16 %v1493
        %v2330 = vunpack.c.l.b16 %v1494
        %v2331 = vunpack.c.l.b16 %v1495
        %v2332 = vpack.c.b16 %v2317, %v2316
        %v2333 = vpack.c.b16 %v2319, %v2318
        %v2334 = vpack.c.b16 %v2321, %v2320
        %v2335 = vpack.c.b16 %v2323, %v2322
        %v2336 = vpack.c.b16 %v2325, %v2324
        %v2337 = vpack.c.b16 %v2327, %v2326
        %v2338 = vpack.c.b16 %v2329, %v2328
        %v2339 = vpack.c.b16 %v2331, %v2330
        %v2356 = vunpack.c.l.b16 %v1544
        %v2357 = vunpack.c.l.b16 %v1545
        %v2358 = vunpack.c.l.b16 %v1546
        %v2359 = vunpack.c.l.b16 %v1547
        %v2360 = vunpack.c.l.b16 %v1548
        %v2361 = vunpack.c.l.b16 %v1549
        %v2362 = vunpack.c.l.b16 %v1550
        %v2363 = vunpack.c.l.b16 %v1551
        %v2364 = vunpack.c.l.b16 %v1552
        %v2365 = vunpack.c.l.b16 %v1553
        %v2366 = vunpack.c.l.b16 %v1554
        %v2367 = vunpack.c.l.b16 %v1555
        %v2368 = vunpack.c.l.b16 %v1556
        %v2369 = vunpack.c.l.b16 %v1557
        %v2370 = vunpack.c.l.b16 %v1558
        %v2371 = vunpack.c.l.b16 %v1559
        %v2372 = vpack.c.b16 %v2357, %v2356
        %v2373 = vpack.c.b16 %v2359, %v2358
        %v2374 = vpack.c.b16 %v2361, %v2360
        %v2375 = vpack.c.b16 %v2363, %v2362
        %v2376 = vpack.c.b16 %v2365, %v2364
        %v2377 = vpack.c.b16 %v2367, %v2366
        %v2378 = vpack.c.b16 %v2369, %v2368
        %v2379 = vpack.c.b16 %v2371, %v2370
        %v2381 = vsel %vm1704, %v2332, 0
        %v2384 = vsel %vm1704, %v2333, 0
        %v2387 = vsel %vm1704, %v2334, 0
        %v2390 = vsel %vm1704, %v2335, 0
        %v2393 = vsel %vm1704, %v2336, 0
        %v2396 = vsel %vm1704, %v2337, 0
        %v2399 = vsel %vm1704, %v2338, 0
        %v2402 = vsel %vm1704, %v2339, 0
        %v2405 = vsel %vm1704, %v2372, 0
        %v2408 = vsel %vm1704, %v2373, 0
        %v2411 = vsel %vm1704, %v2374, 0
        %v2414 = vsel %vm1704, %v2375, 0
        %v2417 = vsel %vm1704, %v2376, 0
        %v2420 = vsel %vm1704, %v2377, 0
        %v2423 = vsel %vm1704, %v2378, 0
        %v2426 = vsel %vm1704, %v2379, 0
        %2428 = vmatprep.subr.bf16.mxu0 0
        %2429 = vmatpush1.bf16.xpose.msra.mxu0 %v2405
        %2430 = vmatprep.subr.bf16.mxu0 0
        %2431 = vmatpush1.bf16.xpose.msra.mxu0 %v2408
        %2432 = vmatprep.subr.bf16.mxu0 0
        %2433 = vmatpush1.bf16.xpose.msra.mxu0 %v2411
        %2434 = vmatprep.subr.bf16.mxu0 0
        %2435 = vmatpush1.bf16.xpose.msra.mxu0 %v2414
        %2436 = vmatprep.subr.bf16.mxu0 0
        %2437 = vmatpush1.bf16.xpose.msra.mxu0 %v2417
        %2438 = vmatprep.subr.bf16.mxu0 0
        %2439 = vmatpush1.bf16.xpose.msra.mxu0 %v2420
        %2440 = vmatprep.subr.bf16.mxu0 0
        %2441 = vmatpush1.bf16.xpose.msra.mxu0 %v2423
        %2442 = vmatprep.subr.bf16.mxu0 0
        %2443 = vmatpush1.bf16.xpose.msra.mxu0 %v2426
        %2444 = vmatprep.subr.bf16.mxu0 0
        %2445 = vmatpush1.bf16.xpose.msra.mxu0 0
        %2446 = vmatprep.subr.bf16.mxu0 0
        %2447 = vmatpush1.bf16.xpose.msra.mxu0 0
        %2448 = vmatprep.subr.bf16.mxu0 0
        %2449 = vmatpush1.bf16.xpose.msra.mxu0 0
        %2450 = vmatprep.subr.bf16.mxu0 0
        %2451 = vmatpush1.bf16.xpose.msra.mxu0 0
        %2452 = vmatprep.subr.bf16.mxu0 0
        %2453 = vmatpush1.bf16.xpose.msra.mxu0 0
        %2454 = vmatprep.subr.bf16.mxu0 0
        %2455 = vmatpush1.bf16.xpose.msra.mxu0 0
        %2456 = vmatprep.subr.bf16.mxu0 0
        %2457 = vmatpush1.bf16.xpose.msra.mxu0 0
        %2458 = vmatprep.subr.bf16.mxu0 0
        %2459 = vmatpush1.bf16.xpose.msra.mxu0 0
        %2460 = vmatprep.mubr.bf16.mxu0 0
        %2461 = vmatmul.mubr.bf16.gmra.mrb[0].mxu0 %v2381
        %v2462 = vpop.f32.mrb[0].mxu0
        %v2463 = vadd.f32 0.0, %v2462
        %v2464 = vpop.f32.mrb[0].mxu0
        %v2465 = vpop.f32.mrb[0].mxu0
        %v2466 = vadd.f32 0.0, %v2465
        %v2467 = vpop.f32.mrb[0].mxu0
        %2468 = vmatprep.mubr.bf16.mxu0 0
        %2469 = vmatmul.mubr.bf16.gmra.mrb[0].mxu0 %v2384
        %v2470 = vpop.f32.mrb[0].mxu0
        %v2471 = vadd.f32 0.0, %v2470
        %v2472 = vpop.f32.mrb[0].mxu0
        %v2473 = vpop.f32.mrb[0].mxu0
        %v2474 = vadd.f32 0.0, %v2473
        %v2475 = vpop.f32.mrb[0].mxu0
        %2476 = vmatprep.mubr.bf16.mxu0 0
        %2477 = vmatmul.mubr.bf16.gmra.mrb[0].mxu0 %v2387
        %v2478 = vpop.f32.mrb[0].mxu0
        %v2479 = vadd.f32 0.0, %v2478
        %v2480 = vpop.f32.mrb[0].mxu0
        %v2481 = vpop.f32.mrb[0].mxu0
        %v2482 = vadd.f32 0.0, %v2481
        %v2483 = vpop.f32.mrb[0].mxu0
        %2484 = vmatprep.mubr.bf16.mxu0 0
        %2485 = vmatmul.mubr.bf16.gmra.mrb[0].mxu0 %v2390
        %v2486 = vpop.f32.mrb[0].mxu0
        %v2487 = vadd.f32 0.0, %v2486
        %v2488 = vpop.f32.mrb[0].mxu0
        %v2489 = vpop.f32.mrb[0].mxu0
        %v2490 = vadd.f32 0.0, %v2489
        %v2491 = vpop.f32.mrb[0].mxu0
        %2492 = vmatprep.mubr.bf16.mxu0 0
        %2493 = vmatmul.mubr.bf16.gmra.mrb[0].mxu0 %v2393
        %v2494 = vpop.f32.mrb[0].mxu0
        %v2495 = vadd.f32 0.0, %v2494
        %v2496 = vpop.f32.mrb[0].mxu0
        %v2497 = vpop.f32.mrb[0].mxu0
        %v2498 = vadd.f32 0.0, %v2497
        %v2499 = vpop.f32.mrb[0].mxu0
        %2500 = vmatprep.mubr.bf16.mxu0 0
        %2501 = vmatmul.mubr.bf16.gmra.mrb[0].mxu0 %v2396
        %v2502 = vpop.f32.mrb[0].mxu0
        %v2503 = vadd.f32 0.0, %v2502
        %v2504 = vpop.f32.mrb[0].mxu0
        %v2505 = vpop.f32.mrb[0].mxu0
        %v2506 = vadd.f32 0.0, %v2505
        %v2507 = vpop.f32.mrb[0].mxu0
        %2508 = vmatprep.mubr.bf16.mxu0 0
        %2509 = vmatmul.mubr.bf16.gmra.mrb[0].mxu0 %v2399
        %v2510 = vpop.f32.mrb[0].mxu0
        %v2511 = vadd.f32 0.0, %v2510
        %v2512 = vpop.f32.mrb[0].mxu0
        %v2513 = vpop.f32.mrb[0].mxu0
        %v2514 = vadd.f32 0.0, %v2513
        %v2515 = vpop.f32.mrb[0].mxu0
        %2516 = vmatprep.mubr.bf16.mxu0 0
        %2517 = vmatmul.mubr.bf16.gmra.mrb[0].mxu0 %v2402
        %v2518 = vpop.f32.mrb[0].mxu0
        %v2519 = vadd.f32 0.0, %v2518
        %v2520 = vpop.f32.mrb[0].mxu0
        %v2521 = vpop.f32.mrb[0].mxu0
        %v2522 = vadd.f32 0.0, %v2521
        %v2523 = vpop.f32.mrb[0].mxu0
        %2524 = vdwg.mxu0
        %v2525 = vmul.f32 %v1788, 0.17677669
        %v2526 = vmul.f32 %v1791, 0.17677669
        %v2527 = vmul.f32 %v1796, 0.17677669
        %v2528 = vmul.f32 %v1799, 0.17677669
        %v2529 = vmul.f32 %v1804, 0.17677669
        %v2530 = vmul.f32 %v1807, 0.17677669
        %v2531 = vmul.f32 %v1812, 0.17677669
        %v2532 = vmul.f32 %v1815, 0.17677669
        %v2533 = vmul.f32 %v1820, 0.17677669
        %v2534 = vmul.f32 %v1823, 0.17677669
        %v2535 = vmul.f32 %v1828, 0.17677669
        %v2536 = vmul.f32 %v1831, 0.17677669
        %v2537 = vmul.f32 %v1836, 0.17677669
        %v2538 = vmul.f32 %v1839, 0.17677669
        %v2539 = vmul.f32 %v1844, 0.17677669
        %v2540 = vmul.f32 %v1847, 0.17677669
        %v2541 = vmul.f32 %v2013, 0.17677669
        %v2542 = vmul.f32 %v2016, 0.17677669
        %v2543 = vmul.f32 %v2021, 0.17677669
        %v2544 = vmul.f32 %v2024, 0.17677669
        %v2545 = vmul.f32 %v2029, 0.17677669
        %v2546 = vmul.f32 %v2032, 0.17677669
        %v2547 = vmul.f32 %v2037, 0.17677669
        %v2548 = vmul.f32 %v2040, 0.17677669
        %v2549 = vmul.f32 %v2045, 0.17677669
        %v2550 = vmul.f32 %v2048, 0.17677669
        %v2551 = vmul.f32 %v2053, 0.17677669
        %v2552 = vmul.f32 %v2056, 0.17677669
        %v2553 = vmul.f32 %v2061, 0.17677669
        %v2554 = vmul.f32 %v2064, 0.17677669
        %v2555 = vmul.f32 %v2069, 0.17677669
        %v2556 = vmul.f32 %v2072, 0.17677669
        %v2557 = vmul.f32 %v2238, 0.17677669
        %v2558 = vmul.f32 %v2241, 0.17677669
        %v2559 = vmul.f32 %v2246, 0.17677669
        %v2560 = vmul.f32 %v2249, 0.17677669
        %v2561 = vmul.f32 %v2254, 0.17677669
        %v2562 = vmul.f32 %v2257, 0.17677669
        %v2563 = vmul.f32 %v2262, 0.17677669
        %v2564 = vmul.f32 %v2265, 0.17677669
        %v2565 = vmul.f32 %v2270, 0.17677669
        %v2566 = vmul.f32 %v2273, 0.17677669
        %v2567 = vmul.f32 %v2278, 0.17677669
        %v2568 = vmul.f32 %v2281, 0.17677669
        %v2569 = vmul.f32 %v2286, 0.17677669
        %v2570 = vmul.f32 %v2289, 0.17677669
        %v2571 = vmul.f32 %v2294, 0.17677669
        %v2572 = vmul.f32 %v2297, 0.17677669
        %v2573 = vmul.f32 %v2463, 0.17677669
        %v2574 = vmul.f32 %v2466, 0.17677669
        %v2575 = vmul.f32 %v2471, 0.17677669
        %v2576 = vmul.f32 %v2474, 0.17677669
        %v2577 = vmul.f32 %v2479, 0.17677669
        %v2578 = vmul.f32 %v2482, 0.17677669
        %v2579 = vmul.f32 %v2487, 0.17677669
        %v2580 = vmul.f32 %v2490, 0.17677669
        %v2581 = vmul.f32 %v2495, 0.17677669
        %v2582 = vmul.f32 %v2498, 0.17677669
        %v2583 = vmul.f32 %v2503, 0.17677669
        %v2584 = vmul.f32 %v2506, 0.17677669
        %v2585 = vmul.f32 %v2511, 0.17677669
        %v2586 = vmul.f32 %v2514, 0.17677669
        %v2587 = vmul.f32 %v2519, 0.17677669
        %v2588 = vmul.f32 %v2522, 0.17677669
        %v2589 = vld [vmem:[%s1191] sm:$0xff]
        %v2590 = vld [vmem:[%s1191 + $0x8] sm:$0xff]
        %v2591 = vld [vmem:[%s1191 + $0x10] sm:$0xff]
        %v2592 = vld [vmem:[%s1191 + $0x18] sm:$0xff]
        %vm2593 = vnez %v2589
        %vm2594 = vnez %v2590
        %vm2595 = vnez %v2591
        %vm2596 = vnez %v2592
        %v2597 = vsel %vm2593, 16843009, 0
        %v2598 = vsel %vm2594, 16843009, 0
        %v2599 = vsel %vm2595, 16843009, 0
        %v2600 = vsel %vm2596, 16843009, 0
        %v2601 = vunpack.c.0.s8 %v2597
        %v2602 = vunpack.c.1.s8 %v2597
        %v2603 = vunpack.c.2.s8 %v2597
        %v2604 = vunpack.c.3.s8 %v2597
        %v2605 = vunpack.c.0.s8 %v2598
        %v2606 = vunpack.c.1.s8 %v2598
        %v2607 = vunpack.c.2.s8 %v2598
        %v2608 = vunpack.c.3.s8 %v2598
        %v2609 = vunpack.c.0.s8 %v2599
        %v2610 = vunpack.c.1.s8 %v2599
        %v2611 = vunpack.c.2.s8 %v2599
        %v2612 = vunpack.c.3.s8 %v2599
        %v2613 = vunpack.c.0.s8 %v2600
        %v2614 = vunpack.c.1.s8 %v2600
        %v2615 = vunpack.c.2.s8 %v2600
        %v2616 = vunpack.c.3.s8 %v2600
        %v2617 = vpack.c.b16 %v2601, %v2601
        %v2618 = vpack.c.b8 %v2617, %v2617
        %v2619 = vpack.c.b16 %v2602, %v2602
        %v2620 = vpack.c.b8 %v2619, %v2619
        %v2621 = vpack.c.b16 %v2603, %v2603
        %v2622 = vpack.c.b8 %v2621, %v2621
        %v2623 = vpack.c.b16 %v2604, %v2604
        %v2624 = vpack.c.b8 %v2623, %v2623
        %v2625 = vpack.c.b16 %v2605, %v2605
        %v2626 = vpack.c.b8 %v2625, %v2625
        %v2627 = vpack.c.b16 %v2606, %v2606
        %v2628 = vpack.c.b8 %v2627, %v2627
        %v2629 = vpack.c.b16 %v2607, %v2607
        %v2630 = vpack.c.b8 %v2629, %v2629
        %v2631 = vpack.c.b16 %v2608, %v2608
        %v2632 = vpack.c.b8 %v2631, %v2631
        %v2633 = vpack.c.b16 %v2609, %v2609
        %v2634 = vpack.c.b8 %v2633, %v2633
        %v2635 = vpack.c.b16 %v2610, %v2610
        %v2636 = vpack.c.b8 %v2635, %v2635
        %v2637 = vpack.c.b16 %v2611, %v2611
        %v2638 = vpack.c.b8 %v2637, %v2637
        %v2639 = vpack.c.b16 %v2612, %v2612
        %v2640 = vpack.c.b8 %v2639, %v2639
        %v2641 = vpack.c.b16 %v2613, %v2613
        %v2642 = vpack.c.b8 %v2641, %v2641
        %v2643 = vpack.c.b16 %v2614, %v2614
        %v2644 = vpack.c.b8 %v2643, %v2643
        %v2645 = vpack.c.b16 %v2615, %v2615
        %v2646 = vpack.c.b8 %v2645, %v2645
        %v2647 = vpack.c.b16 %v2616, %v2616
        %v2648 = vpack.c.b8 %v2647, %v2647
        %vm2649 = vnez %v2618
        %vm2650 = vnez %v2620
        %vm2651 = vnez %v2622
        %vm2652 = vnez %v2624
        %vm2653 = vnez %v2626
        %vm2654 = vnez %v2628
        %vm2655 = vnez %v2630
        %vm2656 = vnez %v2632
        %vm2657 = vnez %v2634
        %vm2658 = vnez %v2636
        %vm2659 = vnez %v2638
        %vm2660 = vnez %v2640
        %vm2661 = vnez %v2642
        %vm2662 = vnez %v2644
        %vm2663 = vnez %v2646
        %vm2664 = vnez %v2648
        %v2665 = vsel %vm2649, 16843009, 0
        %v2666 = vsel %vm2650, 16843009, 0
        %v2667 = vsel %vm2651, 16843009, 0
        %v2668 = vsel %vm2652, 16843009, 0
        %v2669 = vsel %vm2653, 16843009, 0
        %v2670 = vsel %vm2654, 16843009, 0
        %v2671 = vsel %vm2655, 16843009, 0
        %v2672 = vsel %vm2656, 16843009, 0
        %v2673 = vsel %vm2657, 16843009, 0
        %v2674 = vsel %vm2658, 16843009, 0
        %v2675 = vsel %vm2659, 16843009, 0
        %v2676 = vsel %vm2660, 16843009, 0
        %v2677 = vsel %vm2661, 16843009, 0
        %v2678 = vsel %vm2662, 16843009, 0
        %v2679 = vsel %vm2663, 16843009, 0
        %v2680 = vsel %vm2664, 16843009, 0
        %v2681 = vunpack.c.0.s8 %v2665
        %v2682 = vunpack.c.0.s8 %v2666
        %v2683 = vunpack.c.0.s8 %v2667
        %v2684 = vunpack.c.0.s8 %v2668
        %v2685 = vunpack.c.0.s8 %v2669
        %v2686 = vunpack.c.0.s8 %v2670
        %v2687 = vunpack.c.0.s8 %v2671
        %v2688 = vunpack.c.0.s8 %v2672
        %v2689 = vunpack.c.0.s8 %v2673
        %v2690 = vunpack.c.0.s8 %v2674
        %v2691 = vunpack.c.0.s8 %v2675
        %v2692 = vunpack.c.0.s8 %v2676
        %v2693 = vunpack.c.0.s8 %v2677
        %v2694 = vunpack.c.0.s8 %v2678
        %v2695 = vunpack.c.0.s8 %v2679
        %v2696 = vunpack.c.0.s8 %v2680
        %vm2697 = vcmp.ne.s32.totalorder %v2681, 0
        %vm2698 = vcmp.ne.s32.totalorder %v2682, 0
        %vm2699 = vcmp.ne.s32.totalorder %v2683, 0
        %vm2700 = vcmp.ne.s32.totalorder %v2684, 0
        %vm2701 = vcmp.ne.s32.totalorder %v2685, 0
        %vm2702 = vcmp.ne.s32.totalorder %v2686, 0
        %vm2703 = vcmp.ne.s32.totalorder %v2687, 0
        %vm2704 = vcmp.ne.s32.totalorder %v2688, 0
        %vm2705 = vcmp.ne.s32.totalorder %v2689, 0
        %vm2706 = vcmp.ne.s32.totalorder %v2690, 0
        %vm2707 = vcmp.ne.s32.totalorder %v2691, 0
        %vm2708 = vcmp.ne.s32.totalorder %v2692, 0
        %vm2709 = vcmp.ne.s32.totalorder %v2693, 0
        %vm2710 = vcmp.ne.s32.totalorder %v2694, 0
        %vm2711 = vcmp.ne.s32.totalorder %v2695, 0
        %vm2712 = vcmp.ne.s32.totalorder %v2696, 0
        %v2713 = vsel %vm2697, 1, 0
        %v2714 = vsel %vm2698, 1, 0
        %v2715 = vsel %vm2699, 1, 0
        %v2716 = vsel %vm2700, 1, 0
        %v2717 = vsel %vm2701, 1, 0
        %v2718 = vsel %vm2702, 1, 0
        %v2719 = vsel %vm2703, 1, 0
        %v2720 = vsel %vm2704, 1, 0
        %v2721 = vsel %vm2705, 1, 0
        %v2722 = vsel %vm2706, 1, 0
        %v2723 = vsel %vm2707, 1, 0
        %v2724 = vsel %vm2708, 1, 0
        %v2725 = vsel %vm2709, 1, 0
        %v2726 = vsel %vm2710, 1, 0
        %v2727 = vsel %vm2711, 1, 0
        %v2728 = vsel %vm2712, 1, 0
        %vm2729 = vcmp.eq.s32.totalorder %v2713, 1
        %vm2730 = vcmp.eq.s32.totalorder %v2714, 1
        %vm2731 = vcmp.eq.s32.totalorder %v2715, 1
        %vm2732 = vcmp.eq.s32.totalorder %v2716, 1
        %vm2733 = vcmp.eq.s32.totalorder %v2717, 1
        %vm2734 = vcmp.eq.s32.totalorder %v2718, 1
        %vm2735 = vcmp.eq.s32.totalorder %v2719, 1
        %vm2736 = vcmp.eq.s32.totalorder %v2720, 1
        %vm2737 = vcmp.eq.s32.totalorder %v2721, 1
        %vm2738 = vcmp.eq.s32.totalorder %v2722, 1
        %vm2739 = vcmp.eq.s32.totalorder %v2723, 1
        %vm2740 = vcmp.eq.s32.totalorder %v2724, 1
        %vm2741 = vcmp.eq.s32.totalorder %v2725, 1
        %vm2742 = vcmp.eq.s32.totalorder %v2726, 1
        %vm2743 = vcmp.eq.s32.totalorder %v2727, 1
        %vm2744 = vcmp.eq.s32.totalorder %v2728, 1
        %v2745 = vsel %vm2729, -10000.0, %v2525
        %v2746 = vsel %vm2730, -10000.0, %v2526
        %v2747 = vsel %vm2731, -10000.0, %v2527
        %v2748 = vsel %vm2732, -10000.0, %v2528
        %v2749 = vsel %vm2733, -10000.0, %v2529
        %v2750 = vsel %vm2734, -10000.0, %v2530
        %v2751 = vsel %vm2735, -10000.0, %v2531
        %v2752 = vsel %vm2736, -10000.0, %v2532
        %v2753 = vsel %vm2737, -10000.0, %v2533
        %v2754 = vsel %vm2738, -10000.0, %v2534
        %v2755 = vsel %vm2739, -10000.0, %v2535
        %v2756 = vsel %vm2740, -10000.0, %v2536
        %v2757 = vsel %vm2741, -10000.0, %v2537
        %v2758 = vsel %vm2742, -10000.0, %v2538
        %v2759 = vsel %vm2743, -10000.0, %v2539
        %v2760 = vsel %vm2744, -10000.0, %v2540
        %v2761 = vsel %vm2729, -10000.0, %v2541
        %v2762 = vsel %vm2730, -10000.0, %v2542
        %v2763 = vsel %vm2731, -10000.0, %v2543
        %v2764 = vsel %vm2732, -10000.0, %v2544
        %v2765 = vsel %vm2733, -10000.0, %v2545
        %v2766 = vsel %vm2734, -10000.0, %v2546
        %v2767 = vsel %vm2735, -10000.0, %v2547
        %v2768 = vsel %vm2736, -10000.0, %v2548
        %v2769 = vsel %vm2737, -10000.0, %v2549
        %v2770 = vsel %vm2738, -10000.0, %v2550
        %v2771 = vsel %vm2739, -10000.0, %v2551
        %v2772 = vsel %vm2740, -10000.0, %v2552
        %v2773 = vsel %vm2741, -10000.0, %v2553
        %v2774 = vsel %vm2742, -10000.0, %v2554
        %v2775 = vsel %vm2743, -10000.0, %v2555
        %v2776 = vsel %vm2744, -10000.0, %v2556
        %v2777 = vsel %vm2729, -10000.0, %v2557
        %v2778 = vsel %vm2730, -10000.0, %v2558
        %v2779 = vsel %vm2731, -10000.0, %v2559
        %v2780 = vsel %vm2732, -10000.0, %v2560
        %v2781 = vsel %vm2733, -10000.0, %v2561
        %v2782 = vsel %vm2734, -10000.0, %v2562
        %v2783 = vsel %vm2735, -10000.0, %v2563
        %v2784 = vsel %vm2736, -10000.0, %v2564
        %v2785 = vsel %vm2737, -10000.0, %v2565
        %v2786 = vsel %vm2738, -10000.0, %v2566
        %v2787 = vsel %vm2739, -10000.0, %v2567
        %v2788 = vsel %vm2740, -10000.0, %v2568
        %v2789 = vsel %vm2741, -10000.0, %v2569
        %v2790 = vsel %vm2742, -10000.0, %v2570
        %v2791 = vsel %vm2743, -10000.0, %v2571
        %v2792 = vsel %vm2744, -10000.0, %v2572
        %v2793 = vsel %vm2729, -10000.0, %v2573
        %v2794 = vsel %vm2730, -10000.0, %v2574
        %v2795 = vsel %vm2731, -10000.0, %v2575
        %v2796 = vsel %vm2732, -10000.0, %v2576
        %v2797 = vsel %vm2733, -10000.0, %v2577
        %v2798 = vsel %vm2734, -10000.0, %v2578
        %v2799 = vsel %vm2735, -10000.0, %v2579
        %v2800 = vsel %vm2736, -10000.0, %v2580
        %v2801 = vsel %vm2737, -10000.0, %v2581
        %v2802 = vsel %vm2738, -10000.0, %v2582
        %v2803 = vsel %vm2739, -10000.0, %v2583
        %v2804 = vsel %vm2740, -10000.0, %v2584
        %v2805 = vsel %vm2741, -10000.0, %v2585
        %v2806 = vsel %vm2742, -10000.0, %v2586
        %v2807 = vsel %vm2743, -10000.0, %v2587
        %v2808 = vsel %vm2744, -10000.0, %v2588
        %v2809 = vld [vmem:[#allocation2] sm:$0xff]
        %v2810 = vld [vmem:[#allocation2 + $0x8] sm:$0xff]
        %v2811 = vld [vmem:[#allocation2 + $0x10] sm:$0xff]
        %v2812 = vld [vmem:[#allocation2 + $0x18] sm:$0xff]
        %v2813 = vld [vmem:[#allocation2 + $0x20] sm:$0xff]
        %v2814 = vld [vmem:[#allocation2 + $0x28] sm:$0xff]
        %v2815 = vld [vmem:[#allocation2 + $0x30] sm:$0xff]
        %v2816 = vld [vmem:[#allocation2 + $0x38] sm:$0xff]
        %v2817 = vld [vmem:[#allocation2 + $0x40] sm:$0xff]
        %v2818 = vld [vmem:[#allocation2 + $0x48] sm:$0xff]
        %v2819 = vld [vmem:[#allocation2 + $0x50] sm:$0xff]
        %v2820 = vld [vmem:[#allocation2 + $0x58] sm:$0xff]
        %v2821 = vld [vmem:[#allocation2 + $0x60] sm:$0xff]
        %v2822 = vld [vmem:[#allocation2 + $0x68] sm:$0xff]
        %v2823 = vld [vmem:[#allocation2 + $0x70] sm:$0xff]
        %v2824 = vld [vmem:[#allocation2 + $0x78] sm:$0xff]
        %v2825 = vld [vmem:[#allocation2 + $0x80] sm:$0xff]
        %v2826 = vld [vmem:[#allocation2 + $0x88] sm:$0xff]
        %v2827 = vld [vmem:[#allocation2 + $0x90] sm:$0xff]
        %v2828 = vld [vmem:[#allocation2 + $0x98] sm:$0xff]
        %v2829 = vld [vmem:[#allocation2 + $0xa0] sm:$0xff]
        %v2830 = vld [vmem:[#allocation2 + $0xa8] sm:$0xff]
        %v2831 = vld [vmem:[#allocation2 + $0xb0] sm:$0xff]
        %v2832 = vld [vmem:[#allocation2 + $0xb8] sm:$0xff]
        %v2833 = vld [vmem:[#allocation2 + $0xc0] sm:$0xff]
        %v2834 = vld [vmem:[#allocation2 + $0xc8] sm:$0xff]
        %v2835 = vld [vmem:[#allocation2 + $0xd0] sm:$0xff]
        %v2836 = vld [vmem:[#allocation2 + $0xd8] sm:$0xff]
        %v2837 = vld [vmem:[#allocation2 + $0xe0] sm:$0xff]
        %v2838 = vld [vmem:[#allocation2 + $0xe8] sm:$0xff]
        %v2839 = vld [vmem:[#allocation2 + $0xf0] sm:$0xff]
        %v2840 = vld [vmem:[#allocation2 + $0xf8] sm:$0xff]
        %v2841 = vld [vmem:[#allocation2 + $0x100] sm:$0xff]
        %v2842 = vld [vmem:[#allocation2 + $0x108] sm:$0xff]
        %v2843 = vld [vmem:[#allocation2 + $0x110] sm:$0xff]
        %v2844 = vld [vmem:[#allocation2 + $0x118] sm:$0xff]
        %v2845 = vld [vmem:[#allocation2 + $0x120] sm:$0xff]
        %v2846 = vld [vmem:[#allocation2 + $0x128] sm:$0xff]
        %v2847 = vld [vmem:[#allocation2 + $0x130] sm:$0xff]
        %v2848 = vld [vmem:[#allocation2 + $0x138] sm:$0xff]
        %v2849 = vld [vmem:[#allocation2 + $0x140] sm:$0xff]
        %v2850 = vld [vmem:[#allocation2 + $0x148] sm:$0xff]
        %v2851 = vld [vmem:[#allocation2 + $0x150] sm:$0xff]
        %v2852 = vld [vmem:[#allocation2 + $0x158] sm:$0xff]
        %v2853 = vld [vmem:[#allocation2 + $0x160] sm:$0xff]
        %v2854 = vld [vmem:[#allocation2 + $0x168] sm:$0xff]
        %v2855 = vld [vmem:[#allocation2 + $0x170] sm:$0xff]
        %v2856 = vld [vmem:[#allocation2 + $0x178] sm:$0xff]
        %v2857 = vld [vmem:[#allocation2 + $0x180] sm:$0xff]
        %v2858 = vld [vmem:[#allocation2 + $0x188] sm:$0xff]
        %v2859 = vld [vmem:[#allocation2 + $0x190] sm:$0xff]
        %v2860 = vld [vmem:[#allocation2 + $0x198] sm:$0xff]
        %v2861 = vld [vmem:[#allocation2 + $0x1a0] sm:$0xff]
        %v2862 = vld [vmem:[#allocation2 + $0x1a8] sm:$0xff]
        %v2863 = vld [vmem:[#allocation2 + $0x1b0] sm:$0xff]
        %v2864 = vld [vmem:[#allocation2 + $0x1b8] sm:$0xff]
        %v2865 = vld [vmem:[#allocation2 + $0x1c0] sm:$0xff]
        %v2866 = vld [vmem:[#allocation2 + $0x1c8] sm:$0xff]
        %v2867 = vld [vmem:[#allocation2 + $0x1d0] sm:$0xff]
        %v2868 = vld [vmem:[#allocation2 + $0x1d8] sm:$0xff]
        %v2869 = vld [vmem:[#allocation2 + $0x1e0] sm:$0xff]
        %v2870 = vld [vmem:[#allocation2 + $0x1e8] sm:$0xff]
        %v2871 = vld [vmem:[#allocation2 + $0x1f0] sm:$0xff]
        %v2872 = vld [vmem:[#allocation2 + $0x1f8] sm:$0xff]
        %2873 = vmax.xlane.f32.xlu0 %v2745
        %v2874 = vpop.xlane.xlu0 %2873
        %2875 = vmax.xlane.f32.xlu0 %v2746
        %v2876 = vpop.xlane.xlu0 %2875
        %2877 = vmax.xlane.f32.xlu0 %v2747
        %v2878 = vpop.xlane.xlu0 %2877
        %2879 = vmax.xlane.f32.xlu0 %v2748
        %v2880 = vpop.xlane.xlu0 %2879
        %2881 = vmax.xlane.f32.xlu0 %v2749
        %v2882 = vpop.xlane.xlu0 %2881
        %2883 = vmax.xlane.f32.xlu0 %v2750
        %v2884 = vpop.xlane.xlu0 %2883
        %2885 = vmax.xlane.f32.xlu0 %v2751
        %v2886 = vpop.xlane.xlu0 %2885
        %2887 = vmax.xlane.f32.xlu0 %v2752
        %v2888 = vpop.xlane.xlu0 %2887
        %2889 = vmax.xlane.f32.xlu0 %v2753
        %v2890 = vpop.xlane.xlu0 %2889
        %2891 = vmax.xlane.f32.xlu0 %v2754
        %v2892 = vpop.xlane.xlu0 %2891
        %2893 = vmax.xlane.f32.xlu0 %v2755
        %v2894 = vpop.xlane.xlu0 %2893
        %2895 = vmax.xlane.f32.xlu0 %v2756
        %v2896 = vpop.xlane.xlu0 %2895
        %2897 = vmax.xlane.f32.xlu0 %v2757
        %v2898 = vpop.xlane.xlu0 %2897
        %2899 = vmax.xlane.f32.xlu0 %v2758
        %v2900 = vpop.xlane.xlu0 %2899
        %2901 = vmax.xlane.f32.xlu0 %v2759
        %v2902 = vpop.xlane.xlu0 %2901
        %2903 = vmax.xlane.f32.xlu0 %v2760
        %v2904 = vpop.xlane.xlu0 %2903
        %2905 = vmax.xlane.f32.xlu0 %v2761
        %v2906 = vpop.xlane.xlu0 %2905
        %2907 = vmax.xlane.f32.xlu0 %v2762
        %v2908 = vpop.xlane.xlu0 %2907
        %2909 = vmax.xlane.f32.xlu0 %v2763
        %v2910 = vpop.xlane.xlu0 %2909
        %2911 = vmax.xlane.f32.xlu0 %v2764
        %v2912 = vpop.xlane.xlu0 %2911
        %2913 = vmax.xlane.f32.xlu0 %v2765
        %v2914 = vpop.xlane.xlu0 %2913
        %2915 = vmax.xlane.f32.xlu0 %v2766
        %v2916 = vpop.xlane.xlu0 %2915
        %2917 = vmax.xlane.f32.xlu0 %v2767
        %v2918 = vpop.xlane.xlu0 %2917
        %2919 = vmax.xlane.f32.xlu0 %v2768
        %v2920 = vpop.xlane.xlu0 %2919
        %2921 = vmax.xlane.f32.xlu0 %v2769
        %v2922 = vpop.xlane.xlu0 %2921
        %2923 = vmax.xlane.f32.xlu0 %v2770
        %v2924 = vpop.xlane.xlu0 %2923
        %2925 = vmax.xlane.f32.xlu0 %v2771
        %v2926 = vpop.xlane.xlu0 %2925
        %2927 = vmax.xlane.f32.xlu0 %v2772
        %v2928 = vpop.xlane.xlu0 %2927
        %2929 = vmax.xlane.f32.xlu0 %v2773
        %v2930 = vpop.xlane.xlu0 %2929
        %2931 = vmax.xlane.f32.xlu0 %v2774
        %v2932 = vpop.xlane.xlu0 %2931
        %2933 = vmax.xlane.f32.xlu0 %v2775
        %v2934 = vpop.xlane.xlu0 %2933
        %2935 = vmax.xlane.f32.xlu0 %v2776
        %v2936 = vpop.xlane.xlu0 %2935
        %2937 = vmax.xlane.f32.xlu0 %v2777
        %v2938 = vpop.xlane.xlu0 %2937
        %2939 = vmax.xlane.f32.xlu0 %v2778
        %v2940 = vpop.xlane.xlu0 %2939
        %2941 = vmax.xlane.f32.xlu0 %v2779
        %v2942 = vpop.xlane.xlu0 %2941
        %2943 = vmax.xlane.f32.xlu0 %v2780
        %v2944 = vpop.xlane.xlu0 %2943
        %2945 = vmax.xlane.f32.xlu0 %v2781
        %v2946 = vpop.xlane.xlu0 %2945
        %2947 = vmax.xlane.f32.xlu0 %v2782
        %v2948 = vpop.xlane.xlu0 %2947
        %2949 = vmax.xlane.f32.xlu0 %v2783
        %v2950 = vpop.xlane.xlu0 %2949
        %2951 = vmax.xlane.f32.xlu0 %v2784
        %v2952 = vpop.xlane.xlu0 %2951
        %2953 = vmax.xlane.f32.xlu0 %v2785
        %v2954 = vpop.xlane.xlu0 %2953
        %2955 = vmax.xlane.f32.xlu0 %v2786
        %v2956 = vpop.xlane.xlu0 %2955
        %2957 = vmax.xlane.f32.xlu0 %v2787
        %v2958 = vpop.xlane.xlu0 %2957
        %2959 = vmax.xlane.f32.xlu0 %v2788
        %v2960 = vpop.xlane.xlu0 %2959
        %2961 = vmax.xlane.f32.xlu0 %v2789
        %v2962 = vpop.xlane.xlu0 %2961
        %2963 = vmax.xlane.f32.xlu0 %v2790
        %v2964 = vpop.xlane.xlu0 %2963
        %2965 = vmax.xlane.f32.xlu0 %v2791
        %v2966 = vpop.xlane.xlu0 %2965
        %2967 = vmax.xlane.f32.xlu0 %v2792
        %v2968 = vpop.xlane.xlu0 %2967
        %2969 = vmax.xlane.f32.xlu0 %v2793
        %v2970 = vpop.xlane.xlu0 %2969
        %2971 = vmax.xlane.f32.xlu0 %v2794
        %v2972 = vpop.xlane.xlu0 %2971
        %2973 = vmax.xlane.f32.xlu0 %v2795
        %v2974 = vpop.xlane.xlu0 %2973
        %2975 = vmax.xlane.f32.xlu0 %v2796
        %v2976 = vpop.xlane.xlu0 %2975
        %2977 = vmax.xlane.f32.xlu0 %v2797
        %v2978 = vpop.xlane.xlu0 %2977
        %2979 = vmax.xlane.f32.xlu0 %v2798
        %v2980 = vpop.xlane.xlu0 %2979
        %2981 = vmax.xlane.f32.xlu0 %v2799
        %v2982 = vpop.xlane.xlu0 %2981
        %2983 = vmax.xlane.f32.xlu0 %v2800
        %v2984 = vpop.xlane.xlu0 %2983
        %2985 = vmax.xlane.f32.xlu0 %v2801
        %v2986 = vpop.xlane.xlu0 %2985
        %2987 = vmax.xlane.f32.xlu0 %v2802
        %v2988 = vpop.xlane.xlu0 %2987
        %2989 = vmax.xlane.f32.xlu0 %v2803
        %v2990 = vpop.xlane.xlu0 %2989
        %2991 = vmax.xlane.f32.xlu0 %v2804
        %v2992 = vpop.xlane.xlu0 %2991
        %2993 = vmax.xlane.f32.xlu0 %v2805
        %v2994 = vpop.xlane.xlu0 %2993
        %2995 = vmax.xlane.f32.xlu0 %v2806
        %v2996 = vpop.xlane.xlu0 %2995
        %2997 = vmax.xlane.f32.xlu0 %v2807
        %v2998 = vpop.xlane.xlu0 %2997
        %2999 = vmax.xlane.f32.xlu0 %v2808
        %v3000 = vpop.xlane.xlu0 %2999
        %v3001 = vmax.f32 %v2809, %v2874
        %v3002 = vmax.f32 %v2810, %v2876
        %v3003 = vmax.f32 %v2811, %v2878
        %v3004 = vmax.f32 %v2812, %v2880
        %v3005 = vmax.f32 %v2813, %v2882
        %v3006 = vmax.f32 %v2814, %v2884
        %v3007 = vmax.f32 %v2815, %v2886
        %v3008 = vmax.f32 %v2816, %v2888
        %v3009 = vmax.f32 %v2817, %v2890
        %v3010 = vmax.f32 %v2818, %v2892
        %v3011 = vmax.f32 %v2819, %v2894
        %v3012 = vmax.f32 %v2820, %v2896
        %v3013 = vmax.f32 %v2821, %v2898
        %v3014 = vmax.f32 %v2822, %v2900
        %v3015 = vmax.f32 %v2823, %v2902
        %v3016 = vmax.f32 %v2824, %v2904
        %v3017 = vmax.f32 %v2825, %v2906
        %v3018 = vmax.f32 %v2826, %v2908
        %v3019 = vmax.f32 %v2827, %v2910
        %v3020 = vmax.f32 %v2828, %v2912
        %v3021 = vmax.f32 %v2829, %v2914
        %v3022 = vmax.f32 %v2830, %v2916
        %v3023 = vmax.f32 %v2831, %v2918
        %v3024 = vmax.f32 %v2832, %v2920
        %v3025 = vmax.f32 %v2833, %v2922
        %v3026 = vmax.f32 %v2834, %v2924
        %v3027 = vmax.f32 %v2835, %v2926
        %v3028 = vmax.f32 %v2836, %v2928
        %v3029 = vmax.f32 %v2837, %v2930
        %v3030 = vmax.f32 %v2838, %v2932
        %v3031 = vmax.f32 %v2839, %v2934
        %v3032 = vmax.f32 %v2840, %v2936
        %v3033 = vmax.f32 %v2841, %v2938
        %v3034 = vmax.f32 %v2842, %v2940
        %v3035 = vmax.f32 %v2843, %v2942
        %v3036 = vmax.f32 %v2844, %v2944
        %v3037 = vmax.f32 %v2845, %v2946
        %v3038 = vmax.f32 %v2846, %v2948
        %v3039 = vmax.f32 %v2847, %v2950
        %v3040 = vmax.f32 %v2848, %v2952
        %v3041 = vmax.f32 %v2849, %v2954
        %v3042 = vmax.f32 %v2850, %v2956
        %v3043 = vmax.f32 %v2851, %v2958
        %v3044 = vmax.f32 %v2852, %v2960
        %v3045 = vmax.f32 %v2853, %v2962
        %v3046 = vmax.f32 %v2854, %v2964
        %v3047 = vmax.f32 %v2855, %v2966
        %v3048 = vmax.f32 %v2856, %v2968
        %v3049 = vmax.f32 %v2857, %v2970
        %v3050 = vmax.f32 %v2858, %v2972
        %v3051 = vmax.f32 %v2859, %v2974
        %v3052 = vmax.f32 %v2860, %v2976
        %v3053 = vmax.f32 %v2861, %v2978
        %v3054 = vmax.f32 %v2862, %v2980
        %v3055 = vmax.f32 %v2863, %v2982
        %v3056 = vmax.f32 %v2864, %v2984
        %v3057 = vmax.f32 %v2865, %v2986
        %v3058 = vmax.f32 %v2866, %v2988
        %v3059 = vmax.f32 %v2867, %v2990
        %v3060 = vmax.f32 %v2868, %v2992
        %v3061 = vmax.f32 %v2869, %v2994
        %v3062 = vmax.f32 %v2870, %v2996
        %v3063 = vmax.f32 %v2871, %v2998
        %v3064 = vmax.f32 %v2872, %v3000
        %v3065 = vsub.f32 %v2809, %v3001
        %v3066 = vsub.f32 %v2810, %v3002
        %v3067 = vsub.f32 %v2811, %v3003
        %v3068 = vsub.f32 %v2812, %v3004
        %v3069 = vsub.f32 %v2813, %v3005
        %v3070 = vsub.f32 %v2814, %v3006
        %v3071 = vsub.f32 %v2815, %v3007
        %v3072 = vsub.f32 %v2816, %v3008
        %v3073 = vsub.f32 %v2817, %v3009
        %v3074 = vsub.f32 %v2818, %v3010
        %v3075 = vsub.f32 %v2819, %v3011
        %v3076 = vsub.f32 %v2820, %v3012
        %v3077 = vsub.f32 %v2821, %v3013
        %v3078 = vsub.f32 %v2822, %v3014
        %v3079 = vsub.f32 %v2823, %v3015
        %v3080 = vsub.f32 %v2824, %v3016
        %v3081 = vsub.f32 %v2825, %v3017
        %v3082 = vsub.f32 %v2826, %v3018
        %v3083 = vsub.f32 %v2827, %v3019
        %v3084 = vsub.f32 %v2828, %v3020
        %v3085 = vsub.f32 %v2829, %v3021
        %v3086 = vsub.f32 %v2830, %v3022
        %v3087 = vsub.f32 %v2831, %v3023
        %v3088 = vsub.f32 %v2832, %v3024
        %v3089 = vsub.f32 %v2833, %v3025
        %v3090 = vsub.f32 %v2834, %v3026
        %v3091 = vsub.f32 %v2835, %v3027
        %v3092 = vsub.f32 %v2836, %v3028
        %v3093 = vsub.f32 %v2837, %v3029
        %v3094 = vsub.f32 %v2838, %v3030
        %v3095 = vsub.f32 %v2839, %v3031
        %v3096 = vsub.f32 %v2840, %v3032
        %v3097 = vsub.f32 %v2841, %v3033
        %v3098 = vsub.f32 %v2842, %v3034
        %v3099 = vsub.f32 %v2843, %v3035
        %v3100 = vsub.f32 %v2844, %v3036
        %v3101 = vsub.f32 %v2845, %v3037
        %v3102 = vsub.f32 %v2846, %v3038
        %v3103 = vsub.f32 %v2847, %v3039
        %v3104 = vsub.f32 %v2848, %v3040
        %v3105 = vsub.f32 %v2849, %v3041
        %v3106 = vsub.f32 %v2850, %v3042
        %v3107 = vsub.f32 %v2851, %v3043
        %v3108 = vsub.f32 %v2852, %v3044
        %v3109 = vsub.f32 %v2853, %v3045
        %v3110 = vsub.f32 %v2854, %v3046
        %v3111 = vsub.f32 %v2855, %v3047
        %v3112 = vsub.f32 %v2856, %v3048
        %v3113 = vsub.f32 %v2857, %v3049
        %v3114 = vsub.f32 %v2858, %v3050
        %v3115 = vsub.f32 %v2859, %v3051
        %v3116 = vsub.f32 %v2860, %v3052
        %v3117 = vsub.f32 %v2861, %v3053
        %v3118 = vsub.f32 %v2862, %v3054
        %v3119 = vsub.f32 %v2863, %v3055
        %v3120 = vsub.f32 %v2864, %v3056
        %v3121 = vsub.f32 %v2865, %v3057
        %v3122 = vsub.f32 %v2866, %v3058
        %v3123 = vsub.f32 %v2867, %v3059
        %v3124 = vsub.f32 %v2868, %v3060
        %v3125 = vsub.f32 %v2869, %v3061
        %v3126 = vsub.f32 %v2870, %v3062
        %v3127 = vsub.f32 %v2871, %v3063
        %v3128 = vsub.f32 %v2872, %v3064
        %v3129 = vmul.f32 %v3065, 1.442695
        %v3130 = vpow.pop %v3129
        %v3131 = vmul.f32 %v3066, 1.442695
        %v3132 = vpow.pop %v3131
        %v3133 = vmul.f32 %v3067, 1.442695
        %v3134 = vpow.pop %v3133
        %v3135 = vmul.f32 %v3068, 1.442695
        %v3136 = vpow.pop %v3135
        %v3137 = vmul.f32 %v3069, 1.442695
        %v3138 = vpow.pop %v3137
        %v3139 = vmul.f32 %v3070, 1.442695
        %v3140 = vpow.pop %v3139
        %v3141 = vmul.f32 %v3071, 1.442695
        %v3142 = vpow.pop %v3141
        %v3143 = vmul.f32 %v3072, 1.442695
        %v3144 = vpow.pop %v3143
        %v3145 = vmul.f32 %v3073, 1.442695
        %v3146 = vpow.pop %v3145
        %v3147 = vmul.f32 %v3074, 1.442695
        %v3148 = vpow.pop %v3147
        %v3149 = vmul.f32 %v3075, 1.442695
        %v3150 = vpow.pop %v3149
        %v3151 = vmul.f32 %v3076, 1.442695
        %v3152 = vpow.pop %v3151
        %v3153 = vmul.f32 %v3077, 1.442695
        %v3154 = vpow.pop %v3153
        %v3155 = vmul.f32 %v3078, 1.442695
        %v3156 = vpow.pop %v3155
        %v3157 = vmul.f32 %v3079, 1.442695
        %v3158 = vpow.pop %v3157
        %v3159 = vmul.f32 %v3080, 1.442695
        %v3160 = vpow.pop %v3159
        %v3161 = vmul.f32 %v3081, 1.442695
        %v3162 = vpow.pop %v3161
        %v3163 = vmul.f32 %v3082, 1.442695
        %v3164 = vpow.pop %v3163
        %v3165 = vmul.f32 %v3083, 1.442695
        %v3166 = vpow.pop %v3165
        %v3167 = vmul.f32 %v3084, 1.442695
        %v3168 = vpow.pop %v3167
        %v3169 = vmul.f32 %v3085, 1.442695
        %v3170 = vpow.pop %v3169
        %v3171 = vmul.f32 %v3086, 1.442695
        %v3172 = vpow.pop %v3171
        %v3173 = vmul.f32 %v3087, 1.442695
        %v3174 = vpow.pop %v3173
        %v3175 = vmul.f32 %v3088, 1.442695
        %v3176 = vpow.pop %v3175
        %v3177 = vmul.f32 %v3089, 1.442695
        %v3178 = vpow.pop %v3177
        %v3179 = vmul.f32 %v3090, 1.442695
        %v3180 = vpow.pop %v3179
        %v3181 = vmul.f32 %v3091, 1.442695
        %v3182 = vpow.pop %v3181
        %v3183 = vmul.f32 %v3092, 1.442695
        %v3184 = vpow.pop %v3183
        %v3185 = vmul.f32 %v3093, 1.442695
        %v3186 = vpow.pop %v3185
        %v3187 = vmul.f32 %v3094, 1.442695
        %v3188 = vpow.pop %v3187
        %v3189 = vmul.f32 %v3095, 1.442695
        %v3190 = vpow.pop %v3189
        %v3191 = vmul.f32 %v3096, 1.442695
        %v3192 = vpow.pop %v3191
        %v3193 = vmul.f32 %v3097, 1.442695
        %v3194 = vpow.pop %v3193
        %v3195 = vmul.f32 %v3098, 1.442695
        %v3196 = vpow.pop %v3195
        %v3197 = vmul.f32 %v3099, 1.442695
        %v3198 = vpow.pop %v3197
        %v3199 = vmul.f32 %v3100, 1.442695
        %v3200 = vpow.pop %v3199
        %v3201 = vmul.f32 %v3101, 1.442695
        %v3202 = vpow.pop %v3201
        %v3203 = vmul.f32 %v3102, 1.442695
        %v3204 = vpow.pop %v3203
        %v3205 = vmul.f32 %v3103, 1.442695
        %v3206 = vpow.pop %v3205
        %v3207 = vmul.f32 %v3104, 1.442695
        %v3208 = vpow.pop %v3207
        %v3209 = vmul.f32 %v3105, 1.442695
        %v3210 = vpow.pop %v3209
        %v3211 = vmul.f32 %v3106, 1.442695
        %v3212 = vpow.pop %v3211
        %v3213 = vmul.f32 %v3107, 1.442695
        %v3214 = vpow.pop %v3213
        %v3215 = vmul.f32 %v3108, 1.442695
        %v3216 = vpow.pop %v3215
        %v3217 = vmul.f32 %v3109, 1.442695
        %v3218 = vpow.pop %v3217
        %v3219 = vmul.f32 %v3110, 1.442695
        %v3220 = vpow.pop %v3219
        %v3221 = vmul.f32 %v3111, 1.442695
        %v3222 = vpow.pop %v3221
        %v3223 = vmul.f32 %v3112, 1.442695
        %v3224 = vpow.pop %v3223
        %v3225 = vmul.f32 %v3113, 1.442695
        %v3226 = vpow.pop %v3225
        %v3227 = vmul.f32 %v3114, 1.442695
        %v3228 = vpow.pop %v3227
        %v3229 = vmul.f32 %v3115, 1.442695
        %v3230 = vpow.pop %v3229
        %v3231 = vmul.f32 %v3116, 1.442695
        %v3232 = vpow.pop %v3231
        %v3233 = vmul.f32 %v3117, 1.442695
        %v3234 = vpow.pop %v3233
        %v3235 = vmul.f32 %v3118, 1.442695
        %v3236 = vpow.pop %v3235
        %v3237 = vmul.f32 %v3119, 1.442695
        %v3238 = vpow.pop %v3237
        %v3239 = vmul.f32 %v3120, 1.442695
        %v3240 = vpow.pop %v3239
        %v3241 = vmul.f32 %v3121, 1.442695
        %v3242 = vpow.pop %v3241
        %v3243 = vmul.f32 %v3122, 1.442695
        %v3244 = vpow.pop %v3243
        %v3245 = vmul.f32 %v3123, 1.442695
        %v3246 = vpow.pop %v3245
        %v3247 = vmul.f32 %v3124, 1.442695
        %v3248 = vpow.pop %v3247
        %v3249 = vmul.f32 %v3125, 1.442695
        %v3250 = vpow.pop %v3249
        %v3251 = vmul.f32 %v3126, 1.442695
        %v3252 = vpow.pop %v3251
        %v3253 = vmul.f32 %v3127, 1.442695
        %v3254 = vpow.pop %v3253
        %v3255 = vmul.f32 %v3128, 1.442695
        %v3256 = vpow.pop %v3255
        %3258 = vset.pattern.permute.xlu0 0
        %3259 = vperm.xlu0 %3258, %v3001
        %v3260 = vpop.permute.xlu0 %3259
        %3263 = vset.pattern.permute.xlu0 0
        %3264 = vperm.xlu0 %3263, %v3002
        %v3265 = vpop.permute.xlu0 %3264
        %3268 = vset.pattern.permute.xlu0 0
        %3269 = vperm.xlu0 %3268, %v3003
        %v3270 = vpop.permute.xlu0 %3269
        %3273 = vset.pattern.permute.xlu0 0
        %3274 = vperm.xlu0 %3273, %v3004
        %v3275 = vpop.permute.xlu0 %3274
        %3278 = vset.pattern.permute.xlu0 0
        %3279 = vperm.xlu0 %3278, %v3005
        %v3280 = vpop.permute.xlu0 %3279
        %3283 = vset.pattern.permute.xlu0 0
        %3284 = vperm.xlu0 %3283, %v3006
        %v3285 = vpop.permute.xlu0 %3284
        %3288 = vset.pattern.permute.xlu0 0
        %3289 = vperm.xlu0 %3288, %v3007
        %v3290 = vpop.permute.xlu0 %3289
        %3293 = vset.pattern.permute.xlu0 0
        %3294 = vperm.xlu0 %3293, %v3008
        %v3295 = vpop.permute.xlu0 %3294
        %3298 = vset.pattern.permute.xlu0 0
        %3299 = vperm.xlu0 %3298, %v3009
        %v3300 = vpop.permute.xlu0 %3299
        %3303 = vset.pattern.permute.xlu0 0
        %3304 = vperm.xlu0 %3303, %v3010
        %v3305 = vpop.permute.xlu0 %3304
        %3308 = vset.pattern.permute.xlu0 0
        %3309 = vperm.xlu0 %3308, %v3011
        %v3310 = vpop.permute.xlu0 %3309
        %3313 = vset.pattern.permute.xlu0 0
        %3314 = vperm.xlu0 %3313, %v3012
        %v3315 = vpop.permute.xlu0 %3314
        %3318 = vset.pattern.permute.xlu0 0
        %3319 = vperm.xlu0 %3318, %v3013
        %v3320 = vpop.permute.xlu0 %3319
        %3323 = vset.pattern.permute.xlu0 0
        %3324 = vperm.xlu0 %3323, %v3014
        %v3325 = vpop.permute.xlu0 %3324
        %3328 = vset.pattern.permute.xlu0 0
        %3329 = vperm.xlu0 %3328, %v3015
        %v3330 = vpop.permute.xlu0 %3329
        %3333 = vset.pattern.permute.xlu0 0
        %3334 = vperm.xlu0 %3333, %v3016
        %v3335 = vpop.permute.xlu0 %3334
        %3338 = vset.pattern.permute.xlu0 0
        %3339 = vperm.xlu0 %3338, %v3017
        %v3340 = vpop.permute.xlu0 %3339
        %3343 = vset.pattern.permute.xlu0 0
        %3344 = vperm.xlu0 %3343, %v3018
        %v3345 = vpop.permute.xlu0 %3344
        %3348 = vset.pattern.permute.xlu0 0
        %3349 = vperm.xlu0 %3348, %v3019
        %v3350 = vpop.permute.xlu0 %3349
        %3353 = vset.pattern.permute.xlu0 0
        %3354 = vperm.xlu0 %3353, %v3020
        %v3355 = vpop.permute.xlu0 %3354
        %3358 = vset.pattern.permute.xlu0 0
        %3359 = vperm.xlu0 %3358, %v3021
        %v3360 = vpop.permute.xlu0 %3359
        %3363 = vset.pattern.permute.xlu0 0
        %3364 = vperm.xlu0 %3363, %v3022
        %v3365 = vpop.permute.xlu0 %3364
        %3368 = vset.pattern.permute.xlu0 0
        %3369 = vperm.xlu0 %3368, %v3023
        %v3370 = vpop.permute.xlu0 %3369
        %3373 = vset.pattern.permute.xlu0 0
        %3374 = vperm.xlu0 %3373, %v3024
        %v3375 = vpop.permute.xlu0 %3374
        %3378 = vset.pattern.permute.xlu0 0
        %3379 = vperm.xlu0 %3378, %v3025
        %v3380 = vpop.permute.xlu0 %3379
        %3383 = vset.pattern.permute.xlu0 0
        %3384 = vperm.xlu0 %3383, %v3026
        %v3385 = vpop.permute.xlu0 %3384
        %3388 = vset.pattern.permute.xlu0 0
        %3389 = vperm.xlu0 %3388, %v3027
        %v3390 = vpop.permute.xlu0 %3389
        %3393 = vset.pattern.permute.xlu0 0
        %3394 = vperm.xlu0 %3393, %v3028
        %v3395 = vpop.permute.xlu0 %3394
        %3398 = vset.pattern.permute.xlu0 0
        %3399 = vperm.xlu0 %3398, %v3029
        %v3400 = vpop.permute.xlu0 %3399
        %3403 = vset.pattern.permute.xlu0 0
        %3404 = vperm.xlu0 %3403, %v3030
        %v3405 = vpop.permute.xlu0 %3404
        %3408 = vset.pattern.permute.xlu0 0
        %3409 = vperm.xlu0 %3408, %v3031
        %v3410 = vpop.permute.xlu0 %3409
        %3413 = vset.pattern.permute.xlu0 0
        %3414 = vperm.xlu0 %3413, %v3032
        %v3415 = vpop.permute.xlu0 %3414
        %3418 = vset.pattern.permute.xlu0 0
        %3419 = vperm.xlu0 %3418, %v3033
        %v3420 = vpop.permute.xlu0 %3419
        %3423 = vset.pattern.permute.xlu0 0
        %3424 = vperm.xlu0 %3423, %v3034
        %v3425 = vpop.permute.xlu0 %3424
        %3428 = vset.pattern.permute.xlu0 0
        %3429 = vperm.xlu0 %3428, %v3035
        %v3430 = vpop.permute.xlu0 %3429
        %3433 = vset.pattern.permute.xlu0 0
        %3434 = vperm.xlu0 %3433, %v3036
        %v3435 = vpop.permute.xlu0 %3434
        %3438 = vset.pattern.permute.xlu0 0
        %3439 = vperm.xlu0 %3438, %v3037
        %v3440 = vpop.permute.xlu0 %3439
        %3443 = vset.pattern.permute.xlu0 0
        %3444 = vperm.xlu0 %3443, %v3038
        %v3445 = vpop.permute.xlu0 %3444
        %3448 = vset.pattern.permute.xlu0 0
        %3449 = vperm.xlu0 %3448, %v3039
        %v3450 = vpop.permute.xlu0 %3449
        %3453 = vset.pattern.permute.xlu0 0
        %3454 = vperm.xlu0 %3453, %v3040
        %v3455 = vpop.permute.xlu0 %3454
        %3458 = vset.pattern.permute.xlu0 0
        %3459 = vperm.xlu0 %3458, %v3041
        %v3460 = vpop.permute.xlu0 %3459
        %3463 = vset.pattern.permute.xlu0 0
        %3464 = vperm.xlu0 %3463, %v3042
        %v3465 = vpop.permute.xlu0 %3464
        %3468 = vset.pattern.permute.xlu0 0
        %3469 = vperm.xlu0 %3468, %v3043
        %v3470 = vpop.permute.xlu0 %3469
        %3473 = vset.pattern.permute.xlu0 0
        %3474 = vperm.xlu0 %3473, %v3044
        %v3475 = vpop.permute.xlu0 %3474
        %3478 = vset.pattern.permute.xlu0 0
        %3479 = vperm.xlu0 %3478, %v3045
        %v3480 = vpop.permute.xlu0 %3479
        %3483 = vset.pattern.permute.xlu0 0
        %3484 = vperm.xlu0 %3483, %v3046
        %v3485 = vpop.permute.xlu0 %3484
        %3488 = vset.pattern.permute.xlu0 0
        %3489 = vperm.xlu0 %3488, %v3047
        %v3490 = vpop.permute.xlu0 %3489
        %3493 = vset.pattern.permute.xlu0 0
        %3494 = vperm.xlu0 %3493, %v3048
        %v3495 = vpop.permute.xlu0 %3494
        %3498 = vset.pattern.permute.xlu0 0
        %3499 = vperm.xlu0 %3498, %v3049
        %v3500 = vpop.permute.xlu0 %3499
        %3503 = vset.pattern.permute.xlu0 0
        %3504 = vperm.xlu0 %3503, %v3050
        %v3505 = vpop.permute.xlu0 %3504
        %3508 = vset.pattern.permute.xlu0 0
        %3509 = vperm.xlu0 %3508, %v3051
        %v3510 = vpop.permute.xlu0 %3509
        %3513 = vset.pattern.permute.xlu0 0
        %3514 = vperm.xlu0 %3513, %v3052
        %v3515 = vpop.permute.xlu0 %3514
        %3518 = vset.pattern.permute.xlu0 0
        %3519 = vperm.xlu0 %3518, %v3053
        %v3520 = vpop.permute.xlu0 %3519
        %3523 = vset.pattern.permute.xlu0 0
        %3524 = vperm.xlu0 %3523, %v3054
        %v3525 = vpop.permute.xlu0 %3524
        %3528 = vset.pattern.permute.xlu0 0
        %3529 = vperm.xlu0 %3528, %v3055
        %v3530 = vpop.permute.xlu0 %3529
        %3533 = vset.pattern.permute.xlu0 0
        %3534 = vperm.xlu0 %3533, %v3056
        %v3535 = vpop.permute.xlu0 %3534
        %3538 = vset.pattern.permute.xlu0 0
        %3539 = vperm.xlu0 %3538, %v3057
        %v3540 = vpop.permute.xlu0 %3539
        %3543 = vset.pattern.permute.xlu0 0
        %3544 = vperm.xlu0 %3543, %v3058
        %v3545 = vpop.permute.xlu0 %3544
        %3548 = vset.pattern.permute.xlu0 0
        %3549 = vperm.xlu0 %3548, %v3059
        %v3550 = vpop.permute.xlu0 %3549
        %3553 = vset.pattern.permute.xlu0 0
        %3554 = vperm.xlu0 %3553, %v3060
        %v3555 = vpop.permute.xlu0 %3554
        %3558 = vset.pattern.permute.xlu0 0
        %3559 = vperm.xlu0 %3558, %v3061
        %v3560 = vpop.permute.xlu0 %3559
        %3563 = vset.pattern.permute.xlu0 0
        %3564 = vperm.xlu0 %3563, %v3062
        %v3565 = vpop.permute.xlu0 %3564
        %3568 = vset.pattern.permute.xlu0 0
        %3569 = vperm.xlu0 %3568, %v3063
        %v3570 = vpop.permute.xlu0 %3569
        %3573 = vset.pattern.permute.xlu0 0
        %3574 = vperm.xlu0 %3573, %v3064
        %v3575 = vpop.permute.xlu0 %3574
        %v3577 = vsub.f32 %v2745, %v3260
        %v3578 = vsub.f32 %v2746, %v3265
        %v3579 = vsub.f32 %v2747, %v3270
        %v3580 = vsub.f32 %v2748, %v3275
        %v3581 = vsub.f32 %v2749, %v3280
        %v3582 = vsub.f32 %v2750, %v3285
        %v3583 = vsub.f32 %v2751, %v3290
        %v3584 = vsub.f32 %v2752, %v3295
        %v3585 = vsub.f32 %v2753, %v3300
        %v3586 = vsub.f32 %v2754, %v3305
        %v3587 = vsub.f32 %v2755, %v3310
        %v3588 = vsub.f32 %v2756, %v3315
        %v3589 = vsub.f32 %v2757, %v3320
        %v3590 = vsub.f32 %v2758, %v3325
        %v3591 = vsub.f32 %v2759, %v3330
        %v3592 = vsub.f32 %v2760, %v3335
        %v3593 = vsub.f32 %v2761, %v3340
        %v3594 = vsub.f32 %v2762, %v3345
        %v3595 = vsub.f32 %v2763, %v3350
        %v3596 = vsub.f32 %v2764, %v3355
        %v3597 = vsub.f32 %v2765, %v3360
        %v3598 = vsub.f32 %v2766, %v3365
        %v3599 = vsub.f32 %v2767, %v3370
        %v3600 = vsub.f32 %v2768, %v3375
        %v3601 = vsub.f32 %v2769, %v3380
        %v3602 = vsub.f32 %v2770, %v3385
        %v3603 = vsub.f32 %v2771, %v3390
        %v3604 = vsub.f32 %v2772, %v3395
        %v3605 = vsub.f32 %v2773, %v3400
        %v3606 = vsub.f32 %v2774, %v3405
        %v3607 = vsub.f32 %v2775, %v3410
        %v3608 = vsub.f32 %v2776, %v3415
        %v3609 = vsub.f32 %v2777, %v3420
        %v3610 = vsub.f32 %v2778, %v3425
        %v3611 = vsub.f32 %v2779, %v3430
        %v3612 = vsub.f32 %v2780, %v3435
        %v3613 = vsub.f32 %v2781, %v3440
        %v3614 = vsub.f32 %v2782, %v3445
        %v3615 = vsub.f32 %v2783, %v3450
        %v3616 = vsub.f32 %v2784, %v3455
        %v3617 = vsub.f32 %v2785, %v3460
        %v3618 = vsub.f32 %v2786, %v3465
        %v3619 = vsub.f32 %v2787, %v3470
        %v3620 = vsub.f32 %v2788, %v3475
        %v3621 = vsub.f32 %v2789, %v3480
        %v3622 = vsub.f32 %v2790, %v3485
        %v3623 = vsub.f32 %v2791, %v3490
        %v3624 = vsub.f32 %v2792, %v3495
        %v3625 = vsub.f32 %v2793, %v3500
        %v3626 = vsub.f32 %v2794, %v3505
        %v3627 = vsub.f32 %v2795, %v3510
        %v3628 = vsub.f32 %v2796, %v3515
        %v3629 = vsub.f32 %v2797, %v3520
        %v3630 = vsub.f32 %v2798, %v3525
        %v3631 = vsub.f32 %v2799, %v3530
        %v3632 = vsub.f32 %v2800, %v3535
        %v3633 = vsub.f32 %v2801, %v3540
        %v3634 = vsub.f32 %v2802, %v3545
        %v3635 = vsub.f32 %v2803, %v3550
        %v3636 = vsub.f32 %v2804, %v3555
        %v3637 = vsub.f32 %v2805, %v3560
        %v3638 = vsub.f32 %v2806, %v3565
        %v3639 = vsub.f32 %v2807, %v3570
        %v3640 = vsub.f32 %v2808, %v3575
        %v3641 = vmul.f32 %v3577, 1.442695
        %v3642 = vpow.pop %v3641
        %v3643 = vmul.f32 %v3578, 1.442695
        %v3644 = vpow.pop %v3643
        %v3645 = vmul.f32 %v3579, 1.442695
        %v3646 = vpow.pop %v3645
        %v3647 = vmul.f32 %v3580, 1.442695
        %v3648 = vpow.pop %v3647
        %v3649 = vmul.f32 %v3581, 1.442695
        %v3650 = vpow.pop %v3649
        %v3651 = vmul.f32 %v3582, 1.442695
        %v3652 = vpow.pop %v3651
        %v3653 = vmul.f32 %v3583, 1.442695
        %v3654 = vpow.pop %v3653
        %v3655 = vmul.f32 %v3584, 1.442695
        %v3656 = vpow.pop %v3655
        %v3657 = vmul.f32 %v3585, 1.442695
        %v3658 = vpow.pop %v3657
        %v3659 = vmul.f32 %v3586, 1.442695
        %v3660 = vpow.pop %v3659
        %v3661 = vmul.f32 %v3587, 1.442695
        %v3662 = vpow.pop %v3661
        %v3663 = vmul.f32 %v3588, 1.442695
        %v3664 = vpow.pop %v3663
        %v3665 = vmul.f32 %v3589, 1.442695
        %v3666 = vpow.pop %v3665
        %v3667 = vmul.f32 %v3590, 1.442695
        %v3668 = vpow.pop %v3667
        %v3669 = vmul.f32 %v3591, 1.442695
        %v3670 = vpow.pop %v3669
        %v3671 = vmul.f32 %v3592, 1.442695
        %v3672 = vpow.pop %v3671
        %v3673 = vmul.f32 %v3593, 1.442695
        %v3674 = vpow.pop %v3673
        %v3675 = vmul.f32 %v3594, 1.442695
        %v3676 = vpow.pop %v3675
        %v3677 = vmul.f32 %v3595, 1.442695
        %v3678 = vpow.pop %v3677
        %v3679 = vmul.f32 %v3596, 1.442695
        %v3680 = vpow.pop %v3679
        %v3681 = vmul.f32 %v3597, 1.442695
        %v3682 = vpow.pop %v3681
        %v3683 = vmul.f32 %v3598, 1.442695
        %v3684 = vpow.pop %v3683
        %v3685 = vmul.f32 %v3599, 1.442695
        %v3686 = vpow.pop %v3685
        %v3687 = vmul.f32 %v3600, 1.442695
        %v3688 = vpow.pop %v3687
        %v3689 = vmul.f32 %v3601, 1.442695
        %v3690 = vpow.pop %v3689
        %v3691 = vmul.f32 %v3602, 1.442695
        %v3692 = vpow.pop %v3691
        %v3693 = vmul.f32 %v3603, 1.442695
        %v3694 = vpow.pop %v3693
        %v3695 = vmul.f32 %v3604, 1.442695
        %v3696 = vpow.pop %v3695
        %v3697 = vmul.f32 %v3605, 1.442695
        %v3698 = vpow.pop %v3697
        %v3699 = vmul.f32 %v3606, 1.442695
        %v3700 = vpow.pop %v3699
        %v3701 = vmul.f32 %v3607, 1.442695
        %v3702 = vpow.pop %v3701
        %v3703 = vmul.f32 %v3608, 1.442695
        %v3704 = vpow.pop %v3703
        %v3705 = vmul.f32 %v3609, 1.442695
        %v3706 = vpow.pop %v3705
        %v3707 = vmul.f32 %v3610, 1.442695
        %v3708 = vpow.pop %v3707
        %v3709 = vmul.f32 %v3611, 1.442695
        %v3710 = vpow.pop %v3709
        %v3711 = vmul.f32 %v3612, 1.442695
        %v3712 = vpow.pop %v3711
        %v3713 = vmul.f32 %v3613, 1.442695
        %v3714 = vpow.pop %v3713
        %v3715 = vmul.f32 %v3614, 1.442695
        %v3716 = vpow.pop %v3715
        %v3717 = vmul.f32 %v3615, 1.442695
        %v3718 = vpow.pop %v3717
        %v3719 = vmul.f32 %v3616, 1.442695
        %v3720 = vpow.pop %v3719
        %v3721 = vmul.f32 %v3617, 1.442695
        %v3722 = vpow.pop %v3721
        %v3723 = vmul.f32 %v3618, 1.442695
        %v3724 = vpow.pop %v3723
        %v3725 = vmul.f32 %v3619, 1.442695
        %v3726 = vpow.pop %v3725
        %v3727 = vmul.f32 %v3620, 1.442695
        %v3728 = vpow.pop %v3727
        %v3729 = vmul.f32 %v3621, 1.442695
        %v3730 = vpow.pop %v3729
        %v3731 = vmul.f32 %v3622, 1.442695
        %v3732 = vpow.pop %v3731
        %v3733 = vmul.f32 %v3623, 1.442695
        %v3734 = vpow.pop %v3733
        %v3735 = vmul.f32 %v3624, 1.442695
        %v3736 = vpow.pop %v3735
        %v3737 = vmul.f32 %v3625, 1.442695
        %v3738 = vpow.pop %v3737
        %v3739 = vmul.f32 %v3626, 1.442695
        %v3740 = vpow.pop %v3739
        %v3741 = vmul.f32 %v3627, 1.442695
        %v3742 = vpow.pop %v3741
        %v3743 = vmul.f32 %v3628, 1.442695
        %v3744 = vpow.pop %v3743
        %v3745 = vmul.f32 %v3629, 1.442695
        %v3746 = vpow.pop %v3745
        %v3747 = vmul.f32 %v3630, 1.442695
        %v3748 = vpow.pop %v3747
        %v3749 = vmul.f32 %v3631, 1.442695
        %v3750 = vpow.pop %v3749
        %v3751 = vmul.f32 %v3632, 1.442695
        %v3752 = vpow.pop %v3751
        %v3753 = vmul.f32 %v3633, 1.442695
        %v3754 = vpow.pop %v3753
        %v3755 = vmul.f32 %v3634, 1.442695
        %v3756 = vpow.pop %v3755
        %v3757 = vmul.f32 %v3635, 1.442695
        %v3758 = vpow.pop %v3757
        %v3759 = vmul.f32 %v3636, 1.442695
        %v3760 = vpow.pop %v3759
        %v3761 = vmul.f32 %v3637, 1.442695
        %v3762 = vpow.pop %v3761
        %v3763 = vmul.f32 %v3638, 1.442695
        %v3764 = vpow.pop %v3763
        %v3765 = vmul.f32 %v3639, 1.442695
        %v3766 = vpow.pop %v3765
        %v3767 = vmul.f32 %v3640, 1.442695
        %v3768 = vpow.pop %v3767
        %v3769 = vld [vmem:[#allocation3] sm:$0xff]
        %v3770 = vld [vmem:[#allocation3 + $0x8] sm:$0xff]
        %v3771 = vld [vmem:[#allocation3 + $0x10] sm:$0xff]
        %v3772 = vld [vmem:[#allocation3 + $0x18] sm:$0xff]
        %v3773 = vld [vmem:[#allocation3 + $0x20] sm:$0xff]
        %v3774 = vld [vmem:[#allocation3 + $0x28] sm:$0xff]
        %v3775 = vld [vmem:[#allocation3 + $0x30] sm:$0xff]
        %v3776 = vld [vmem:[#allocation3 + $0x38] sm:$0xff]
        %v3777 = vld [vmem:[#allocation3 + $0x40] sm:$0xff]
        %v3778 = vld [vmem:[#allocation3 + $0x48] sm:$0xff]
        %v3779 = vld [vmem:[#allocation3 + $0x50] sm:$0xff]
        %v3780 = vld [vmem:[#allocation3 + $0x58] sm:$0xff]
        %v3781 = vld [vmem:[#allocation3 + $0x60] sm:$0xff]
        %v3782 = vld [vmem:[#allocation3 + $0x68] sm:$0xff]
        %v3783 = vld [vmem:[#allocation3 + $0x70] sm:$0xff]
        %v3784 = vld [vmem:[#allocation3 + $0x78] sm:$0xff]
        %v3785 = vld [vmem:[#allocation3 + $0x80] sm:$0xff]
        %v3786 = vld [vmem:[#allocation3 + $0x88] sm:$0xff]
        %v3787 = vld [vmem:[#allocation3 + $0x90] sm:$0xff]
        %v3788 = vld [vmem:[#allocation3 + $0x98] sm:$0xff]
        %v3789 = vld [vmem:[#allocation3 + $0xa0] sm:$0xff]
        %v3790 = vld [vmem:[#allocation3 + $0xa8] sm:$0xff]
        %v3791 = vld [vmem:[#allocation3 + $0xb0] sm:$0xff]
        %v3792 = vld [vmem:[#allocation3 + $0xb8] sm:$0xff]
        %v3793 = vld [vmem:[#allocation3 + $0xc0] sm:$0xff]
        %v3794 = vld [vmem:[#allocation3 + $0xc8] sm:$0xff]
        %v3795 = vld [vmem:[#allocation3 + $0xd0] sm:$0xff]
        %v3796 = vld [vmem:[#allocation3 + $0xd8] sm:$0xff]
        %v3797 = vld [vmem:[#allocation3 + $0xe0] sm:$0xff]
        %v3798 = vld [vmem:[#allocation3 + $0xe8] sm:$0xff]
        %v3799 = vld [vmem:[#allocation3 + $0xf0] sm:$0xff]
        %v3800 = vld [vmem:[#allocation3 + $0xf8] sm:$0xff]
        %v3801 = vld [vmem:[#allocation3 + $0x100] sm:$0xff]
        %v3802 = vld [vmem:[#allocation3 + $0x108] sm:$0xff]
        %v3803 = vld [vmem:[#allocation3 + $0x110] sm:$0xff]
        %v3804 = vld [vmem:[#allocation3 + $0x118] sm:$0xff]
        %v3805 = vld [vmem:[#allocation3 + $0x120] sm:$0xff]
        %v3806 = vld [vmem:[#allocation3 + $0x128] sm:$0xff]
        %v3807 = vld [vmem:[#allocation3 + $0x130] sm:$0xff]
        %v3808 = vld [vmem:[#allocation3 + $0x138] sm:$0xff]
        %v3809 = vld [vmem:[#allocation3 + $0x140] sm:$0xff]
        %v3810 = vld [vmem:[#allocation3 + $0x148] sm:$0xff]
        %v3811 = vld [vmem:[#allocation3 + $0x150] sm:$0xff]
        %v3812 = vld [vmem:[#allocation3 + $0x158] sm:$0xff]
        %v3813 = vld [vmem:[#allocation3 + $0x160] sm:$0xff]
        %v3814 = vld [vmem:[#allocation3 + $0x168] sm:$0xff]
        %v3815 = vld [vmem:[#allocation3 + $0x170] sm:$0xff]
        %v3816 = vld [vmem:[#allocation3 + $0x178] sm:$0xff]
        %v3817 = vld [vmem:[#allocation3 + $0x180] sm:$0xff]
        %v3818 = vld [vmem:[#allocation3 + $0x188] sm:$0xff]
        %v3819 = vld [vmem:[#allocation3 + $0x190] sm:$0xff]
        %v3820 = vld [vmem:[#allocation3 + $0x198] sm:$0xff]
        %v3821 = vld [vmem:[#allocation3 + $0x1a0] sm:$0xff]
        %v3822 = vld [vmem:[#allocation3 + $0x1a8] sm:$0xff]
        %v3823 = vld [vmem:[#allocation3 + $0x1b0] sm:$0xff]
        %v3824 = vld [vmem:[#allocation3 + $0x1b8] sm:$0xff]
        %v3825 = vld [vmem:[#allocation3 + $0x1c0] sm:$0xff]
        %v3826 = vld [vmem:[#allocation3 + $0x1c8] sm:$0xff]
        %v3827 = vld [vmem:[#allocation3 + $0x1d0] sm:$0xff]
        %v3828 = vld [vmem:[#allocation3 + $0x1d8] sm:$0xff]
        %v3829 = vld [vmem:[#allocation3 + $0x1e0] sm:$0xff]
        %v3830 = vld [vmem:[#allocation3 + $0x1e8] sm:$0xff]
        %v3831 = vld [vmem:[#allocation3 + $0x1f0] sm:$0xff]
        %v3832 = vld [vmem:[#allocation3 + $0x1f8] sm:$0xff]
        %v3833 = vmul.f32 %v3130, %v3769
        %v3834 = vmul.f32 %v3132, %v3770
        %v3835 = vmul.f32 %v3134, %v3771
        %v3836 = vmul.f32 %v3136, %v3772
        %v3837 = vmul.f32 %v3138, %v3773
        %v3838 = vmul.f32 %v3140, %v3774
        %v3839 = vmul.f32 %v3142, %v3775
        %v3840 = vmul.f32 %v3144, %v3776
        %v3841 = vmul.f32 %v3146, %v3777
        %v3842 = vmul.f32 %v3148, %v3778
        %v3843 = vmul.f32 %v3150, %v3779
        %v3844 = vmul.f32 %v3152, %v3780
        %v3845 = vmul.f32 %v3154, %v3781
        %v3846 = vmul.f32 %v3156, %v3782
        %v3847 = vmul.f32 %v3158, %v3783
        %v3848 = vmul.f32 %v3160, %v3784
        %v3849 = vmul.f32 %v3162, %v3785
        %v3850 = vmul.f32 %v3164, %v3786
        %v3851 = vmul.f32 %v3166, %v3787
        %v3852 = vmul.f32 %v3168, %v3788
        %v3853 = vmul.f32 %v3170, %v3789
        %v3854 = vmul.f32 %v3172, %v3790
        %v3855 = vmul.f32 %v3174, %v3791
        %v3856 = vmul.f32 %v3176, %v3792
        %v3857 = vmul.f32 %v3178, %v3793
        %v3858 = vmul.f32 %v3180, %v3794
        %v3859 = vmul.f32 %v3182, %v3795
        %v3860 = vmul.f32 %v3184, %v3796
        %v3861 = vmul.f32 %v3186, %v3797
        %v3862 = vmul.f32 %v3188, %v3798
        %v3863 = vmul.f32 %v3190, %v3799
        %v3864 = vmul.f32 %v3192, %v3800
        %v3865 = vmul.f32 %v3194, %v3801
        %v3866 = vmul.f32 %v3196, %v3802
        %v3867 = vmul.f32 %v3198, %v3803
        %v3868 = vmul.f32 %v3200, %v3804
        %v3869 = vmul.f32 %v3202, %v3805
        %v3870 = vmul.f32 %v3204, %v3806
        %v3871 = vmul.f32 %v3206, %v3807
        %v3872 = vmul.f32 %v3208, %v3808
        %v3873 = vmul.f32 %v3210, %v3809
        %v3874 = vmul.f32 %v3212, %v3810
        %v3875 = vmul.f32 %v3214, %v3811
        %v3876 = vmul.f32 %v3216, %v3812
        %v3877 = vmul.f32 %v3218, %v3813
        %v3878 = vmul.f32 %v3220, %v3814
        %v3879 = vmul.f32 %v3222, %v3815
        %v3880 = vmul.f32 %v3224, %v3816
        %v3881 = vmul.f32 %v3226, %v3817
        %v3882 = vmul.f32 %v3228, %v3818
        %v3883 = vmul.f32 %v3230, %v3819
        %v3884 = vmul.f32 %v3232, %v3820
        %v3885 = vmul.f32 %v3234, %v3821
        %v3886 = vmul.f32 %v3236, %v3822
        %v3887 = vmul.f32 %v3238, %v3823
        %v3888 = vmul.f32 %v3240, %v3824
        %v3889 = vmul.f32 %v3242, %v3825
        %v3890 = vmul.f32 %v3244, %v3826
        %v3891 = vmul.f32 %v3246, %v3827
        %v3892 = vmul.f32 %v3248, %v3828
        %v3893 = vmul.f32 %v3250, %v3829
        %v3894 = vmul.f32 %v3252, %v3830
        %v3895 = vmul.f32 %v3254, %v3831
        %v3896 = vmul.f32 %v3256, %v3832
        %3897 = vadd.xlane.f32.xlu0 %v3642
        %v3898 = vpop.xlane.xlu0 %3897
        %3899 = vadd.xlane.f32.xlu0 %v3644
        %v3900 = vpop.xlane.xlu0 %3899
        %3901 = vadd.xlane.f32.xlu0 %v3646
        %v3902 = vpop.xlane.xlu0 %3901
        %3903 = vadd.xlane.f32.xlu0 %v3648
        %v3904 = vpop.xlane.xlu0 %3903
        %3905 = vadd.xlane.f32.xlu0 %v3650
        %v3906 = vpop.xlane.xlu0 %3905
        %3907 = vadd.xlane.f32.xlu0 %v3652
        %v3908 = vpop.xlane.xlu0 %3907
        %3909 = vadd.xlane.f32.xlu0 %v3654
        %v3910 = vpop.xlane.xlu0 %3909
        %3911 = vadd.xlane.f32.xlu0 %v3656
        %v3912 = vpop.xlane.xlu0 %3911
        %3913 = vadd.xlane.f32.xlu0 %v3658
        %v3914 = vpop.xlane.xlu0 %3913
        %3915 = vadd.xlane.f32.xlu0 %v3660
        %v3916 = vpop.xlane.xlu0 %3915
        %3917 = vadd.xlane.f32.xlu0 %v3662
        %v3918 = vpop.xlane.xlu0 %3917
        %3919 = vadd.xlane.f32.xlu0 %v3664
        %v3920 = vpop.xlane.xlu0 %3919
        %3921 = vadd.xlane.f32.xlu0 %v3666
        %v3922 = vpop.xlane.xlu0 %3921
        %3923 = vadd.xlane.f32.xlu0 %v3668
        %v3924 = vpop.xlane.xlu0 %3923
        %3925 = vadd.xlane.f32.xlu0 %v3670
        %v3926 = vpop.xlane.xlu0 %3925
        %3927 = vadd.xlane.f32.xlu0 %v3672
        %v3928 = vpop.xlane.xlu0 %3927
        %3929 = vadd.xlane.f32.xlu0 %v3674
        %v3930 = vpop.xlane.xlu0 %3929
        %3931 = vadd.xlane.f32.xlu0 %v3676
        %v3932 = vpop.xlane.xlu0 %3931
        %3933 = vadd.xlane.f32.xlu0 %v3678
        %v3934 = vpop.xlane.xlu0 %3933
        %3935 = vadd.xlane.f32.xlu0 %v3680
        %v3936 = vpop.xlane.xlu0 %3935
        %3937 = vadd.xlane.f32.xlu0 %v3682
        %v3938 = vpop.xlane.xlu0 %3937
        %3939 = vadd.xlane.f32.xlu0 %v3684
        %v3940 = vpop.xlane.xlu0 %3939
        %3941 = vadd.xlane.f32.xlu0 %v3686
        %v3942 = vpop.xlane.xlu0 %3941
        %3943 = vadd.xlane.f32.xlu0 %v3688
        %v3944 = vpop.xlane.xlu0 %3943
        %3945 = vadd.xlane.f32.xlu0 %v3690
        %v3946 = vpop.xlane.xlu0 %3945
        %3947 = vadd.xlane.f32.xlu0 %v3692
        %v3948 = vpop.xlane.xlu0 %3947
        %3949 = vadd.xlane.f32.xlu0 %v3694
        %v3950 = vpop.xlane.xlu0 %3949
        %3951 = vadd.xlane.f32.xlu0 %v3696
        %v3952 = vpop.xlane.xlu0 %3951
        %3953 = vadd.xlane.f32.xlu0 %v3698
        %v3954 = vpop.xlane.xlu0 %3953
        %3955 = vadd.xlane.f32.xlu0 %v3700
        %v3956 = vpop.xlane.xlu0 %3955
        %3957 = vadd.xlane.f32.xlu0 %v3702
        %v3958 = vpop.xlane.xlu0 %3957
        %3959 = vadd.xlane.f32.xlu0 %v3704
        %v3960 = vpop.xlane.xlu0 %3959
        %3961 = vadd.xlane.f32.xlu0 %v3706
        %v3962 = vpop.xlane.xlu0 %3961
        %3963 = vadd.xlane.f32.xlu0 %v3708
        %v3964 = vpop.xlane.xlu0 %3963
        %3965 = vadd.xlane.f32.xlu0 %v3710
        %v3966 = vpop.xlane.xlu0 %3965
        %3967 = vadd.xlane.f32.xlu0 %v3712
        %v3968 = vpop.xlane.xlu0 %3967
        %3969 = vadd.xlane.f32.xlu0 %v3714
        %v3970 = vpop.xlane.xlu0 %3969
        %3971 = vadd.xlane.f32.xlu0 %v3716
        %v3972 = vpop.xlane.xlu0 %3971
        %3973 = vadd.xlane.f32.xlu0 %v3718
        %v3974 = vpop.xlane.xlu0 %3973
        %3975 = vadd.xlane.f32.xlu0 %v3720
        %v3976 = vpop.xlane.xlu0 %3975
        %3977 = vadd.xlane.f32.xlu0 %v3722
        %v3978 = vpop.xlane.xlu0 %3977
        %3979 = vadd.xlane.f32.xlu0 %v3724
        %v3980 = vpop.xlane.xlu0 %3979
        %3981 = vadd.xlane.f32.xlu0 %v3726
        %v3982 = vpop.xlane.xlu0 %3981
        %3983 = vadd.xlane.f32.xlu0 %v3728
        %v3984 = vpop.xlane.xlu0 %3983
        %3985 = vadd.xlane.f32.xlu0 %v3730
        %v3986 = vpop.xlane.xlu0 %3985
        %3987 = vadd.xlane.f32.xlu0 %v3732
        %v3988 = vpop.xlane.xlu0 %3987
        %3989 = vadd.xlane.f32.xlu0 %v3734
        %v3990 = vpop.xlane.xlu0 %3989
        %3991 = vadd.xlane.f32.xlu0 %v3736
        %v3992 = vpop.xlane.xlu0 %3991
        %3993 = vadd.xlane.f32.xlu0 %v3738
        %v3994 = vpop.xlane.xlu0 %3993
        %3995 = vadd.xlane.f32.xlu0 %v3740
        %v3996 = vpop.xlane.xlu0 %3995
        %3997 = vadd.xlane.f32.xlu0 %v3742
        %v3998 = vpop.xlane.xlu0 %3997
        %3999 = vadd.xlane.f32.xlu0 %v3744
        %v4000 = vpop.xlane.xlu0 %3999
        %4001 = vadd.xlane.f32.xlu0 %v3746
        %v4002 = vpop.xlane.xlu0 %4001
        %4003 = vadd.xlane.f32.xlu0 %v3748
        %v4004 = vpop.xlane.xlu0 %4003
        %4005 = vadd.xlane.f32.xlu0 %v3750
        %v4006 = vpop.xlane.xlu0 %4005
        %4007 = vadd.xlane.f32.xlu0 %v3752
        %v4008 = vpop.xlane.xlu0 %4007
        %4009 = vadd.xlane.f32.xlu0 %v3754
        %v4010 = vpop.xlane.xlu0 %4009
        %4011 = vadd.xlane.f32.xlu0 %v3756
        %v4012 = vpop.xlane.xlu0 %4011
        %4013 = vadd.xlane.f32.xlu0 %v3758
        %v4014 = vpop.xlane.xlu0 %4013
        %4015 = vadd.xlane.f32.xlu0 %v3760
        %v4016 = vpop.xlane.xlu0 %4015
        %4017 = vadd.xlane.f32.xlu0 %v3762
        %v4018 = vpop.xlane.xlu0 %4017
        %4019 = vadd.xlane.f32.xlu0 %v3764
        %v4020 = vpop.xlane.xlu0 %4019
        %4021 = vadd.xlane.f32.xlu0 %v3766
        %v4022 = vpop.xlane.xlu0 %4021
        %4023 = vadd.xlane.f32.xlu0 %v3768
        %v4024 = vpop.xlane.xlu0 %4023
        %v4025 = vadd.f32 %v3833, %v3898
        %v4026 = vadd.f32 %v3834, %v3900
        %v4027 = vadd.f32 %v3835, %v3902
        %v4028 = vadd.f32 %v3836, %v3904
        %v4029 = vadd.f32 %v3837, %v3906
        %v4030 = vadd.f32 %v3838, %v3908
        %v4031 = vadd.f32 %v3839, %v3910
        %v4032 = vadd.f32 %v3840, %v3912
        %v4033 = vadd.f32 %v3841, %v3914
        %v4034 = vadd.f32 %v3842, %v3916
        %v4035 = vadd.f32 %v3843, %v3918
        %v4036 = vadd.f32 %v3844, %v3920
        %v4037 = vadd.f32 %v3845, %v3922
        %v4038 = vadd.f32 %v3846, %v3924
        %v4039 = vadd.f32 %v3847, %v3926
        %v4040 = vadd.f32 %v3848, %v3928
        %v4041 = vadd.f32 %v3849, %v3930
        %v4042 = vadd.f32 %v3850, %v3932
        %v4043 = vadd.f32 %v3851, %v3934
        %v4044 = vadd.f32 %v3852, %v3936
        %v4045 = vadd.f32 %v3853, %v3938
        %v4046 = vadd.f32 %v3854, %v3940
        %v4047 = vadd.f32 %v3855, %v3942
        %v4048 = vadd.f32 %v3856, %v3944
        %v4049 = vadd.f32 %v3857, %v3946
        %v4050 = vadd.f32 %v3858, %v3948
        %v4051 = vadd.f32 %v3859, %v3950
        %v4052 = vadd.f32 %v3860, %v3952
        %v4053 = vadd.f32 %v3861, %v3954
        %v4054 = vadd.f32 %v3862, %v3956
        %v4055 = vadd.f32 %v3863, %v3958
        %v4056 = vadd.f32 %v3864, %v3960
        %v4057 = vadd.f32 %v3865, %v3962
        %v4058 = vadd.f32 %v3866, %v3964
        %v4059 = vadd.f32 %v3867, %v3966
        %v4060 = vadd.f32 %v3868, %v3968
        %v4061 = vadd.f32 %v3869, %v3970
        %v4062 = vadd.f32 %v3870, %v3972
        %v4063 = vadd.f32 %v3871, %v3974
        %v4064 = vadd.f32 %v3872, %v3976
        %v4065 = vadd.f32 %v3873, %v3978
        %v4066 = vadd.f32 %v3874, %v3980
        %v4067 = vadd.f32 %v3875, %v3982
        %v4068 = vadd.f32 %v3876, %v3984
        %v4069 = vadd.f32 %v3877, %v3986
        %v4070 = vadd.f32 %v3878, %v3988
        %v4071 = vadd.f32 %v3879, %v3990
        %v4072 = vadd.f32 %v3880, %v3992
        %v4073 = vadd.f32 %v3881, %v3994
        %v4074 = vadd.f32 %v3882, %v3996
        %v4075 = vadd.f32 %v3883, %v3998
        %v4076 = vadd.f32 %v3884, %v4000
        %v4077 = vadd.f32 %v3885, %v4002
        %v4078 = vadd.f32 %v3886, %v4004
        %v4079 = vadd.f32 %v3887, %v4006
        %v4080 = vadd.f32 %v3888, %v4008
        %v4081 = vadd.f32 %v3889, %v4010
        %v4082 = vadd.f32 %v3890, %v4012
        %v4083 = vadd.f32 %v3891, %v4014
        %v4084 = vadd.f32 %v3892, %v4016
        %v4085 = vadd.f32 %v3893, %v4018
        %v4086 = vadd.f32 %v3894, %v4020
        %v4087 = vadd.f32 %v3895, %v4022
        %v4088 = vadd.f32 %v3896, %v4024
        %vm4089 = vcmask 7168
        %4090 = vst.msk [vmem:[#allocation3] sm:$0xff] %vm4089, %v4025
        %4091 = vst.msk [vmem:[#allocation3 + $0x8] sm:$0xff] %vm4089, %v4026
        %4092 = vst.msk [vmem:[#allocation3 + $0x10] sm:$0xff] %vm4089, %v4027
        %4093 = vst.msk [vmem:[#allocation3 + $0x18] sm:$0xff] %vm4089, %v4028
        %4094 = vst.msk [vmem:[#allocation3 + $0x20] sm:$0xff] %vm4089, %v4029
        %4095 = vst.msk [vmem:[#allocation3 + $0x28] sm:$0xff] %vm4089, %v4030
        %4096 = vst.msk [vmem:[#allocation3 + $0x30] sm:$0xff] %vm4089, %v4031
        %4097 = vst.msk [vmem:[#allocation3 + $0x38] sm:$0xff] %vm4089, %v4032
        %4098 = vst.msk [vmem:[#allocation3 + $0x40] sm:$0xff] %vm4089, %v4033
        %4099 = vst.msk [vmem:[#allocation3 + $0x48] sm:$0xff] %vm4089, %v4034
        %4100 = vst.msk [vmem:[#allocation3 + $0x50] sm:$0xff] %vm4089, %v4035
        %4101 = vst.msk [vmem:[#allocation3 + $0x58] sm:$0xff] %vm4089, %v4036
        %4102 = vst.msk [vmem:[#allocation3 + $0x60] sm:$0xff] %vm4089, %v4037
        %4103 = vst.msk [vmem:[#allocation3 + $0x68] sm:$0xff] %vm4089, %v4038
        %4104 = vst.msk [vmem:[#allocation3 + $0x70] sm:$0xff] %vm4089, %v4039
        %4105 = vst.msk [vmem:[#allocation3 + $0x78] sm:$0xff] %vm4089, %v4040
        %4106 = vst.msk [vmem:[#allocation3 + $0x80] sm:$0xff] %vm4089, %v4041
        %4107 = vst.msk [vmem:[#allocation3 + $0x88] sm:$0xff] %vm4089, %v4042
        %4108 = vst.msk [vmem:[#allocation3 + $0x90] sm:$0xff] %vm4089, %v4043
        %4109 = vst.msk [vmem:[#allocation3 + $0x98] sm:$0xff] %vm4089, %v4044
        %4110 = vst.msk [vmem:[#allocation3 + $0xa0] sm:$0xff] %vm4089, %v4045
        %4111 = vst.msk [vmem:[#allocation3 + $0xa8] sm:$0xff] %vm4089, %v4046
        %4112 = vst.msk [vmem:[#allocation3 + $0xb0] sm:$0xff] %vm4089, %v4047
        %4113 = vst.msk [vmem:[#allocation3 + $0xb8] sm:$0xff] %vm4089, %v4048
        %4114 = vst.msk [vmem:[#allocation3 + $0xc0] sm:$0xff] %vm4089, %v4049
        %4115 = vst.msk [vmem:[#allocation3 + $0xc8] sm:$0xff] %vm4089, %v4050
        %4116 = vst.msk [vmem:[#allocation3 + $0xd0] sm:$0xff] %vm4089, %v4051
        %4117 = vst.msk [vmem:[#allocation3 + $0xd8] sm:$0xff] %vm4089, %v4052
        %4118 = vst.msk [vmem:[#allocation3 + $0xe0] sm:$0xff] %vm4089, %v4053
        %4119 = vst.msk [vmem:[#allocation3 + $0xe8] sm:$0xff] %vm4089, %v4054
        %4120 = vst.msk [vmem:[#allocation3 + $0xf0] sm:$0xff] %vm4089, %v4055
        %4121 = vst.msk [vmem:[#allocation3 + $0xf8] sm:$0xff] %vm4089, %v4056
        %4122 = vst.msk [vmem:[#allocation3 + $0x100] sm:$0xff] %vm4089, %v4057
        %4123 = vst.msk [vmem:[#allocation3 + $0x108] sm:$0xff] %vm4089, %v4058
        %4124 = vst.msk [vmem:[#allocation3 + $0x110] sm:$0xff] %vm4089, %v4059
        %4125 = vst.msk [vmem:[#allocation3 + $0x118] sm:$0xff] %vm4089, %v4060
        %4126 = vst.msk [vmem:[#allocation3 + $0x120] sm:$0xff] %vm4089, %v4061
        %4127 = vst.msk [vmem:[#allocation3 + $0x128] sm:$0xff] %vm4089, %v4062
        %4128 = vst.msk [vmem:[#allocation3 + $0x130] sm:$0xff] %vm4089, %v4063
        %4129 = vst.msk [vmem:[#allocation3 + $0x138] sm:$0xff] %vm4089, %v4064
        %4130 = vst.msk [vmem:[#allocation3 + $0x140] sm:$0xff] %vm4089, %v4065
        %4131 = vst.msk [vmem:[#allocation3 + $0x148] sm:$0xff] %vm4089, %v4066
        %4132 = vst.msk [vmem:[#allocation3 + $0x150] sm:$0xff] %vm4089, %v4067
        %4133 = vst.msk [vmem:[#allocation3 + $0x158] sm:$0xff] %vm4089, %v4068
        %4134 = vst.msk [vmem:[#allocation3 + $0x160] sm:$0xff] %vm4089, %v4069
        %4135 = vst.msk [vmem:[#allocation3 + $0x168] sm:$0xff] %vm4089, %v4070
        %4136 = vst.msk [vmem:[#allocation3 + $0x170] sm:$0xff] %vm4089, %v4071
        %4137 = vst.msk [vmem:[#allocation3 + $0x178] sm:$0xff] %vm4089, %v4072
        %4138 = vst.msk [vmem:[#allocation3 + $0x180] sm:$0xff] %vm4089, %v4073
        %4139 = vst.msk [vmem:[#allocation3 + $0x188] sm:$0xff] %vm4089, %v4074
        %4140 = vst.msk [vmem:[#allocation3 + $0x190] sm:$0xff] %vm4089, %v4075
        %4141 = vst.msk [vmem:[#allocation3 + $0x198] sm:$0xff] %vm4089, %v4076
        %4142 = vst.msk [vmem:[#allocation3 + $0x1a0] sm:$0xff] %vm4089, %v4077
        %4143 = vst.msk [vmem:[#allocation3 + $0x1a8] sm:$0xff] %vm4089, %v4078
        %4144 = vst.msk [vmem:[#allocation3 + $0x1b0] sm:$0xff] %vm4089, %v4079
        %4145 = vst.msk [vmem:[#allocation3 + $0x1b8] sm:$0xff] %vm4089, %v4080
        %4146 = vst.msk [vmem:[#allocation3 + $0x1c0] sm:$0xff] %vm4089, %v4081
        %4147 = vst.msk [vmem:[#allocation3 + $0x1c8] sm:$0xff] %vm4089, %v4082
        %4148 = vst.msk [vmem:[#allocation3 + $0x1d0] sm:$0xff] %vm4089, %v4083
        %4149 = vst.msk [vmem:[#allocation3 + $0x1d8] sm:$0xff] %vm4089, %v4084
        %4150 = vst.msk [vmem:[#allocation3 + $0x1e0] sm:$0xff] %vm4089, %v4085
        %4151 = vst.msk [vmem:[#allocation3 + $0x1e8] sm:$0xff] %vm4089, %v4086
        %4152 = vst.msk [vmem:[#allocation3 + $0x1f0] sm:$0xff] %vm4089, %v4087
        %4153 = vst.msk [vmem:[#allocation3 + $0x1f8] sm:$0xff] %vm4089, %v4088
        %v4154 = vld [vmem:[#allocation4] sm:$0xff]
        %v4155 = vld [vmem:[#allocation4 + $0x8] sm:$0xff]
        %v4156 = vld [vmem:[#allocation4 + $0x10] sm:$0xff]
        %v4157 = vld [vmem:[#allocation4 + $0x18] sm:$0xff]
        %v4158 = vld [vmem:[#allocation4 + $0x20] sm:$0xff]
        %v4159 = vld [vmem:[#allocation4 + $0x28] sm:$0xff]
        %v4160 = vld [vmem:[#allocation4 + $0x30] sm:$0xff]
        %v4161 = vld [vmem:[#allocation4 + $0x38] sm:$0xff]
        %v4162 = vld [vmem:[#allocation4 + $0x40] sm:$0xff]
        %v4163 = vld [vmem:[#allocation4 + $0x48] sm:$0xff]
        %v4164 = vld [vmem:[#allocation4 + $0x50] sm:$0xff]
        %v4165 = vld [vmem:[#allocation4 + $0x58] sm:$0xff]
        %v4166 = vld [vmem:[#allocation4 + $0x60] sm:$0xff]
        %v4167 = vld [vmem:[#allocation4 + $0x68] sm:$0xff]
        %v4168 = vld [vmem:[#allocation4 + $0x70] sm:$0xff]
        %v4169 = vld [vmem:[#allocation4 + $0x78] sm:$0xff]
        %v4170 = vld [vmem:[#allocation4 + $0x80] sm:$0xff]
        %v4171 = vld [vmem:[#allocation4 + $0x88] sm:$0xff]
        %v4172 = vld [vmem:[#allocation4 + $0x90] sm:$0xff]
        %v4173 = vld [vmem:[#allocation4 + $0x98] sm:$0xff]
        %v4174 = vld [vmem:[#allocation4 + $0xa0] sm:$0xff]
        %v4175 = vld [vmem:[#allocation4 + $0xa8] sm:$0xff]
        %v4176 = vld [vmem:[#allocation4 + $0xb0] sm:$0xff]
        %v4177 = vld [vmem:[#allocation4 + $0xb8] sm:$0xff]
        %v4178 = vld [vmem:[#allocation4 + $0xc0] sm:$0xff]
        %v4179 = vld [vmem:[#allocation4 + $0xc8] sm:$0xff]
        %v4180 = vld [vmem:[#allocation4 + $0xd0] sm:$0xff]
        %v4181 = vld [vmem:[#allocation4 + $0xd8] sm:$0xff]
        %v4182 = vld [vmem:[#allocation4 + $0xe0] sm:$0xff]
        %v4183 = vld [vmem:[#allocation4 + $0xe8] sm:$0xff]
        %v4184 = vld [vmem:[#allocation4 + $0xf0] sm:$0xff]
        %v4185 = vld [vmem:[#allocation4 + $0xf8] sm:$0xff]
        %v4186 = vld [vmem:[#allocation4 + $0x100] sm:$0xff]
        %v4187 = vld [vmem:[#allocation4 + $0x108] sm:$0xff]
        %v4188 = vld [vmem:[#allocation4 + $0x110] sm:$0xff]
        %v4189 = vld [vmem:[#allocation4 + $0x118] sm:$0xff]
        %v4190 = vld [vmem:[#allocation4 + $0x120] sm:$0xff]
        %v4191 = vld [vmem:[#allocation4 + $0x128] sm:$0xff]
        %v4192 = vld [vmem:[#allocation4 + $0x130] sm:$0xff]
        %v4193 = vld [vmem:[#allocation4 + $0x138] sm:$0xff]
        %v4194 = vld [vmem:[#allocation4 + $0x140] sm:$0xff]
        %v4195 = vld [vmem:[#allocation4 + $0x148] sm:$0xff]
        %v4196 = vld [vmem:[#allocation4 + $0x150] sm:$0xff]
        %v4197 = vld [vmem:[#allocation4 + $0x158] sm:$0xff]
        %v4198 = vld [vmem:[#allocation4 + $0x160] sm:$0xff]
        %v4199 = vld [vmem:[#allocation4 + $0x168] sm:$0xff]
        %v4200 = vld [vmem:[#allocation4 + $0x170] sm:$0xff]
        %v4201 = vld [vmem:[#allocation4 + $0x178] sm:$0xff]
        %v4202 = vld [vmem:[#allocation4 + $0x180] sm:$0xff]
        %v4203 = vld [vmem:[#allocation4 + $0x188] sm:$0xff]
        %v4204 = vld [vmem:[#allocation4 + $0x190] sm:$0xff]
        %v4205 = vld [vmem:[#allocation4 + $0x198] sm:$0xff]
        %v4206 = vld [vmem:[#allocation4 + $0x1a0] sm:$0xff]
        %v4207 = vld [vmem:[#allocation4 + $0x1a8] sm:$0xff]
        %v4208 = vld [vmem:[#allocation4 + $0x1b0] sm:$0xff]
        %v4209 = vld [vmem:[#allocation4 + $0x1b8] sm:$0xff]
        %v4210 = vld [vmem:[#allocation4 + $0x1c0] sm:$0xff]
        %v4211 = vld [vmem:[#allocation4 + $0x1c8] sm:$0xff]
        %v4212 = vld [vmem:[#allocation4 + $0x1d0] sm:$0xff]
        %v4213 = vld [vmem:[#allocation4 + $0x1d8] sm:$0xff]
        %v4214 = vld [vmem:[#allocation4 + $0x1e0] sm:$0xff]
        %v4215 = vld [vmem:[#allocation4 + $0x1e8] sm:$0xff]
        %v4216 = vld [vmem:[#allocation4 + $0x1f0] sm:$0xff]
        %v4217 = vld [vmem:[#allocation4 + $0x1f8] sm:$0xff]
        %4219 = vset.pattern.permute.xlu0 0
        %4220 = vperm.xlu0 %4219, %v3130
        %v4221 = vpop.permute.xlu0 %4220
        %4224 = vset.pattern.permute.xlu0 0
        %4225 = vperm.xlu0 %4224, %v3132
        %v4226 = vpop.permute.xlu0 %4225
        %4229 = vset.pattern.permute.xlu0 0
        %4230 = vperm.xlu0 %4229, %v3134
        %v4231 = vpop.permute.xlu0 %4230
        %4234 = vset.pattern.permute.xlu0 0
        %4235 = vperm.xlu0 %4234, %v3136
        %v4236 = vpop.permute.xlu0 %4235
        %4239 = vset.pattern.permute.xlu0 0
        %4240 = vperm.xlu0 %4239, %v3138
        %v4241 = vpop.permute.xlu0 %4240
        %4244 = vset.pattern.permute.xlu0 0
        %4245 = vperm.xlu0 %4244, %v3140
        %v4246 = vpop.permute.xlu0 %4245
        %4249 = vset.pattern.permute.xlu0 0
        %4250 = vperm.xlu0 %4249, %v3142
        %v4251 = vpop.permute.xlu0 %4250
        %4254 = vset.pattern.permute.xlu0 0
        %4255 = vperm.xlu0 %4254, %v3144
        %v4256 = vpop.permute.xlu0 %4255
        %4259 = vset.pattern.permute.xlu0 0
        %4260 = vperm.xlu0 %4259, %v3146
        %v4261 = vpop.permute.xlu0 %4260
        %4264 = vset.pattern.permute.xlu0 0
        %4265 = vperm.xlu0 %4264, %v3148
        %v4266 = vpop.permute.xlu0 %4265
        %4269 = vset.pattern.permute.xlu0 0
        %4270 = vperm.xlu0 %4269, %v3150
        %v4271 = vpop.permute.xlu0 %4270
        %4274 = vset.pattern.permute.xlu0 0
        %4275 = vperm.xlu0 %4274, %v3152
        %v4276 = vpop.permute.xlu0 %4275
        %4279 = vset.pattern.permute.xlu0 0
        %4280 = vperm.xlu0 %4279, %v3154
        %v4281 = vpop.permute.xlu0 %4280
        %4284 = vset.pattern.permute.xlu0 0
        %4285 = vperm.xlu0 %4284, %v3156
        %v4286 = vpop.permute.xlu0 %4285
        %4289 = vset.pattern.permute.xlu0 0
        %4290 = vperm.xlu0 %4289, %v3158
        %v4291 = vpop.permute.xlu0 %4290
        %4294 = vset.pattern.permute.xlu0 0
        %4295 = vperm.xlu0 %4294, %v3160
        %v4296 = vpop.permute.xlu0 %4295
        %4299 = vset.pattern.permute.xlu0 0
        %4300 = vperm.xlu0 %4299, %v3162
        %v4301 = vpop.permute.xlu0 %4300
        %4304 = vset.pattern.permute.xlu0 0
        %4305 = vperm.xlu0 %4304, %v3164
        %v4306 = vpop.permute.xlu0 %4305
        %4309 = vset.pattern.permute.xlu0 0
        %4310 = vperm.xlu0 %4309, %v3166
        %v4311 = vpop.permute.xlu0 %4310
        %4314 = vset.pattern.permute.xlu0 0
        %4315 = vperm.xlu0 %4314, %v3168
        %v4316 = vpop.permute.xlu0 %4315
        %4319 = vset.pattern.permute.xlu0 0
        %4320 = vperm.xlu0 %4319, %v3170
        %v4321 = vpop.permute.xlu0 %4320
        %4324 = vset.pattern.permute.xlu0 0
        %4325 = vperm.xlu0 %4324, %v3172
        %v4326 = vpop.permute.xlu0 %4325
        %4329 = vset.pattern.permute.xlu0 0
        %4330 = vperm.xlu0 %4329, %v3174
        %v4331 = vpop.permute.xlu0 %4330
        %4334 = vset.pattern.permute.xlu0 0
        %4335 = vperm.xlu0 %4334, %v3176
        %v4336 = vpop.permute.xlu0 %4335
        %4339 = vset.pattern.permute.xlu0 0
        %4340 = vperm.xlu0 %4339, %v3178
        %v4341 = vpop.permute.xlu0 %4340
        %4344 = vset.pattern.permute.xlu0 0
        %4345 = vperm.xlu0 %4344, %v3180
        %v4346 = vpop.permute.xlu0 %4345
        %4349 = vset.pattern.permute.xlu0 0
        %4350 = vperm.xlu0 %4349, %v3182
        %v4351 = vpop.permute.xlu0 %4350
        %4354 = vset.pattern.permute.xlu0 0
        %4355 = vperm.xlu0 %4354, %v3184
        %v4356 = vpop.permute.xlu0 %4355
        %4359 = vset.pattern.permute.xlu0 0
        %4360 = vperm.xlu0 %4359, %v3186
        %v4361 = vpop.permute.xlu0 %4360
        %4364 = vset.pattern.permute.xlu0 0
        %4365 = vperm.xlu0 %4364, %v3188
        %v4366 = vpop.permute.xlu0 %4365
        %4369 = vset.pattern.permute.xlu0 0
        %4370 = vperm.xlu0 %4369, %v3190
        %v4371 = vpop.permute.xlu0 %4370
        %4374 = vset.pattern.permute.xlu0 0
        %4375 = vperm.xlu0 %4374, %v3192
        %v4376 = vpop.permute.xlu0 %4375
        %4379 = vset.pattern.permute.xlu0 0
        %4380 = vperm.xlu0 %4379, %v3194
        %v4381 = vpop.permute.xlu0 %4380
        %4384 = vset.pattern.permute.xlu0 0
        %4385 = vperm.xlu0 %4384, %v3196
        %v4386 = vpop.permute.xlu0 %4385
        %4389 = vset.pattern.permute.xlu0 0
        %4390 = vperm.xlu0 %4389, %v3198
        %v4391 = vpop.permute.xlu0 %4390
        %4394 = vset.pattern.permute.xlu0 0
        %4395 = vperm.xlu0 %4394, %v3200
        %v4396 = vpop.permute.xlu0 %4395
        %4399 = vset.pattern.permute.xlu0 0
        %4400 = vperm.xlu0 %4399, %v3202
        %v4401 = vpop.permute.xlu0 %4400
        %4404 = vset.pattern.permute.xlu0 0
        %4405 = vperm.xlu0 %4404, %v3204
        %v4406 = vpop.permute.xlu0 %4405
        %4409 = vset.pattern.permute.xlu0 0
        %4410 = vperm.xlu0 %4409, %v3206
        %v4411 = vpop.permute.xlu0 %4410
        %4414 = vset.pattern.permute.xlu0 0
        %4415 = vperm.xlu0 %4414, %v3208
        %v4416 = vpop.permute.xlu0 %4415
        %4419 = vset.pattern.permute.xlu0 0
        %4420 = vperm.xlu0 %4419, %v3210
        %v4421 = vpop.permute.xlu0 %4420
        %4424 = vset.pattern.permute.xlu0 0
        %4425 = vperm.xlu0 %4424, %v3212
        %v4426 = vpop.permute.xlu0 %4425
        %4429 = vset.pattern.permute.xlu0 0
        %4430 = vperm.xlu0 %4429, %v3214
        %v4431 = vpop.permute.xlu0 %4430
        %4434 = vset.pattern.permute.xlu0 0
        %4435 = vperm.xlu0 %4434, %v3216
        %v4436 = vpop.permute.xlu0 %4435
        %4439 = vset.pattern.permute.xlu0 0
        %4440 = vperm.xlu0 %4439, %v3218
        %v4441 = vpop.permute.xlu0 %4440
        %4444 = vset.pattern.permute.xlu0 0
        %4445 = vperm.xlu0 %4444, %v3220
        %v4446 = vpop.permute.xlu0 %4445
        %4449 = vset.pattern.permute.xlu0 0
        %4450 = vperm.xlu0 %4449, %v3222
        %v4451 = vpop.permute.xlu0 %4450
        %4454 = vset.pattern.permute.xlu0 0
        %4455 = vperm.xlu0 %4454, %v3224
        %v4456 = vpop.permute.xlu0 %4455
        %4459 = vset.pattern.permute.xlu0 0
        %4460 = vperm.xlu0 %4459, %v3226
        %v4461 = vpop.permute.xlu0 %4460
        %4464 = vset.pattern.permute.xlu0 0
        %4465 = vperm.xlu0 %4464, %v3228
        %v4466 = vpop.permute.xlu0 %4465
        %4469 = vset.pattern.permute.xlu0 0
        %4470 = vperm.xlu0 %4469, %v3230
        %v4471 = vpop.permute.xlu0 %4470
        %4474 = vset.pattern.permute.xlu0 0
        %4475 = vperm.xlu0 %4474, %v3232
        %v4476 = vpop.permute.xlu0 %4475
        %4479 = vset.pattern.permute.xlu0 0
        %4480 = vperm.xlu0 %4479, %v3234
        %v4481 = vpop.permute.xlu0 %4480
        %4484 = vset.pattern.permute.xlu0 0
        %4485 = vperm.xlu0 %4484, %v3236
        %v4486 = vpop.permute.xlu0 %4485
        %4489 = vset.pattern.permute.xlu0 0
        %4490 = vperm.xlu0 %4489, %v3238
        %v4491 = vpop.permute.xlu0 %4490
        %4494 = vset.pattern.permute.xlu0 0
        %4495 = vperm.xlu0 %4494, %v3240
        %v4496 = vpop.permute.xlu0 %4495
        %4499 = vset.pattern.permute.xlu0 0
        %4500 = vperm.xlu0 %4499, %v3242
        %v4501 = vpop.permute.xlu0 %4500
        %4504 = vset.pattern.permute.xlu0 0
        %4505 = vperm.xlu0 %4504, %v3244
        %v4506 = vpop.permute.xlu0 %4505
        %4509 = vset.pattern.permute.xlu0 0
        %4510 = vperm.xlu0 %4509, %v3246
        %v4511 = vpop.permute.xlu0 %4510
        %4514 = vset.pattern.permute.xlu0 0
        %4515 = vperm.xlu0 %4514, %v3248
        %v4516 = vpop.permute.xlu0 %4515
        %4519 = vset.pattern.permute.xlu0 0
        %4520 = vperm.xlu0 %4519, %v3250
        %v4521 = vpop.permute.xlu0 %4520
        %4524 = vset.pattern.permute.xlu0 0
        %4525 = vperm.xlu0 %4524, %v3252
        %v4526 = vpop.permute.xlu0 %4525
        %4529 = vset.pattern.permute.xlu0 0
        %4530 = vperm.xlu0 %4529, %v3254
        %v4531 = vpop.permute.xlu0 %4530
        %4534 = vset.pattern.permute.xlu0 0
        %4535 = vperm.xlu0 %4534, %v3256
        %v4536 = vpop.permute.xlu0 %4535
        %v4538 = vmul.f32 %v4221, %v4154
        %v4539 = vmul.f32 %v4226, %v4155
        %v4540 = vmul.f32 %v4231, %v4156
        %v4541 = vmul.f32 %v4236, %v4157
        %v4542 = vmul.f32 %v4241, %v4158
        %v4543 = vmul.f32 %v4246, %v4159
        %v4544 = vmul.f32 %v4251, %v4160
        %v4545 = vmul.f32 %v4256, %v4161
        %v4546 = vmul.f32 %v4261, %v4162
        %v4547 = vmul.f32 %v4266, %v4163
        %v4548 = vmul.f32 %v4271, %v4164
        %v4549 = vmul.f32 %v4276, %v4165
        %v4550 = vmul.f32 %v4281, %v4166
        %v4551 = vmul.f32 %v4286, %v4167
        %v4552 = vmul.f32 %v4291, %v4168
        %v4553 = vmul.f32 %v4296, %v4169
        %v4554 = vmul.f32 %v4301, %v4170
        %v4555 = vmul.f32 %v4306, %v4171
        %v4556 = vmul.f32 %v4311, %v4172
        %v4557 = vmul.f32 %v4316, %v4173
        %v4558 = vmul.f32 %v4321, %v4174
        %v4559 = vmul.f32 %v4326, %v4175
        %v4560 = vmul.f32 %v4331, %v4176
        %v4561 = vmul.f32 %v4336, %v4177
        %v4562 = vmul.f32 %v4341, %v4178
        %v4563 = vmul.f32 %v4346, %v4179
        %v4564 = vmul.f32 %v4351, %v4180
        %v4565 = vmul.f32 %v4356, %v4181
        %v4566 = vmul.f32 %v4361, %v4182
        %v4567 = vmul.f32 %v4366, %v4183
        %v4568 = vmul.f32 %v4371, %v4184
        %v4569 = vmul.f32 %v4376, %v4185
        %v4570 = vmul.f32 %v4381, %v4186
        %v4571 = vmul.f32 %v4386, %v4187
        %v4572 = vmul.f32 %v4391, %v4188
        %v4573 = vmul.f32 %v4396, %v4189
        %v4574 = vmul.f32 %v4401, %v4190
        %v4575 = vmul.f32 %v4406, %v4191
        %v4576 = vmul.f32 %v4411, %v4192
        %v4577 = vmul.f32 %v4416, %v4193
        %v4578 = vmul.f32 %v4421, %v4194
        %v4579 = vmul.f32 %v4426, %v4195
        %v4580 = vmul.f32 %v4431, %v4196
        %v4581 = vmul.f32 %v4436, %v4197
        %v4582 = vmul.f32 %v4441, %v4198
        %v4583 = vmul.f32 %v4446, %v4199
        %v4584 = vmul.f32 %v4451, %v4200
        %v4585 = vmul.f32 %v4456, %v4201
        %v4586 = vmul.f32 %v4461, %v4202
        %v4587 = vmul.f32 %v4466, %v4203
        %v4588 = vmul.f32 %v4471, %v4204
        %v4589 = vmul.f32 %v4476, %v4205
        %v4590 = vmul.f32 %v4481, %v4206
        %v4591 = vmul.f32 %v4486, %v4207
        %v4592 = vmul.f32 %v4491, %v4208
        %v4593 = vmul.f32 %v4496, %v4209
        %v4594 = vmul.f32 %v4501, %v4210
        %v4595 = vmul.f32 %v4506, %v4211
        %v4596 = vmul.f32 %v4511, %v4212
        %v4597 = vmul.f32 %v4516, %v4213
        %v4598 = vmul.f32 %v4521, %v4214
        %v4599 = vmul.f32 %v4526, %v4215
        %v4600 = vmul.f32 %v4531, %v4216
        %v4601 = vmul.f32 %v4536, %v4217
        %v4602 = vpack.c.bf16 %v3644, %v3642
        %v4603 = vpack.c.bf16 %v3648, %v3646
        %v4604 = vpack.c.bf16 %v3652, %v3650
        %v4605 = vpack.c.bf16 %v3656, %v3654
        %v4606 = vpack.c.bf16 %v3660, %v3658
        %v4607 = vpack.c.bf16 %v3664, %v3662
        %v4608 = vpack.c.bf16 %v3668, %v3666
        %v4609 = vpack.c.bf16 %v3672, %v3670
        %v4610 = vpack.c.bf16 %v3676, %v3674
        %v4611 = vpack.c.bf16 %v3680, %v3678
        %v4612 = vpack.c.bf16 %v3684, %v3682
        %v4613 = vpack.c.bf16 %v3688, %v3686
        %v4614 = vpack.c.bf16 %v3692, %v3690
        %v4615 = vpack.c.bf16 %v3696, %v3694
        %v4616 = vpack.c.bf16 %v3700, %v3698
        %v4617 = vpack.c.bf16 %v3704, %v3702
        %v4618 = vpack.c.bf16 %v3708, %v3706
        %v4619 = vpack.c.bf16 %v3712, %v3710
        %v4620 = vpack.c.bf16 %v3716, %v3714
        %v4621 = vpack.c.bf16 %v3720, %v3718
        %v4622 = vpack.c.bf16 %v3724, %v3722
        %v4623 = vpack.c.bf16 %v3728, %v3726
        %v4624 = vpack.c.bf16 %v3732, %v3730
        %v4625 = vpack.c.bf16 %v3736, %v3734
        %v4626 = vpack.c.bf16 %v3740, %v3738
        %v4627 = vpack.c.bf16 %v3744, %v3742
        %v4628 = vpack.c.bf16 %v3748, %v3746
        %v4629 = vpack.c.bf16 %v3752, %v3750
        %v4630 = vpack.c.bf16 %v3756, %v3754
        %v4631 = vpack.c.bf16 %v3760, %v3758
        %v4632 = vpack.c.bf16 %v3764, %v3762
        %v4633 = vpack.c.bf16 %v3768, %v3766
        %v4650 = vunpack.c.l.b16 %v1560
        %v4651 = vunpack.c.l.b16 %v1561
        %v4652 = vunpack.c.l.b16 %v1562
        %v4653 = vunpack.c.l.b16 %v1563
        %v4654 = vunpack.c.l.b16 %v1564
        %v4655 = vunpack.c.l.b16 %v1565
        %v4656 = vunpack.c.l.b16 %v1566
        %v4657 = vunpack.c.l.b16 %v1567
        %v4658 = vunpack.c.l.b16 %v1568
        %v4659 = vunpack.c.l.b16 %v1569
        %v4660 = vunpack.c.l.b16 %v1570
        %v4661 = vunpack.c.l.b16 %v1571
        %v4662 = vunpack.c.l.b16 %v1572
        %v4663 = vunpack.c.l.b16 %v1573
        %v4664 = vunpack.c.l.b16 %v1574
        %v4665 = vunpack.c.l.b16 %v1575
        %v4666 = vpack.c.b16 %v4651, %v4650
        %v4667 = vpack.c.b16 %v4653, %v4652
        %v4668 = vpack.c.b16 %v4655, %v4654
        %v4669 = vpack.c.b16 %v4657, %v4656
        %v4670 = vpack.c.b16 %v4659, %v4658
        %v4671 = vpack.c.b16 %v4661, %v4660
        %v4672 = vpack.c.b16 %v4663, %v4662
        %v4673 = vpack.c.b16 %v4665, %v4664
        %4682 = vmatprep.subr.bf16.mxu0 0
        %4683 = vmatpush1.bf16.msra.mxu0 %v4666
        %4684 = vmatprep.subr.bf16.mxu0 0
        %4685 = vmatpush1.bf16.msra.mxu0 %v4667
        %4686 = vmatprep.subr.bf16.mxu0 0
        %4687 = vmatpush1.bf16.msra.mxu0 %v4668
        %4688 = vmatprep.subr.bf16.mxu0 0
        %4689 = vmatpush1.bf16.msra.mxu0 %v4669
        %4690 = vmatprep.subr.bf16.mxu0 0
        %4691 = vmatpush1.bf16.msra.mxu0 %v4670
        %4692 = vmatprep.subr.bf16.mxu0 0
        %4693 = vmatpush1.bf16.msra.mxu0 %v4671
        %4694 = vmatprep.subr.bf16.mxu0 0
        %4695 = vmatpush1.bf16.msra.mxu0 %v4672
        %4696 = vmatprep.subr.bf16.mxu0 0
        %4697 = vmatpush1.bf16.msra.mxu0 %v4673
        %4698 = vmatprep.subr.bf16.mxu0 0
        %4699 = vmatpush1.bf16.msra.mxu0 0
        %4700 = vmatprep.subr.bf16.mxu0 0
        %4701 = vmatpush1.bf16.msra.mxu0 0
        %4702 = vmatprep.subr.bf16.mxu0 0
        %4703 = vmatpush1.bf16.msra.mxu0 0
        %4704 = vmatprep.subr.bf16.mxu0 0
        %4705 = vmatpush1.bf16.msra.mxu0 0
        %4706 = vmatprep.subr.bf16.mxu0 0
        %4707 = vmatpush1.bf16.msra.mxu0 0
        %4708 = vmatprep.subr.bf16.mxu0 0
        %4709 = vmatpush1.bf16.msra.mxu0 0
        %4710 = vmatprep.subr.bf16.mxu0 0
        %4711 = vmatpush1.bf16.msra.mxu0 0
        %4712 = vmatprep.subr.bf16.mxu0 0
        %4713 = vmatpush1.bf16.msra.mxu0 0
        %4714 = vmatprep.mubr.bf16.mxu0 0
        %4715 = vmatmul.mubr.bf16.gmra.mrb[0].mxu0 %v4602
        %v4716 = vpop.f32.mrb[0].mxu0
        %v4717 = vadd.f32 0.0, %v4716
        %v4718 = vpop.f32.mrb[0].mxu0
        %v4719 = vpop.f32.mrb[0].mxu0
        %v4720 = vadd.f32 0.0, %v4719
        %v4721 = vpop.f32.mrb[0].mxu0
        %4722 = vmatprep.mubr.bf16.mxu0 0
        %4723 = vmatmul.mubr.bf16.gmra.mrb[0].mxu0 %v4603
        %v4724 = vpop.f32.mrb[0].mxu0
        %v4725 = vadd.f32 0.0, %v4724
        %v4726 = vpop.f32.mrb[0].mxu0
        %v4727 = vpop.f32.mrb[0].mxu0
        %v4728 = vadd.f32 0.0, %v4727
        %v4729 = vpop.f32.mrb[0].mxu0
        %4730 = vmatprep.mubr.bf16.mxu0 0
        %4731 = vmatmul.mubr.bf16.gmra.mrb[0].mxu0 %v4604
        %v4732 = vpop.f32.mrb[0].mxu0
        %v4733 = vadd.f32 0.0, %v4732
        %v4734 = vpop.f32.mrb[0].mxu0
        %v4735 = vpop.f32.mrb[0].mxu0
        %v4736 = vadd.f32 0.0, %v4735
        %v4737 = vpop.f32.mrb[0].mxu0
        %4738 = vmatprep.mubr.bf16.mxu0 0
        %4739 = vmatmul.mubr.bf16.gmra.mrb[0].mxu0 %v4605
        %v4740 = vpop.f32.mrb[0].mxu0
        %v4741 = vadd.f32 0.0, %v4740
        %v4742 = vpop.f32.mrb[0].mxu0
        %v4743 = vpop.f32.mrb[0].mxu0
        %v4744 = vadd.f32 0.0, %v4743
        %v4745 = vpop.f32.mrb[0].mxu0
        %4746 = vmatprep.mubr.bf16.mxu0 0
        %4747 = vmatmul.mubr.bf16.gmra.mrb[0].mxu0 %v4606
        %v4748 = vpop.f32.mrb[0].mxu0
        %v4749 = vadd.f32 0.0, %v4748
        %v4750 = vpop.f32.mrb[0].mxu0
        %v4751 = vpop.f32.mrb[0].mxu0
        %v4752 = vadd.f32 0.0, %v4751
        %v4753 = vpop.f32.mrb[0].mxu0
        %4754 = vmatprep.mubr.bf16.mxu0 0
        %4755 = vmatmul.mubr.bf16.gmra.mrb[0].mxu0 %v4607
        %v4756 = vpop.f32.mrb[0].mxu0
        %v4757 = vadd.f32 0.0, %v4756
        %v4758 = vpop.f32.mrb[0].mxu0
        %v4759 = vpop.f32.mrb[0].mxu0
        %v4760 = vadd.f32 0.0, %v4759
        %v4761 = vpop.f32.mrb[0].mxu0
        %4762 = vmatprep.mubr.bf16.mxu0 0
        %4763 = vmatmul.mubr.bf16.gmra.mrb[0].mxu0 %v4608
        %v4764 = vpop.f32.mrb[0].mxu0
        %v4765 = vadd.f32 0.0, %v4764
        %v4766 = vpop.f32.mrb[0].mxu0
        %v4767 = vpop.f32.mrb[0].mxu0
        %v4768 = vadd.f32 0.0, %v4767
        %v4769 = vpop.f32.mrb[0].mxu0
        %4770 = vmatprep.mubr.bf16.mxu0 0
        %4771 = vmatmul.mubr.bf16.gmra.mrb[0].mxu0 %v4609
        %v4772 = vpop.f32.mrb[0].mxu0
        %v4773 = vadd.f32 0.0, %v4772
        %v4774 = vpop.f32.mrb[0].mxu0
        %v4775 = vpop.f32.mrb[0].mxu0
        %v4776 = vadd.f32 0.0, %v4775
        %v4777 = vpop.f32.mrb[0].mxu0
        %4778 = vdwg.mxu0
        %v4795 = vunpack.c.l.b16 %v1576
        %v4796 = vunpack.c.l.b16 %v1577
        %v4797 = vunpack.c.l.b16 %v1578
        %v4798 = vunpack.c.l.b16 %v1579
        %v4799 = vunpack.c.l.b16 %v1580
        %v4800 = vunpack.c.l.b16 %v1581
        %v4801 = vunpack.c.l.b16 %v1582
        %v4802 = vunpack.c.l.b16 %v1583
        %v4803 = vunpack.c.l.b16 %v1584
        %v4804 = vunpack.c.l.b16 %v1585
        %v4805 = vunpack.c.l.b16 %v1586
        %v4806 = vunpack.c.l.b16 %v1587
        %v4807 = vunpack.c.l.b16 %v1588
        %v4808 = vunpack.c.l.b16 %v1589
        %v4809 = vunpack.c.l.b16 %v1590
        %v4810 = vunpack.c.l.b16 %v1591
        %v4811 = vpack.c.b16 %v4796, %v4795
        %v4812 = vpack.c.b16 %v4798, %v4797
        %v4813 = vpack.c.b16 %v4800, %v4799
        %v4814 = vpack.c.b16 %v4802, %v4801
        %v4815 = vpack.c.b16 %v4804, %v4803
        %v4816 = vpack.c.b16 %v4806, %v4805
        %v4817 = vpack.c.b16 %v4808, %v4807
        %v4818 = vpack.c.b16 %v4810, %v4809
        %4827 = vmatprep.subr.bf16.mxu0 0
        %4828 = vmatpush1.bf16.msra.mxu0 %v4811
        %4829 = vmatprep.subr.bf16.mxu0 0
        %4830 = vmatpush1.bf16.msra.mxu0 %v4812
        %4831 = vmatprep.subr.bf16.mxu0 0
        %4832 = vmatpush1.bf16.msra.mxu0 %v4813
        %4833 = vmatprep.subr.bf16.mxu0 0
        %4834 = vmatpush1.bf16.msra.mxu0 %v4814
        %4835 = vmatprep.subr.bf16.mxu0 0
        %4836 = vmatpush1.bf16.msra.mxu0 %v4815
        %4837 = vmatprep.subr.bf16.mxu0 0
        %4838 = vmatpush1.bf16.msra.mxu0 %v4816
        %4839 = vmatprep.subr.bf16.mxu0 0
        %4840 = vmatpush1.bf16.msra.mxu0 %v4817
        %4841 = vmatprep.subr.bf16.mxu0 0
        %4842 = vmatpush1.bf16.msra.mxu0 %v4818
        %4843 = vmatprep.subr.bf16.mxu0 0
        %4844 = vmatpush1.bf16.msra.mxu0 0
        %4845 = vmatprep.subr.bf16.mxu0 0
        %4846 = vmatpush1.bf16.msra.mxu0 0
        %4847 = vmatprep.subr.bf16.mxu0 0
        %4848 = vmatpush1.bf16.msra.mxu0 0
        %4849 = vmatprep.subr.bf16.mxu0 0
        %4850 = vmatpush1.bf16.msra.mxu0 0
        %4851 = vmatprep.subr.bf16.mxu0 0
        %4852 = vmatpush1.bf16.msra.mxu0 0
        %4853 = vmatprep.subr.bf16.mxu0 0
        %4854 = vmatpush1.bf16.msra.mxu0 0
        %4855 = vmatprep.subr.bf16.mxu0 0
        %4856 = vmatpush1.bf16.msra.mxu0 0
        %4857 = vmatprep.subr.bf16.mxu0 0
        %4858 = vmatpush1.bf16.msra.mxu0 0
        %4859 = vmatprep.mubr.bf16.mxu0 0
        %4860 = vmatmul.mubr.bf16.gmra.mrb[0].mxu0 %v4610
        %v4861 = vpop.f32.mrb[0].mxu0
        %v4862 = vadd.f32 0.0, %v4861
        %v4863 = vpop.f32.mrb[0].mxu0
        %v4864 = vpop.f32.mrb[0].mxu0
        %v4865 = vadd.f32 0.0, %v4864
        %v4866 = vpop.f32.mrb[0].mxu0
        %4867 = vmatprep.mubr.bf16.mxu0 0
        %4868 = vmatmul.mubr.bf16.gmra.mrb[0].mxu0 %v4611
        %v4869 = vpop.f32.mrb[0].mxu0
        %v4870 = vadd.f32 0.0, %v4869
        %v4871 = vpop.f32.mrb[0].mxu0
        %v4872 = vpop.f32.mrb[0].mxu0
        %v4873 = vadd.f32 0.0, %v4872
        %v4874 = vpop.f32.mrb[0].mxu0
        %4875 = vmatprep.mubr.bf16.mxu0 0
        %4876 = vmatmul.mubr.bf16.gmra.mrb[0].mxu0 %v4612
        %v4877 = vpop.f32.mrb[0].mxu0
        %v4878 = vadd.f32 0.0, %v4877
        %v4879 = vpop.f32.mrb[0].mxu0
        %v4880 = vpop.f32.mrb[0].mxu0
        %v4881 = vadd.f32 0.0, %v4880
        %v4882 = vpop.f32.mrb[0].mxu0
        %4883 = vmatprep.mubr.bf16.mxu0 0
        %4884 = vmatmul.mubr.bf16.gmra.mrb[0].mxu0 %v4613
        %v4885 = vpop.f32.mrb[0].mxu0
        %v4886 = vadd.f32 0.0, %v4885
        %v4887 = vpop.f32.mrb[0].mxu0
        %v4888 = vpop.f32.mrb[0].mxu0
        %v4889 = vadd.f32 0.0, %v4888
        %v4890 = vpop.f32.mrb[0].mxu0
        %4891 = vmatprep.mubr.bf16.mxu0 0
        %4892 = vmatmul.mubr.bf16.gmra.mrb[0].mxu0 %v4614
        %v4893 = vpop.f32.mrb[0].mxu0
        %v4894 = vadd.f32 0.0, %v4893
        %v4895 = vpop.f32.mrb[0].mxu0
        %v4896 = vpop.f32.mrb[0].mxu0
        %v4897 = vadd.f32 0.0, %v4896
        %v4898 = vpop.f32.mrb[0].mxu0
        %4899 = vmatprep.mubr.bf16.mxu0 0
        %4900 = vmatmul.mubr.bf16.gmra.mrb[0].mxu0 %v4615
        %v4901 = vpop.f32.mrb[0].mxu0
        %v4902 = vadd.f32 0.0, %v4901
        %v4903 = vpop.f32.mrb[0].mxu0
        %v4904 = vpop.f32.mrb[0].mxu0
        %v4905 = vadd.f32 0.0, %v4904
        %v4906 = vpop.f32.mrb[0].mxu0
        %4907 = vmatprep.mubr.bf16.mxu0 0
        %4908 = vmatmul.mubr.bf16.gmra.mrb[0].mxu0 %v4616
        %v4909 = vpop.f32.mrb[0].mxu0
        %v4910 = vadd.f32 0.0, %v4909
        %v4911 = vpop.f32.mrb[0].mxu0
        %v4912 = vpop.f32.mrb[0].mxu0
        %v4913 = vadd.f32 0.0, %v4912
        %v4914 = vpop.f32.mrb[0].mxu0
        %4915 = vmatprep.mubr.bf16.mxu0 0
        %4916 = vmatmul.mubr.bf16.gmra.mrb[0].mxu0 %v4617
        %v4917 = vpop.f32.mrb[0].mxu0
        %v4918 = vadd.f32 0.0, %v4917
        %v4919 = vpop.f32.mrb[0].mxu0
        %v4920 = vpop.f32.mrb[0].mxu0
        %v4921 = vadd.f32 0.0, %v4920
        %v4922 = vpop.f32.mrb[0].mxu0
        %4923 = vdwg.mxu0
        %v4940 = vunpack.c.l.b16 %v1592
        %v4941 = vunpack.c.l.b16 %v1593
        %v4942 = vunpack.c.l.b16 %v1594
        %v4943 = vunpack.c.l.b16 %v1595
        %v4944 = vunpack.c.l.b16 %v1596
        %v4945 = vunpack.c.l.b16 %v1597
        %v4946 = vunpack.c.l.b16 %v1598
        %v4947 = vunpack.c.l.b16 %v1599
        %v4948 = vunpack.c.l.b16 %v1600
        %v4949 = vunpack.c.l.b16 %v1601
        %v4950 = vunpack.c.l.b16 %v1602
        %v4951 = vunpack.c.l.b16 %v1603
        %v4952 = vunpack.c.l.b16 %v1604
        %v4953 = vunpack.c.l.b16 %v1605
        %v4954 = vunpack.c.l.b16 %v1606
        %v4955 = vunpack.c.l.b16 %v1607
        %v4956 = vpack.c.b16 %v4941, %v4940
        %v4957 = vpack.c.b16 %v4943, %v4942
        %v4958 = vpack.c.b16 %v4945, %v4944
        %v4959 = vpack.c.b16 %v4947, %v4946
        %v4960 = vpack.c.b16 %v4949, %v4948
        %v4961 = vpack.c.b16 %v4951, %v4950
        %v4962 = vpack.c.b16 %v4953, %v4952
        %v4963 = vpack.c.b16 %v4955, %v4954
        %4972 = vmatprep.subr.bf16.mxu0 0
        %4973 = vmatpush1.bf16.msra.mxu0 %v4956
        %4974 = vmatprep.subr.bf16.mxu0 0
        %4975 = vmatpush1.bf16.msra.mxu0 %v4957
        %4976 = vmatprep.subr.bf16.mxu0 0
        %4977 = vmatpush1.bf16.msra.mxu0 %v4958
        %4978 = vmatprep.subr.bf16.mxu0 0
        %4979 = vmatpush1.bf16.msra.mxu0 %v4959
        %4980 = vmatprep.subr.bf16.mxu0 0
        %4981 = vmatpush1.bf16.msra.mxu0 %v4960
        %4982 = vmatprep.subr.bf16.mxu0 0
        %4983 = vmatpush1.bf16.msra.mxu0 %v4961
        %4984 = vmatprep.subr.bf16.mxu0 0
        %4985 = vmatpush1.bf16.msra.mxu0 %v4962
        %4986 = vmatprep.subr.bf16.mxu0 0
        %4987 = vmatpush1.bf16.msra.mxu0 %v4963
        %4988 = vmatprep.subr.bf16.mxu0 0
        %4989 = vmatpush1.bf16.msra.mxu0 0
        %4990 = vmatprep.subr.bf16.mxu0 0
        %4991 = vmatpush1.bf16.msra.mxu0 0
        %4992 = vmatprep.subr.bf16.mxu0 0
        %4993 = vmatpush1.bf16.msra.mxu0 0
        %4994 = vmatprep.subr.bf16.mxu0 0
        %4995 = vmatpush1.bf16.msra.mxu0 0
        %4996 = vmatprep.subr.bf16.mxu0 0
        %4997 = vmatpush1.bf16.msra.mxu0 0
        %4998 = vmatprep.subr.bf16.mxu0 0
        %4999 = vmatpush1.bf16.msra.mxu0 0
        %5000 = vmatprep.subr.bf16.mxu0 0
        %5001 = vmatpush1.bf16.msra.mxu0 0
        %5002 = vmatprep.subr.bf16.mxu0 0
        %5003 = vmatpush1.bf16.msra.mxu0 0
        %5004 = vmatprep.mubr.bf16.mxu0 0
        %5005 = vmatmul.mubr.bf16.gmra.mrb[0].mxu0 %v4618
        %v5006 = vpop.f32.mrb[0].mxu0
        %v5007 = vadd.f32 0.0, %v5006
        %v5008 = vpop.f32.mrb[0].mxu0
        %v5009 = vpop.f32.mrb[0].mxu0
        %v5010 = vadd.f32 0.0, %v5009
        %v5011 = vpop.f32.mrb[0].mxu0
        %5012 = vmatprep.mubr.bf16.mxu0 0
        %5013 = vmatmul.mubr.bf16.gmra.mrb[0].mxu0 %v4619
        %v5014 = vpop.f32.mrb[0].mxu0
        %v5015 = vadd.f32 0.0, %v5014
        %v5016 = vpop.f32.mrb[0].mxu0
        %v5017 = vpop.f32.mrb[0].mxu0
        %v5018 = vadd.f32 0.0, %v5017
        %v5019 = vpop.f32.mrb[0].mxu0
        %5020 = vmatprep.mubr.bf16.mxu0 0
        %5021 = vmatmul.mubr.bf16.gmra.mrb[0].mxu0 %v4620
        %v5022 = vpop.f32.mrb[0].mxu0
        %v5023 = vadd.f32 0.0, %v5022
        %v5024 = vpop.f32.mrb[0].mxu0
        %v5025 = vpop.f32.mrb[0].mxu0
        %v5026 = vadd.f32 0.0, %v5025
        %v5027 = vpop.f32.mrb[0].mxu0
        %5028 = vmatprep.mubr.bf16.mxu0 0
        %5029 = vmatmul.mubr.bf16.gmra.mrb[0].mxu0 %v4621
        %v5030 = vpop.f32.mrb[0].mxu0
        %v5031 = vadd.f32 0.0, %v5030
        %v5032 = vpop.f32.mrb[0].mxu0
        %v5033 = vpop.f32.mrb[0].mxu0
        %v5034 = vadd.f32 0.0, %v5033
        %v5035 = vpop.f32.mrb[0].mxu0
        %5036 = vmatprep.mubr.bf16.mxu0 0
        %5037 = vmatmul.mubr.bf16.gmra.mrb[0].mxu0 %v4622
        %v5038 = vpop.f32.mrb[0].mxu0
        %v5039 = vadd.f32 0.0, %v5038
        %v5040 = vpop.f32.mrb[0].mxu0
        %v5041 = vpop.f32.mrb[0].mxu0
        %v5042 = vadd.f32 0.0, %v5041
        %v5043 = vpop.f32.mrb[0].mxu0
        %5044 = vmatprep.mubr.bf16.mxu0 0
        %5045 = vmatmul.mubr.bf16.gmra.mrb[0].mxu0 %v4623
        %v5046 = vpop.f32.mrb[0].mxu0
        %v5047 = vadd.f32 0.0, %v5046
        %v5048 = vpop.f32.mrb[0].mxu0
        %v5049 = vpop.f32.mrb[0].mxu0
        %v5050 = vadd.f32 0.0, %v5049
        %v5051 = vpop.f32.mrb[0].mxu0
        %5052 = vmatprep.mubr.bf16.mxu0 0
        %5053 = vmatmul.mubr.bf16.gmra.mrb[0].mxu0 %v4624
        %v5054 = vpop.f32.mrb[0].mxu0
        %v5055 = vadd.f32 0.0, %v5054
        %v5056 = vpop.f32.mrb[0].mxu0
        %v5057 = vpop.f32.mrb[0].mxu0
        %v5058 = vadd.f32 0.0, %v5057
        %v5059 = vpop.f32.mrb[0].mxu0
        %5060 = vmatprep.mubr.bf16.mxu0 0
        %5061 = vmatmul.mubr.bf16.gmra.mrb[0].mxu0 %v4625
        %v5062 = vpop.f32.mrb[0].mxu0
        %v5063 = vadd.f32 0.0, %v5062
        %v5064 = vpop.f32.mrb[0].mxu0
        %v5065 = vpop.f32.mrb[0].mxu0
        %v5066 = vadd.f32 0.0, %v5065
        %v5067 = vpop.f32.mrb[0].mxu0
        %5068 = vdwg.mxu0
        %v5085 = vunpack.c.l.b16 %v1608
        %v5086 = vunpack.c.l.b16 %v1609
        %v5087 = vunpack.c.l.b16 %v1610
        %v5088 = vunpack.c.l.b16 %v1611
        %v5089 = vunpack.c.l.b16 %v1612
        %v5090 = vunpack.c.l.b16 %v1613
        %v5091 = vunpack.c.l.b16 %v1614
        %v5092 = vunpack.c.l.b16 %v1615
        %v5093 = vunpack.c.l.b16 %v1616
        %v5094 = vunpack.c.l.b16 %v1617
        %v5095 = vunpack.c.l.b16 %v1618
        %v5096 = vunpack.c.l.b16 %v1619
        %v5097 = vunpack.c.l.b16 %v1620
        %v5098 = vunpack.c.l.b16 %v1621
        %v5099 = vunpack.c.l.b16 %v1622
        %v5100 = vunpack.c.l.b16 %v1623
        %v5101 = vpack.c.b16 %v5086, %v5085
        %v5102 = vpack.c.b16 %v5088, %v5087
        %v5103 = vpack.c.b16 %v5090, %v5089
        %v5104 = vpack.c.b16 %v5092, %v5091
        %v5105 = vpack.c.b16 %v5094, %v5093
        %v5106 = vpack.c.b16 %v5096, %v5095
        %v5107 = vpack.c.b16 %v5098, %v5097
        %v5108 = vpack.c.b16 %v5100, %v5099
        %5117 = vmatprep.subr.bf16.mxu0 0
        %5118 = vmatpush1.bf16.msra.mxu0 %v5101
        %5119 = vmatprep.subr.bf16.mxu0 0
        %5120 = vmatpush1.bf16.msra.mxu0 %v5102
        %5121 = vmatprep.subr.bf16.mxu0 0
        %5122 = vmatpush1.bf16.msra.mxu0 %v5103
        %5123 = vmatprep.subr.bf16.mxu0 0
        %5124 = vmatpush1.bf16.msra.mxu0 %v5104
        %5125 = vmatprep.subr.bf16.mxu0 0
        %5126 = vmatpush1.bf16.msra.mxu0 %v5105
        %5127 = vmatprep.subr.bf16.mxu0 0
        %5128 = vmatpush1.bf16.msra.mxu0 %v5106
        %5129 = vmatprep.subr.bf16.mxu0 0
        %5130 = vmatpush1.bf16.msra.mxu0 %v5107
        %5131 = vmatprep.subr.bf16.mxu0 0
        %5132 = vmatpush1.bf16.msra.mxu0 %v5108
        %5133 = vmatprep.subr.bf16.mxu0 0
        %5134 = vmatpush1.bf16.msra.mxu0 0
        %5135 = vmatprep.subr.bf16.mxu0 0
        %5136 = vmatpush1.bf16.msra.mxu0 0
        %5137 = vmatprep.subr.bf16.mxu0 0
        %5138 = vmatpush1.bf16.msra.mxu0 0
        %5139 = vmatprep.subr.bf16.mxu0 0
        %5140 = vmatpush1.bf16.msra.mxu0 0
        %5141 = vmatprep.subr.bf16.mxu0 0
        %5142 = vmatpush1.bf16.msra.mxu0 0
        %5143 = vmatprep.subr.bf16.mxu0 0
        %5144 = vmatpush1.bf16.msra.mxu0 0
        %5145 = vmatprep.subr.bf16.mxu0 0
        %5146 = vmatpush1.bf16.msra.mxu0 0
        %5147 = vmatprep.subr.bf16.mxu0 0
        %5148 = vmatpush1.bf16.msra.mxu0 0
        %5149 = vmatprep.mubr.bf16.mxu0 0
        %5150 = vmatmul.mubr.bf16.gmra.mrb[0].mxu0 %v4626
        %v5151 = vpop.f32.mrb[0].mxu0
        %v5152 = vadd.f32 0.0, %v5151
        %v5153 = vpop.f32.mrb[0].mxu0
        %v5154 = vpop.f32.mrb[0].mxu0
        %v5155 = vadd.f32 0.0, %v5154
        %v5156 = vpop.f32.mrb[0].mxu0
        %5157 = vmatprep.mubr.bf16.mxu0 0
        %5158 = vmatmul.mubr.bf16.gmra.mrb[0].mxu0 %v4627
        %v5159 = vpop.f32.mrb[0].mxu0
        %v5160 = vadd.f32 0.0, %v5159
        %v5161 = vpop.f32.mrb[0].mxu0
        %v5162 = vpop.f32.mrb[0].mxu0
        %v5163 = vadd.f32 0.0, %v5162
        %v5164 = vpop.f32.mrb[0].mxu0
        %5165 = vmatprep.mubr.bf16.mxu0 0
        %5166 = vmatmul.mubr.bf16.gmra.mrb[0].mxu0 %v4628
        %v5167 = vpop.f32.mrb[0].mxu0
        %v5168 = vadd.f32 0.0, %v5167
        %v5169 = vpop.f32.mrb[0].mxu0
        %v5170 = vpop.f32.mrb[0].mxu0
        %v5171 = vadd.f32 0.0, %v5170
        %v5172 = vpop.f32.mrb[0].mxu0
        %5173 = vmatprep.mubr.bf16.mxu0 0
        %5174 = vmatmul.mubr.bf16.gmra.mrb[0].mxu0 %v4629
        %v5175 = vpop.f32.mrb[0].mxu0
        %v5176 = vadd.f32 0.0, %v5175
        %v5177 = vpop.f32.mrb[0].mxu0
        %v5178 = vpop.f32.mrb[0].mxu0
        %v5179 = vadd.f32 0.0, %v5178
        %v5180 = vpop.f32.mrb[0].mxu0
        %5181 = vmatprep.mubr.bf16.mxu0 0
        %5182 = vmatmul.mubr.bf16.gmra.mrb[0].mxu0 %v4630
        %v5183 = vpop.f32.mrb[0].mxu0
        %v5184 = vadd.f32 0.0, %v5183
        %v5185 = vpop.f32.mrb[0].mxu0
        %v5186 = vpop.f32.mrb[0].mxu0
        %v5187 = vadd.f32 0.0, %v5186
        %v5188 = vpop.f32.mrb[0].mxu0
        %5189 = vmatprep.mubr.bf16.mxu0 0
        %5190 = vmatmul.mubr.bf16.gmra.mrb[0].mxu0 %v4631
        %v5191 = vpop.f32.mrb[0].mxu0
        %v5192 = vadd.f32 0.0, %v5191
        %v5193 = vpop.f32.mrb[0].mxu0
        %v5194 = vpop.f32.mrb[0].mxu0
        %v5195 = vadd.f32 0.0, %v5194
        %v5196 = vpop.f32.mrb[0].mxu0
        %5197 = vmatprep.mubr.bf16.mxu0 0
        %5198 = vmatmul.mubr.bf16.gmra.mrb[0].mxu0 %v4632
        %v5199 = vpop.f32.mrb[0].mxu0
        %v5200 = vadd.f32 0.0, %v5199
        %v5201 = vpop.f32.mrb[0].mxu0
        %v5202 = vpop.f32.mrb[0].mxu0
        %v5203 = vadd.f32 0.0, %v5202
        %v5204 = vpop.f32.mrb[0].mxu0
        %5205 = vmatprep.mubr.bf16.mxu0 0
        %5206 = vmatmul.mubr.bf16.gmra.mrb[0].mxu0 %v4633
        %v5207 = vpop.f32.mrb[0].mxu0
        %v5208 = vadd.f32 0.0, %v5207
        %v5209 = vpop.f32.mrb[0].mxu0
        %v5210 = vpop.f32.mrb[0].mxu0
        %v5211 = vadd.f32 0.0, %v5210
        %v5212 = vpop.f32.mrb[0].mxu0
        %5213 = vdwg.mxu0
        %v5214 = vadd.f32 %v4538, %v4717
        %v5215 = vadd.f32 %v4539, %v4720
        %v5216 = vadd.f32 %v4540, %v4725
        %v5217 = vadd.f32 %v4541, %v4728
        %v5218 = vadd.f32 %v4542, %v4733
        %v5219 = vadd.f32 %v4543, %v4736
        %v5220 = vadd.f32 %v4544, %v4741
        %v5221 = vadd.f32 %v4545, %v4744
        %v5222 = vadd.f32 %v4546, %v4749
        %v5223 = vadd.f32 %v4547, %v4752
        %v5224 = vadd.f32 %v4548, %v4757
        %v5225 = vadd.f32 %v4549, %v4760
        %v5226 = vadd.f32 %v4550, %v4765
        %v5227 = vadd.f32 %v4551, %v4768
        %v5228 = vadd.f32 %v4552, %v4773
        %v5229 = vadd.f32 %v4553, %v4776
        %v5230 = vadd.f32 %v4554, %v4862
        %v5231 = vadd.f32 %v4555, %v4865
        %v5232 = vadd.f32 %v4556, %v4870
        %v5233 = vadd.f32 %v4557, %v4873
        %v5234 = vadd.f32 %v4558, %v4878
        %v5235 = vadd.f32 %v4559, %v4881
        %v5236 = vadd.f32 %v4560, %v4886
        %v5237 = vadd.f32 %v4561, %v4889
        %v5238 = vadd.f32 %v4562, %v4894
        %v5239 = vadd.f32 %v4563, %v4897
        %v5240 = vadd.f32 %v4564, %v4902
        %v5241 = vadd.f32 %v4565, %v4905
        %v5242 = vadd.f32 %v4566, %v4910
        %v5243 = vadd.f32 %v4567, %v4913
        %v5244 = vadd.f32 %v4568, %v4918
        %v5245 = vadd.f32 %v4569, %v4921
        %v5246 = vadd.f32 %v4570, %v5007
        %v5247 = vadd.f32 %v4571, %v5010
        %v5248 = vadd.f32 %v4572, %v5015
        %v5249 = vadd.f32 %v4573, %v5018
        %v5250 = vadd.f32 %v4574, %v5023
        %v5251 = vadd.f32 %v4575, %v5026
        %v5252 = vadd.f32 %v4576, %v5031
        %v5253 = vadd.f32 %v4577, %v5034
        %v5254 = vadd.f32 %v4578, %v5039
        %v5255 = vadd.f32 %v4579, %v5042
        %v5256 = vadd.f32 %v4580, %v5047
        %v5257 = vadd.f32 %v4581, %v5050
        %v5258 = vadd.f32 %v4582, %v5055
        %v5259 = vadd.f32 %v4583, %v5058
        %v5260 = vadd.f32 %v4584, %v5063
        %v5261 = vadd.f32 %v4585, %v5066
        %v5262 = vadd.f32 %v4586, %v5152
        %v5263 = vadd.f32 %v4587, %v5155
        %v5264 = vadd.f32 %v4588, %v5160
        %v5265 = vadd.f32 %v4589, %v5163
        %v5266 = vadd.f32 %v4590, %v5168
        %v5267 = vadd.f32 %v4591, %v5171
        %v5268 = vadd.f32 %v4592, %v5176
        %v5269 = vadd.f32 %v4593, %v5179
        %v5270 = vadd.f32 %v4594, %v5184
        %v5271 = vadd.f32 %v4595, %v5187
        %v5272 = vadd.f32 %v4596, %v5192
        %v5273 = vadd.f32 %v4597, %v5195
        %v5274 = vadd.f32 %v4598, %v5200
        %v5275 = vadd.f32 %v4599, %v5203
        %v5276 = vadd.f32 %v4600, %v5208
        %v5277 = vadd.f32 %v4601, %v5211
        %5278 = vst.msk [vmem:[#allocation4] sm:$0xff] %vm1704, %v5214
        %5279 = vst.msk [vmem:[#allocation4 + $0x8] sm:$0xff] %vm1704, %v5215
        %5280 = vst.msk [vmem:[#allocation4 + $0x10] sm:$0xff] %vm1704, %v5216
        %5281 = vst.msk [vmem:[#allocation4 + $0x18] sm:$0xff] %vm1704, %v5217
        %5282 = vst.msk [vmem:[#allocation4 + $0x20] sm:$0xff] %vm1704, %v5218
        %5283 = vst.msk [vmem:[#allocation4 + $0x28] sm:$0xff] %vm1704, %v5219
        %5284 = vst.msk [vmem:[#allocation4 + $0x30] sm:$0xff] %vm1704, %v5220
        %5285 = vst.msk [vmem:[#allocation4 + $0x38] sm:$0xff] %vm1704, %v5221
        %5286 = vst.msk [vmem:[#allocation4 + $0x40] sm:$0xff] %vm1704, %v5222
        %5287 = vst.msk [vmem:[#allocation4 + $0x48] sm:$0xff] %vm1704, %v5223
        %5288 = vst.msk [vmem:[#allocation4 + $0x50] sm:$0xff] %vm1704, %v5224
        %5289 = vst.msk [vmem:[#allocation4 + $0x58] sm:$0xff] %vm1704, %v5225
        %5290 = vst.msk [vmem:[#allocation4 + $0x60] sm:$0xff] %vm1704, %v5226
        %5291 = vst.msk [vmem:[#allocation4 + $0x68] sm:$0xff] %vm1704, %v5227
        %5292 = vst.msk [vmem:[#allocation4 + $0x70] sm:$0xff] %vm1704, %v5228
        %5293 = vst.msk [vmem:[#allocation4 + $0x78] sm:$0xff] %vm1704, %v5229
        %5294 = vst.msk [vmem:[#allocation4 + $0x80] sm:$0xff] %vm1704, %v5230
        %5295 = vst.msk [vmem:[#allocation4 + $0x88] sm:$0xff] %vm1704, %v5231
        %5296 = vst.msk [vmem:[#allocation4 + $0x90] sm:$0xff] %vm1704, %v5232
        %5297 = vst.msk [vmem:[#allocation4 + $0x98] sm:$0xff] %vm1704, %v5233
        %5298 = vst.msk [vmem:[#allocation4 + $0xa0] sm:$0xff] %vm1704, %v5234
        %5299 = vst.msk [vmem:[#allocation4 + $0xa8] sm:$0xff] %vm1704, %v5235
        %5300 = vst.msk [vmem:[#allocation4 + $0xb0] sm:$0xff] %vm1704, %v5236
        %5301 = vst.msk [vmem:[#allocation4 + $0xb8] sm:$0xff] %vm1704, %v5237
        %5302 = vst.msk [vmem:[#allocation4 + $0xc0] sm:$0xff] %vm1704, %v5238
        %5303 = vst.msk [vmem:[#allocation4 + $0xc8] sm:$0xff] %vm1704, %v5239
        %5304 = vst.msk [vmem:[#allocation4 + $0xd0] sm:$0xff] %vm1704, %v5240
        %5305 = vst.msk [vmem:[#allocation4 + $0xd8] sm:$0xff] %vm1704, %v5241
        %5306 = vst.msk [vmem:[#allocation4 + $0xe0] sm:$0xff] %vm1704, %v5242
        %5307 = vst.msk [vmem:[#allocation4 + $0xe8] sm:$0xff] %vm1704, %v5243
        %5308 = vst.msk [vmem:[#allocation4 + $0xf0] sm:$0xff] %vm1704, %v5244
        %5309 = vst.msk [vmem:[#allocation4 + $0xf8] sm:$0xff] %vm1704, %v5245
        %5310 = vst.msk [vmem:[#allocation4 + $0x100] sm:$0xff] %vm1704, %v5246
        %5311 = vst.msk [vmem:[#allocation4 + $0x108] sm:$0xff] %vm1704, %v5247
        %5312 = vst.msk [vmem:[#allocation4 + $0x110] sm:$0xff] %vm1704, %v5248
        %5313 = vst.msk [vmem:[#allocation4 + $0x118] sm:$0xff] %vm1704, %v5249
        %5314 = vst.msk [vmem:[#allocation4 + $0x120] sm:$0xff] %vm1704, %v5250
        %5315 = vst.msk [vmem:[#allocation4 + $0x128] sm:$0xff] %vm1704, %v5251
        %5316 = vst.msk [vmem:[#allocation4 + $0x130] sm:$0xff] %vm1704, %v5252
        %5317 = vst.msk [vmem:[#allocation4 + $0x138] sm:$0xff] %vm1704, %v5253
        %5318 = vst.msk [vmem:[#allocation4 + $0x140] sm:$0xff] %vm1704, %v5254
        %5319 = vst.msk [vmem:[#allocation4 + $0x148] sm:$0xff] %vm1704, %v5255
        %5320 = vst.msk [vmem:[#allocation4 + $0x150] sm:$0xff] %vm1704, %v5256
        %5321 = vst.msk [vmem:[#allocation4 + $0x158] sm:$0xff] %vm1704, %v5257
        %5322 = vst.msk [vmem:[#allocation4 + $0x160] sm:$0xff] %vm1704, %v5258
        %5323 = vst.msk [vmem:[#allocation4 + $0x168] sm:$0xff] %vm1704, %v5259
        %5324 = vst.msk [vmem:[#allocation4 + $0x170] sm:$0xff] %vm1704, %v5260
        %5325 = vst.msk [vmem:[#allocation4 + $0x178] sm:$0xff] %vm1704, %v5261
        %5326 = vst.msk [vmem:[#allocation4 + $0x180] sm:$0xff] %vm1704, %v5262
        %5327 = vst.msk [vmem:[#allocation4 + $0x188] sm:$0xff] %vm1704, %v5263
        %5328 = vst.msk [vmem:[#allocation4 + $0x190] sm:$0xff] %vm1704, %v5264
        %5329 = vst.msk [vmem:[#allocation4 + $0x198] sm:$0xff] %vm1704, %v5265
        %5330 = vst.msk [vmem:[#allocation4 + $0x1a0] sm:$0xff] %vm1704, %v5266
        %5331 = vst.msk [vmem:[#allocation4 + $0x1a8] sm:$0xff] %vm1704, %v5267
        %5332 = vst.msk [vmem:[#allocation4 + $0x1b0] sm:$0xff] %vm1704, %v5268
        %5333 = vst.msk [vmem:[#allocation4 + $0x1b8] sm:$0xff] %vm1704, %v5269
        %5334 = vst.msk [vmem:[#allocation4 + $0x1c0] sm:$0xff] %vm1704, %v5270
        %5335 = vst.msk [vmem:[#allocation4 + $0x1c8] sm:$0xff] %vm1704, %v5271
        %5336 = vst.msk [vmem:[#allocation4 + $0x1d0] sm:$0xff] %vm1704, %v5272
        %5337 = vst.msk [vmem:[#allocation4 + $0x1d8] sm:$0xff] %vm1704, %v5273
        %5338 = vst.msk [vmem:[#allocation4 + $0x1e0] sm:$0xff] %vm1704, %v5274
        %5339 = vst.msk [vmem:[#allocation4 + $0x1e8] sm:$0xff] %vm1704, %v5275
        %5340 = vst.msk [vmem:[#allocation4 + $0x1f0] sm:$0xff] %vm1704, %v5276
        %5341 = vst.msk [vmem:[#allocation4 + $0x1f8] sm:$0xff] %vm1704, %v5277
        %5342 = vst.msk [vmem:[#allocation2] sm:$0xff] %vm4089, %v3001
        %5343 = vst.msk [vmem:[#allocation2 + $0x8] sm:$0xff] %vm4089, %v3002
        %5344 = vst.msk [vmem:[#allocation2 + $0x10] sm:$0xff] %vm4089, %v3003
        %5345 = vst.msk [vmem:[#allocation2 + $0x18] sm:$0xff] %vm4089, %v3004
        %5346 = vst.msk [vmem:[#allocation2 + $0x20] sm:$0xff] %vm4089, %v3005
        %5347 = vst.msk [vmem:[#allocation2 + $0x28] sm:$0xff] %vm4089, %v3006
        %5348 = vst.msk [vmem:[#allocation2 + $0x30] sm:$0xff] %vm4089, %v3007
        %5349 = vst.msk [vmem:[#allocation2 + $0x38] sm:$0xff] %vm4089, %v3008
        %5350 = vst.msk [vmem:[#allocation2 + $0x40] sm:$0xff] %vm4089, %v3009
        %5351 = vst.msk [vmem:[#allocation2 + $0x48] sm:$0xff] %vm4089, %v3010
        %5352 = vst.msk [vmem:[#allocation2 + $0x50] sm:$0xff] %vm4089, %v3011
        %5353 = vst.msk [vmem:[#allocation2 + $0x58] sm:$0xff] %vm4089, %v3012
        %5354 = vst.msk [vmem:[#allocation2 + $0x60] sm:$0xff] %vm4089, %v3013
        %5355 = vst.msk [vmem:[#allocation2 + $0x68] sm:$0xff] %vm4089, %v3014
        %5356 = vst.msk [vmem:[#allocation2 + $0x70] sm:$0xff] %vm4089, %v3015
        %5357 = vst.msk [vmem:[#allocation2 + $0x78] sm:$0xff] %vm4089, %v3016
        %5358 = vst.msk [vmem:[#allocation2 + $0x80] sm:$0xff] %vm4089, %v3017
        %5359 = vst.msk [vmem:[#allocation2 + $0x88] sm:$0xff] %vm4089, %v3018
        %5360 = vst.msk [vmem:[#allocation2 + $0x90] sm:$0xff] %vm4089, %v3019
        %5361 = vst.msk [vmem:[#allocation2 + $0x98] sm:$0xff] %vm4089, %v3020
        %5362 = vst.msk [vmem:[#allocation2 + $0xa0] sm:$0xff] %vm4089, %v3021
        %5363 = vst.msk [vmem:[#allocation2 + $0xa8] sm:$0xff] %vm4089, %v3022
        %5364 = vst.msk [vmem:[#allocation2 + $0xb0] sm:$0xff] %vm4089, %v3023
        %5365 = vst.msk [vmem:[#allocation2 + $0xb8] sm:$0xff] %vm4089, %v3024
        %5366 = vst.msk [vmem:[#allocation2 + $0xc0] sm:$0xff] %vm4089, %v3025
        %5367 = vst.msk [vmem:[#allocation2 + $0xc8] sm:$0xff] %vm4089, %v3026
        %5368 = vst.msk [vmem:[#allocation2 + $0xd0] sm:$0xff] %vm4089, %v3027
        %5369 = vst.msk [vmem:[#allocation2 + $0xd8] sm:$0xff] %vm4089, %v3028
        %5370 = vst.msk [vmem:[#allocation2 + $0xe0] sm:$0xff] %vm4089, %v3029
        %5371 = vst.msk [vmem:[#allocation2 + $0xe8] sm:$0xff] %vm4089, %v3030
        %5372 = vst.msk [vmem:[#allocation2 + $0xf0] sm:$0xff] %vm4089, %v3031
        %5373 = vst.msk [vmem:[#allocation2 + $0xf8] sm:$0xff] %vm4089, %v3032
        %5374 = vst.msk [vmem:[#allocation2 + $0x100] sm:$0xff] %vm4089, %v3033
        %5375 = vst.msk [vmem:[#allocation2 + $0x108] sm:$0xff] %vm4089, %v3034
        %5376 = vst.msk [vmem:[#allocation2 + $0x110] sm:$0xff] %vm4089, %v3035
        %5377 = vst.msk [vmem:[#allocation2 + $0x118] sm:$0xff] %vm4089, %v3036
        %5378 = vst.msk [vmem:[#allocation2 + $0x120] sm:$0xff] %vm4089, %v3037
        %5379 = vst.msk [vmem:[#allocation2 + $0x128] sm:$0xff] %vm4089, %v3038
        %5380 = vst.msk [vmem:[#allocation2 + $0x130] sm:$0xff] %vm4089, %v3039
        %5381 = vst.msk [vmem:[#allocation2 + $0x138] sm:$0xff] %vm4089, %v3040
        %5382 = vst.msk [vmem:[#allocation2 + $0x140] sm:$0xff] %vm4089, %v3041
        %5383 = vst.msk [vmem:[#allocation2 + $0x148] sm:$0xff] %vm4089, %v3042
        %5384 = vst.msk [vmem:[#allocation2 + $0x150] sm:$0xff] %vm4089, %v3043
        %5385 = vst.msk [vmem:[#allocation2 + $0x158] sm:$0xff] %vm4089, %v3044
        %5386 = vst.msk [vmem:[#allocation2 + $0x160] sm:$0xff] %vm4089, %v3045
        %5387 = vst.msk [vmem:[#allocation2 + $0x168] sm:$0xff] %vm4089, %v3046
        %5388 = vst.msk [vmem:[#allocation2 + $0x170] sm:$0xff] %vm4089, %v3047
        %5389 = vst.msk [vmem:[#allocation2 + $0x178] sm:$0xff] %vm4089, %v3048
        %5390 = vst.msk [vmem:[#allocation2 + $0x180] sm:$0xff] %vm4089, %v3049
        %5391 = vst.msk [vmem:[#allocation2 + $0x188] sm:$0xff] %vm4089, %v3050
        %5392 = vst.msk [vmem:[#allocation2 + $0x190] sm:$0xff] %vm4089, %v3051
        %5393 = vst.msk [vmem:[#allocation2 + $0x198] sm:$0xff] %vm4089, %v3052
        %5394 = vst.msk [vmem:[#allocation2 + $0x1a0] sm:$0xff] %vm4089, %v3053
        %5395 = vst.msk [vmem:[#allocation2 + $0x1a8] sm:$0xff] %vm4089, %v3054
        %5396 = vst.msk [vmem:[#allocation2 + $0x1b0] sm:$0xff] %vm4089, %v3055
        %5397 = vst.msk [vmem:[#allocation2 + $0x1b8] sm:$0xff] %vm4089, %v3056
        %5398 = vst.msk [vmem:[#allocation2 + $0x1c0] sm:$0xff] %vm4089, %v3057
        %5399 = vst.msk [vmem:[#allocation2 + $0x1c8] sm:$0xff] %vm4089, %v3058
        %5400 = vst.msk [vmem:[#allocation2 + $0x1d0] sm:$0xff] %vm4089, %v3059
        %5401 = vst.msk [vmem:[#allocation2 + $0x1d8] sm:$0xff] %vm4089, %v3060
        %5402 = vst.msk [vmem:[#allocation2 + $0x1e0] sm:$0xff] %vm4089, %v3061
        %5403 = vst.msk [vmem:[#allocation2 + $0x1e8] sm:$0xff] %vm4089, %v3062
        %5404 = vst.msk [vmem:[#allocation2 + $0x1f0] sm:$0xff] %vm4089, %v3063
        %5405 = vst.msk [vmem:[#allocation2 + $0x1f8] sm:$0xff] %vm4089, %v3064
        %p5406 = scmp.eq.s32.totalorder %s25, 1
        // Predicated region
        $region202: #{tpu_custom_call.1} parent=180 // pred_check
          %p5407 = pneg %p5406
        $region203: #{tpu_custom_call.1} parent=180 // pred_check_branch
          %5409 = sbr.rel (%p5407) target = $region205
        $region204: #{tpu_custom_call.1} parent=180 // pred_region
          %v5410 = vld [vmem:[#allocation3] sm:$0xff]
          %v5411 = vld [vmem:[#allocation3 + $0x8] sm:$0xff]
          %v5412 = vld [vmem:[#allocation3 + $0x10] sm:$0xff]
          %v5413 = vld [vmem:[#allocation3 + $0x18] sm:$0xff]
          %v5414 = vld [vmem:[#allocation3 + $0x20] sm:$0xff]
          %v5415 = vld [vmem:[#allocation3 + $0x28] sm:$0xff]
          %v5416 = vld [vmem:[#allocation3 + $0x30] sm:$0xff]
          %v5417 = vld [vmem:[#allocation3 + $0x38] sm:$0xff]
          %v5418 = vld [vmem:[#allocation3 + $0x40] sm:$0xff]
          %v5419 = vld [vmem:[#allocation3 + $0x48] sm:$0xff]
          %v5420 = vld [vmem:[#allocation3 + $0x50] sm:$0xff]
          %v5421 = vld [vmem:[#allocation3 + $0x58] sm:$0xff]
          %v5422 = vld [vmem:[#allocation3 + $0x60] sm:$0xff]
          %v5423 = vld [vmem:[#allocation3 + $0x68] sm:$0xff]
          %v5424 = vld [vmem:[#allocation3 + $0x70] sm:$0xff]
          %v5425 = vld [vmem:[#allocation3 + $0x78] sm:$0xff]
          %v5426 = vld [vmem:[#allocation3 + $0x80] sm:$0xff]
          %v5427 = vld [vmem:[#allocation3 + $0x88] sm:$0xff]
          %v5428 = vld [vmem:[#allocation3 + $0x90] sm:$0xff]
          %v5429 = vld [vmem:[#allocation3 + $0x98] sm:$0xff]
          %v5430 = vld [vmem:[#allocation3 + $0xa0] sm:$0xff]
          %v5431 = vld [vmem:[#allocation3 + $0xa8] sm:$0xff]
          %v5432 = vld [vmem:[#allocation3 + $0xb0] sm:$0xff]
          %v5433 = vld [vmem:[#allocation3 + $0xb8] sm:$0xff]
          %v5434 = vld [vmem:[#allocation3 + $0xc0] sm:$0xff]
          %v5435 = vld [vmem:[#allocation3 + $0xc8] sm:$0xff]
          %v5436 = vld [vmem:[#allocation3 + $0xd0] sm:$0xff]
          %v5437 = vld [vmem:[#allocation3 + $0xd8] sm:$0xff]
          %v5438 = vld [vmem:[#allocation3 + $0xe0] sm:$0xff]
          %v5439 = vld [vmem:[#allocation3 + $0xe8] sm:$0xff]
          %v5440 = vld [vmem:[#allocation3 + $0xf0] sm:$0xff]
          %v5441 = vld [vmem:[#allocation3 + $0xf8] sm:$0xff]
          %v5442 = vld [vmem:[#allocation3 + $0x100] sm:$0xff]
          %v5443 = vld [vmem:[#allocation3 + $0x108] sm:$0xff]
          %v5444 = vld [vmem:[#allocation3 + $0x110] sm:$0xff]
          %v5445 = vld [vmem:[#allocation3 + $0x118] sm:$0xff]
          %v5446 = vld [vmem:[#allocation3 + $0x120] sm:$0xff]
          %v5447 = vld [vmem:[#allocation3 + $0x128] sm:$0xff]
          %v5448 = vld [vmem:[#allocation3 + $0x130] sm:$0xff]
          %v5449 = vld [vmem:[#allocation3 + $0x138] sm:$0xff]
          %v5450 = vld [vmem:[#allocation3 + $0x140] sm:$0xff]
          %v5451 = vld [vmem:[#allocation3 + $0x148] sm:$0xff]
          %v5452 = vld [vmem:[#allocation3 + $0x150] sm:$0xff]
          %v5453 = vld [vmem:[#allocation3 + $0x158] sm:$0xff]
          %v5454 = vld [vmem:[#allocation3 + $0x160] sm:$0xff]
          %v5455 = vld [vmem:[#allocation3 + $0x168] sm:$0xff]
          %v5456 = vld [vmem:[#allocation3 + $0x170] sm:$0xff]
          %v5457 = vld [vmem:[#allocation3 + $0x178] sm:$0xff]
          %v5458 = vld [vmem:[#allocation3 + $0x180] sm:$0xff]
          %v5459 = vld [vmem:[#allocation3 + $0x188] sm:$0xff]
          %v5460 = vld [vmem:[#allocation3 + $0x190] sm:$0xff]
          %v5461 = vld [vmem:[#allocation3 + $0x198] sm:$0xff]
          %v5462 = vld [vmem:[#allocation3 + $0x1a0] sm:$0xff]
          %v5463 = vld [vmem:[#allocation3 + $0x1a8] sm:$0xff]
          %v5464 = vld [vmem:[#allocation3 + $0x1b0] sm:$0xff]
          %v5465 = vld [vmem:[#allocation3 + $0x1b8] sm:$0xff]
          %v5466 = vld [vmem:[#allocation3 + $0x1c0] sm:$0xff]
          %v5467 = vld [vmem:[#allocation3 + $0x1c8] sm:$0xff]
          %v5468 = vld [vmem:[#allocation3 + $0x1d0] sm:$0xff]
          %v5469 = vld [vmem:[#allocation3 + $0x1d8] sm:$0xff]
          %v5470 = vld [vmem:[#allocation3 + $0x1e0] sm:$0xff]
          %v5471 = vld [vmem:[#allocation3 + $0x1e8] sm:$0xff]
          %v5472 = vld [vmem:[#allocation3 + $0x1f0] sm:$0xff]
          %v5473 = vld [vmem:[#allocation3 + $0x1f8] sm:$0xff]
          %v5474 = vrcp.pop %v5410
          %v5475 = vrcp.pop %v5411
          %v5476 = vrcp.pop %v5412
          %v5477 = vrcp.pop %v5413
          %v5478 = vrcp.pop %v5414
          %v5479 = vrcp.pop %v5415
          %v5480 = vrcp.pop %v5416
          %v5481 = vrcp.pop %v5417
          %v5482 = vrcp.pop %v5418
          %v5483 = vrcp.pop %v5419
          %v5484 = vrcp.pop %v5420
          %v5485 = vrcp.pop %v5421
          %v5486 = vrcp.pop %v5422
          %v5487 = vrcp.pop %v5423
          %v5488 = vrcp.pop %v5424
          %v5489 = vrcp.pop %v5425
          %v5490 = vrcp.pop %v5426
          %v5491 = vrcp.pop %v5427
          %v5492 = vrcp.pop %v5428
          %v5493 = vrcp.pop %v5429
          %v5494 = vrcp.pop %v5430
          %v5495 = vrcp.pop %v5431
          %v5496 = vrcp.pop %v5432
          %v5497 = vrcp.pop %v5433
          %v5498 = vrcp.pop %v5434
          %v5499 = vrcp.pop %v5435
          %v5500 = vrcp.pop %v5436
          %v5501 = vrcp.pop %v5437
          %v5502 = vrcp.pop %v5438
          %v5503 = vrcp.pop %v5439
          %v5504 = vrcp.pop %v5440
          %v5505 = vrcp.pop %v5441
          %v5506 = vrcp.pop %v5442
          %v5507 = vrcp.pop %v5443
          %v5508 = vrcp.pop %v5444
          %v5509 = vrcp.pop %v5445
          %v5510 = vrcp.pop %v5446
          %v5511 = vrcp.pop %v5447
          %v5512 = vrcp.pop %v5448
          %v5513 = vrcp.pop %v5449
          %v5514 = vrcp.pop %v5450
          %v5515 = vrcp.pop %v5451
          %v5516 = vrcp.pop %v5452
          %v5517 = vrcp.pop %v5453
          %v5518 = vrcp.pop %v5454
          %v5519 = vrcp.pop %v5455
          %v5520 = vrcp.pop %v5456
          %v5521 = vrcp.pop %v5457
          %v5522 = vrcp.pop %v5458
          %v5523 = vrcp.pop %v5459
          %v5524 = vrcp.pop %v5460
          %v5525 = vrcp.pop %v5461
          %v5526 = vrcp.pop %v5462
          %v5527 = vrcp.pop %v5463
          %v5528 = vrcp.pop %v5464
          %v5529 = vrcp.pop %v5465
          %v5530 = vrcp.pop %v5466
          %v5531 = vrcp.pop %v5467
          %v5532 = vrcp.pop %v5468
          %v5533 = vrcp.pop %v5469
          %v5534 = vrcp.pop %v5470
          %v5535 = vrcp.pop %v5471
          %v5536 = vrcp.pop %v5472
          %v5537 = vrcp.pop %v5473
          %v5538 = vld [vmem:[#allocation4] sm:$0xff]
          %v5539 = vld [vmem:[#allocation4 + $0x8] sm:$0xff]
          %v5540 = vld [vmem:[#allocation4 + $0x10] sm:$0xff]
          %v5541 = vld [vmem:[#allocation4 + $0x18] sm:$0xff]
          %v5542 = vld [vmem:[#allocation4 + $0x20] sm:$0xff]
          %v5543 = vld [vmem:[#allocation4 + $0x28] sm:$0xff]
          %v5544 = vld [vmem:[#allocation4 + $0x30] sm:$0xff]
          %v5545 = vld [vmem:[#allocation4 + $0x38] sm:$0xff]
          %v5546 = vld [vmem:[#allocation4 + $0x40] sm:$0xff]
          %v5547 = vld [vmem:[#allocation4 + $0x48] sm:$0xff]
          %v5548 = vld [vmem:[#allocation4 + $0x50] sm:$0xff]
          %v5549 = vld [vmem:[#allocation4 + $0x58] sm:$0xff]
          %v5550 = vld [vmem:[#allocation4 + $0x60] sm:$0xff]
          %v5551 = vld [vmem:[#allocation4 + $0x68] sm:$0xff]
          %v5552 = vld [vmem:[#allocation4 + $0x70] sm:$0xff]
          %v5553 = vld [vmem:[#allocation4 + $0x78] sm:$0xff]
          %v5554 = vld [vmem:[#allocation4 + $0x80] sm:$0xff]
          %v5555 = vld [vmem:[#allocation4 + $0x88] sm:$0xff]
          %v5556 = vld [vmem:[#allocation4 + $0x90] sm:$0xff]
          %v5557 = vld [vmem:[#allocation4 + $0x98] sm:$0xff]
          %v5558 = vld [vmem:[#allocation4 + $0xa0] sm:$0xff]
          %v5559 = vld [vmem:[#allocation4 + $0xa8] sm:$0xff]
          %v5560 = vld [vmem:[#allocation4 + $0xb0] sm:$0xff]
          %v5561 = vld [vmem:[#allocation4 + $0xb8] sm:$0xff]
          %v5562 = vld [vmem:[#allocation4 + $0xc0] sm:$0xff]
          %v5563 = vld [vmem:[#allocation4 + $0xc8] sm:$0xff]
          %v5564 = vld [vmem:[#allocation4 + $0xd0] sm:$0xff]
          %v5565 = vld [vmem:[#allocation4 + $0xd8] sm:$0xff]
          %v5566 = vld [vmem:[#allocation4 + $0xe0] sm:$0xff]
          %v5567 = vld [vmem:[#allocation4 + $0xe8] sm:$0xff]
          %v5568 = vld [vmem:[#allocation4 + $0xf0] sm:$0xff]
          %v5569 = vld [vmem:[#allocation4 + $0xf8] sm:$0xff]
          %v5570 = vld [vmem:[#allocation4 + $0x100] sm:$0xff]
          %v5571 = vld [vmem:[#allocation4 + $0x108] sm:$0xff]
          %v5572 = vld [vmem:[#allocation4 + $0x110] sm:$0xff]
          %v5573 = vld [vmem:[#allocation4 + $0x118] sm:$0xff]
          %v5574 = vld [vmem:[#allocation4 + $0x120] sm:$0xff]
          %v5575 = vld [vmem:[#allocation4 + $0x128] sm:$0xff]
          %v5576 = vld [vmem:[#allocation4 + $0x130] sm:$0xff]
          %v5577 = vld [vmem:[#allocation4 + $0x138] sm:$0xff]
          %v5578 = vld [vmem:[#allocation4 + $0x140] sm:$0xff]
          %v5579 = vld [vmem:[#allocation4 + $0x148] sm:$0xff]
          %v5580 = vld [vmem:[#allocation4 + $0x150] sm:$0xff]
          %v5581 = vld [vmem:[#allocation4 + $0x158] sm:$0xff]
          %v5582 = vld [vmem:[#allocation4 + $0x160] sm:$0xff]
          %v5583 = vld [vmem:[#allocation4 + $0x168] sm:$0xff]
          %v5584 = vld [vmem:[#allocation4 + $0x170] sm:$0xff]
          %v5585 = vld [vmem:[#allocation4 + $0x178] sm:$0xff]
          %v5586 = vld [vmem:[#allocation4 + $0x180] sm:$0xff]
          %v5587 = vld [vmem:[#allocation4 + $0x188] sm:$0xff]
          %v5588 = vld [vmem:[#allocation4 + $0x190] sm:$0xff]
          %v5589 = vld [vmem:[#allocation4 + $0x198] sm:$0xff]
          %v5590 = vld [vmem:[#allocation4 + $0x1a0] sm:$0xff]
          %v5591 = vld [vmem:[#allocation4 + $0x1a8] sm:$0xff]
          %v5592 = vld [vmem:[#allocation4 + $0x1b0] sm:$0xff]
          %v5593 = vld [vmem:[#allocation4 + $0x1b8] sm:$0xff]
          %v5594 = vld [vmem:[#allocation4 + $0x1c0] sm:$0xff]
          %v5595 = vld [vmem:[#allocation4 + $0x1c8] sm:$0xff]
          %v5596 = vld [vmem:[#allocation4 + $0x1d0] sm:$0xff]
          %v5597 = vld [vmem:[#allocation4 + $0x1d8] sm:$0xff]
          %v5598 = vld [vmem:[#allocation4 + $0x1e0] sm:$0xff]
          %v5599 = vld [vmem:[#allocation4 + $0x1e8] sm:$0xff]
          %v5600 = vld [vmem:[#allocation4 + $0x1f0] sm:$0xff]
          %v5601 = vld [vmem:[#allocation4 + $0x1f8] sm:$0xff]
          %5603 = vset.pattern.permute.xlu0 0
          %5604 = vperm.xlu0 %5603, %v5474
          %v5605 = vpop.permute.xlu0 %5604
          %5608 = vset.pattern.permute.xlu0 0
          %5609 = vperm.xlu0 %5608, %v5475
          %v5610 = vpop.permute.xlu0 %5609
          %5613 = vset.pattern.permute.xlu0 0
          %5614 = vperm.xlu0 %5613, %v5476
          %v5615 = vpop.permute.xlu0 %5614
          %5618 = vset.pattern.permute.xlu0 0
          %5619 = vperm.xlu0 %5618, %v5477
          %v5620 = vpop.permute.xlu0 %5619
          %5623 = vset.pattern.permute.xlu0 0
          %5624 = vperm.xlu0 %5623, %v5478
          %v5625 = vpop.permute.xlu0 %5624
          %5628 = vset.pattern.permute.xlu0 0
          %5629 = vperm.xlu0 %5628, %v5479
          %v5630 = vpop.permute.xlu0 %5629
          %5633 = vset.pattern.permute.xlu0 0
          %5634 = vperm.xlu0 %5633, %v5480
          %v5635 = vpop.permute.xlu0 %5634
          %5638 = vset.pattern.permute.xlu0 0
          %5639 = vperm.xlu0 %5638, %v5481
          %v5640 = vpop.permute.xlu0 %5639
          %5643 = vset.pattern.permute.xlu0 0
          %5644 = vperm.xlu0 %5643, %v5482
          %v5645 = vpop.permute.xlu0 %5644
          %5648 = vset.pattern.permute.xlu0 0
          %5649 = vperm.xlu0 %5648, %v5483
          %v5650 = vpop.permute.xlu0 %5649
          %5653 = vset.pattern.permute.xlu0 0
          %5654 = vperm.xlu0 %5653, %v5484
          %v5655 = vpop.permute.xlu0 %5654
          %5658 = vset.pattern.permute.xlu0 0
          %5659 = vperm.xlu0 %5658, %v5485
          %v5660 = vpop.permute.xlu0 %5659
          %5663 = vset.pattern.permute.xlu0 0
          %5664 = vperm.xlu0 %5663, %v5486
          %v5665 = vpop.permute.xlu0 %5664
          %5668 = vset.pattern.permute.xlu0 0
          %5669 = vperm.xlu0 %5668, %v5487
          %v5670 = vpop.permute.xlu0 %5669
          %5673 = vset.pattern.permute.xlu0 0
          %5674 = vperm.xlu0 %5673, %v5488
          %v5675 = vpop.permute.xlu0 %5674
          %5678 = vset.pattern.permute.xlu0 0
          %5679 = vperm.xlu0 %5678, %v5489
          %v5680 = vpop.permute.xlu0 %5679
          %5683 = vset.pattern.permute.xlu0 0
          %5684 = vperm.xlu0 %5683, %v5490
          %v5685 = vpop.permute.xlu0 %5684
          %5688 = vset.pattern.permute.xlu0 0
          %5689 = vperm.xlu0 %5688, %v5491
          %v5690 = vpop.permute.xlu0 %5689
          %5693 = vset.pattern.permute.xlu0 0
          %5694 = vperm.xlu0 %5693, %v5492
          %v5695 = vpop.permute.xlu0 %5694
          %5698 = vset.pattern.permute.xlu0 0
          %5699 = vperm.xlu0 %5698, %v5493
          %v5700 = vpop.permute.xlu0 %5699
          %5703 = vset.pattern.permute.xlu0 0
          %5704 = vperm.xlu0 %5703, %v5494
          %v5705 = vpop.permute.xlu0 %5704
          %5708 = vset.pattern.permute.xlu0 0
          %5709 = vperm.xlu0 %5708, %v5495
          %v5710 = vpop.permute.xlu0 %5709
          %5713 = vset.pattern.permute.xlu0 0
          %5714 = vperm.xlu0 %5713, %v5496
          %v5715 = vpop.permute.xlu0 %5714
          %5718 = vset.pattern.permute.xlu0 0
          %5719 = vperm.xlu0 %5718, %v5497
          %v5720 = vpop.permute.xlu0 %5719
          %5723 = vset.pattern.permute.xlu0 0
          %5724 = vperm.xlu0 %5723, %v5498
          %v5725 = vpop.permute.xlu0 %5724
          %5728 = vset.pattern.permute.xlu0 0
          %5729 = vperm.xlu0 %5728, %v5499
          %v5730 = vpop.permute.xlu0 %5729
          %5733 = vset.pattern.permute.xlu0 0
          %5734 = vperm.xlu0 %5733, %v5500
          %v5735 = vpop.permute.xlu0 %5734
          %5738 = vset.pattern.permute.xlu0 0
          %5739 = vperm.xlu0 %5738, %v5501
          %v5740 = vpop.permute.xlu0 %5739
          %5743 = vset.pattern.permute.xlu0 0
          %5744 = vperm.xlu0 %5743, %v5502
          %v5745 = vpop.permute.xlu0 %5744
          %5748 = vset.pattern.permute.xlu0 0
          %5749 = vperm.xlu0 %5748, %v5503
          %v5750 = vpop.permute.xlu0 %5749
          %5753 = vset.pattern.permute.xlu0 0
          %5754 = vperm.xlu0 %5753, %v5504
          %v5755 = vpop.permute.xlu0 %5754
          %5758 = vset.pattern.permute.xlu0 0
          %5759 = vperm.xlu0 %5758, %v5505
          %v5760 = vpop.permute.xlu0 %5759
          %5763 = vset.pattern.permute.xlu0 0
          %5764 = vperm.xlu0 %5763, %v5506
          %v5765 = vpop.permute.xlu0 %5764
          %5768 = vset.pattern.permute.xlu0 0
          %5769 = vperm.xlu0 %5768, %v5507
          %v5770 = vpop.permute.xlu0 %5769
          %5773 = vset.pattern.permute.xlu0 0
          %5774 = vperm.xlu0 %5773, %v5508
          %v5775 = vpop.permute.xlu0 %5774
          %5778 = vset.pattern.permute.xlu0 0
          %5779 = vperm.xlu0 %5778, %v5509
          %v5780 = vpop.permute.xlu0 %5779
          %5783 = vset.pattern.permute.xlu0 0
          %5784 = vperm.xlu0 %5783, %v5510
          %v5785 = vpop.permute.xlu0 %5784
          %5788 = vset.pattern.permute.xlu0 0
          %5789 = vperm.xlu0 %5788, %v5511
          %v5790 = vpop.permute.xlu0 %5789
          %5793 = vset.pattern.permute.xlu0 0
          %5794 = vperm.xlu0 %5793, %v5512
          %v5795 = vpop.permute.xlu0 %5794
          %5798 = vset.pattern.permute.xlu0 0
          %5799 = vperm.xlu0 %5798, %v5513
          %v5800 = vpop.permute.xlu0 %5799
          %5803 = vset.pattern.permute.xlu0 0
          %5804 = vperm.xlu0 %5803, %v5514
          %v5805 = vpop.permute.xlu0 %5804
          %5808 = vset.pattern.permute.xlu0 0
          %5809 = vperm.xlu0 %5808, %v5515
          %v5810 = vpop.permute.xlu0 %5809
          %5813 = vset.pattern.permute.xlu0 0
          %5814 = vperm.xlu0 %5813, %v5516
          %v5815 = vpop.permute.xlu0 %5814
          %5818 = vset.pattern.permute.xlu0 0
          %5819 = vperm.xlu0 %5818, %v5517
          %v5820 = vpop.permute.xlu0 %5819
          %5823 = vset.pattern.permute.xlu0 0
          %5824 = vperm.xlu0 %5823, %v5518
          %v5825 = vpop.permute.xlu0 %5824
          %5828 = vset.pattern.permute.xlu0 0
          %5829 = vperm.xlu0 %5828, %v5519
          %v5830 = vpop.permute.xlu0 %5829
          %5833 = vset.pattern.permute.xlu0 0
          %5834 = vperm.xlu0 %5833, %v5520
          %v5835 = vpop.permute.xlu0 %5834
          %5838 = vset.pattern.permute.xlu0 0
          %5839 = vperm.xlu0 %5838, %v5521
          %v5840 = vpop.permute.xlu0 %5839
          %5843 = vset.pattern.permute.xlu0 0
          %5844 = vperm.xlu0 %5843, %v5522
          %v5845 = vpop.permute.xlu0 %5844
          %5848 = vset.pattern.permute.xlu0 0
          %5849 = vperm.xlu0 %5848, %v5523
          %v5850 = vpop.permute.xlu0 %5849
          %5853 = vset.pattern.permute.xlu0 0
          %5854 = vperm.xlu0 %5853, %v5524
          %v5855 = vpop.permute.xlu0 %5854
          %5858 = vset.pattern.permute.xlu0 0
          %5859 = vperm.xlu0 %5858, %v5525
          %v5860 = vpop.permute.xlu0 %5859
          %5863 = vset.pattern.permute.xlu0 0
          %5864 = vperm.xlu0 %5863, %v5526
          %v5865 = vpop.permute.xlu0 %5864
          %5868 = vset.pattern.permute.xlu0 0
          %5869 = vperm.xlu0 %5868, %v5527
          %v5870 = vpop.permute.xlu0 %5869
          %5873 = vset.pattern.permute.xlu0 0
          %5874 = vperm.xlu0 %5873, %v5528
          %v5875 = vpop.permute.xlu0 %5874
          %5878 = vset.pattern.permute.xlu0 0
          %5879 = vperm.xlu0 %5878, %v5529
          %v5880 = vpop.permute.xlu0 %5879
          %5883 = vset.pattern.permute.xlu0 0
          %5884 = vperm.xlu0 %5883, %v5530
          %v5885 = vpop.permute.xlu0 %5884
          %5888 = vset.pattern.permute.xlu0 0
          %5889 = vperm.xlu0 %5888, %v5531
          %v5890 = vpop.permute.xlu0 %5889
          %5893 = vset.pattern.permute.xlu0 0
          %5894 = vperm.xlu0 %5893, %v5532
          %v5895 = vpop.permute.xlu0 %5894
          %5898 = vset.pattern.permute.xlu0 0
          %5899 = vperm.xlu0 %5898, %v5533
          %v5900 = vpop.permute.xlu0 %5899
          %5903 = vset.pattern.permute.xlu0 0
          %5904 = vperm.xlu0 %5903, %v5534
          %v5905 = vpop.permute.xlu0 %5904
          %5908 = vset.pattern.permute.xlu0 0
          %5909 = vperm.xlu0 %5908, %v5535
          %v5910 = vpop.permute.xlu0 %5909
          %5913 = vset.pattern.permute.xlu0 0
          %5914 = vperm.xlu0 %5913, %v5536
          %v5915 = vpop.permute.xlu0 %5914
          %5918 = vset.pattern.permute.xlu0 0
          %5919 = vperm.xlu0 %5918, %v5537
          %v5920 = vpop.permute.xlu0 %5919
          %v5922 = vmul.f32 %v5538, %v5605
          %v5923 = vmul.f32 %v5539, %v5610
          %v5924 = vmul.f32 %v5540, %v5615
          %v5925 = vmul.f32 %v5541, %v5620
          %v5926 = vmul.f32 %v5542, %v5625
          %v5927 = vmul.f32 %v5543, %v5630
          %v5928 = vmul.f32 %v5544, %v5635
          %v5929 = vmul.f32 %v5545, %v5640
          %v5930 = vmul.f32 %v5546, %v5645
          %v5931 = vmul.f32 %v5547, %v5650
          %v5932 = vmul.f32 %v5548, %v5655
          %v5933 = vmul.f32 %v5549, %v5660
          %v5934 = vmul.f32 %v5550, %v5665
          %v5935 = vmul.f32 %v5551, %v5670
          %v5936 = vmul.f32 %v5552, %v5675
          %v5937 = vmul.f32 %v5553, %v5680
          %v5938 = vmul.f32 %v5554, %v5685
          %v5939 = vmul.f32 %v5555, %v5690
          %v5940 = vmul.f32 %v5556, %v5695
          %v5941 = vmul.f32 %v5557, %v5700
          %v5942 = vmul.f32 %v5558, %v5705
          %v5943 = vmul.f32 %v5559, %v5710
          %v5944 = vmul.f32 %v5560, %v5715
          %v5945 = vmul.f32 %v5561, %v5720
          %v5946 = vmul.f32 %v5562, %v5725
          %v5947 = vmul.f32 %v5563, %v5730
          %v5948 = vmul.f32 %v5564, %v5735
          %v5949 = vmul.f32 %v5565, %v5740
          %v5950 = vmul.f32 %v5566, %v5745
          %v5951 = vmul.f32 %v5567, %v5750
          %v5952 = vmul.f32 %v5568, %v5755
          %v5953 = vmul.f32 %v5569, %v5760
          %v5954 = vmul.f32 %v5570, %v5765
          %v5955 = vmul.f32 %v5571, %v5770
          %v5956 = vmul.f32 %v5572, %v5775
          %v5957 = vmul.f32 %v5573, %v5780
          %v5958 = vmul.f32 %v5574, %v5785
          %v5959 = vmul.f32 %v5575, %v5790
          %v5960 = vmul.f32 %v5576, %v5795
          %v5961 = vmul.f32 %v5577, %v5800
          %v5962 = vmul.f32 %v5578, %v5805
          %v5963 = vmul.f32 %v5579, %v5810
          %v5964 = vmul.f32 %v5580, %v5815
          %v5965 = vmul.f32 %v5581, %v5820
          %v5966 = vmul.f32 %v5582, %v5825
          %v5967 = vmul.f32 %v5583, %v5830
          %v5968 = vmul.f32 %v5584, %v5835
          %v5969 = vmul.f32 %v5585, %v5840
          %v5970 = vmul.f32 %v5586, %v5845
          %v5971 = vmul.f32 %v5587, %v5850
          %v5972 = vmul.f32 %v5588, %v5855
          %v5973 = vmul.f32 %v5589, %v5860
          %v5974 = vmul.f32 %v5590, %v5865
          %v5975 = vmul.f32 %v5591, %v5870
          %v5976 = vmul.f32 %v5592, %v5875
          %v5977 = vmul.f32 %v5593, %v5880
          %v5978 = vmul.f32 %v5594, %v5885
          %v5979 = vmul.f32 %v5595, %v5890
          %v5980 = vmul.f32 %v5596, %v5895
          %v5981 = vmul.f32 %v5597, %v5900
          %v5982 = vmul.f32 %v5598, %v5905
          %v5983 = vmul.f32 %v5599, %v5910
          %v5984 = vmul.f32 %v5600, %v5915
          %v5985 = vmul.f32 %v5601, %v5920
          %6002 = vrot.lane.b32.xlu0 %v5938, 32
          %v6003 = vpop.permute.xlu0 %6002
          %6004 = vrot.lane.b32.xlu0 %v5939, 32
          %v6005 = vpop.permute.xlu0 %6004
          %6006 = vrot.lane.b32.xlu0 %v5940, 32
          %v6007 = vpop.permute.xlu0 %6006
          %6008 = vrot.lane.b32.xlu0 %v5941, 32
          %v6009 = vpop.permute.xlu0 %6008
          %6010 = vrot.lane.b32.xlu0 %v5942, 32
          %v6011 = vpop.permute.xlu0 %6010
          %6012 = vrot.lane.b32.xlu0 %v5943, 32
          %v6013 = vpop.permute.xlu0 %6012
          %6014 = vrot.lane.b32.xlu0 %v5944, 32
          %v6015 = vpop.permute.xlu0 %6014
          %6016 = vrot.lane.b32.xlu0 %v5945, 32
          %v6017 = vpop.permute.xlu0 %6016
          %6018 = vrot.lane.b32.xlu0 %v5946, 32
          %v6019 = vpop.permute.xlu0 %6018
          %6020 = vrot.lane.b32.xlu0 %v5947, 32
          %v6021 = vpop.permute.xlu0 %6020
          %6022 = vrot.lane.b32.xlu0 %v5948, 32
          %v6023 = vpop.permute.xlu0 %6022
          %6024 = vrot.lane.b32.xlu0 %v5949, 32
          %v6025 = vpop.permute.xlu0 %6024
          %6026 = vrot.lane.b32.xlu0 %v5950, 32
          %v6027 = vpop.permute.xlu0 %6026
          %6028 = vrot.lane.b32.xlu0 %v5951, 32
          %v6029 = vpop.permute.xlu0 %6028
          %6030 = vrot.lane.b32.xlu0 %v5952, 32
          %v6031 = vpop.permute.xlu0 %6030
          %6032 = vrot.lane.b32.xlu0 %v5953, 32
          %v6033 = vpop.permute.xlu0 %6032
          %6066 = vrot.lane.b32.xlu0 %v5954, 64
          %v6067 = vpop.permute.xlu0 %6066
          %6068 = vrot.lane.b32.xlu0 %v5955, 64
          %v6069 = vpop.permute.xlu0 %6068
          %6070 = vrot.lane.b32.xlu0 %v5956, 64
          %v6071 = vpop.permute.xlu0 %6070
          %6072 = vrot.lane.b32.xlu0 %v5957, 64
          %v6073 = vpop.permute.xlu0 %6072
          %6074 = vrot.lane.b32.xlu0 %v5958, 64
          %v6075 = vpop.permute.xlu0 %6074
          %6076 = vrot.lane.b32.xlu0 %v5959, 64
          %v6077 = vpop.permute.xlu0 %6076
          %6078 = vrot.lane.b32.xlu0 %v5960, 64
          %v6079 = vpop.permute.xlu0 %6078
          %6080 = vrot.lane.b32.xlu0 %v5961, 64
          %v6081 = vpop.permute.xlu0 %6080
          %6082 = vrot.lane.b32.xlu0 %v5962, 64
          %v6083 = vpop.permute.xlu0 %6082
          %6084 = vrot.lane.b32.xlu0 %v5963, 64
          %v6085 = vpop.permute.xlu0 %6084
          %6086 = vrot.lane.b32.xlu0 %v5964, 64
          %v6087 = vpop.permute.xlu0 %6086
          %6088 = vrot.lane.b32.xlu0 %v5965, 64
          %v6089 = vpop.permute.xlu0 %6088
          %6090 = vrot.lane.b32.xlu0 %v5966, 64
          %v6091 = vpop.permute.xlu0 %6090
          %6092 = vrot.lane.b32.xlu0 %v5967, 64
          %v6093 = vpop.permute.xlu0 %6092
          %6094 = vrot.lane.b32.xlu0 %v5968, 64
          %v6095 = vpop.permute.xlu0 %6094
          %6096 = vrot.lane.b32.xlu0 %v5969, 64
          %v6097 = vpop.permute.xlu0 %6096
          %6130 = vrot.lane.b32.xlu0 %v5970, 96
          %v6131 = vpop.permute.xlu0 %6130
          %6132 = vrot.lane.b32.xlu0 %v5971, 96
          %v6133 = vpop.permute.xlu0 %6132
          %6134 = vrot.lane.b32.xlu0 %v5972, 96
          %v6135 = vpop.permute.xlu0 %6134
          %6136 = vrot.lane.b32.xlu0 %v5973, 96
          %v6137 = vpop.permute.xlu0 %6136
          %6138 = vrot.lane.b32.xlu0 %v5974, 96
          %v6139 = vpop.permute.xlu0 %6138
          %6140 = vrot.lane.b32.xlu0 %v5975, 96
          %v6141 = vpop.permute.xlu0 %6140
          %6142 = vrot.lane.b32.xlu0 %v5976, 96
          %v6143 = vpop.permute.xlu0 %6142
          %6144 = vrot.lane.b32.xlu0 %v5977, 96
          %v6145 = vpop.permute.xlu0 %6144
          %6146 = vrot.lane.b32.xlu0 %v5978, 96
          %v6147 = vpop.permute.xlu0 %6146
          %6148 = vrot.lane.b32.xlu0 %v5979, 96
          %v6149 = vpop.permute.xlu0 %6148
          %6150 = vrot.lane.b32.xlu0 %v5980, 96
          %v6151 = vpop.permute.xlu0 %6150
          %6152 = vrot.lane.b32.xlu0 %v5981, 96
          %v6153 = vpop.permute.xlu0 %6152
          %6154 = vrot.lane.b32.xlu0 %v5982, 96
          %v6155 = vpop.permute.xlu0 %6154
          %6156 = vrot.lane.b32.xlu0 %v5983, 96
          %v6157 = vpop.permute.xlu0 %6156
          %6158 = vrot.lane.b32.xlu0 %v5984, 96
          %v6159 = vpop.permute.xlu0 %6158
          %6160 = vrot.lane.b32.xlu0 %v5985, 96
          %v6161 = vpop.permute.xlu0 %6160
          %v6178 = vsel %vm1704, %v5922, %v6003
          %v6179 = vsel %vm1704, %v5923, %v6005
          %v6180 = vsel %vm1704, %v5924, %v6007
          %v6181 = vsel %vm1704, %v5925, %v6009
          %v6182 = vsel %vm1704, %v5926, %v6011
          %v6183 = vsel %vm1704, %v5927, %v6013
          %v6184 = vsel %vm1704, %v5928, %v6015
          %v6185 = vsel %vm1704, %v5929, %v6017
          %v6186 = vsel %vm1704, %v5930, %v6019
          %v6187 = vsel %vm1704, %v5931, %v6021
          %v6188 = vsel %vm1704, %v5932, %v6023
          %v6189 = vsel %vm1704, %v5933, %v6025
          %v6190 = vsel %vm1704, %v5934, %v6027
          %v6191 = vsel %vm1704, %v5935, %v6029
          %v6192 = vsel %vm1704, %v5936, %v6031
          %v6193 = vsel %vm1704, %v5937, %v6033
          %vm6194 = vcmask 523264
          %v6195 = vsel %vm6194, %v6178, %v6067
          %v6196 = vsel %vm6194, %v6179, %v6069
          %v6197 = vsel %vm6194, %v6180, %v6071
          %v6198 = vsel %vm6194, %v6181, %v6073
          %v6199 = vsel %vm6194, %v6182, %v6075
          %v6200 = vsel %vm6194, %v6183, %v6077
          %v6201 = vsel %vm6194, %v6184, %v6079
          %v6202 = vsel %vm6194, %v6185, %v6081
          %v6203 = vsel %vm6194, %v6186, %v6083
          %v6204 = vsel %vm6194, %v6187, %v6085
          %v6205 = vsel %vm6194, %v6188, %v6087
          %v6206 = vsel %vm6194, %v6189, %v6089
          %v6207 = vsel %vm6194, %v6190, %v6091
          %v6208 = vsel %vm6194, %v6191, %v6093
          %v6209 = vsel %vm6194, %v6192, %v6095
          %v6210 = vsel %vm6194, %v6193, %v6097
          %vm6211 = vcmask 785408
          %v6212 = vsel %vm6211, %v6195, %v6131
          %v6213 = vsel %vm6211, %v6196, %v6133
          %v6214 = vsel %vm6211, %v6197, %v6135
          %v6215 = vsel %vm6211, %v6198, %v6137
          %v6216 = vsel %vm6211, %v6199, %v6139
          %v6217 = vsel %vm6211, %v6200, %v6141
          %v6218 = vsel %vm6211, %v6201, %v6143
          %v6219 = vsel %vm6211, %v6202, %v6145
          %v6220 = vsel %vm6211, %v6203, %v6147
          %v6221 = vsel %vm6211, %v6204, %v6149
          %v6222 = vsel %vm6211, %v6205, %v6151
          %v6223 = vsel %vm6211, %v6206, %v6153
          %v6224 = vsel %vm6211, %v6207, %v6155
          %v6225 = vsel %vm6211, %v6208, %v6157
          %v6226 = vsel %vm6211, %v6209, %v6159
          %v6227 = vsel %vm6211, %v6210, %v6161
          %v6228 = vpack.c.bf16 %v6213, %v6212
          %v6229 = vpack.c.bf16 %v6215, %v6214
          %v6230 = vpack.c.bf16 %v6217, %v6216
          %v6231 = vpack.c.bf16 %v6219, %v6218
          %v6232 = vpack.c.bf16 %v6221, %v6220
          %v6233 = vpack.c.bf16 %v6223, %v6222
          %v6234 = vpack.c.bf16 %v6225, %v6224
          %v6235 = vpack.c.bf16 %v6227, %v6226
          %v6244 = vunpack.c.l.b16 %v6228
          %v6245 = vunpack.c.h.b16 %v6228
          %v6246 = vunpack.c.l.b16 %v6229
          %v6247 = vunpack.c.h.b16 %v6229
          %v6248 = vunpack.c.l.b16 %v6230
          %v6249 = vunpack.c.h.b16 %v6230
          %v6250 = vunpack.c.l.b16 %v6231
          %v6251 = vunpack.c.h.b16 %v6231
          %v6252 = vunpack.c.l.b16 %v6232
          %v6253 = vunpack.c.h.b16 %v6232
          %v6254 = vunpack.c.l.b16 %v6233
          %v6255 = vunpack.c.h.b16 %v6233
          %v6256 = vunpack.c.l.b16 %v6234
          %v6257 = vunpack.c.h.b16 %v6234
          %v6258 = vunpack.c.l.b16 %v6235
          %v6259 = vunpack.c.h.b16 %v6235
          %v6260 = vpack.c.b16 %v6244, %v6244
          %v6261 = vpack.c.b16 %v6245, %v6245
          %v6262 = vpack.c.b16 %v6246, %v6246
          %v6263 = vpack.c.b16 %v6247, %v6247
          %v6264 = vpack.c.b16 %v6248, %v6248
          %v6265 = vpack.c.b16 %v6249, %v6249
          %v6266 = vpack.c.b16 %v6250, %v6250
          %v6267 = vpack.c.b16 %v6251, %v6251
          %v6268 = vpack.c.b16 %v6252, %v6252
          %v6269 = vpack.c.b16 %v6253, %v6253
          %v6270 = vpack.c.b16 %v6254, %v6254
          %v6271 = vpack.c.b16 %v6255, %v6255
          %v6272 = vpack.c.b16 %v6256, %v6256
          %v6273 = vpack.c.b16 %v6257, %v6257
          %v6274 = vpack.c.b16 %v6258, %v6258
          %v6275 = vpack.c.b16 %v6259, %v6259
          %6292 = vst [vmem:[%s1225] sm:$0xf] %v6260
          %6293 = vst [vmem:[%s1225 + $0x4] sm:$0xf] %v6261
          %6294 = vst [vmem:[%s1225 + $0x8] sm:$0xf] %v6262
          %6295 = vst [vmem:[%s1225 + $0xc] sm:$0xf] %v6263
          %6296 = vst [vmem:[%s1225 + $0x10] sm:$0xf] %v6264
          %6297 = vst [vmem:[%s1225 + $0x14] sm:$0xf] %v6265
          %6298 = vst [vmem:[%s1225 + $0x18] sm:$0xf] %v6266
          %6299 = vst [vmem:[%s1225 + $0x1c] sm:$0xf] %v6267
          %6300 = vst [vmem:[%s1225 + $0x20] sm:$0xf] %v6268
          %6301 = vst [vmem:[%s1225 + $0x24] sm:$0xf] %v6269
          %6302 = vst [vmem:[%s1225 + $0x28] sm:$0xf] %v6270
          %6303 = vst [vmem:[%s1225 + $0x2c] sm:$0xf] %v6271
          %6304 = vst [vmem:[%s1225 + $0x30] sm:$0xf] %v6272
          %6305 = vst [vmem:[%s1225 + $0x34] sm:$0xf] %v6273
          %6306 = vst [vmem:[%s1225 + $0x38] sm:$0xf] %v6274
          %6307 = vst [vmem:[%s1225 + $0x3c] sm:$0xf] %v6275
        $region205: #{tpu_custom_call.1} parent=180 // pred_fallthru
          _
        %s6308 = sand.u32 %s161, 1
        %s6309 = scalar_lea.sflag [#allocation10], %s6308
        %s6310 = sand.u32 %s161, 1
        %s6311 = smul.addr %s6310, 64
        %s6312 = scalar_lea.vmem [#allocation9], %s6311
        // Predicated region
        $region206: #{tpu_custom_call.1} parent=180 // pred_check
          %p6313 = pneg %p171
        $region207: #{tpu_custom_call.1} parent=180 // pred_check_branch
          %6315 = sbr.rel (%p6313) target = $region209
        $region208: #{tpu_custom_call.1} parent=180 // pred_region
          %s6316 = smul.u32 16, %s24
          %s6318 = ssub.s32 1024, 1024
          %6319 = vsyncadd %s6309, %s6318
          %s6320 = smul.addr %s23, 32
          %s6321 = sadd.s32 %s6316, %s6320
          %s6322 = smul.addr %s6321, 64
          %s6323 = scalar_lea.hbm %s4, %s6322
          %s6324 = sshll.u32 %s6312, 4
          %s6325 = int_to_ptr.vmem [resolvable:$true] %s6324
          %6330 = dma.vmem_to_hbm [thread:$0]  %s6325, 1024, %s6323, %s6309, 64, 64, 4
        $region209: #{tpu_custom_call.1} parent=180 // pred_fallthru
          _
      $region181: #{tpu_custom_call.1} parent=5 // pred_fallthru
        _
      %p6331 = scmp.le.s32.totalorder 2, %s13
      // Predicated region
      $region210: #{tpu_custom_call.1} parent=5 // pred_check
        %p6332 = pneg %p6331
      $region211: #{tpu_custom_call.1} parent=5 // pred_check_branch
        %6334 = sbr.rel (%p6332) target = $region213
      $region212: #{tpu_custom_call.1} parent=5 // pred_region
        %s6335 = ssub.s32 %s13, 2
        // Predicated region
        $region214: #{tpu_custom_call.1} parent=212 // pred_check
          %p6336 = pneg %p177
        $region215: #{tpu_custom_call.1} parent=212 // pred_check_branch
          %6338 = sbr.rel (%p6336) target = $region217
        $region216: #{tpu_custom_call.1} parent=212 // pred_region
          %s6339 = sand.u32 %s162, 1
          %s6340 = scalar_lea.sflag [#allocation10], %s6339
          %s6341 = sand.u32 %s162, 1
          %s6342 = smul.addr %s6341, 64
          %s6343 = scalar_lea.vmem [#allocation9], %s6342
          %6344 = dma.done %s6340, 1024
        $region217: #{tpu_custom_call.1} parent=212 // pred_fallthru
          _
      $region213: #{tpu_custom_call.1} parent=5 // pred_fallthru
        _
    $region6: #{tpu_custom_call.1} parent=1 // loop_footer
      %s17 = sadd.s32 1, %s13
    $region7: #{tpu_custom_call.1} parent=1 // loop_footer_branch
      %12 = sbr.rel target = $region3
    $region8: #{tpu_custom_call.1} parent=1 // loop_exit
      _
    %6345 = vsyncpa [#allocation10], 1
    %s6346 = scalar_lea.sflag [#allocation10], 1
    %6347 = vsyncpa %s6346, 1

</llo_original>
